<compile_context>
chip_gen: v7x
topology: tpu7x:2x2x1
jax: 0.10.0
libtpu: 0.0.40
codegen_flags: <defaults>
</compile_context>

<pallas_src>
import math
from functools import partial

import jax
import jax.numpy as jnp
from jax import lax
from jax.experimental import pallas as pl
from jax.experimental.pallas import tpu as pltpu  # noqa: F401  (TPU backend)

# ----------------------------- model config ---------------------------------
D_MODEL = 32
N_HEADS = 4
D_HEAD = D_MODEL // N_HEADS
D_FF = 64
N_LAYERS = 2
VOCAB = 16
EPS = 1e-6
SCALE = 1.0 / math.sqrt(D_HEAD)
_BIG_NEG = 1e9          # additive mask magnitude (0 = keep, -1e9 = drop)
_LANES = 128            # lane width of the packed weight slabs
_ROW_ALIGN = 8          # sublane alignment of every packed entry

# TODO(synk): dropout is identity (eval mode) and the generator head is not
# part of Transformer.forward(), so neither is implemented here.
# TODO(synk): fully-masked attention rows would give a uniform (not zero)
# distribution; fine for the all-ones src mask + causal tgt mask used here.


# --------------------------- packed-weight layout ----------------------------
# Static layout tables: key = (name, layer_or_None) -> (row_offset, rows, cols).
# Row counts are multiples of 16, so every bf16 slab slice is tile-aligned.

def _mat_layout():
    """All MXU weight matrices (packed as bf16, each padded to 128 lanes)."""
    entries = [(("src_emb", None), VOCAB, D_MODEL),
               (("tgt_emb", None), VOCAB, D_MODEL)]
    for l in range(N_LAYERS):
        entries += [(("e_qkv_w", l), D_MODEL, 3 * D_MODEL),
                    (("e_wo", l), D_MODEL, D_MODEL),
                    (("e_w1", l), D_MODEL, D_FF),
                    (("e_w2", l), D_FF, D_MODEL)]
    for l in range(N_LAYERS):
        entries += [(("d_qkv_w", l), D_MODEL, 3 * D_MODEL),
                    (("d_swo", l), D_MODEL, D_MODEL),
                    (("d_cq_w", l), D_MODEL, D_MODEL),
                    (("d_ckv_w", l), D_MODEL, 2 * D_MODEL),
                    (("d_cwo", l), D_MODEL, D_MODEL),
                    (("d_w1", l), D_MODEL, D_FF),
                    (("d_w2", l), D_FF, D_MODEL)]
    return entries


def _vec_layout(B, Ss, St):
    """All f32 vectors (biases, LN params) + pre-tiled PE slabs."""
    entries = [(("pe_src", None), B * Ss, D_MODEL),
               (("pe_tgt", None), B * St, D_MODEL)]
    for l in range(N_LAYERS):
        entries += [(("e_qkv_b", l), 1, 3 * D_MODEL),
                    (("e_bo", l), 1, D_MODEL),
                    (("e_ln1_g", l), 1, D_MODEL), (("e_ln1_b", l), 1, D_MODEL),
                    (("e_ln2_g", l), 1, D_MODEL), (("e_ln2_b", l), 1, D_MODEL),
                    (("e_b1", l), 1, D_FF), (("e_b2", l), 1, D_MODEL)]
    entries += [(("e_lnf_g", None), 1, D_MODEL), (("e_lnf_b", None), 1, D_MODEL)]
    for l in range(N_LAYERS):
        entries += [(("d_qkv_b", l), 1, 3 * D_MODEL),
                    (("d_sbo", l), 1, D_MODEL),
                    (("d_cq_b", l), 1, D_MODEL),
                    (("d_ckv_b", l), 1, 2 * D_MODEL),
                    (("d_cbo", l), 1, D_MODEL),
                    (("d_ln1_g", l), 1, D_MODEL), (("d_ln1_b", l), 1, D_MODEL),
                    (("d_ln2_g", l), 1, D_MODEL), (("d_ln2_b", l), 1, D_MODEL),
                    (("d_ln3_g", l), 1, D_MODEL), (("d_ln3_b", l), 1, D_MODEL),
                    (("d_b1", l), 1, D_FF), (("d_b2", l), 1, D_MODEL)]
    entries += [(("d_lnf_g", None), 1, D_MODEL), (("d_lnf_b", None), 1, D_MODEL)]
    return entries


def _offsets(entries):
    """key -> (row_offset, rows, cols); offsets are 8-sublane aligned."""
    table, off = {}, 0
    for key, rows, cols in entries:
        table[key] = (off, rows, cols)
        off += ((rows + _ROW_ALIGN - 1) // _ROW_ALIGN) * _ROW_ALIGN
    return table, off


def _make_getters(wmat, wvec, mat_off, vec_off):
    """Lazy per-use accessors.  Work identically on Pallas Refs (static slice
    -> load at use site, bounded live range) and on jnp arrays (reference)."""
    def getm(name, l=None):
        off, rows, cols = mat_off[(name, l)]
        return wmat[off:off + rows, :cols]          # bf16 weight matrix

    def getv(name, l=None):
        off, rows, cols = vec_off[(name, l)]
        return wvec[off:off + rows, :cols]          # f32 vector / PE slab
    return getm, getv


# ------------------------- shared forward math --------------------------------
def _layer_norm(x, g, b):
    mean = jnp.mean(x, axis=-1, keepdims=True)
    var = jnp.mean(jnp.square(x - mean), axis=-1, keepdims=True)
    return (x - mean) * lax.rsqrt(var + EPS) * g + b


def _softmax_rows(s, approx):
    s = s - jnp.max(s, axis=-1, keepdims=True)
    p = jnp.exp(s)
    denom = jnp.sum(p, axis=-1, keepdims=True)
    if approx:
        return p * pl.reciprocal(denom, approx=True)    # EUP slot, ~free
    return p / denom


def _mha(q2d, k2d, v2d, wo, bo, add_mask, B, Sq, Sk, approx):
    """Multi-head attention with heads folded into the einsum batch axis.

    q2d [B*Sq, D], k2d/v2d [B*Sk, D] (f32); wo [D, D] bf16; bo [1, D] f32;
    add_mask [H*B, Sq, Sk] f32 additive mask, fully materialized in the
    wrapper (no in-kernel broadcasts).  One batched einsum for the scores and
    one for P@V; softmax/mask math stays in f32.
    """
    bf16 = jnp.bfloat16

    def heads(x2d, S):
        # head-major relayout via a cheap leading-axis concat: index = h*B + b
        parts = [x2d[:, h * D_HEAD:(h + 1) * D_HEAD].reshape(B, S, D_HEAD)
                 for h in range(N_HEADS)]
        return jnp.concatenate(parts, axis=0).astype(bf16)

    qs, ks, vs = heads(q2d, Sq), heads(k2d, Sk), heads(v2d, Sk)
    s = jnp.einsum("bqd,bkd->bqk", qs, ks, preferred_element_type=jnp.float32)
    p = _softmax_rows(s * SCALE + add_mask, approx)
    o = jnp.einsum("bqk,bkd->bqd", p.astype(bf16), vs,
                   preferred_element_type=jnp.float32)        # [(h,b), Sq, dk]
    # Folded output projection: concat_h(o_h) @ Wo == sum_h o_h @ Wo[h].
    # Leading-axis slices of `o` are cheap; the MXU does the head->lane relayout.
    out = None
    for h in range(N_HEADS):
        oh = o[h * B:(h + 1) * B].reshape(B * Sq, D_HEAD).astype(bf16)
        c = jnp.dot(oh, wo[h * D_HEAD:(h + 1) * D_HEAD, :],
                    preferred_element_type=jnp.float32)
        out = c if out is None else out + c
    return out + bo


def _forward_core(src_ids, tgt_ids, enc_mask, dself_mask, dcross_mask,
                  getm, getv, B, Ss, St, approx):
    """Full encoder-decoder forward.  Runs identically inside the Pallas
    kernel (approx=True) and as the pure-JAX reference (approx=False)."""
    bf16 = jnp.bfloat16
    D = D_MODEL

    def embed(ids, emb_name, pe_name, S):
        # gather-free embedding: one-hot [B*S, VOCAB] @ emb [VOCAB, D] (MXU).
        # sqrt(D_MODEL) is folded into the packed table; PE slab is pre-tiled.
        iota = lax.broadcasted_iota(jnp.int32, (B * S, VOCAB), 1)
        onehot = jnp.where(ids == iota, 1.0, 0.0).astype(bf16)
        x = jnp.dot(onehot, getm(emb_name), preferred_element_type=jnp.float32)
        return x + getv(pe_name)                                # [B*S, D] f32

    def ffn(xn, prefix, l):
        h = jnp.dot(xn.astype(bf16), getm(prefix + "_w1", l),
                    preferred_element_type=jnp.float32) + getv(prefix + "_b1", l)
        h = jnp.maximum(h, 0.0)
        return jnp.dot(h.astype(bf16), getm(prefix + "_w2", l),
                       preferred_element_type=jnp.float32) + getv(prefix + "_b2", l)

    # ------------------------------ encoder ------------------------------
    x = embed(src_ids, "src_emb", "pe_src", Ss)                 # [B*Ss, D]
    for l in range(N_LAYERS):
        xn = _layer_norm(x, getv("e_ln1_g", l), getv("e_ln1_b", l))
        qkv = jnp.dot(xn.astype(bf16), getm("e_qkv_w", l),
                      preferred_element_type=jnp.float32) + getv("e_qkv_b", l)
        x = x + _mha(qkv[:, :D], qkv[:, D:2 * D], qkv[:, 2 * D:3 * D],
                     getm("e_wo", l), getv("e_bo", l),
                     enc_mask, B, Ss, Ss, approx)
        xn = _layer_norm(x, getv("e_ln2_g", l), getv("e_ln2_b", l))
        x = x + ffn(xn, "e", l)
    memory = _layer_norm(x, getv("e_lnf_g"), getv("e_lnf_b"))   # [B*Ss, D]
    mem_bf16 = memory.astype(bf16)                              # hoisted cast

    # ------------------------------ decoder ------------------------------
    y = embed(tgt_ids, "tgt_emb", "pe_tgt", St)                 # [B*St, D]
    for l in range(N_LAYERS):
        # masked self-attention
        yn = _layer_norm(y, getv("d_ln1_g", l), getv("d_ln1_b", l))
        qkv = jnp.dot(yn.astype(bf16), getm("d_qkv_w", l),
                      preferred_element_type=jnp.float32) + getv("d_qkv_b", l)
        y = y + _mha(qkv[:, :D], qkv[:, D:2 * D], qkv[:, 2 * D:3 * D],
                     getm("d_swo", l), getv("d_sbo", l),
                     dself_mask, B, St, St, approx)
        # cross-attention over the encoder memory
        yn = _layer_norm(y, getv("d_ln2_g", l), getv("d_ln2_b", l))
        q2d = jnp.dot(yn.astype(bf16), getm("d_cq_w", l),
                      preferred_element_type=jnp.float32) + getv("d_cq_b", l)
        kv = jnp.dot(mem_bf16, getm("d_ckv_w", l),
                     preferred_element_type=jnp.float32) + getv("d_ckv_b", l)
        y = y + _mha(q2d, kv[:, :D], kv[:, D:2 * D],
                     getm("d_cwo", l), getv("d_cbo", l),
                     dcross_mask, B, St, Ss, approx)
        # position-wise FFN
        yn = _layer_norm(y, getv("d_ln3_g", l), getv("d_ln3_b", l))
        y = y + ffn(yn, "d", l)
    return _layer_norm(y, getv("d_lnf_g"), getv("d_lnf_b"))     # [B*St, D]


# ----------------------------- the fused kernel -------------------------------
def _transformer_kernel(src_ids_ref, tgt_ids_ref, enc_mask_ref, dself_mask_ref,
                        dcross_mask_ref, wmat_ref, wvec_ref, out_ref,
                        *, mat_off, vec_off, B, Ss, St):
    # Weight slabs are kept as refs; every weight is loaded lazily, per use,
    # through static tile-aligned slices (see _make_getters).
    getm, getv = _make_getters(wmat_ref, wvec_ref, mat_off, vec_off)
    out_ref[...] = _forward_core(
        src_ids_ref[...], tgt_ids_ref[...],
        enc_mask_ref[...], dself_mask_ref[...], dcross_mask_ref[...],
        getm, getv, B, Ss, St, approx=True)


# ----------------------------- wrappers ---------------------------------------
def positional_encoding(max_len, d_model):
    pos = jnp.arange(max_len, dtype=jnp.float32)[:, None]
    div = jnp.exp(jnp.arange(0, d_model, 2, dtype=jnp.float32)
                  * (-math.log(10000.0) / d_model))
    pe = jnp.zeros((max_len, d_model), jnp.float32)
    pe = pe.at[:, 0::2].set(jnp.sin(pos * div))
    pe = pe.at[:, 1::2].set(jnp.cos(pos * div))
    return pe


def pack_params(params, B, Ss, St):
    """One-time packing of all ~40 parameter tensors into two slabs:
       wmat: bf16 [rows, 128]  (all MXU weight matrices + scaled embeddings)
       wvec: f32  [rows, 128]  (all biases / LN params + pre-tiled PE slabs)."""
    w, pe, sd = params["weights"], params["pe"], math.sqrt(D_MODEL)

    def value(name, l):
        if name == "src_emb":
            return params["src_emb"] * sd              # fold sqrt(D) scale
        if name == "tgt_emb":
            return params["tgt_emb"] * sd
        if name == "pe_src":
            return jnp.tile(pe[:Ss], (B, 1))            # [B*Ss, D]
        if name == "pe_tgt":
            return jnp.tile(pe[:St], (B, 1))
        arr = w[name]
        return arr[l] if l is not None else arr

    def build(entries, offsets, rows_total):
        buf = jnp.zeros((rows_total, _LANES), jnp.float32)
        for (name, l), rows, cols in entries:
            off = offsets[(name, l)][0]
            buf = buf.at[off:off + rows, :cols].set(value(name, l))
        return buf

    mat_entries = _mat_layout()
    vec_entries = _vec_layout(B, Ss, St)
    mat_off, mat_rows = _offsets(mat_entries)
    vec_off, vec_rows = _offsets(vec_entries)
    return {"wmat": build(mat_entries, mat_off, mat_rows).astype(jnp.bfloat16),
            "wvec": build(vec_entries, vec_off, vec_rows)}


def _prepare_inputs(src, tgt, src_mask, tgt_mask):
    """Token ids as tiny int32 operands + fully-materialized additive masks
    (pre-broadcast over queries and pre-tiled over heads -> zero in-kernel
    broadcast / select work)."""
    B, Ss = src.shape
    St = tgt.shape[1]
    src_ids = src.reshape(B * Ss, 1).astype(jnp.int32)
    tgt_ids = tgt.reshape(B * St, 1).astype(jnp.int32)
    src_keep = src_mask.astype(jnp.float32).reshape(B, 1, Ss)
    tgt_keep = tgt_mask.astype(jnp.float32).reshape(B, St, St)
    enc_add = jnp.tile(jnp.broadcast_to((src_keep - 1.0) * _BIG_NEG,
                                        (B, Ss, Ss)), (N_HEADS, 1, 1))
    dcross_add = jnp.tile(jnp.broadcast_to((src_keep - 1.0) * _BIG_NEG,
                                           (B, St, Ss)), (N_HEADS, 1, 1))
    dself_add = jnp.tile((tgt_keep - 1.0) * _BIG_NEG, (N_HEADS, 1, 1))
    return src_ids, tgt_ids, enc_add, dself_add, dcross_add


def transformer_forward(packed, src, tgt, src_mask, tgt_mask):
    """One pallas_call for the whole encoder-decoder forward pass."""
    B, Ss = src.shape
    St = tgt.shape[1]
    mat_off, _ = _offsets(_mat_layout())
    vec_off, _ = _offsets(_vec_layout(B, Ss, St))
    inputs = _prepare_inputs(src, tgt, src_mask, tgt_mask)
    kernel = partial(_transformer_kernel, mat_off=mat_off, vec_off=vec_off,
                     B=B, Ss=Ss, St=St)
    # No grid / BlockSpecs: 7 whole-array VMEM operands (<0.5 MiB total),
    # launched exactly once.
    out2d = pl.pallas_call(
        kernel,
        out_shape=jax.ShapeDtypeStruct((B * St, D_MODEL), jnp.float32),
    )(*inputs, packed["wmat"], packed["wvec"])
    return out2d.reshape(B, St, D_MODEL)


def reference_forward(packed, src, tgt, src_mask, tgt_mask):
    """Pure-JAX reference: identical math (incl. bf16 matmul operands), exact
    reciprocal instead of the EUP approximation."""
    B, Ss = src.shape
    St = tgt.shape[1]
    mat_off, _ = _offsets(_mat_layout())
    vec_off, _ = _offsets(_vec_layout(B, Ss, St))
    src_ids, tgt_ids, enc_add, dself_add, dcross_add = _prepare_inputs(
        src, tgt, src_mask, tgt_mask)
    getm, getv = _make_getters(packed["wmat"], packed["wvec"], mat_off, vec_off)
    y = _forward_core(src_ids, tgt_ids, enc_add, dself_add, dcross_add,
                      getm, getv, B, Ss, St, approx=False)
    return y.reshape(B, St, D_MODEL)


# ----------------------------- parameter init --------------------------------
def _init_params(key, max_len=64):
    keys = iter(jax.random.split(key, 32))
    L = N_LAYERS

    def w(*shape):
        return jax.random.normal(next(keys), shape, jnp.float32) * 0.02

    def zeros(*shape):
        return jnp.zeros(shape, jnp.float32)

    def ones(*shape):
        return jnp.ones(shape, jnp.float32)

    weights = {
        # ---- encoder ----
        "e_qkv_w": w(L, D_MODEL, 3 * D_MODEL), "e_qkv_b": zeros(L, 1, 3 * D_MODEL),
        "e_wo": w(L, D_MODEL, D_MODEL), "e_bo": zeros(L, 1, D_MODEL),
        "e_ln1_g": ones(L, 1, D_MODEL), "e_ln1_b": zeros(L, 1, D_MODEL),
        "e_ln2_g": ones(L, 1, D_MODEL), "e_ln2_b": zeros(L, 1, D_MODEL),
        "e_w1": w(L, D_MODEL, D_FF), "e_b1": zeros(L, 1, D_FF),
        "e_w2": w(L, D_FF, D_MODEL), "e_b2": zeros(L, 1, D_MODEL),
        "e_lnf_g": ones(1, D_MODEL), "e_lnf_b": zeros(1, D_MODEL),
        # ---- decoder ----
        "d_qkv_w": w(L, D_MODEL, 3 * D_MODEL), "d_qkv_b": zeros(L, 1, 3 * D_MODEL),
        "d_swo": w(L, D_MODEL, D_MODEL), "d_sbo": zeros(L, 1, D_MODEL),
        "d_cq_w": w(L, D_MODEL, D_MODEL), "d_cq_b": zeros(L, 1, D_MODEL),
        "d_ckv_w": w(L, D_MODEL, 2 * D_MODEL), "d_ckv_b": zeros(L, 1, 2 * D_MODEL),
        "d_cwo": w(L, D_MODEL, D_MODEL), "d_cbo": zeros(L, 1, D_MODEL),
        "d_ln1_g": ones(L, 1, D_MODEL), "d_ln1_b": zeros(L, 1, D_MODEL),
        "d_ln2_g": ones(L, 1, D_MODEL), "d_ln2_b": zeros(L, 1, D_MODEL),
        "d_ln3_g": ones(L, 1, D_MODEL), "d_ln3_b": zeros(L, 1, D_MODEL),
        "d_w1": w(L, D_MODEL, D_FF), "d_b1": zeros(L, 1, D_FF),
        "d_w2": w(L, D_FF, D_MODEL), "d_b2": zeros(L, 1, D_MODEL),
        "d_lnf_g": ones(1, D_MODEL), "d_lnf_b": zeros(1, D_MODEL),
    }
    return {
        "src_emb": w(VOCAB, D_MODEL),
        "tgt_emb": w(VOCAB, D_MODEL),
        "pe": positional_encoding(max_len, D_MODEL),
        "weights": weights,
    }


def make_subsequent_mask(size):
    """1 where attention is allowed (lower-triangular incl. diagonal)."""
    return jnp.tril(jnp.ones((1, size, size), jnp.float32))


# ----------------------------- main ------------------------------------------
if __name__ == "__main__":
    B, S_SRC, S_TGT = 2, 8, 8

    key = jax.random.PRNGKey(0)
    k_params, k_src, k_tgt = jax.random.split(key, 3)

    params = _init_params(k_params)
    packed = pack_params(params, B, S_SRC, S_TGT)   # ~40 tensors -> 2 slabs

    src = jax.random.randint(k_src, (B, S_SRC), 0, VOCAB)
    tgt = jax.random.randint(k_tgt, (B, S_TGT), 0, VOCAB)

    # src_mask: [B,1,1,S_src] (all valid); tgt_mask: [B,1,S_tgt,S_tgt] causal.
    src_mask = jnp.ones((B, 1, 1, S_SRC), jnp.float32)
    tgt_mask = jnp.broadcast_to(
        make_subsequent_mask(S_TGT)[None], (B, 1, S_TGT, S_TGT))

    fwd = jax.jit(transformer_forward)
    out = jax.block_until_ready(fwd(packed, src, tgt, src_mask, tgt_mask))

    assert out.shape == (B, S_TGT, D_MODEL)
    assert bool(jnp.all(jnp.isfinite(out)))

    # Numerical self-check against the pure-JAX reference (identical math,
    # exact division instead of the EUP approx reciprocal).
    ref = reference_forward(params if False else packed, src, tgt, src_mask, tgt_mask)
    assert bool(jnp.allclose(out, ref, atol=5e-2, rtol=5e-2))

    print("KERNEL_OK")
</pallas_src>

<mosaic_0001>
module attributes {stable_mosaic.version = 11 : i64} {
  func.func @_transformer_kernel(%arg0: memref<16x1xi32, #tpu.memory_space<vmem>>, %arg1: memref<16x1xi32, #tpu.memory_space<vmem>>, %arg2: memref<8x8x8xf32, #tpu.memory_space<vmem>>, %arg3: memref<8x8x8xf32, #tpu.memory_space<vmem>>, %arg4: memref<8x8x8xf32, #tpu.memory_space<vmem>>, %arg5: memref<864x128xbf16, #tpu.memory_space<vmem>>, %arg6: memref<400x128xf32, #tpu.memory_space<vmem>>, %arg7: memref<16x32xf32, #tpu.memory_space<vmem>>) attributes {dimension_semantics = [], scalar_prefetch = 0 : i64, scratch_operands = 0 : i64, tpu.core_type = #tpu.core_type<tc>} {
    %c0 = arith.constant 0 : index
    %c0_0 = arith.constant 0 : index
    %0 = vector.load %arg0[%c0, %c0_0] : memref<16x1xi32, #tpu.memory_space<vmem>>, vector<16x1xi32>
    %c0_1 = arith.constant 0 : index
    %c0_2 = arith.constant 0 : index
    %1 = vector.load %arg1[%c0_1, %c0_2] : memref<16x1xi32, #tpu.memory_space<vmem>>, vector<16x1xi32>
    %c0_3 = arith.constant 0 : index
    %c0_4 = arith.constant 0 : index
    %c0_5 = arith.constant 0 : index
    %2 = vector.load %arg2[%c0_3, %c0_4, %c0_5] : memref<8x8x8xf32, #tpu.memory_space<vmem>>, vector<8x8x8xf32>
    %c0_6 = arith.constant 0 : index
    %c0_7 = arith.constant 0 : index
    %c0_8 = arith.constant 0 : index
    %3 = vector.load %arg3[%c0_6, %c0_7, %c0_8] : memref<8x8x8xf32, #tpu.memory_space<vmem>>, vector<8x8x8xf32>
    %c0_9 = arith.constant 0 : index
    %c0_10 = arith.constant 0 : index
    %c0_11 = arith.constant 0 : index
    %4 = vector.load %arg4[%c0_9, %c0_10, %c0_11] : memref<8x8x8xf32, #tpu.memory_space<vmem>>, vector<8x8x8xf32>
    %5 = tpu.iota {dimensions = array<i32: 1>} : vector<16x16xi32>
    %6 = vector.broadcast %0 : vector<16x1xi32> to vector<16x16xi32>
    %7 = arith.cmpi eq, %6, %5 : vector<16x16xi32>
    %cst = arith.constant 1.000000e+00 : f32
    %cst_12 = arith.constant 0.000000e+00 : f32
    %8 = vector.broadcast %cst : f32 to vector<16x16xf32>
    %9 = vector.broadcast %cst_12 : f32 to vector<16x16xf32>
    %10 = arith.select %7, %8, %9 : vector<16x16xi1>, vector<16x16xf32>
    %11 = arith.truncf %10 : vector<16x16xf32> to vector<16x16xbf16>
    %c0_13 = arith.constant 0 : index
    %c0_14 = arith.constant 0 : index
    %12 = vector.load %arg5[%c0_13, %c0_14] : memref<864x128xbf16, #tpu.memory_space<vmem>>, vector<16x32xbf16>
    %cst_15 = arith.constant dense<0.000000e+00> : vector<16x32xf32>
    %13 = tpu.matmul %11, %12, %cst_15 {dimension_numbers = #tpu.dot_dimension_numbers<[1], [0], [0], [1], [0, 0, 1, 1], [], []>} : vector<16x16xbf16>, vector<16x32xbf16>, vector<16x32xf32> -> vector<16x32xf32>
    %c0_16 = arith.constant 0 : index
    %c0_17 = arith.constant 0 : index
    %14 = vector.load %arg6[%c0_16, %c0_17] : memref<400x128xf32, #tpu.memory_space<vmem>>, vector<16x32xf32>
    %15 = arith.addf %13, %14 : vector<16x32xf32>
    %c48 = arith.constant 48 : index
    %c0_18 = arith.constant 0 : index
    %16 = vector.load %arg6[%c48, %c0_18] : memref<400x128xf32, #tpu.memory_space<vmem>>, vector<1x32xf32>
    %c56 = arith.constant 56 : index
    %c0_19 = arith.constant 0 : index
    %17 = vector.load %arg6[%c56, %c0_19] : memref<400x128xf32, #tpu.memory_space<vmem>>, vector<1x32xf32>
    %cst_20 = arith.constant dense<0.000000e+00> : vector<16xf32>
    %18 = vector.multi_reduction <add>, %15, %cst_20 [1] : vector<16x32xf32> to vector<16xf32>
    %19 = vector.shape_cast %18 : vector<16xf32> to vector<16x1xf32>
    %cst_21 = arith.constant 3.200000e+01 : f32
    %20 = vector.broadcast %cst_21 : f32 to vector<16x1xf32>
    %21 = arith.divf %19, %20 : vector<16x1xf32>
    %22 = vector.broadcast %21 : vector<16x1xf32> to vector<16x32xf32>
    %23 = arith.subf %15, %22 : vector<16x32xf32>
    %24 = arith.mulf %23, %23 : vector<16x32xf32>
    %cst_22 = arith.constant dense<0.000000e+00> : vector<16xf32>
    %25 = vector.multi_reduction <add>, %24, %cst_22 [1] : vector<16x32xf32> to vector<16xf32>
    %26 = vector.shape_cast %25 : vector<16xf32> to vector<16x1xf32>
    %cst_23 = arith.constant 3.200000e+01 : f32
    %27 = vector.broadcast %cst_23 : f32 to vector<16x1xf32>
    %28 = arith.divf %26, %27 : vector<16x1xf32>
    %29 = vector.broadcast %21 : vector<16x1xf32> to vector<16x32xf32>
    %30 = arith.subf %15, %29 : vector<16x32xf32>
    %cst_24 = arith.constant 9.99999997E-7 : f32
    %31 = vector.broadcast %cst_24 : f32 to vector<16x1xf32>
    %32 = arith.addf %28, %31 : vector<16x1xf32>
    %33 = math.rsqrt %32 : vector<16x1xf32>
    %34 = vector.broadcast %33 : vector<16x1xf32> to vector<16x32xf32>
    %35 = arith.mulf %30, %34 : vector<16x32xf32>
    %36 = vector.broadcast %16 : vector<1x32xf32> to vector<16x32xf32>
    %37 = arith.mulf %35, %36 : vector<16x32xf32>
    %38 = vector.broadcast %17 : vector<1x32xf32> to vector<16x32xf32>
    %39 = arith.addf %37, %38 : vector<16x32xf32>
    %40 = arith.truncf %39 : vector<16x32xf32> to vector<16x32xbf16>
    %c32 = arith.constant 32 : index
    %c0_25 = arith.constant 0 : index
    %41 = vector.load %arg5[%c32, %c0_25] : memref<864x128xbf16, #tpu.memory_space<vmem>>, vector<32x96xbf16>
    %cst_26 = arith.constant dense<0.000000e+00> : vector<16x96xf32>
    %42 = tpu.matmul %40, %41, %cst_26 {dimension_numbers = #tpu.dot_dimension_numbers<[1], [0], [0], [1], [0, 0, 1, 1], [], []>} : vector<16x32xbf16>, vector<32x96xbf16>, vector<16x96xf32> -> vector<16x96xf32>
    %c32_27 = arith.constant 32 : index
    %c0_28 = arith.constant 0 : index
    %43 = vector.load %arg6[%c32_27, %c0_28] : memref<400x128xf32, #tpu.memory_space<vmem>>, vector<1x96xf32>
    %44 = vector.broadcast %43 : vector<1x96xf32> to vector<16x96xf32>
    %45 = arith.addf %42, %44 : vector<16x96xf32>
    %46 = vector.extract_strided_slice %45 {offsets = [0, 0], sizes = [16, 32], strides = [1, 1]} : vector<16x96xf32> to vector<16x32xf32>
    %47 = vector.extract_strided_slice %45 {offsets = [0, 32], sizes = [16, 32], strides = [1, 1]} : vector<16x96xf32> to vector<16x32xf32>
    %48 = vector.extract_strided_slice %45 {offsets = [0, 64], sizes = [16, 32], strides = [1, 1]} : vector<16x96xf32> to vector<16x32xf32>
    %c64 = arith.constant 64 : index
    %c0_29 = arith.constant 0 : index
    %49 = vector.load %arg5[%c64, %c0_29] : memref<864x128xbf16, #tpu.memory_space<vmem>>, vector<32x32xbf16>
    %c40 = arith.constant 40 : index
    %c0_30 = arith.constant 0 : index
    %50 = vector.load %arg6[%c40, %c0_30] : memref<400x128xf32, #tpu.memory_space<vmem>>, vector<1x32xf32>
    %51 = vector.extract_strided_slice %46 {offsets = [0, 0], sizes = [16, 8], strides = [1, 1]} : vector<16x32xf32> to vector<16x8xf32>
    %52 = vector.shape_cast %51 : vector<16x8xf32> to vector<2x8x8xf32>
    %53 = vector.extract_strided_slice %46 {offsets = [0, 8], sizes = [16, 8], strides = [1, 1]} : vector<16x32xf32> to vector<16x8xf32>
    %54 = vector.shape_cast %53 : vector<16x8xf32> to vector<2x8x8xf32>
    %55 = vector.extract_strided_slice %46 {offsets = [0, 16], sizes = [16, 8], strides = [1, 1]} : vector<16x32xf32> to vector<16x8xf32>
    %56 = vector.shape_cast %55 : vector<16x8xf32> to vector<2x8x8xf32>
    %57 = vector.extract_strided_slice %46 {offsets = [0, 24], sizes = [16, 8], strides = [1, 1]} : vector<16x32xf32> to vector<16x8xf32>
    %58 = vector.shape_cast %57 : vector<16x8xf32> to vector<2x8x8xf32>
    %59 = tpu.concatenate %52, %54, %56, %58 in 0 : vector<2x8x8xf32>, vector<2x8x8xf32>, vector<2x8x8xf32>, vector<2x8x8xf32> -> vector<8x8x8xf32>
    %60 = arith.truncf %59 : vector<8x8x8xf32> to vector<8x8x8xbf16>
    %61 = vector.extract_strided_slice %47 {offsets = [0, 0], sizes = [16, 8], strides = [1, 1]} : vector<16x32xf32> to vector<16x8xf32>
    %62 = vector.shape_cast %61 : vector<16x8xf32> to vector<2x8x8xf32>
    %63 = vector.extract_strided_slice %47 {offsets = [0, 8], sizes = [16, 8], strides = [1, 1]} : vector<16x32xf32> to vector<16x8xf32>
    %64 = vector.shape_cast %63 : vector<16x8xf32> to vector<2x8x8xf32>
    %65 = vector.extract_strided_slice %47 {offsets = [0, 16], sizes = [16, 8], strides = [1, 1]} : vector<16x32xf32> to vector<16x8xf32>
    %66 = vector.shape_cast %65 : vector<16x8xf32> to vector<2x8x8xf32>
    %67 = vector.extract_strided_slice %47 {offsets = [0, 24], sizes = [16, 8], strides = [1, 1]} : vector<16x32xf32> to vector<16x8xf32>
    %68 = vector.shape_cast %67 : vector<16x8xf32> to vector<2x8x8xf32>
    %69 = tpu.concatenate %62, %64, %66, %68 in 0 : vector<2x8x8xf32>, vector<2x8x8xf32>, vector<2x8x8xf32>, vector<2x8x8xf32> -> vector<8x8x8xf32>
    %70 = arith.truncf %69 : vector<8x8x8xf32> to vector<8x8x8xbf16>
    %71 = vector.extract_strided_slice %48 {offsets = [0, 0], sizes = [16, 8], strides = [1, 1]} : vector<16x32xf32> to vector<16x8xf32>
    %72 = vector.shape_cast %71 : vector<16x8xf32> to vector<2x8x8xf32>
    %73 = vector.extract_strided_slice %48 {offsets = [0, 8], sizes = [16, 8], strides = [1, 1]} : vector<16x32xf32> to vector<16x8xf32>
    %74 = vector.shape_cast %73 : vector<16x8xf32> to vector<2x8x8xf32>
    %75 = vector.extract_strided_slice %48 {offsets = [0, 16], sizes = [16, 8], strides = [1, 1]} : vector<16x32xf32> to vector<16x8xf32>
    %76 = vector.shape_cast %75 : vector<16x8xf32> to vector<2x8x8xf32>
    %77 = vector.extract_strided_slice %48 {offsets = [0, 24], sizes = [16, 8], strides = [1, 1]} : vector<16x32xf32> to vector<16x8xf32>
    %78 = vector.shape_cast %77 : vector<16x8xf32> to vector<2x8x8xf32>
    %79 = tpu.concatenate %72, %74, %76, %78 in 0 : vector<2x8x8xf32>, vector<2x8x8xf32>, vector<2x8x8xf32>, vector<2x8x8xf32> -> vector<8x8x8xf32>
    %80 = arith.truncf %79 : vector<8x8x8xf32> to vector<8x8x8xbf16>
    "tpu.trace_start"() <{level = 10 : i32, message = "bqd,bkd->bqk"}> : () -> ()
    %cst_31 = arith.constant dense<0.000000e+00> : vector<8x8x8xf32>
    %81 = tpu.matmul %60, %70, %cst_31 {dimension_numbers = #tpu.dot_dimension_numbers<[2], [2], [1], [1], [0, 0, 0, 1, 1, 1], [0], [0]>} : vector<8x8x8xbf16>, vector<8x8x8xbf16>, vector<8x8x8xf32> -> vector<8x8x8xf32>
    "tpu.trace_stop"() : () -> ()
    %cst_32 = arith.constant 0.353553385 : f32
    %82 = vector.broadcast %cst_32 : f32 to vector<8x8x8xf32>
    %83 = arith.mulf %81, %82 : vector<8x8x8xf32>
    %84 = arith.addf %83, %2 : vector<8x8x8xf32>
    %cst_33 = arith.constant dense<0xFF800000> : vector<8x8xf32>
    %85 = vector.multi_reduction <maximumf>, %84, %cst_33 [2] : vector<8x8x8xf32> to vector<8x8xf32>
    %86 = vector.shape_cast %85 : vector<8x8xf32> to vector<8x8x1xf32>
    %87 = vector.broadcast %86 : vector<8x8x1xf32> to vector<8x8x8xf32>
    %88 = arith.subf %84, %87 : vector<8x8x8xf32>
    %89 = math.exp %88 : vector<8x8x8xf32>
    %cst_34 = arith.constant dense<0.000000e+00> : vector<8x8xf32>
    %90 = vector.multi_reduction <add>, %89, %cst_34 [2] : vector<8x8x8xf32> to vector<8x8xf32>
    %91 = vector.shape_cast %90 : vector<8x8xf32> to vector<8x8x1xf32>
    %92 = tpu.reciprocal %91 {approx = true} : vector<8x8x1xf32> -> vector<8x8x1xf32>
    %93 = vector.broadcast %92 : vector<8x8x1xf32> to vector<8x8x8xf32>
    %94 = arith.mulf %89, %93 : vector<8x8x8xf32>
    %95 = arith.truncf %94 : vector<8x8x8xf32> to vector<8x8x8xbf16>
    "tpu.trace_start"() <{level = 10 : i32, message = "bqk,bkd->bqd"}> : () -> ()
    %cst_35 = arith.constant dense<0.000000e+00> : vector<8x8x8xf32>
    %96 = tpu.matmul %95, %80, %cst_35 {dimension_numbers = #tpu.dot_dimension_numbers<[2], [1], [1], [2], [0, 0, 0, 1, 1, 2], [0], [0]>} : vector<8x8x8xbf16>, vector<8x8x8xbf16>, vector<8x8x8xf32> -> vector<8x8x8xf32>
    "tpu.trace_stop"() : () -> ()
    %97 = vector.extract_strided_slice %96 {offsets = [0, 0, 0], sizes = [2, 8, 8], strides = [1, 1, 1]} : vector<8x8x8xf32> to vector<2x8x8xf32>
    %98 = vector.shape_cast %97 : vector<2x8x8xf32> to vector<16x8xf32>
    %99 = arith.truncf %98 : vector<16x8xf32> to vector<16x8xbf16>
    %100 = vector.extract_strided_slice %49 {offsets = [0, 0], sizes = [8, 32], strides = [1, 1]} : vector<32x32xbf16> to vector<8x32xbf16>
    %cst_36 = arith.constant dense<0.000000e+00> : vector<16x32xf32>
    %101 = tpu.matmul %99, %100, %cst_36 {dimension_numbers = #tpu.dot_dimension_numbers<[1], [0], [0], [1], [0, 0, 1, 1], [], []>} : vector<16x8xbf16>, vector<8x32xbf16>, vector<16x32xf32> -> vector<16x32xf32>
    %102 = vector.extract_strided_slice %96 {offsets = [2, 0, 0], sizes = [2, 8, 8], strides = [1, 1, 1]} : vector<8x8x8xf32> to vector<2x8x8xf32>
    %103 = vector.shape_cast %102 : vector<2x8x8xf32> to vector<16x8xf32>
    %104 = arith.truncf %103 : vector<16x8xf32> to vector<16x8xbf16>
    %105 = vector.extract_strided_slice %49 {offsets = [8, 0], sizes = [8, 32], strides = [1, 1]} : vector<32x32xbf16> to vector<8x32xbf16>
    %cst_37 = arith.constant dense<0.000000e+00> : vector<16x32xf32>
    %106 = tpu.matmul %104, %105, %cst_37 {dimension_numbers = #tpu.dot_dimension_numbers<[1], [0], [0], [1], [0, 0, 1, 1], [], []>} : vector<16x8xbf16>, vector<8x32xbf16>, vector<16x32xf32> -> vector<16x32xf32>
    %107 = arith.addf %101, %106 : vector<16x32xf32>
    %108 = vector.extract_strided_slice %96 {offsets = [4, 0, 0], sizes = [2, 8, 8], strides = [1, 1, 1]} : vector<8x8x8xf32> to vector<2x8x8xf32>
    %109 = vector.shape_cast %108 : vector<2x8x8xf32> to vector<16x8xf32>
    %110 = arith.truncf %109 : vector<16x8xf32> to vector<16x8xbf16>
    %111 = vector.extract_strided_slice %49 {offsets = [16, 0], sizes = [8, 32], strides = [1, 1]} : vector<32x32xbf16> to vector<8x32xbf16>
    %cst_38 = arith.constant dense<0.000000e+00> : vector<16x32xf32>
    %112 = tpu.matmul %110, %111, %cst_38 {dimension_numbers = #tpu.dot_dimension_numbers<[1], [0], [0], [1], [0, 0, 1, 1], [], []>} : vector<16x8xbf16>, vector<8x32xbf16>, vector<16x32xf32> -> vector<16x32xf32>
    %113 = arith.addf %107, %112 : vector<16x32xf32>
    %114 = vector.extract_strided_slice %96 {offsets = [6, 0, 0], sizes = [2, 8, 8], strides = [1, 1, 1]} : vector<8x8x8xf32> to vector<2x8x8xf32>
    %115 = vector.shape_cast %114 : vector<2x8x8xf32> to vector<16x8xf32>
    %116 = arith.truncf %115 : vector<16x8xf32> to vector<16x8xbf16>
    %117 = vector.extract_strided_slice %49 {offsets = [24, 0], sizes = [8, 32], strides = [1, 1]} : vector<32x32xbf16> to vector<8x32xbf16>
    %cst_39 = arith.constant dense<0.000000e+00> : vector<16x32xf32>
    %118 = tpu.matmul %116, %117, %cst_39 {dimension_numbers = #tpu.dot_dimension_numbers<[1], [0], [0], [1], [0, 0, 1, 1], [], []>} : vector<16x8xbf16>, vector<8x32xbf16>, vector<16x32xf32> -> vector<16x32xf32>
    %119 = arith.addf %113, %118 : vector<16x32xf32>
    %120 = vector.broadcast %50 : vector<1x32xf32> to vector<16x32xf32>
    %121 = arith.addf %119, %120 : vector<16x32xf32>
    %122 = arith.addf %15, %121 : vector<16x32xf32>
    %c64_40 = arith.constant 64 : index
    %c0_41 = arith.constant 0 : index
    %123 = vector.load %arg6[%c64_40, %c0_41] : memref<400x128xf32, #tpu.memory_space<vmem>>, vector<1x32xf32>
    %c72 = arith.constant 72 : index
    %c0_42 = arith.constant 0 : index
    %124 = vector.load %arg6[%c72, %c0_42] : memref<400x128xf32, #tpu.memory_space<vmem>>, vector<1x32xf32>
    %cst_43 = arith.constant dense<0.000000e+00> : vector<16xf32>
    %125 = vector.multi_reduction <add>, %122, %cst_43 [1] : vector<16x32xf32> to vector<16xf32>
    %126 = vector.shape_cast %125 : vector<16xf32> to vector<16x1xf32>
    %cst_44 = arith.constant 3.200000e+01 : f32
    %127 = vector.broadcast %cst_44 : f32 to vector<16x1xf32>
    %128 = arith.divf %126, %127 : vector<16x1xf32>
    %129 = vector.broadcast %128 : vector<16x1xf32> to vector<16x32xf32>
    %130 = arith.subf %122, %129 : vector<16x32xf32>
    %131 = arith.mulf %130, %130 : vector<16x32xf32>
    %cst_45 = arith.constant dense<0.000000e+00> : vector<16xf32>
    %132 = vector.multi_reduction <add>, %131, %cst_45 [1] : vector<16x32xf32> to vector<16xf32>
    %133 = vector.shape_cast %132 : vector<16xf32> to vector<16x1xf32>
    %cst_46 = arith.constant 3.200000e+01 : f32
    %134 = vector.broadcast %cst_46 : f32 to vector<16x1xf32>
    %135 = arith.divf %133, %134 : vector<16x1xf32>
    %136 = vector.broadcast %128 : vector<16x1xf32> to vector<16x32xf32>
    %137 = arith.subf %122, %136 : vector<16x32xf32>
    %cst_47 = arith.constant 9.99999997E-7 : f32
    %138 = vector.broadcast %cst_47 : f32 to vector<16x1xf32>
    %139 = arith.addf %135, %138 : vector<16x1xf32>
    %140 = math.rsqrt %139 : vector<16x1xf32>
    %141 = vector.broadcast %140 : vector<16x1xf32> to vector<16x32xf32>
    %142 = arith.mulf %137, %141 : vector<16x32xf32>
    %143 = vector.broadcast %123 : vector<1x32xf32> to vector<16x32xf32>
    %144 = arith.mulf %142, %143 : vector<16x32xf32>
    %145 = vector.broadcast %124 : vector<1x32xf32> to vector<16x32xf32>
    %146 = arith.addf %144, %145 : vector<16x32xf32>
    %147 = arith.truncf %146 : vector<16x32xf32> to vector<16x32xbf16>
    %c96 = arith.constant 96 : index
    %c0_48 = arith.constant 0 : index
    %148 = vector.load %arg5[%c96, %c0_48] : memref<864x128xbf16, #tpu.memory_space<vmem>>, vector<32x64xbf16>
    %cst_49 = arith.constant dense<0.000000e+00> : vector<16x64xf32>
    %149 = tpu.matmul %147, %148, %cst_49 {dimension_numbers = #tpu.dot_dimension_numbers<[1], [0], [0], [1], [0, 0, 1, 1], [], []>} : vector<16x32xbf16>, vector<32x64xbf16>, vector<16x64xf32> -> vector<16x64xf32>
    %c80 = arith.constant 80 : index
    %c0_50 = arith.constant 0 : index
    %150 = vector.load %arg6[%c80, %c0_50] : memref<400x128xf32, #tpu.memory_space<vmem>>, vector<1x64xf32>
    %151 = vector.broadcast %150 : vector<1x64xf32> to vector<16x64xf32>
    %152 = arith.addf %149, %151 : vector<16x64xf32>
    %cst_51 = arith.constant 0.000000e+00 : f32
    %153 = vector.broadcast %cst_51 : f32 to vector<16x64xf32>
    %154 = arith.maximumf %152, %153 : vector<16x64xf32>
    %155 = arith.truncf %154 : vector<16x64xf32> to vector<16x64xbf16>
    %c128 = arith.constant 128 : index
    %c0_52 = arith.constant 0 : index
    %156 = vector.load %arg5[%c128, %c0_52] : memref<864x128xbf16, #tpu.memory_space<vmem>>, vector<64x32xbf16>
    %cst_53 = arith.constant dense<0.000000e+00> : vector<16x32xf32>
    %157 = tpu.matmul %155, %156, %cst_53 {dimension_numbers = #tpu.dot_dimension_numbers<[1], [0], [0], [1], [0, 0, 1, 1], [], []>} : vector<16x64xbf16>, vector<64x32xbf16>, vector<16x32xf32> -> vector<16x32xf32>
    %c88 = arith.constant 88 : index
    %c0_54 = arith.constant 0 : index
    %158 = vector.load %arg6[%c88, %c0_54] : memref<400x128xf32, #tpu.memory_space<vmem>>, vector<1x32xf32>
    %159 = vector.broadcast %158 : vector<1x32xf32> to vector<16x32xf32>
    %160 = arith.addf %157, %159 : vector<16x32xf32>
    %161 = arith.addf %122, %160 : vector<16x32xf32>
    %c112 = arith.constant 112 : index
    %c0_55 = arith.constant 0 : index
    %162 = vector.load %arg6[%c112, %c0_55] : memref<400x128xf32, #tpu.memory_space<vmem>>, vector<1x32xf32>
    %c120 = arith.constant 120 : index
    %c0_56 = arith.constant 0 : index
    %163 = vector.load %arg6[%c120, %c0_56] : memref<400x128xf32, #tpu.memory_space<vmem>>, vector<1x32xf32>
    %cst_57 = arith.constant dense<0.000000e+00> : vector<16xf32>
    %164 = vector.multi_reduction <add>, %161, %cst_57 [1] : vector<16x32xf32> to vector<16xf32>
    %165 = vector.shape_cast %164 : vector<16xf32> to vector<16x1xf32>
    %cst_58 = arith.constant 3.200000e+01 : f32
    %166 = vector.broadcast %cst_58 : f32 to vector<16x1xf32>
    %167 = arith.divf %165, %166 : vector<16x1xf32>
    %168 = vector.broadcast %167 : vector<16x1xf32> to vector<16x32xf32>
    %169 = arith.subf %161, %168 : vector<16x32xf32>
    %170 = arith.mulf %169, %169 : vector<16x32xf32>
    %cst_59 = arith.constant dense<0.000000e+00> : vector<16xf32>
    %171 = vector.multi_reduction <add>, %170, %cst_59 [1] : vector<16x32xf32> to vector<16xf32>
    %172 = vector.shape_cast %171 : vector<16xf32> to vector<16x1xf32>
    %cst_60 = arith.constant 3.200000e+01 : f32
    %173 = vector.broadcast %cst_60 : f32 to vector<16x1xf32>
    %174 = arith.divf %172, %173 : vector<16x1xf32>
    %175 = vector.broadcast %167 : vector<16x1xf32> to vector<16x32xf32>
    %176 = arith.subf %161, %175 : vector<16x32xf32>
    %cst_61 = arith.constant 9.99999997E-7 : f32
    %177 = vector.broadcast %cst_61 : f32 to vector<16x1xf32>
    %178 = arith.addf %174, %177 : vector<16x1xf32>
    %179 = math.rsqrt %178 : vector<16x1xf32>
    %180 = vector.broadcast %179 : vector<16x1xf32> to vector<16x32xf32>
    %181 = arith.mulf %176, %180 : vector<16x32xf32>
    %182 = vector.broadcast %162 : vector<1x32xf32> to vector<16x32xf32>
    %183 = arith.mulf %181, %182 : vector<16x32xf32>
    %184 = vector.broadcast %163 : vector<1x32xf32> to vector<16x32xf32>
    %185 = arith.addf %183, %184 : vector<16x32xf32>
    %186 = arith.truncf %185 : vector<16x32xf32> to vector<16x32xbf16>
    %c192 = arith.constant 192 : index
    %c0_62 = arith.constant 0 : index
    %187 = vector.load %arg5[%c192, %c0_62] : memref<864x128xbf16, #tpu.memory_space<vmem>>, vector<32x96xbf16>
    %cst_63 = arith.constant dense<0.000000e+00> : vector<16x96xf32>
    %188 = tpu.matmul %186, %187, %cst_63 {dimension_numbers = #tpu.dot_dimension_numbers<[1], [0], [0], [1], [0, 0, 1, 1], [], []>} : vector<16x32xbf16>, vector<32x96xbf16>, vector<16x96xf32> -> vector<16x96xf32>
    %c96_64 = arith.constant 96 : index
    %c0_65 = arith.constant 0 : index
    %189 = vector.load %arg6[%c96_64, %c0_65] : memref<400x128xf32, #tpu.memory_space<vmem>>, vector<1x96xf32>
    %190 = vector.broadcast %189 : vector<1x96xf32> to vector<16x96xf32>
    %191 = arith.addf %188, %190 : vector<16x96xf32>
    %192 = vector.extract_strided_slice %191 {offsets = [0, 0], sizes = [16, 32], strides = [1, 1]} : vector<16x96xf32> to vector<16x32xf32>
    %193 = vector.extract_strided_slice %191 {offsets = [0, 32], sizes = [16, 32], strides = [1, 1]} : vector<16x96xf32> to vector<16x32xf32>
    %194 = vector.extract_strided_slice %191 {offsets = [0, 64], sizes = [16, 32], strides = [1, 1]} : vector<16x96xf32> to vector<16x32xf32>
    %c224 = arith.constant 224 : index
    %c0_66 = arith.constant 0 : index
    %195 = vector.load %arg5[%c224, %c0_66] : memref<864x128xbf16, #tpu.memory_space<vmem>>, vector<32x32xbf16>
    %c104 = arith.constant 104 : index
    %c0_67 = arith.constant 0 : index
    %196 = vector.load %arg6[%c104, %c0_67] : memref<400x128xf32, #tpu.memory_space<vmem>>, vector<1x32xf32>
    %197 = vector.extract_strided_slice %192 {offsets = [0, 0], sizes = [16, 8], strides = [1, 1]} : vector<16x32xf32> to vector<16x8xf32>
    %198 = vector.shape_cast %197 : vector<16x8xf32> to vector<2x8x8xf32>
    %199 = vector.extract_strided_slice %192 {offsets = [0, 8], sizes = [16, 8], strides = [1, 1]} : vector<16x32xf32> to vector<16x8xf32>
    %200 = vector.shape_cast %199 : vector<16x8xf32> to vector<2x8x8xf32>
    %201 = vector.extract_strided_slice %192 {offsets = [0, 16], sizes = [16, 8], strides = [1, 1]} : vector<16x32xf32> to vector<16x8xf32>
    %202 = vector.shape_cast %201 : vector<16x8xf32> to vector<2x8x8xf32>
    %203 = vector.extract_strided_slice %192 {offsets = [0, 24], sizes = [16, 8], strides = [1, 1]} : vector<16x32xf32> to vector<16x8xf32>
    %204 = vector.shape_cast %203 : vector<16x8xf32> to vector<2x8x8xf32>
    %205 = tpu.concatenate %198, %200, %202, %204 in 0 : vector<2x8x8xf32>, vector<2x8x8xf32>, vector<2x8x8xf32>, vector<2x8x8xf32> -> vector<8x8x8xf32>
    %206 = arith.truncf %205 : vector<8x8x8xf32> to vector<8x8x8xbf16>
    %207 = vector.extract_strided_slice %193 {offsets = [0, 0], sizes = [16, 8], strides = [1, 1]} : vector<16x32xf32> to vector<16x8xf32>
    %208 = vector.shape_cast %207 : vector<16x8xf32> to vector<2x8x8xf32>
    %209 = vector.extract_strided_slice %193 {offsets = [0, 8], sizes = [16, 8], strides = [1, 1]} : vector<16x32xf32> to vector<16x8xf32>
    %210 = vector.shape_cast %209 : vector<16x8xf32> to vector<2x8x8xf32>
    %211 = vector.extract_strided_slice %193 {offsets = [0, 16], sizes = [16, 8], strides = [1, 1]} : vector<16x32xf32> to vector<16x8xf32>
    %212 = vector.shape_cast %211 : vector<16x8xf32> to vector<2x8x8xf32>
    %213 = vector.extract_strided_slice %193 {offsets = [0, 24], sizes = [16, 8], strides = [1, 1]} : vector<16x32xf32> to vector<16x8xf32>
    %214 = vector.shape_cast %213 : vector<16x8xf32> to vector<2x8x8xf32>
    %215 = tpu.concatenate %208, %210, %212, %214 in 0 : vector<2x8x8xf32>, vector<2x8x8xf32>, vector<2x8x8xf32>, vector<2x8x8xf32> -> vector<8x8x8xf32>
    %216 = arith.truncf %215 : vector<8x8x8xf32> to vector<8x8x8xbf16>
    %217 = vector.extract_strided_slice %194 {offsets = [0, 0], sizes = [16, 8], strides = [1, 1]} : vector<16x32xf32> to vector<16x8xf32>
    %218 = vector.shape_cast %217 : vector<16x8xf32> to vector<2x8x8xf32>
    %219 = vector.extract_strided_slice %194 {offsets = [0, 8], sizes = [16, 8], strides = [1, 1]} : vector<16x32xf32> to vector<16x8xf32>
    %220 = vector.shape_cast %219 : vector<16x8xf32> to vector<2x8x8xf32>
    %221 = vector.extract_strided_slice %194 {offsets = [0, 16], sizes = [16, 8], strides = [1, 1]} : vector<16x32xf32> to vector<16x8xf32>
    %222 = vector.shape_cast %221 : vector<16x8xf32> to vector<2x8x8xf32>
    %223 = vector.extract_strided_slice %194 {offsets = [0, 24], sizes = [16, 8], strides = [1, 1]} : vector<16x32xf32> to vector<16x8xf32>
    %224 = vector.shape_cast %223 : vector<16x8xf32> to vector<2x8x8xf32>
    %225 = tpu.concatenate %218, %220, %222, %224 in 0 : vector<2x8x8xf32>, vector<2x8x8xf32>, vector<2x8x8xf32>, vector<2x8x8xf32> -> vector<8x8x8xf32>
    %226 = arith.truncf %225 : vector<8x8x8xf32> to vector<8x8x8xbf16>
    "tpu.trace_start"() <{level = 10 : i32, message = "bqd,bkd->bqk"}> : () -> ()
    %cst_68 = arith.constant dense<0.000000e+00> : vector<8x8x8xf32>
    %227 = tpu.matmul %206, %216, %cst_68 {dimension_numbers = #tpu.dot_dimension_numbers<[2], [2], [1], [1], [0, 0, 0, 1, 1, 1], [0], [0]>} : vector<8x8x8xbf16>, vector<8x8x8xbf16>, vector<8x8x8xf32> -> vector<8x8x8xf32>
    "tpu.trace_stop"() : () -> ()
    %cst_69 = arith.constant 0.353553385 : f32
    %228 = vector.broadcast %cst_69 : f32 to vector<8x8x8xf32>
    %229 = arith.mulf %227, %228 : vector<8x8x8xf32>
    %230 = arith.addf %229, %2 : vector<8x8x8xf32>
    %cst_70 = arith.constant dense<0xFF800000> : vector<8x8xf32>
    %231 = vector.multi_reduction <maximumf>, %230, %cst_70 [2] : vector<8x8x8xf32> to vector<8x8xf32>
    %232 = vector.shape_cast %231 : vector<8x8xf32> to vector<8x8x1xf32>
    %233 = vector.broadcast %232 : vector<8x8x1xf32> to vector<8x8x8xf32>
    %234 = arith.subf %230, %233 : vector<8x8x8xf32>
    %235 = math.exp %234 : vector<8x8x8xf32>
    %cst_71 = arith.constant dense<0.000000e+00> : vector<8x8xf32>
    %236 = vector.multi_reduction <add>, %235, %cst_71 [2] : vector<8x8x8xf32> to vector<8x8xf32>
    %237 = vector.shape_cast %236 : vector<8x8xf32> to vector<8x8x1xf32>
    %238 = tpu.reciprocal %237 {approx = true} : vector<8x8x1xf32> -> vector<8x8x1xf32>
    %239 = vector.broadcast %238 : vector<8x8x1xf32> to vector<8x8x8xf32>
    %240 = arith.mulf %235, %239 : vector<8x8x8xf32>
    %241 = arith.truncf %240 : vector<8x8x8xf32> to vector<8x8x8xbf16>
    "tpu.trace_start"() <{level = 10 : i32, message = "bqk,bkd->bqd"}> : () -> ()
    %cst_72 = arith.constant dense<0.000000e+00> : vector<8x8x8xf32>
    %242 = tpu.matmul %241, %226, %cst_72 {dimension_numbers = #tpu.dot_dimension_numbers<[2], [1], [1], [2], [0, 0, 0, 1, 1, 2], [0], [0]>} : vector<8x8x8xbf16>, vector<8x8x8xbf16>, vector<8x8x8xf32> -> vector<8x8x8xf32>
    "tpu.trace_stop"() : () -> ()
    %243 = vector.extract_strided_slice %242 {offsets = [0, 0, 0], sizes = [2, 8, 8], strides = [1, 1, 1]} : vector<8x8x8xf32> to vector<2x8x8xf32>
    %244 = vector.shape_cast %243 : vector<2x8x8xf32> to vector<16x8xf32>
    %245 = arith.truncf %244 : vector<16x8xf32> to vector<16x8xbf16>
    %246 = vector.extract_strided_slice %195 {offsets = [0, 0], sizes = [8, 32], strides = [1, 1]} : vector<32x32xbf16> to vector<8x32xbf16>
    %cst_73 = arith.constant dense<0.000000e+00> : vector<16x32xf32>
    %247 = tpu.matmul %245, %246, %cst_73 {dimension_numbers = #tpu.dot_dimension_numbers<[1], [0], [0], [1], [0, 0, 1, 1], [], []>} : vector<16x8xbf16>, vector<8x32xbf16>, vector<16x32xf32> -> vector<16x32xf32>
    %248 = vector.extract_strided_slice %242 {offsets = [2, 0, 0], sizes = [2, 8, 8], strides = [1, 1, 1]} : vector<8x8x8xf32> to vector<2x8x8xf32>
    %249 = vector.shape_cast %248 : vector<2x8x8xf32> to vector<16x8xf32>
    %250 = arith.truncf %249 : vector<16x8xf32> to vector<16x8xbf16>
    %251 = vector.extract_strided_slice %195 {offsets = [8, 0], sizes = [8, 32], strides = [1, 1]} : vector<32x32xbf16> to vector<8x32xbf16>
    %cst_74 = arith.constant dense<0.000000e+00> : vector<16x32xf32>
    %252 = tpu.matmul %250, %251, %cst_74 {dimension_numbers = #tpu.dot_dimension_numbers<[1], [0], [0], [1], [0, 0, 1, 1], [], []>} : vector<16x8xbf16>, vector<8x32xbf16>, vector<16x32xf32> -> vector<16x32xf32>
    %253 = arith.addf %247, %252 : vector<16x32xf32>
    %254 = vector.extract_strided_slice %242 {offsets = [4, 0, 0], sizes = [2, 8, 8], strides = [1, 1, 1]} : vector<8x8x8xf32> to vector<2x8x8xf32>
    %255 = vector.shape_cast %254 : vector<2x8x8xf32> to vector<16x8xf32>
    %256 = arith.truncf %255 : vector<16x8xf32> to vector<16x8xbf16>
    %257 = vector.extract_strided_slice %195 {offsets = [16, 0], sizes = [8, 32], strides = [1, 1]} : vector<32x32xbf16> to vector<8x32xbf16>
    %cst_75 = arith.constant dense<0.000000e+00> : vector<16x32xf32>
    %258 = tpu.matmul %256, %257, %cst_75 {dimension_numbers = #tpu.dot_dimension_numbers<[1], [0], [0], [1], [0, 0, 1, 1], [], []>} : vector<16x8xbf16>, vector<8x32xbf16>, vector<16x32xf32> -> vector<16x32xf32>
    %259 = arith.addf %253, %258 : vector<16x32xf32>
    %260 = vector.extract_strided_slice %242 {offsets = [6, 0, 0], sizes = [2, 8, 8], strides = [1, 1, 1]} : vector<8x8x8xf32> to vector<2x8x8xf32>
    %261 = vector.shape_cast %260 : vector<2x8x8xf32> to vector<16x8xf32>
    %262 = arith.truncf %261 : vector<16x8xf32> to vector<16x8xbf16>
    %263 = vector.extract_strided_slice %195 {offsets = [24, 0], sizes = [8, 32], strides = [1, 1]} : vector<32x32xbf16> to vector<8x32xbf16>
    %cst_76 = arith.constant dense<0.000000e+00> : vector<16x32xf32>
    %264 = tpu.matmul %262, %263, %cst_76 {dimension_numbers = #tpu.dot_dimension_numbers<[1], [0], [0], [1], [0, 0, 1, 1], [], []>} : vector<16x8xbf16>, vector<8x32xbf16>, vector<16x32xf32> -> vector<16x32xf32>
    %265 = arith.addf %259, %264 : vector<16x32xf32>
    %266 = vector.broadcast %196 : vector<1x32xf32> to vector<16x32xf32>
    %267 = arith.addf %265, %266 : vector<16x32xf32>
    %268 = arith.addf %161, %267 : vector<16x32xf32>
    %c128_77 = arith.constant 128 : index
    %c0_78 = arith.constant 0 : index
    %269 = vector.load %arg6[%c128_77, %c0_78] : memref<400x128xf32, #tpu.memory_space<vmem>>, vector<1x32xf32>
    %c136 = arith.constant 136 : index
    %c0_79 = arith.constant 0 : index
    %270 = vector.load %arg6[%c136, %c0_79] : memref<400x128xf32, #tpu.memory_space<vmem>>, vector<1x32xf32>
    %cst_80 = arith.constant dense<0.000000e+00> : vector<16xf32>
    %271 = vector.multi_reduction <add>, %268, %cst_80 [1] : vector<16x32xf32> to vector<16xf32>
    %272 = vector.shape_cast %271 : vector<16xf32> to vector<16x1xf32>
    %cst_81 = arith.constant 3.200000e+01 : f32
    %273 = vector.broadcast %cst_81 : f32 to vector<16x1xf32>
    %274 = arith.divf %272, %273 : vector<16x1xf32>
    %275 = vector.broadcast %274 : vector<16x1xf32> to vector<16x32xf32>
    %276 = arith.subf %268, %275 : vector<16x32xf32>
    %277 = arith.mulf %276, %276 : vector<16x32xf32>
    %cst_82 = arith.constant dense<0.000000e+00> : vector<16xf32>
    %278 = vector.multi_reduction <add>, %277, %cst_82 [1] : vector<16x32xf32> to vector<16xf32>
    %279 = vector.shape_cast %278 : vector<16xf32> to vector<16x1xf32>
    %cst_83 = arith.constant 3.200000e+01 : f32
    %280 = vector.broadcast %cst_83 : f32 to vector<16x1xf32>
    %281 = arith.divf %279, %280 : vector<16x1xf32>
    %282 = vector.broadcast %274 : vector<16x1xf32> to vector<16x32xf32>
    %283 = arith.subf %268, %282 : vector<16x32xf32>
    %cst_84 = arith.constant 9.99999997E-7 : f32
    %284 = vector.broadcast %cst_84 : f32 to vector<16x1xf32>
    %285 = arith.addf %281, %284 : vector<16x1xf32>
    %286 = math.rsqrt %285 : vector<16x1xf32>
    %287 = vector.broadcast %286 : vector<16x1xf32> to vector<16x32xf32>
    %288 = arith.mulf %283, %287 : vector<16x32xf32>
    %289 = vector.broadcast %269 : vector<1x32xf32> to vector<16x32xf32>
    %290 = arith.mulf %288, %289 : vector<16x32xf32>
    %291 = vector.broadcast %270 : vector<1x32xf32> to vector<16x32xf32>
    %292 = arith.addf %290, %291 : vector<16x32xf32>
    %293 = arith.truncf %292 : vector<16x32xf32> to vector<16x32xbf16>
    %c256 = arith.constant 256 : index
    %c0_85 = arith.constant 0 : index
    %294 = vector.load %arg5[%c256, %c0_85] : memref<864x128xbf16, #tpu.memory_space<vmem>>, vector<32x64xbf16>
    %cst_86 = arith.constant dense<0.000000e+00> : vector<16x64xf32>
    %295 = tpu.matmul %293, %294, %cst_86 {dimension_numbers = #tpu.dot_dimension_numbers<[1], [0], [0], [1], [0, 0, 1, 1], [], []>} : vector<16x32xbf16>, vector<32x64xbf16>, vector<16x64xf32> -> vector<16x64xf32>
    %c144 = arith.constant 144 : index
    %c0_87 = arith.constant 0 : index
    %296 = vector.load %arg6[%c144, %c0_87] : memref<400x128xf32, #tpu.memory_space<vmem>>, vector<1x64xf32>
    %297 = vector.broadcast %296 : vector<1x64xf32> to vector<16x64xf32>
    %298 = arith.addf %295, %297 : vector<16x64xf32>
    %cst_88 = arith.constant 0.000000e+00 : f32
    %299 = vector.broadcast %cst_88 : f32 to vector<16x64xf32>
    %300 = arith.maximumf %298, %299 : vector<16x64xf32>
    %301 = arith.truncf %300 : vector<16x64xf32> to vector<16x64xbf16>
    %c288 = arith.constant 288 : index
    %c0_89 = arith.constant 0 : index
    %302 = vector.load %arg5[%c288, %c0_89] : memref<864x128xbf16, #tpu.memory_space<vmem>>, vector<64x32xbf16>
    %cst_90 = arith.constant dense<0.000000e+00> : vector<16x32xf32>
    %303 = tpu.matmul %301, %302, %cst_90 {dimension_numbers = #tpu.dot_dimension_numbers<[1], [0], [0], [1], [0, 0, 1, 1], [], []>} : vector<16x64xbf16>, vector<64x32xbf16>, vector<16x32xf32> -> vector<16x32xf32>
    %c152 = arith.constant 152 : index
    %c0_91 = arith.constant 0 : index
    %304 = vector.load %arg6[%c152, %c0_91] : memref<400x128xf32, #tpu.memory_space<vmem>>, vector<1x32xf32>
    %305 = vector.broadcast %304 : vector<1x32xf32> to vector<16x32xf32>
    %306 = arith.addf %303, %305 : vector<16x32xf32>
    %307 = arith.addf %268, %306 : vector<16x32xf32>
    %c160 = arith.constant 160 : index
    %c0_92 = arith.constant 0 : index
    %308 = vector.load %arg6[%c160, %c0_92] : memref<400x128xf32, #tpu.memory_space<vmem>>, vector<1x32xf32>
    %c168 = arith.constant 168 : index
    %c0_93 = arith.constant 0 : index
    %309 = vector.load %arg6[%c168, %c0_93] : memref<400x128xf32, #tpu.memory_space<vmem>>, vector<1x32xf32>
    %cst_94 = arith.constant dense<0.000000e+00> : vector<16xf32>
    %310 = vector.multi_reduction <add>, %307, %cst_94 [1] : vector<16x32xf32> to vector<16xf32>
    %311 = vector.shape_cast %310 : vector<16xf32> to vector<16x1xf32>
    %cst_95 = arith.constant 3.200000e+01 : f32
    %312 = vector.broadcast %cst_95 : f32 to vector<16x1xf32>
    %313 = arith.divf %311, %312 : vector<16x1xf32>
    %314 = vector.broadcast %313 : vector<16x1xf32> to vector<16x32xf32>
    %315 = arith.subf %307, %314 : vector<16x32xf32>
    %316 = arith.mulf %315, %315 : vector<16x32xf32>
    %cst_96 = arith.constant dense<0.000000e+00> : vector<16xf32>
    %317 = vector.multi_reduction <add>, %316, %cst_96 [1] : vector<16x32xf32> to vector<16xf32>
    %318 = vector.shape_cast %317 : vector<16xf32> to vector<16x1xf32>
    %cst_97 = arith.constant 3.200000e+01 : f32
    %319 = vector.broadcast %cst_97 : f32 to vector<16x1xf32>
    %320 = arith.divf %318, %319 : vector<16x1xf32>
    %321 = vector.broadcast %313 : vector<16x1xf32> to vector<16x32xf32>
    %322 = arith.subf %307, %321 : vector<16x32xf32>
    %cst_98 = arith.constant 9.99999997E-7 : f32
    %323 = vector.broadcast %cst_98 : f32 to vector<16x1xf32>
    %324 = arith.addf %320, %323 : vector<16x1xf32>
    %325 = math.rsqrt %324 : vector<16x1xf32>
    %326 = vector.broadcast %325 : vector<16x1xf32> to vector<16x32xf32>
    %327 = arith.mulf %322, %326 : vector<16x32xf32>
    %328 = vector.broadcast %308 : vector<1x32xf32> to vector<16x32xf32>
    %329 = arith.mulf %327, %328 : vector<16x32xf32>
    %330 = vector.broadcast %309 : vector<1x32xf32> to vector<16x32xf32>
    %331 = arith.addf %329, %330 : vector<16x32xf32>
    %332 = arith.truncf %331 : vector<16x32xf32> to vector<16x32xbf16>
    %333 = tpu.iota {dimensions = array<i32: 1>} : vector<16x16xi32>
    %334 = vector.broadcast %1 : vector<16x1xi32> to vector<16x16xi32>
    %335 = arith.cmpi eq, %334, %333 : vector<16x16xi32>
    %cst_99 = arith.constant 1.000000e+00 : f32
    %cst_100 = arith.constant 0.000000e+00 : f32
    %336 = vector.broadcast %cst_99 : f32 to vector<16x16xf32>
    %337 = vector.broadcast %cst_100 : f32 to vector<16x16xf32>
    %338 = arith.select %335, %336, %337 : vector<16x16xi1>, vector<16x16xf32>
    %339 = arith.truncf %338 : vector<16x16xf32> to vector<16x16xbf16>
    %c16 = arith.constant 16 : index
    %c0_101 = arith.constant 0 : index
    %340 = vector.load %arg5[%c16, %c0_101] : memref<864x128xbf16, #tpu.memory_space<vmem>>, vector<16x32xbf16>
    %cst_102 = arith.constant dense<0.000000e+00> : vector<16x32xf32>
    %341 = tpu.matmul %339, %340, %cst_102 {dimension_numbers = #tpu.dot_dimension_numbers<[1], [0], [0], [1], [0, 0, 1, 1], [], []>} : vector<16x16xbf16>, vector<16x32xbf16>, vector<16x32xf32> -> vector<16x32xf32>
    %c16_103 = arith.constant 16 : index
    %c0_104 = arith.constant 0 : index
    %342 = vector.load %arg6[%c16_103, %c0_104] : memref<400x128xf32, #tpu.memory_space<vmem>>, vector<16x32xf32>
    %343 = arith.addf %341, %342 : vector<16x32xf32>
    %c216 = arith.constant 216 : index
    %c0_105 = arith.constant 0 : index
    %344 = vector.load %arg6[%c216, %c0_105] : memref<400x128xf32, #tpu.memory_space<vmem>>, vector<1x32xf32>
    %c224_106 = arith.constant 224 : index
    %c0_107 = arith.constant 0 : index
    %345 = vector.load %arg6[%c224_106, %c0_107] : memref<400x128xf32, #tpu.memory_space<vmem>>, vector<1x32xf32>
    %cst_108 = arith.constant dense<0.000000e+00> : vector<16xf32>
    %346 = vector.multi_reduction <add>, %343, %cst_108 [1] : vector<16x32xf32> to vector<16xf32>
    %347 = vector.shape_cast %346 : vector<16xf32> to vector<16x1xf32>
    %cst_109 = arith.constant 3.200000e+01 : f32
    %348 = vector.broadcast %cst_109 : f32 to vector<16x1xf32>
    %349 = arith.divf %347, %348 : vector<16x1xf32>
    %350 = vector.broadcast %349 : vector<16x1xf32> to vector<16x32xf32>
    %351 = arith.subf %343, %350 : vector<16x32xf32>
    %352 = arith.mulf %351, %351 : vector<16x32xf32>
    %cst_110 = arith.constant dense<0.000000e+00> : vector<16xf32>
    %353 = vector.multi_reduction <add>, %352, %cst_110 [1] : vector<16x32xf32> to vector<16xf32>
    %354 = vector.shape_cast %353 : vector<16xf32> to vector<16x1xf32>
    %cst_111 = arith.constant 3.200000e+01 : f32
    %355 = vector.broadcast %cst_111 : f32 to vector<16x1xf32>
    %356 = arith.divf %354, %355 : vector<16x1xf32>
    %357 = vector.broadcast %349 : vector<16x1xf32> to vector<16x32xf32>
    %358 = arith.subf %343, %357 : vector<16x32xf32>
    %cst_112 = arith.constant 9.99999997E-7 : f32
    %359 = vector.broadcast %cst_112 : f32 to vector<16x1xf32>
    %360 = arith.addf %356, %359 : vector<16x1xf32>
    %361 = math.rsqrt %360 : vector<16x1xf32>
    %362 = vector.broadcast %361 : vector<16x1xf32> to vector<16x32xf32>
    %363 = arith.mulf %358, %362 : vector<16x32xf32>
    %364 = vector.broadcast %344 : vector<1x32xf32> to vector<16x32xf32>
    %365 = arith.mulf %363, %364 : vector<16x32xf32>
    %366 = vector.broadcast %345 : vector<1x32xf32> to vector<16x32xf32>
    %367 = arith.addf %365, %366 : vector<16x32xf32>
    %368 = arith.truncf %367 : vector<16x32xf32> to vector<16x32xbf16>
    %c352 = arith.constant 352 : index
    %c0_113 = arith.constant 0 : index
    %369 = vector.load %arg5[%c352, %c0_113] : memref<864x128xbf16, #tpu.memory_space<vmem>>, vector<32x96xbf16>
    %cst_114 = arith.constant dense<0.000000e+00> : vector<16x96xf32>
    %370 = tpu.matmul %368, %369, %cst_114 {dimension_numbers = #tpu.dot_dimension_numbers<[1], [0], [0], [1], [0, 0, 1, 1], [], []>} : vector<16x32xbf16>, vector<32x96xbf16>, vector<16x96xf32> -> vector<16x96xf32>
    %c176 = arith.constant 176 : index
    %c0_115 = arith.constant 0 : index
    %371 = vector.load %arg6[%c176, %c0_115] : memref<400x128xf32, #tpu.memory_space<vmem>>, vector<1x96xf32>
    %372 = vector.broadcast %371 : vector<1x96xf32> to vector<16x96xf32>
    %373 = arith.addf %370, %372 : vector<16x96xf32>
    %374 = vector.extract_strided_slice %373 {offsets = [0, 0], sizes = [16, 32], strides = [1, 1]} : vector<16x96xf32> to vector<16x32xf32>
    %375 = vector.extract_strided_slice %373 {offsets = [0, 32], sizes = [16, 32], strides = [1, 1]} : vector<16x96xf32> to vector<16x32xf32>
    %376 = vector.extract_strided_slice %373 {offsets = [0, 64], sizes = [16, 32], strides = [1, 1]} : vector<16x96xf32> to vector<16x32xf32>
    %c384 = arith.constant 384 : index
    %c0_116 = arith.constant 0 : index
    %377 = vector.load %arg5[%c384, %c0_116] : memref<864x128xbf16, #tpu.memory_space<vmem>>, vector<32x32xbf16>
    %c184 = arith.constant 184 : index
    %c0_117 = arith.constant 0 : index
    %378 = vector.load %arg6[%c184, %c0_117] : memref<400x128xf32, #tpu.memory_space<vmem>>, vector<1x32xf32>
    %379 = vector.extract_strided_slice %374 {offsets = [0, 0], sizes = [16, 8], strides = [1, 1]} : vector<16x32xf32> to vector<16x8xf32>
    %380 = vector.shape_cast %379 : vector<16x8xf32> to vector<2x8x8xf32>
    %381 = vector.extract_strided_slice %374 {offsets = [0, 8], sizes = [16, 8], strides = [1, 1]} : vector<16x32xf32> to vector<16x8xf32>
    %382 = vector.shape_cast %381 : vector<16x8xf32> to vector<2x8x8xf32>
    %383 = vector.extract_strided_slice %374 {offsets = [0, 16], sizes = [16, 8], strides = [1, 1]} : vector<16x32xf32> to vector<16x8xf32>
    %384 = vector.shape_cast %383 : vector<16x8xf32> to vector<2x8x8xf32>
    %385 = vector.extract_strided_slice %374 {offsets = [0, 24], sizes = [16, 8], strides = [1, 1]} : vector<16x32xf32> to vector<16x8xf32>
    %386 = vector.shape_cast %385 : vector<16x8xf32> to vector<2x8x8xf32>
    %387 = tpu.concatenate %380, %382, %384, %386 in 0 : vector<2x8x8xf32>, vector<2x8x8xf32>, vector<2x8x8xf32>, vector<2x8x8xf32> -> vector<8x8x8xf32>
    %388 = arith.truncf %387 : vector<8x8x8xf32> to vector<8x8x8xbf16>
    %389 = vector.extract_strided_slice %375 {offsets = [0, 0], sizes = [16, 8], strides = [1, 1]} : vector<16x32xf32> to vector<16x8xf32>
    %390 = vector.shape_cast %389 : vector<16x8xf32> to vector<2x8x8xf32>
    %391 = vector.extract_strided_slice %375 {offsets = [0, 8], sizes = [16, 8], strides = [1, 1]} : vector<16x32xf32> to vector<16x8xf32>
    %392 = vector.shape_cast %391 : vector<16x8xf32> to vector<2x8x8xf32>
    %393 = vector.extract_strided_slice %375 {offsets = [0, 16], sizes = [16, 8], strides = [1, 1]} : vector<16x32xf32> to vector<16x8xf32>
    %394 = vector.shape_cast %393 : vector<16x8xf32> to vector<2x8x8xf32>
    %395 = vector.extract_strided_slice %375 {offsets = [0, 24], sizes = [16, 8], strides = [1, 1]} : vector<16x32xf32> to vector<16x8xf32>
    %396 = vector.shape_cast %395 : vector<16x8xf32> to vector<2x8x8xf32>
    %397 = tpu.concatenate %390, %392, %394, %396 in 0 : vector<2x8x8xf32>, vector<2x8x8xf32>, vector<2x8x8xf32>, vector<2x8x8xf32> -> vector<8x8x8xf32>
    %398 = arith.truncf %397 : vector<8x8x8xf32> to vector<8x8x8xbf16>
    %399 = vector.extract_strided_slice %376 {offsets = [0, 0], sizes = [16, 8], strides = [1, 1]} : vector<16x32xf32> to vector<16x8xf32>
    %400 = vector.shape_cast %399 : vector<16x8xf32> to vector<2x8x8xf32>
    %401 = vector.extract_strided_slice %376 {offsets = [0, 8], sizes = [16, 8], strides = [1, 1]} : vector<16x32xf32> to vector<16x8xf32>
    %402 = vector.shape_cast %401 : vector<16x8xf32> to vector<2x8x8xf32>
    %403 = vector.extract_strided_slice %376 {offsets = [0, 16], sizes = [16, 8], strides = [1, 1]} : vector<16x32xf32> to vector<16x8xf32>
    %404 = vector.shape_cast %403 : vector<16x8xf32> to vector<2x8x8xf32>
    %405 = vector.extract_strided_slice %376 {offsets = [0, 24], sizes = [16, 8], strides = [1, 1]} : vector<16x32xf32> to vector<16x8xf32>
    %406 = vector.shape_cast %405 : vector<16x8xf32> to vector<2x8x8xf32>
    %407 = tpu.concatenate %400, %402, %404, %406 in 0 : vector<2x8x8xf32>, vector<2x8x8xf32>, vector<2x8x8xf32>, vector<2x8x8xf32> -> vector<8x8x8xf32>
    %408 = arith.truncf %407 : vector<8x8x8xf32> to vector<8x8x8xbf16>
    "tpu.trace_start"() <{level = 10 : i32, message = "bqd,bkd->bqk"}> : () -> ()
    %cst_118 = arith.constant dense<0.000000e+00> : vector<8x8x8xf32>
    %409 = tpu.matmul %388, %398, %cst_118 {dimension_numbers = #tpu.dot_dimension_numbers<[2], [2], [1], [1], [0, 0, 0, 1, 1, 1], [0], [0]>} : vector<8x8x8xbf16>, vector<8x8x8xbf16>, vector<8x8x8xf32> -> vector<8x8x8xf32>
    "tpu.trace_stop"() : () -> ()
    %cst_119 = arith.constant 0.353553385 : f32
    %410 = vector.broadcast %cst_119 : f32 to vector<8x8x8xf32>
    %411 = arith.mulf %409, %410 : vector<8x8x8xf32>
    %412 = arith.addf %411, %3 : vector<8x8x8xf32>
    %cst_120 = arith.constant dense<0xFF800000> : vector<8x8xf32>
    %413 = vector.multi_reduction <maximumf>, %412, %cst_120 [2] : vector<8x8x8xf32> to vector<8x8xf32>
    %414 = vector.shape_cast %413 : vector<8x8xf32> to vector<8x8x1xf32>
    %415 = vector.broadcast %414 : vector<8x8x1xf32> to vector<8x8x8xf32>
    %416 = arith.subf %412, %415 : vector<8x8x8xf32>
    %417 = math.exp %416 : vector<8x8x8xf32>
    %cst_121 = arith.constant dense<0.000000e+00> : vector<8x8xf32>
    %418 = vector.multi_reduction <add>, %417, %cst_121 [2] : vector<8x8x8xf32> to vector<8x8xf32>
    %419 = vector.shape_cast %418 : vector<8x8xf32> to vector<8x8x1xf32>
    %420 = tpu.reciprocal %419 {approx = true} : vector<8x8x1xf32> -> vector<8x8x1xf32>
    %421 = vector.broadcast %420 : vector<8x8x1xf32> to vector<8x8x8xf32>
    %422 = arith.mulf %417, %421 : vector<8x8x8xf32>
    %423 = arith.truncf %422 : vector<8x8x8xf32> to vector<8x8x8xbf16>
    "tpu.trace_start"() <{level = 10 : i32, message = "bqk,bkd->bqd"}> : () -> ()
    %cst_122 = arith.constant dense<0.000000e+00> : vector<8x8x8xf32>
    %424 = tpu.matmul %423, %408, %cst_122 {dimension_numbers = #tpu.dot_dimension_numbers<[2], [1], [1], [2], [0, 0, 0, 1, 1, 2], [0], [0]>} : vector<8x8x8xbf16>, vector<8x8x8xbf16>, vector<8x8x8xf32> -> vector<8x8x8xf32>
    "tpu.trace_stop"() : () -> ()
    %425 = vector.extract_strided_slice %424 {offsets = [0, 0, 0], sizes = [2, 8, 8], strides = [1, 1, 1]} : vector<8x8x8xf32> to vector<2x8x8xf32>
    %426 = vector.shape_cast %425 : vector<2x8x8xf32> to vector<16x8xf32>
    %427 = arith.truncf %426 : vector<16x8xf32> to vector<16x8xbf16>
    %428 = vector.extract_strided_slice %377 {offsets = [0, 0], sizes = [8, 32], strides = [1, 1]} : vector<32x32xbf16> to vector<8x32xbf16>
    %cst_123 = arith.constant dense<0.000000e+00> : vector<16x32xf32>
    %429 = tpu.matmul %427, %428, %cst_123 {dimension_numbers = #tpu.dot_dimension_numbers<[1], [0], [0], [1], [0, 0, 1, 1], [], []>} : vector<16x8xbf16>, vector<8x32xbf16>, vector<16x32xf32> -> vector<16x32xf32>
    %430 = vector.extract_strided_slice %424 {offsets = [2, 0, 0], sizes = [2, 8, 8], strides = [1, 1, 1]} : vector<8x8x8xf32> to vector<2x8x8xf32>
    %431 = vector.shape_cast %430 : vector<2x8x8xf32> to vector<16x8xf32>
    %432 = arith.truncf %431 : vector<16x8xf32> to vector<16x8xbf16>
    %433 = vector.extract_strided_slice %377 {offsets = [8, 0], sizes = [8, 32], strides = [1, 1]} : vector<32x32xbf16> to vector<8x32xbf16>
    %cst_124 = arith.constant dense<0.000000e+00> : vector<16x32xf32>
    %434 = tpu.matmul %432, %433, %cst_124 {dimension_numbers = #tpu.dot_dimension_numbers<[1], [0], [0], [1], [0, 0, 1, 1], [], []>} : vector<16x8xbf16>, vector<8x32xbf16>, vector<16x32xf32> -> vector<16x32xf32>
    %435 = arith.addf %429, %434 : vector<16x32xf32>
    %436 = vector.extract_strided_slice %424 {offsets = [4, 0, 0], sizes = [2, 8, 8], strides = [1, 1, 1]} : vector<8x8x8xf32> to vector<2x8x8xf32>
    %437 = vector.shape_cast %436 : vector<2x8x8xf32> to vector<16x8xf32>
    %438 = arith.truncf %437 : vector<16x8xf32> to vector<16x8xbf16>
    %439 = vector.extract_strided_slice %377 {offsets = [16, 0], sizes = [8, 32], strides = [1, 1]} : vector<32x32xbf16> to vector<8x32xbf16>
    %cst_125 = arith.constant dense<0.000000e+00> : vector<16x32xf32>
    %440 = tpu.matmul %438, %439, %cst_125 {dimension_numbers = #tpu.dot_dimension_numbers<[1], [0], [0], [1], [0, 0, 1, 1], [], []>} : vector<16x8xbf16>, vector<8x32xbf16>, vector<16x32xf32> -> vector<16x32xf32>
    %441 = arith.addf %435, %440 : vector<16x32xf32>
    %442 = vector.extract_strided_slice %424 {offsets = [6, 0, 0], sizes = [2, 8, 8], strides = [1, 1, 1]} : vector<8x8x8xf32> to vector<2x8x8xf32>
    %443 = vector.shape_cast %442 : vector<2x8x8xf32> to vector<16x8xf32>
    %444 = arith.truncf %443 : vector<16x8xf32> to vector<16x8xbf16>
    %445 = vector.extract_strided_slice %377 {offsets = [24, 0], sizes = [8, 32], strides = [1, 1]} : vector<32x32xbf16> to vector<8x32xbf16>
    %cst_126 = arith.constant dense<0.000000e+00> : vector<16x32xf32>
    %446 = tpu.matmul %444, %445, %cst_126 {dimension_numbers = #tpu.dot_dimension_numbers<[1], [0], [0], [1], [0, 0, 1, 1], [], []>} : vector<16x8xbf16>, vector<8x32xbf16>, vector<16x32xf32> -> vector<16x32xf32>
    %447 = arith.addf %441, %446 : vector<16x32xf32>
    %448 = vector.broadcast %378 : vector<1x32xf32> to vector<16x32xf32>
    %449 = arith.addf %447, %448 : vector<16x32xf32>
    %450 = arith.addf %343, %449 : vector<16x32xf32>
    %c232 = arith.constant 232 : index
    %c0_127 = arith.constant 0 : index
    %451 = vector.load %arg6[%c232, %c0_127] : memref<400x128xf32, #tpu.memory_space<vmem>>, vector<1x32xf32>
    %c240 = arith.constant 240 : index
    %c0_128 = arith.constant 0 : index
    %452 = vector.load %arg6[%c240, %c0_128] : memref<400x128xf32, #tpu.memory_space<vmem>>, vector<1x32xf32>
    %cst_129 = arith.constant dense<0.000000e+00> : vector<16xf32>
    %453 = vector.multi_reduction <add>, %450, %cst_129 [1] : vector<16x32xf32> to vector<16xf32>
    %454 = vector.shape_cast %453 : vector<16xf32> to vector<16x1xf32>
    %cst_130 = arith.constant 3.200000e+01 : f32
    %455 = vector.broadcast %cst_130 : f32 to vector<16x1xf32>
    %456 = arith.divf %454, %455 : vector<16x1xf32>
    %457 = vector.broadcast %456 : vector<16x1xf32> to vector<16x32xf32>
    %458 = arith.subf %450, %457 : vector<16x32xf32>
    %459 = arith.mulf %458, %458 : vector<16x32xf32>
    %cst_131 = arith.constant dense<0.000000e+00> : vector<16xf32>
    %460 = vector.multi_reduction <add>, %459, %cst_131 [1] : vector<16x32xf32> to vector<16xf32>
    %461 = vector.shape_cast %460 : vector<16xf32> to vector<16x1xf32>
    %cst_132 = arith.constant 3.200000e+01 : f32
    %462 = vector.broadcast %cst_132 : f32 to vector<16x1xf32>
    %463 = arith.divf %461, %462 : vector<16x1xf32>
    %464 = vector.broadcast %456 : vector<16x1xf32> to vector<16x32xf32>
    %465 = arith.subf %450, %464 : vector<16x32xf32>
    %cst_133 = arith.constant 9.99999997E-7 : f32
    %466 = vector.broadcast %cst_133 : f32 to vector<16x1xf32>
    %467 = arith.addf %463, %466 : vector<16x1xf32>
    %468 = math.rsqrt %467 : vector<16x1xf32>
    %469 = vector.broadcast %468 : vector<16x1xf32> to vector<16x32xf32>
    %470 = arith.mulf %465, %469 : vector<16x32xf32>
    %471 = vector.broadcast %451 : vector<1x32xf32> to vector<16x32xf32>
    %472 = arith.mulf %470, %471 : vector<16x32xf32>
    %473 = vector.broadcast %452 : vector<1x32xf32> to vector<16x32xf32>
    %474 = arith.addf %472, %473 : vector<16x32xf32>
    %475 = arith.truncf %474 : vector<16x32xf32> to vector<16x32xbf16>
    %c416 = arith.constant 416 : index
    %c0_134 = arith.constant 0 : index
    %476 = vector.load %arg5[%c416, %c0_134] : memref<864x128xbf16, #tpu.memory_space<vmem>>, vector<32x32xbf16>
    %cst_135 = arith.constant dense<0.000000e+00> : vector<16x32xf32>
    %477 = tpu.matmul %475, %476, %cst_135 {dimension_numbers = #tpu.dot_dimension_numbers<[1], [0], [0], [1], [0, 0, 1, 1], [], []>} : vector<16x32xbf16>, vector<32x32xbf16>, vector<16x32xf32> -> vector<16x32xf32>
    %c192_136 = arith.constant 192 : index
    %c0_137 = arith.constant 0 : index
    %478 = vector.load %arg6[%c192_136, %c0_137] : memref<400x128xf32, #tpu.memory_space<vmem>>, vector<1x32xf32>
    %479 = vector.broadcast %478 : vector<1x32xf32> to vector<16x32xf32>
    %480 = arith.addf %477, %479 : vector<16x32xf32>
    %c448 = arith.constant 448 : index
    %c0_138 = arith.constant 0 : index
    %481 = vector.load %arg5[%c448, %c0_138] : memref<864x128xbf16, #tpu.memory_space<vmem>>, vector<32x64xbf16>
    %cst_139 = arith.constant dense<0.000000e+00> : vector<16x64xf32>
    %482 = tpu.matmul %332, %481, %cst_139 {dimension_numbers = #tpu.dot_dimension_numbers<[1], [0], [0], [1], [0, 0, 1, 1], [], []>} : vector<16x32xbf16>, vector<32x64xbf16>, vector<16x64xf32> -> vector<16x64xf32>
    %c200 = arith.constant 200 : index
    %c0_140 = arith.constant 0 : index
    %483 = vector.load %arg6[%c200, %c0_140] : memref<400x128xf32, #tpu.memory_space<vmem>>, vector<1x64xf32>
    %484 = vector.broadcast %483 : vector<1x64xf32> to vector<16x64xf32>
    %485 = arith.addf %482, %484 : vector<16x64xf32>
    %486 = vector.extract_strided_slice %485 {offsets = [0, 0], sizes = [16, 32], strides = [1, 1]} : vector<16x64xf32> to vector<16x32xf32>
    %487 = vector.extract_strided_slice %485 {offsets = [0, 32], sizes = [16, 32], strides = [1, 1]} : vector<16x64xf32> to vector<16x32xf32>
    %c480 = arith.constant 480 : index
    %c0_141 = arith.constant 0 : index
    %488 = vector.load %arg5[%c480, %c0_141] : memref<864x128xbf16, #tpu.memory_space<vmem>>, vector<32x32xbf16>
    %c208 = arith.constant 208 : index
    %c0_142 = arith.constant 0 : index
    %489 = vector.load %arg6[%c208, %c0_142] : memref<400x128xf32, #tpu.memory_space<vmem>>, vector<1x32xf32>
    %490 = vector.extract_strided_slice %480 {offsets = [0, 0], sizes = [16, 8], strides = [1, 1]} : vector<16x32xf32> to vector<16x8xf32>
    %491 = vector.shape_cast %490 : vector<16x8xf32> to vector<2x8x8xf32>
    %492 = vector.extract_strided_slice %480 {offsets = [0, 8], sizes = [16, 8], strides = [1, 1]} : vector<16x32xf32> to vector<16x8xf32>
    %493 = vector.shape_cast %492 : vector<16x8xf32> to vector<2x8x8xf32>
    %494 = vector.extract_strided_slice %480 {offsets = [0, 16], sizes = [16, 8], strides = [1, 1]} : vector<16x32xf32> to vector<16x8xf32>
    %495 = vector.shape_cast %494 : vector<16x8xf32> to vector<2x8x8xf32>
    %496 = vector.extract_strided_slice %480 {offsets = [0, 24], sizes = [16, 8], strides = [1, 1]} : vector<16x32xf32> to vector<16x8xf32>
    %497 = vector.shape_cast %496 : vector<16x8xf32> to vector<2x8x8xf32>
    %498 = tpu.concatenate %491, %493, %495, %497 in 0 : vector<2x8x8xf32>, vector<2x8x8xf32>, vector<2x8x8xf32>, vector<2x8x8xf32> -> vector<8x8x8xf32>
    %499 = arith.truncf %498 : vector<8x8x8xf32> to vector<8x8x8xbf16>
    %500 = vector.extract_strided_slice %486 {offsets = [0, 0], sizes = [16, 8], strides = [1, 1]} : vector<16x32xf32> to vector<16x8xf32>
    %501 = vector.shape_cast %500 : vector<16x8xf32> to vector<2x8x8xf32>
    %502 = vector.extract_strided_slice %486 {offsets = [0, 8], sizes = [16, 8], strides = [1, 1]} : vector<16x32xf32> to vector<16x8xf32>
    %503 = vector.shape_cast %502 : vector<16x8xf32> to vector<2x8x8xf32>
    %504 = vector.extract_strided_slice %486 {offsets = [0, 16], sizes = [16, 8], strides = [1, 1]} : vector<16x32xf32> to vector<16x8xf32>
    %505 = vector.shape_cast %504 : vector<16x8xf32> to vector<2x8x8xf32>
    %506 = vector.extract_strided_slice %486 {offsets = [0, 24], sizes = [16, 8], strides = [1, 1]} : vector<16x32xf32> to vector<16x8xf32>
    %507 = vector.shape_cast %506 : vector<16x8xf32> to vector<2x8x8xf32>
    %508 = tpu.concatenate %501, %503, %505, %507 in 0 : vector<2x8x8xf32>, vector<2x8x8xf32>, vector<2x8x8xf32>, vector<2x8x8xf32> -> vector<8x8x8xf32>
    %509 = arith.truncf %508 : vector<8x8x8xf32> to vector<8x8x8xbf16>
    %510 = vector.extract_strided_slice %487 {offsets = [0, 0], sizes = [16, 8], strides = [1, 1]} : vector<16x32xf32> to vector<16x8xf32>
    %511 = vector.shape_cast %510 : vector<16x8xf32> to vector<2x8x8xf32>
    %512 = vector.extract_strided_slice %487 {offsets = [0, 8], sizes = [16, 8], strides = [1, 1]} : vector<16x32xf32> to vector<16x8xf32>
    %513 = vector.shape_cast %512 : vector<16x8xf32> to vector<2x8x8xf32>
    %514 = vector.extract_strided_slice %487 {offsets = [0, 16], sizes = [16, 8], strides = [1, 1]} : vector<16x32xf32> to vector<16x8xf32>
    %515 = vector.shape_cast %514 : vector<16x8xf32> to vector<2x8x8xf32>
    %516 = vector.extract_strided_slice %487 {offsets = [0, 24], sizes = [16, 8], strides = [1, 1]} : vector<16x32xf32> to vector<16x8xf32>
    %517 = vector.shape_cast %516 : vector<16x8xf32> to vector<2x8x8xf32>
    %518 = tpu.concatenate %511, %513, %515, %517 in 0 : vector<2x8x8xf32>, vector<2x8x8xf32>, vector<2x8x8xf32>, vector<2x8x8xf32> -> vector<8x8x8xf32>
    %519 = arith.truncf %518 : vector<8x8x8xf32> to vector<8x8x8xbf16>
    "tpu.trace_start"() <{level = 10 : i32, message = "bqd,bkd->bqk"}> : () -> ()
    %cst_143 = arith.constant dense<0.000000e+00> : vector<8x8x8xf32>
    %520 = tpu.matmul %499, %509, %cst_143 {dimension_numbers = #tpu.dot_dimension_numbers<[2], [2], [1], [1], [0, 0, 0, 1, 1, 1], [0], [0]>} : vector<8x8x8xbf16>, vector<8x8x8xbf16>, vector<8x8x8xf32> -> vector<8x8x8xf32>
    "tpu.trace_stop"() : () -> ()
    %cst_144 = arith.constant 0.353553385 : f32
    %521 = vector.broadcast %cst_144 : f32 to vector<8x8x8xf32>
    %522 = arith.mulf %520, %521 : vector<8x8x8xf32>
    %523 = arith.addf %522, %4 : vector<8x8x8xf32>
    %cst_145 = arith.constant dense<0xFF800000> : vector<8x8xf32>
    %524 = vector.multi_reduction <maximumf>, %523, %cst_145 [2] : vector<8x8x8xf32> to vector<8x8xf32>
    %525 = vector.shape_cast %524 : vector<8x8xf32> to vector<8x8x1xf32>
    %526 = vector.broadcast %525 : vector<8x8x1xf32> to vector<8x8x8xf32>
    %527 = arith.subf %523, %526 : vector<8x8x8xf32>
    %528 = math.exp %527 : vector<8x8x8xf32>
    %cst_146 = arith.constant dense<0.000000e+00> : vector<8x8xf32>
    %529 = vector.multi_reduction <add>, %528, %cst_146 [2] : vector<8x8x8xf32> to vector<8x8xf32>
    %530 = vector.shape_cast %529 : vector<8x8xf32> to vector<8x8x1xf32>
    %531 = tpu.reciprocal %530 {approx = true} : vector<8x8x1xf32> -> vector<8x8x1xf32>
    %532 = vector.broadcast %531 : vector<8x8x1xf32> to vector<8x8x8xf32>
    %533 = arith.mulf %528, %532 : vector<8x8x8xf32>
    %534 = arith.truncf %533 : vector<8x8x8xf32> to vector<8x8x8xbf16>
    "tpu.trace_start"() <{level = 10 : i32, message = "bqk,bkd->bqd"}> : () -> ()
    %cst_147 = arith.constant dense<0.000000e+00> : vector<8x8x8xf32>
    %535 = tpu.matmul %534, %519, %cst_147 {dimension_numbers = #tpu.dot_dimension_numbers<[2], [1], [1], [2], [0, 0, 0, 1, 1, 2], [0], [0]>} : vector<8x8x8xbf16>, vector<8x8x8xbf16>, vector<8x8x8xf32> -> vector<8x8x8xf32>
    "tpu.trace_stop"() : () -> ()
    %536 = vector.extract_strided_slice %535 {offsets = [0, 0, 0], sizes = [2, 8, 8], strides = [1, 1, 1]} : vector<8x8x8xf32> to vector<2x8x8xf32>
    %537 = vector.shape_cast %536 : vector<2x8x8xf32> to vector<16x8xf32>
    %538 = arith.truncf %537 : vector<16x8xf32> to vector<16x8xbf16>
    %539 = vector.extract_strided_slice %488 {offsets = [0, 0], sizes = [8, 32], strides = [1, 1]} : vector<32x32xbf16> to vector<8x32xbf16>
    %cst_148 = arith.constant dense<0.000000e+00> : vector<16x32xf32>
    %540 = tpu.matmul %538, %539, %cst_148 {dimension_numbers = #tpu.dot_dimension_numbers<[1], [0], [0], [1], [0, 0, 1, 1], [], []>} : vector<16x8xbf16>, vector<8x32xbf16>, vector<16x32xf32> -> vector<16x32xf32>
    %541 = vector.extract_strided_slice %535 {offsets = [2, 0, 0], sizes = [2, 8, 8], strides = [1, 1, 1]} : vector<8x8x8xf32> to vector<2x8x8xf32>
    %542 = vector.shape_cast %541 : vector<2x8x8xf32> to vector<16x8xf32>
    %543 = arith.truncf %542 : vector<16x8xf32> to vector<16x8xbf16>
    %544 = vector.extract_strided_slice %488 {offsets = [8, 0], sizes = [8, 32], strides = [1, 1]} : vector<32x32xbf16> to vector<8x32xbf16>
    %cst_149 = arith.constant dense<0.000000e+00> : vector<16x32xf32>
    %545 = tpu.matmul %543, %544, %cst_149 {dimension_numbers = #tpu.dot_dimension_numbers<[1], [0], [0], [1], [0, 0, 1, 1], [], []>} : vector<16x8xbf16>, vector<8x32xbf16>, vector<16x32xf32> -> vector<16x32xf32>
    %546 = arith.addf %540, %545 : vector<16x32xf32>
    %547 = vector.extract_strided_slice %535 {offsets = [4, 0, 0], sizes = [2, 8, 8], strides = [1, 1, 1]} : vector<8x8x8xf32> to vector<2x8x8xf32>
    %548 = vector.shape_cast %547 : vector<2x8x8xf32> to vector<16x8xf32>
    %549 = arith.truncf %548 : vector<16x8xf32> to vector<16x8xbf16>
    %550 = vector.extract_strided_slice %488 {offsets = [16, 0], sizes = [8, 32], strides = [1, 1]} : vector<32x32xbf16> to vector<8x32xbf16>
    %cst_150 = arith.constant dense<0.000000e+00> : vector<16x32xf32>
    %551 = tpu.matmul %549, %550, %cst_150 {dimension_numbers = #tpu.dot_dimension_numbers<[1], [0], [0], [1], [0, 0, 1, 1], [], []>} : vector<16x8xbf16>, vector<8x32xbf16>, vector<16x32xf32> -> vector<16x32xf32>
    %552 = arith.addf %546, %551 : vector<16x32xf32>
    %553 = vector.extract_strided_slice %535 {offsets = [6, 0, 0], sizes = [2, 8, 8], strides = [1, 1, 1]} : vector<8x8x8xf32> to vector<2x8x8xf32>
    %554 = vector.shape_cast %553 : vector<2x8x8xf32> to vector<16x8xf32>
    %555 = arith.truncf %554 : vector<16x8xf32> to vector<16x8xbf16>
    %556 = vector.extract_strided_slice %488 {offsets = [24, 0], sizes = [8, 32], strides = [1, 1]} : vector<32x32xbf16> to vector<8x32xbf16>
    %cst_151 = arith.constant dense<0.000000e+00> : vector<16x32xf32>
    %557 = tpu.matmul %555, %556, %cst_151 {dimension_numbers = #tpu.dot_dimension_numbers<[1], [0], [0], [1], [0, 0, 1, 1], [], []>} : vector<16x8xbf16>, vector<8x32xbf16>, vector<16x32xf32> -> vector<16x32xf32>
    %558 = arith.addf %552, %557 : vector<16x32xf32>
    %559 = vector.broadcast %489 : vector<1x32xf32> to vector<16x32xf32>
    %560 = arith.addf %558, %559 : vector<16x32xf32>
    %561 = arith.addf %450, %560 : vector<16x32xf32>
    %c248 = arith.constant 248 : index
    %c0_152 = arith.constant 0 : index
    %562 = vector.load %arg6[%c248, %c0_152] : memref<400x128xf32, #tpu.memory_space<vmem>>, vector<1x32xf32>
    %c256_153 = arith.constant 256 : index
    %c0_154 = arith.constant 0 : index
    %563 = vector.load %arg6[%c256_153, %c0_154] : memref<400x128xf32, #tpu.memory_space<vmem>>, vector<1x32xf32>
    %cst_155 = arith.constant dense<0.000000e+00> : vector<16xf32>
    %564 = vector.multi_reduction <add>, %561, %cst_155 [1] : vector<16x32xf32> to vector<16xf32>
    %565 = vector.shape_cast %564 : vector<16xf32> to vector<16x1xf32>
    %cst_156 = arith.constant 3.200000e+01 : f32
    %566 = vector.broadcast %cst_156 : f32 to vector<16x1xf32>
    %567 = arith.divf %565, %566 : vector<16x1xf32>
    %568 = vector.broadcast %567 : vector<16x1xf32> to vector<16x32xf32>
    %569 = arith.subf %561, %568 : vector<16x32xf32>
    %570 = arith.mulf %569, %569 : vector<16x32xf32>
    %cst_157 = arith.constant dense<0.000000e+00> : vector<16xf32>
    %571 = vector.multi_reduction <add>, %570, %cst_157 [1] : vector<16x32xf32> to vector<16xf32>
    %572 = vector.shape_cast %571 : vector<16xf32> to vector<16x1xf32>
    %cst_158 = arith.constant 3.200000e+01 : f32
    %573 = vector.broadcast %cst_158 : f32 to vector<16x1xf32>
    %574 = arith.divf %572, %573 : vector<16x1xf32>
    %575 = vector.broadcast %567 : vector<16x1xf32> to vector<16x32xf32>
    %576 = arith.subf %561, %575 : vector<16x32xf32>
    %cst_159 = arith.constant 9.99999997E-7 : f32
    %577 = vector.broadcast %cst_159 : f32 to vector<16x1xf32>
    %578 = arith.addf %574, %577 : vector<16x1xf32>
    %579 = math.rsqrt %578 : vector<16x1xf32>
    %580 = vector.broadcast %579 : vector<16x1xf32> to vector<16x32xf32>
    %581 = arith.mulf %576, %580 : vector<16x32xf32>
    %582 = vector.broadcast %562 : vector<1x32xf32> to vector<16x32xf32>
    %583 = arith.mulf %581, %582 : vector<16x32xf32>
    %584 = vector.broadcast %563 : vector<1x32xf32> to vector<16x32xf32>
    %585 = arith.addf %583, %584 : vector<16x32xf32>
    %586 = arith.truncf %585 : vector<16x32xf32> to vector<16x32xbf16>
    %c512 = arith.constant 512 : index
    %c0_160 = arith.constant 0 : index
    %587 = vector.load %arg5[%c512, %c0_160] : memref<864x128xbf16, #tpu.memory_space<vmem>>, vector<32x64xbf16>
    %cst_161 = arith.constant dense<0.000000e+00> : vector<16x64xf32>
    %588 = tpu.matmul %586, %587, %cst_161 {dimension_numbers = #tpu.dot_dimension_numbers<[1], [0], [0], [1], [0, 0, 1, 1], [], []>} : vector<16x32xbf16>, vector<32x64xbf16>, vector<16x64xf32> -> vector<16x64xf32>
    %c264 = arith.constant 264 : index
    %c0_162 = arith.constant 0 : index
    %589 = vector.load %arg6[%c264, %c0_162] : memref<400x128xf32, #tpu.memory_space<vmem>>, vector<1x64xf32>
    %590 = vector.broadcast %589 : vector<1x64xf32> to vector<16x64xf32>
    %591 = arith.addf %588, %590 : vector<16x64xf32>
    %cst_163 = arith.constant 0.000000e+00 : f32
    %592 = vector.broadcast %cst_163 : f32 to vector<16x64xf32>
    %593 = arith.maximumf %591, %592 : vector<16x64xf32>
    %594 = arith.truncf %593 : vector<16x64xf32> to vector<16x64xbf16>
    %c544 = arith.constant 544 : index
    %c0_164 = arith.constant 0 : index
    %595 = vector.load %arg5[%c544, %c0_164] : memref<864x128xbf16, #tpu.memory_space<vmem>>, vector<64x32xbf16>
    %cst_165 = arith.constant dense<0.000000e+00> : vector<16x32xf32>
    %596 = tpu.matmul %594, %595, %cst_165 {dimension_numbers = #tpu.dot_dimension_numbers<[1], [0], [0], [1], [0, 0, 1, 1], [], []>} : vector<16x64xbf16>, vector<64x32xbf16>, vector<16x32xf32> -> vector<16x32xf32>
    %c272 = arith.constant 272 : index
    %c0_166 = arith.constant 0 : index
    %597 = vector.load %arg6[%c272, %c0_166] : memref<400x128xf32, #tpu.memory_space<vmem>>, vector<1x32xf32>
    %598 = vector.broadcast %597 : vector<1x32xf32> to vector<16x32xf32>
    %599 = arith.addf %596, %598 : vector<16x32xf32>
    %600 = arith.addf %561, %599 : vector<16x32xf32>
    %c320 = arith.constant 320 : index
    %c0_167 = arith.constant 0 : index
    %601 = vector.load %arg6[%c320, %c0_167] : memref<400x128xf32, #tpu.memory_space<vmem>>, vector<1x32xf32>
    %c328 = arith.constant 328 : index
    %c0_168 = arith.constant 0 : index
    %602 = vector.load %arg6[%c328, %c0_168] : memref<400x128xf32, #tpu.memory_space<vmem>>, vector<1x32xf32>
    %cst_169 = arith.constant dense<0.000000e+00> : vector<16xf32>
    %603 = vector.multi_reduction <add>, %600, %cst_169 [1] : vector<16x32xf32> to vector<16xf32>
    %604 = vector.shape_cast %603 : vector<16xf32> to vector<16x1xf32>
    %cst_170 = arith.constant 3.200000e+01 : f32
    %605 = vector.broadcast %cst_170 : f32 to vector<16x1xf32>
    %606 = arith.divf %604, %605 : vector<16x1xf32>
    %607 = vector.broadcast %606 : vector<16x1xf32> to vector<16x32xf32>
    %608 = arith.subf %600, %607 : vector<16x32xf32>
    %609 = arith.mulf %608, %608 : vector<16x32xf32>
    %cst_171 = arith.constant dense<0.000000e+00> : vector<16xf32>
    %610 = vector.multi_reduction <add>, %609, %cst_171 [1] : vector<16x32xf32> to vector<16xf32>
    %611 = vector.shape_cast %610 : vector<16xf32> to vector<16x1xf32>
    %cst_172 = arith.constant 3.200000e+01 : f32
    %612 = vector.broadcast %cst_172 : f32 to vector<16x1xf32>
    %613 = arith.divf %611, %612 : vector<16x1xf32>
    %614 = vector.broadcast %606 : vector<16x1xf32> to vector<16x32xf32>
    %615 = arith.subf %600, %614 : vector<16x32xf32>
    %cst_173 = arith.constant 9.99999997E-7 : f32
    %616 = vector.broadcast %cst_173 : f32 to vector<16x1xf32>
    %617 = arith.addf %613, %616 : vector<16x1xf32>
    %618 = math.rsqrt %617 : vector<16x1xf32>
    %619 = vector.broadcast %618 : vector<16x1xf32> to vector<16x32xf32>
    %620 = arith.mulf %615, %619 : vector<16x32xf32>
    %621 = vector.broadcast %601 : vector<1x32xf32> to vector<16x32xf32>
    %622 = arith.mulf %620, %621 : vector<16x32xf32>
    %623 = vector.broadcast %602 : vector<1x32xf32> to vector<16x32xf32>
    %624 = arith.addf %622, %623 : vector<16x32xf32>
    %625 = arith.truncf %624 : vector<16x32xf32> to vector<16x32xbf16>
    %c608 = arith.constant 608 : index
    %c0_174 = arith.constant 0 : index
    %626 = vector.load %arg5[%c608, %c0_174] : memref<864x128xbf16, #tpu.memory_space<vmem>>, vector<32x96xbf16>
    %cst_175 = arith.constant dense<0.000000e+00> : vector<16x96xf32>
    %627 = tpu.matmul %625, %626, %cst_175 {dimension_numbers = #tpu.dot_dimension_numbers<[1], [0], [0], [1], [0, 0, 1, 1], [], []>} : vector<16x32xbf16>, vector<32x96xbf16>, vector<16x96xf32> -> vector<16x96xf32>
    %c280 = arith.constant 280 : index
    %c0_176 = arith.constant 0 : index
    %628 = vector.load %arg6[%c280, %c0_176] : memref<400x128xf32, #tpu.memory_space<vmem>>, vector<1x96xf32>
    %629 = vector.broadcast %628 : vector<1x96xf32> to vector<16x96xf32>
    %630 = arith.addf %627, %629 : vector<16x96xf32>
    %631 = vector.extract_strided_slice %630 {offsets = [0, 0], sizes = [16, 32], strides = [1, 1]} : vector<16x96xf32> to vector<16x32xf32>
    %632 = vector.extract_strided_slice %630 {offsets = [0, 32], sizes = [16, 32], strides = [1, 1]} : vector<16x96xf32> to vector<16x32xf32>
    %633 = vector.extract_strided_slice %630 {offsets = [0, 64], sizes = [16, 32], strides = [1, 1]} : vector<16x96xf32> to vector<16x32xf32>
    %c640 = arith.constant 640 : index
    %c0_177 = arith.constant 0 : index
    %634 = vector.load %arg5[%c640, %c0_177] : memref<864x128xbf16, #tpu.memory_space<vmem>>, vector<32x32xbf16>
    %c288_178 = arith.constant 288 : index
    %c0_179 = arith.constant 0 : index
    %635 = vector.load %arg6[%c288_178, %c0_179] : memref<400x128xf32, #tpu.memory_space<vmem>>, vector<1x32xf32>
    %636 = vector.extract_strided_slice %631 {offsets = [0, 0], sizes = [16, 8], strides = [1, 1]} : vector<16x32xf32> to vector<16x8xf32>
    %637 = vector.shape_cast %636 : vector<16x8xf32> to vector<2x8x8xf32>
    %638 = vector.extract_strided_slice %631 {offsets = [0, 8], sizes = [16, 8], strides = [1, 1]} : vector<16x32xf32> to vector<16x8xf32>
    %639 = vector.shape_cast %638 : vector<16x8xf32> to vector<2x8x8xf32>
    %640 = vector.extract_strided_slice %631 {offsets = [0, 16], sizes = [16, 8], strides = [1, 1]} : vector<16x32xf32> to vector<16x8xf32>
    %641 = vector.shape_cast %640 : vector<16x8xf32> to vector<2x8x8xf32>
    %642 = vector.extract_strided_slice %631 {offsets = [0, 24], sizes = [16, 8], strides = [1, 1]} : vector<16x32xf32> to vector<16x8xf32>
    %643 = vector.shape_cast %642 : vector<16x8xf32> to vector<2x8x8xf32>
    %644 = tpu.concatenate %637, %639, %641, %643 in 0 : vector<2x8x8xf32>, vector<2x8x8xf32>, vector<2x8x8xf32>, vector<2x8x8xf32> -> vector<8x8x8xf32>
    %645 = arith.truncf %644 : vector<8x8x8xf32> to vector<8x8x8xbf16>
    %646 = vector.extract_strided_slice %632 {offsets = [0, 0], sizes = [16, 8], strides = [1, 1]} : vector<16x32xf32> to vector<16x8xf32>
    %647 = vector.shape_cast %646 : vector<16x8xf32> to vector<2x8x8xf32>
    %648 = vector.extract_strided_slice %632 {offsets = [0, 8], sizes = [16, 8], strides = [1, 1]} : vector<16x32xf32> to vector<16x8xf32>
    %649 = vector.shape_cast %648 : vector<16x8xf32> to vector<2x8x8xf32>
    %650 = vector.extract_strided_slice %632 {offsets = [0, 16], sizes = [16, 8], strides = [1, 1]} : vector<16x32xf32> to vector<16x8xf32>
    %651 = vector.shape_cast %650 : vector<16x8xf32> to vector<2x8x8xf32>
    %652 = vector.extract_strided_slice %632 {offsets = [0, 24], sizes = [16, 8], strides = [1, 1]} : vector<16x32xf32> to vector<16x8xf32>
    %653 = vector.shape_cast %652 : vector<16x8xf32> to vector<2x8x8xf32>
    %654 = tpu.concatenate %647, %649, %651, %653 in 0 : vector<2x8x8xf32>, vector<2x8x8xf32>, vector<2x8x8xf32>, vector<2x8x8xf32> -> vector<8x8x8xf32>
    %655 = arith.truncf %654 : vector<8x8x8xf32> to vector<8x8x8xbf16>
    %656 = vector.extract_strided_slice %633 {offsets = [0, 0], sizes = [16, 8], strides = [1, 1]} : vector<16x32xf32> to vector<16x8xf32>
    %657 = vector.shape_cast %656 : vector<16x8xf32> to vector<2x8x8xf32>
    %658 = vector.extract_strided_slice %633 {offsets = [0, 8], sizes = [16, 8], strides = [1, 1]} : vector<16x32xf32> to vector<16x8xf32>
    %659 = vector.shape_cast %658 : vector<16x8xf32> to vector<2x8x8xf32>
    %660 = vector.extract_strided_slice %633 {offsets = [0, 16], sizes = [16, 8], strides = [1, 1]} : vector<16x32xf32> to vector<16x8xf32>
    %661 = vector.shape_cast %660 : vector<16x8xf32> to vector<2x8x8xf32>
    %662 = vector.extract_strided_slice %633 {offsets = [0, 24], sizes = [16, 8], strides = [1, 1]} : vector<16x32xf32> to vector<16x8xf32>
    %663 = vector.shape_cast %662 : vector<16x8xf32> to vector<2x8x8xf32>
    %664 = tpu.concatenate %657, %659, %661, %663 in 0 : vector<2x8x8xf32>, vector<2x8x8xf32>, vector<2x8x8xf32>, vector<2x8x8xf32> -> vector<8x8x8xf32>
    %665 = arith.truncf %664 : vector<8x8x8xf32> to vector<8x8x8xbf16>
    "tpu.trace_start"() <{level = 10 : i32, message = "bqd,bkd->bqk"}> : () -> ()
    %cst_180 = arith.constant dense<0.000000e+00> : vector<8x8x8xf32>
    %666 = tpu.matmul %645, %655, %cst_180 {dimension_numbers = #tpu.dot_dimension_numbers<[2], [2], [1], [1], [0, 0, 0, 1, 1, 1], [0], [0]>} : vector<8x8x8xbf16>, vector<8x8x8xbf16>, vector<8x8x8xf32> -> vector<8x8x8xf32>
    "tpu.trace_stop"() : () -> ()
    %cst_181 = arith.constant 0.353553385 : f32
    %667 = vector.broadcast %cst_181 : f32 to vector<8x8x8xf32>
    %668 = arith.mulf %666, %667 : vector<8x8x8xf32>
    %669 = arith.addf %668, %3 : vector<8x8x8xf32>
    %cst_182 = arith.constant dense<0xFF800000> : vector<8x8xf32>
    %670 = vector.multi_reduction <maximumf>, %669, %cst_182 [2] : vector<8x8x8xf32> to vector<8x8xf32>
    %671 = vector.shape_cast %670 : vector<8x8xf32> to vector<8x8x1xf32>
    %672 = vector.broadcast %671 : vector<8x8x1xf32> to vector<8x8x8xf32>
    %673 = arith.subf %669, %672 : vector<8x8x8xf32>
    %674 = math.exp %673 : vector<8x8x8xf32>
    %cst_183 = arith.constant dense<0.000000e+00> : vector<8x8xf32>
    %675 = vector.multi_reduction <add>, %674, %cst_183 [2] : vector<8x8x8xf32> to vector<8x8xf32>
    %676 = vector.shape_cast %675 : vector<8x8xf32> to vector<8x8x1xf32>
    %677 = tpu.reciprocal %676 {approx = true} : vector<8x8x1xf32> -> vector<8x8x1xf32>
    %678 = vector.broadcast %677 : vector<8x8x1xf32> to vector<8x8x8xf32>
    %679 = arith.mulf %674, %678 : vector<8x8x8xf32>
    %680 = arith.truncf %679 : vector<8x8x8xf32> to vector<8x8x8xbf16>
    "tpu.trace_start"() <{level = 10 : i32, message = "bqk,bkd->bqd"}> : () -> ()
    %cst_184 = arith.constant dense<0.000000e+00> : vector<8x8x8xf32>
    %681 = tpu.matmul %680, %665, %cst_184 {dimension_numbers = #tpu.dot_dimension_numbers<[2], [1], [1], [2], [0, 0, 0, 1, 1, 2], [0], [0]>} : vector<8x8x8xbf16>, vector<8x8x8xbf16>, vector<8x8x8xf32> -> vector<8x8x8xf32>
    "tpu.trace_stop"() : () -> ()
    %682 = vector.extract_strided_slice %681 {offsets = [0, 0, 0], sizes = [2, 8, 8], strides = [1, 1, 1]} : vector<8x8x8xf32> to vector<2x8x8xf32>
    %683 = vector.shape_cast %682 : vector<2x8x8xf32> to vector<16x8xf32>
    %684 = arith.truncf %683 : vector<16x8xf32> to vector<16x8xbf16>
    %685 = vector.extract_strided_slice %634 {offsets = [0, 0], sizes = [8, 32], strides = [1, 1]} : vector<32x32xbf16> to vector<8x32xbf16>
    %cst_185 = arith.constant dense<0.000000e+00> : vector<16x32xf32>
    %686 = tpu.matmul %684, %685, %cst_185 {dimension_numbers = #tpu.dot_dimension_numbers<[1], [0], [0], [1], [0, 0, 1, 1], [], []>} : vector<16x8xbf16>, vector<8x32xbf16>, vector<16x32xf32> -> vector<16x32xf32>
    %687 = vector.extract_strided_slice %681 {offsets = [2, 0, 0], sizes = [2, 8, 8], strides = [1, 1, 1]} : vector<8x8x8xf32> to vector<2x8x8xf32>
    %688 = vector.shape_cast %687 : vector<2x8x8xf32> to vector<16x8xf32>
    %689 = arith.truncf %688 : vector<16x8xf32> to vector<16x8xbf16>
    %690 = vector.extract_strided_slice %634 {offsets = [8, 0], sizes = [8, 32], strides = [1, 1]} : vector<32x32xbf16> to vector<8x32xbf16>
    %cst_186 = arith.constant dense<0.000000e+00> : vector<16x32xf32>
    %691 = tpu.matmul %689, %690, %cst_186 {dimension_numbers = #tpu.dot_dimension_numbers<[1], [0], [0], [1], [0, 0, 1, 1], [], []>} : vector<16x8xbf16>, vector<8x32xbf16>, vector<16x32xf32> -> vector<16x32xf32>
    %692 = arith.addf %686, %691 : vector<16x32xf32>
    %693 = vector.extract_strided_slice %681 {offsets = [4, 0, 0], sizes = [2, 8, 8], strides = [1, 1, 1]} : vector<8x8x8xf32> to vector<2x8x8xf32>
    %694 = vector.shape_cast %693 : vector<2x8x8xf32> to vector<16x8xf32>
    %695 = arith.truncf %694 : vector<16x8xf32> to vector<16x8xbf16>
    %696 = vector.extract_strided_slice %634 {offsets = [16, 0], sizes = [8, 32], strides = [1, 1]} : vector<32x32xbf16> to vector<8x32xbf16>
    %cst_187 = arith.constant dense<0.000000e+00> : vector<16x32xf32>
    %697 = tpu.matmul %695, %696, %cst_187 {dimension_numbers = #tpu.dot_dimension_numbers<[1], [0], [0], [1], [0, 0, 1, 1], [], []>} : vector<16x8xbf16>, vector<8x32xbf16>, vector<16x32xf32> -> vector<16x32xf32>
    %698 = arith.addf %692, %697 : vector<16x32xf32>
    %699 = vector.extract_strided_slice %681 {offsets = [6, 0, 0], sizes = [2, 8, 8], strides = [1, 1, 1]} : vector<8x8x8xf32> to vector<2x8x8xf32>
    %700 = vector.shape_cast %699 : vector<2x8x8xf32> to vector<16x8xf32>
    %701 = arith.truncf %700 : vector<16x8xf32> to vector<16x8xbf16>
    %702 = vector.extract_strided_slice %634 {offsets = [24, 0], sizes = [8, 32], strides = [1, 1]} : vector<32x32xbf16> to vector<8x32xbf16>
    %cst_188 = arith.constant dense<0.000000e+00> : vector<16x32xf32>
    %703 = tpu.matmul %701, %702, %cst_188 {dimension_numbers = #tpu.dot_dimension_numbers<[1], [0], [0], [1], [0, 0, 1, 1], [], []>} : vector<16x8xbf16>, vector<8x32xbf16>, vector<16x32xf32> -> vector<16x32xf32>
    %704 = arith.addf %698, %703 : vector<16x32xf32>
    %705 = vector.broadcast %635 : vector<1x32xf32> to vector<16x32xf32>
    %706 = arith.addf %704, %705 : vector<16x32xf32>
    %707 = arith.addf %600, %706 : vector<16x32xf32>
    %c336 = arith.constant 336 : index
    %c0_189 = arith.constant 0 : index
    %708 = vector.load %arg6[%c336, %c0_189] : memref<400x128xf32, #tpu.memory_space<vmem>>, vector<1x32xf32>
    %c344 = arith.constant 344 : index
    %c0_190 = arith.constant 0 : index
    %709 = vector.load %arg6[%c344, %c0_190] : memref<400x128xf32, #tpu.memory_space<vmem>>, vector<1x32xf32>
    %cst_191 = arith.constant dense<0.000000e+00> : vector<16xf32>
    %710 = vector.multi_reduction <add>, %707, %cst_191 [1] : vector<16x32xf32> to vector<16xf32>
    %711 = vector.shape_cast %710 : vector<16xf32> to vector<16x1xf32>
    %cst_192 = arith.constant 3.200000e+01 : f32
    %712 = vector.broadcast %cst_192 : f32 to vector<16x1xf32>
    %713 = arith.divf %711, %712 : vector<16x1xf32>
    %714 = vector.broadcast %713 : vector<16x1xf32> to vector<16x32xf32>
    %715 = arith.subf %707, %714 : vector<16x32xf32>
    %716 = arith.mulf %715, %715 : vector<16x32xf32>
    %cst_193 = arith.constant dense<0.000000e+00> : vector<16xf32>
    %717 = vector.multi_reduction <add>, %716, %cst_193 [1] : vector<16x32xf32> to vector<16xf32>
    %718 = vector.shape_cast %717 : vector<16xf32> to vector<16x1xf32>
    %cst_194 = arith.constant 3.200000e+01 : f32
    %719 = vector.broadcast %cst_194 : f32 to vector<16x1xf32>
    %720 = arith.divf %718, %719 : vector<16x1xf32>
    %721 = vector.broadcast %713 : vector<16x1xf32> to vector<16x32xf32>
    %722 = arith.subf %707, %721 : vector<16x32xf32>
    %cst_195 = arith.constant 9.99999997E-7 : f32
    %723 = vector.broadcast %cst_195 : f32 to vector<16x1xf32>
    %724 = arith.addf %720, %723 : vector<16x1xf32>
    %725 = math.rsqrt %724 : vector<16x1xf32>
    %726 = vector.broadcast %725 : vector<16x1xf32> to vector<16x32xf32>
    %727 = arith.mulf %722, %726 : vector<16x32xf32>
    %728 = vector.broadcast %708 : vector<1x32xf32> to vector<16x32xf32>
    %729 = arith.mulf %727, %728 : vector<16x32xf32>
    %730 = vector.broadcast %709 : vector<1x32xf32> to vector<16x32xf32>
    %731 = arith.addf %729, %730 : vector<16x32xf32>
    %732 = arith.truncf %731 : vector<16x32xf32> to vector<16x32xbf16>
    %c672 = arith.constant 672 : index
    %c0_196 = arith.constant 0 : index
    %733 = vector.load %arg5[%c672, %c0_196] : memref<864x128xbf16, #tpu.memory_space<vmem>>, vector<32x32xbf16>
    %cst_197 = arith.constant dense<0.000000e+00> : vector<16x32xf32>
    %734 = tpu.matmul %732, %733, %cst_197 {dimension_numbers = #tpu.dot_dimension_numbers<[1], [0], [0], [1], [0, 0, 1, 1], [], []>} : vector<16x32xbf16>, vector<32x32xbf16>, vector<16x32xf32> -> vector<16x32xf32>
    %c296 = arith.constant 296 : index
    %c0_198 = arith.constant 0 : index
    %735 = vector.load %arg6[%c296, %c0_198] : memref<400x128xf32, #tpu.memory_space<vmem>>, vector<1x32xf32>
    %736 = vector.broadcast %735 : vector<1x32xf32> to vector<16x32xf32>
    %737 = arith.addf %734, %736 : vector<16x32xf32>
    %c704 = arith.constant 704 : index
    %c0_199 = arith.constant 0 : index
    %738 = vector.load %arg5[%c704, %c0_199] : memref<864x128xbf16, #tpu.memory_space<vmem>>, vector<32x64xbf16>
    %cst_200 = arith.constant dense<0.000000e+00> : vector<16x64xf32>
    %739 = tpu.matmul %332, %738, %cst_200 {dimension_numbers = #tpu.dot_dimension_numbers<[1], [0], [0], [1], [0, 0, 1, 1], [], []>} : vector<16x32xbf16>, vector<32x64xbf16>, vector<16x64xf32> -> vector<16x64xf32>
    %c304 = arith.constant 304 : index
    %c0_201 = arith.constant 0 : index
    %740 = vector.load %arg6[%c304, %c0_201] : memref<400x128xf32, #tpu.memory_space<vmem>>, vector<1x64xf32>
    %741 = vector.broadcast %740 : vector<1x64xf32> to vector<16x64xf32>
    %742 = arith.addf %739, %741 : vector<16x64xf32>
    %743 = vector.extract_strided_slice %742 {offsets = [0, 0], sizes = [16, 32], strides = [1, 1]} : vector<16x64xf32> to vector<16x32xf32>
    %744 = vector.extract_strided_slice %742 {offsets = [0, 32], sizes = [16, 32], strides = [1, 1]} : vector<16x64xf32> to vector<16x32xf32>
    %c736 = arith.constant 736 : index
    %c0_202 = arith.constant 0 : index
    %745 = vector.load %arg5[%c736, %c0_202] : memref<864x128xbf16, #tpu.memory_space<vmem>>, vector<32x32xbf16>
    %c312 = arith.constant 312 : index
    %c0_203 = arith.constant 0 : index
    %746 = vector.load %arg6[%c312, %c0_203] : memref<400x128xf32, #tpu.memory_space<vmem>>, vector<1x32xf32>
    %747 = vector.extract_strided_slice %737 {offsets = [0, 0], sizes = [16, 8], strides = [1, 1]} : vector<16x32xf32> to vector<16x8xf32>
    %748 = vector.shape_cast %747 : vector<16x8xf32> to vector<2x8x8xf32>
    %749 = vector.extract_strided_slice %737 {offsets = [0, 8], sizes = [16, 8], strides = [1, 1]} : vector<16x32xf32> to vector<16x8xf32>
    %750 = vector.shape_cast %749 : vector<16x8xf32> to vector<2x8x8xf32>
    %751 = vector.extract_strided_slice %737 {offsets = [0, 16], sizes = [16, 8], strides = [1, 1]} : vector<16x32xf32> to vector<16x8xf32>
    %752 = vector.shape_cast %751 : vector<16x8xf32> to vector<2x8x8xf32>
    %753 = vector.extract_strided_slice %737 {offsets = [0, 24], sizes = [16, 8], strides = [1, 1]} : vector<16x32xf32> to vector<16x8xf32>
    %754 = vector.shape_cast %753 : vector<16x8xf32> to vector<2x8x8xf32>
    %755 = tpu.concatenate %748, %750, %752, %754 in 0 : vector<2x8x8xf32>, vector<2x8x8xf32>, vector<2x8x8xf32>, vector<2x8x8xf32> -> vector<8x8x8xf32>
    %756 = arith.truncf %755 : vector<8x8x8xf32> to vector<8x8x8xbf16>
    %757 = vector.extract_strided_slice %743 {offsets = [0, 0], sizes = [16, 8], strides = [1, 1]} : vector<16x32xf32> to vector<16x8xf32>
    %758 = vector.shape_cast %757 : vector<16x8xf32> to vector<2x8x8xf32>
    %759 = vector.extract_strided_slice %743 {offsets = [0, 8], sizes = [16, 8], strides = [1, 1]} : vector<16x32xf32> to vector<16x8xf32>
    %760 = vector.shape_cast %759 : vector<16x8xf32> to vector<2x8x8xf32>
    %761 = vector.extract_strided_slice %743 {offsets = [0, 16], sizes = [16, 8], strides = [1, 1]} : vector<16x32xf32> to vector<16x8xf32>
    %762 = vector.shape_cast %761 : vector<16x8xf32> to vector<2x8x8xf32>
    %763 = vector.extract_strided_slice %743 {offsets = [0, 24], sizes = [16, 8], strides = [1, 1]} : vector<16x32xf32> to vector<16x8xf32>
    %764 = vector.shape_cast %763 : vector<16x8xf32> to vector<2x8x8xf32>
    %765 = tpu.concatenate %758, %760, %762, %764 in 0 : vector<2x8x8xf32>, vector<2x8x8xf32>, vector<2x8x8xf32>, vector<2x8x8xf32> -> vector<8x8x8xf32>
    %766 = arith.truncf %765 : vector<8x8x8xf32> to vector<8x8x8xbf16>
    %767 = vector.extract_strided_slice %744 {offsets = [0, 0], sizes = [16, 8], strides = [1, 1]} : vector<16x32xf32> to vector<16x8xf32>
    %768 = vector.shape_cast %767 : vector<16x8xf32> to vector<2x8x8xf32>
    %769 = vector.extract_strided_slice %744 {offsets = [0, 8], sizes = [16, 8], strides = [1, 1]} : vector<16x32xf32> to vector<16x8xf32>
    %770 = vector.shape_cast %769 : vector<16x8xf32> to vector<2x8x8xf32>
    %771 = vector.extract_strided_slice %744 {offsets = [0, 16], sizes = [16, 8], strides = [1, 1]} : vector<16x32xf32> to vector<16x8xf32>
    %772 = vector.shape_cast %771 : vector<16x8xf32> to vector<2x8x8xf32>
    %773 = vector.extract_strided_slice %744 {offsets = [0, 24], sizes = [16, 8], strides = [1, 1]} : vector<16x32xf32> to vector<16x8xf32>
    %774 = vector.shape_cast %773 : vector<16x8xf32> to vector<2x8x8xf32>
    %775 = tpu.concatenate %768, %770, %772, %774 in 0 : vector<2x8x8xf32>, vector<2x8x8xf32>, vector<2x8x8xf32>, vector<2x8x8xf32> -> vector<8x8x8xf32>
    %776 = arith.truncf %775 : vector<8x8x8xf32> to vector<8x8x8xbf16>
    "tpu.trace_start"() <{level = 10 : i32, message = "bqd,bkd->bqk"}> : () -> ()
    %cst_204 = arith.constant dense<0.000000e+00> : vector<8x8x8xf32>
    %777 = tpu.matmul %756, %766, %cst_204 {dimension_numbers = #tpu.dot_dimension_numbers<[2], [2], [1], [1], [0, 0, 0, 1, 1, 1], [0], [0]>} : vector<8x8x8xbf16>, vector<8x8x8xbf16>, vector<8x8x8xf32> -> vector<8x8x8xf32>
    "tpu.trace_stop"() : () -> ()
    %cst_205 = arith.constant 0.353553385 : f32
    %778 = vector.broadcast %cst_205 : f32 to vector<8x8x8xf32>
    %779 = arith.mulf %777, %778 : vector<8x8x8xf32>
    %780 = arith.addf %779, %4 : vector<8x8x8xf32>
    %cst_206 = arith.constant dense<0xFF800000> : vector<8x8xf32>
    %781 = vector.multi_reduction <maximumf>, %780, %cst_206 [2] : vector<8x8x8xf32> to vector<8x8xf32>
    %782 = vector.shape_cast %781 : vector<8x8xf32> to vector<8x8x1xf32>
    %783 = vector.broadcast %782 : vector<8x8x1xf32> to vector<8x8x8xf32>
    %784 = arith.subf %780, %783 : vector<8x8x8xf32>
    %785 = math.exp %784 : vector<8x8x8xf32>
    %cst_207 = arith.constant dense<0.000000e+00> : vector<8x8xf32>
    %786 = vector.multi_reduction <add>, %785, %cst_207 [2] : vector<8x8x8xf32> to vector<8x8xf32>
    %787 = vector.shape_cast %786 : vector<8x8xf32> to vector<8x8x1xf32>
    %788 = tpu.reciprocal %787 {approx = true} : vector<8x8x1xf32> -> vector<8x8x1xf32>
    %789 = vector.broadcast %788 : vector<8x8x1xf32> to vector<8x8x8xf32>
    %790 = arith.mulf %785, %789 : vector<8x8x8xf32>
    %791 = arith.truncf %790 : vector<8x8x8xf32> to vector<8x8x8xbf16>
    "tpu.trace_start"() <{level = 10 : i32, message = "bqk,bkd->bqd"}> : () -> ()
    %cst_208 = arith.constant dense<0.000000e+00> : vector<8x8x8xf32>
    %792 = tpu.matmul %791, %776, %cst_208 {dimension_numbers = #tpu.dot_dimension_numbers<[2], [1], [1], [2], [0, 0, 0, 1, 1, 2], [0], [0]>} : vector<8x8x8xbf16>, vector<8x8x8xbf16>, vector<8x8x8xf32> -> vector<8x8x8xf32>
    "tpu.trace_stop"() : () -> ()
    %793 = vector.extract_strided_slice %792 {offsets = [0, 0, 0], sizes = [2, 8, 8], strides = [1, 1, 1]} : vector<8x8x8xf32> to vector<2x8x8xf32>
    %794 = vector.shape_cast %793 : vector<2x8x8xf32> to vector<16x8xf32>
    %795 = arith.truncf %794 : vector<16x8xf32> to vector<16x8xbf16>
    %796 = vector.extract_strided_slice %745 {offsets = [0, 0], sizes = [8, 32], strides = [1, 1]} : vector<32x32xbf16> to vector<8x32xbf16>
    %cst_209 = arith.constant dense<0.000000e+00> : vector<16x32xf32>
    %797 = tpu.matmul %795, %796, %cst_209 {dimension_numbers = #tpu.dot_dimension_numbers<[1], [0], [0], [1], [0, 0, 1, 1], [], []>} : vector<16x8xbf16>, vector<8x32xbf16>, vector<16x32xf32> -> vector<16x32xf32>
    %798 = vector.extract_strided_slice %792 {offsets = [2, 0, 0], sizes = [2, 8, 8], strides = [1, 1, 1]} : vector<8x8x8xf32> to vector<2x8x8xf32>
    %799 = vector.shape_cast %798 : vector<2x8x8xf32> to vector<16x8xf32>
    %800 = arith.truncf %799 : vector<16x8xf32> to vector<16x8xbf16>
    %801 = vector.extract_strided_slice %745 {offsets = [8, 0], sizes = [8, 32], strides = [1, 1]} : vector<32x32xbf16> to vector<8x32xbf16>
    %cst_210 = arith.constant dense<0.000000e+00> : vector<16x32xf32>
    %802 = tpu.matmul %800, %801, %cst_210 {dimension_numbers = #tpu.dot_dimension_numbers<[1], [0], [0], [1], [0, 0, 1, 1], [], []>} : vector<16x8xbf16>, vector<8x32xbf16>, vector<16x32xf32> -> vector<16x32xf32>
    %803 = arith.addf %797, %802 : vector<16x32xf32>
    %804 = vector.extract_strided_slice %792 {offsets = [4, 0, 0], sizes = [2, 8, 8], strides = [1, 1, 1]} : vector<8x8x8xf32> to vector<2x8x8xf32>
    %805 = vector.shape_cast %804 : vector<2x8x8xf32> to vector<16x8xf32>
    %806 = arith.truncf %805 : vector<16x8xf32> to vector<16x8xbf16>
    %807 = vector.extract_strided_slice %745 {offsets = [16, 0], sizes = [8, 32], strides = [1, 1]} : vector<32x32xbf16> to vector<8x32xbf16>
    %cst_211 = arith.constant dense<0.000000e+00> : vector<16x32xf32>
    %808 = tpu.matmul %806, %807, %cst_211 {dimension_numbers = #tpu.dot_dimension_numbers<[1], [0], [0], [1], [0, 0, 1, 1], [], []>} : vector<16x8xbf16>, vector<8x32xbf16>, vector<16x32xf32> -> vector<16x32xf32>
    %809 = arith.addf %803, %808 : vector<16x32xf32>
    %810 = vector.extract_strided_slice %792 {offsets = [6, 0, 0], sizes = [2, 8, 8], strides = [1, 1, 1]} : vector<8x8x8xf32> to vector<2x8x8xf32>
    %811 = vector.shape_cast %810 : vector<2x8x8xf32> to vector<16x8xf32>
    %812 = arith.truncf %811 : vector<16x8xf32> to vector<16x8xbf16>
    %813 = vector.extract_strided_slice %745 {offsets = [24, 0], sizes = [8, 32], strides = [1, 1]} : vector<32x32xbf16> to vector<8x32xbf16>
    %cst_212 = arith.constant dense<0.000000e+00> : vector<16x32xf32>
    %814 = tpu.matmul %812, %813, %cst_212 {dimension_numbers = #tpu.dot_dimension_numbers<[1], [0], [0], [1], [0, 0, 1, 1], [], []>} : vector<16x8xbf16>, vector<8x32xbf16>, vector<16x32xf32> -> vector<16x32xf32>
    %815 = arith.addf %809, %814 : vector<16x32xf32>
    %816 = vector.broadcast %746 : vector<1x32xf32> to vector<16x32xf32>
    %817 = arith.addf %815, %816 : vector<16x32xf32>
    %818 = arith.addf %707, %817 : vector<16x32xf32>
    %c352_213 = arith.constant 352 : index
    %c0_214 = arith.constant 0 : index
    %819 = vector.load %arg6[%c352_213, %c0_214] : memref<400x128xf32, #tpu.memory_space<vmem>>, vector<1x32xf32>
    %c360 = arith.constant 360 : index
    %c0_215 = arith.constant 0 : index
    %820 = vector.load %arg6[%c360, %c0_215] : memref<400x128xf32, #tpu.memory_space<vmem>>, vector<1x32xf32>
    %cst_216 = arith.constant dense<0.000000e+00> : vector<16xf32>
    %821 = vector.multi_reduction <add>, %818, %cst_216 [1] : vector<16x32xf32> to vector<16xf32>
    %822 = vector.shape_cast %821 : vector<16xf32> to vector<16x1xf32>
    %cst_217 = arith.constant 3.200000e+01 : f32
    %823 = vector.broadcast %cst_217 : f32 to vector<16x1xf32>
    %824 = arith.divf %822, %823 : vector<16x1xf32>
    %825 = vector.broadcast %824 : vector<16x1xf32> to vector<16x32xf32>
    %826 = arith.subf %818, %825 : vector<16x32xf32>
    %827 = arith.mulf %826, %826 : vector<16x32xf32>
    %cst_218 = arith.constant dense<0.000000e+00> : vector<16xf32>
    %828 = vector.multi_reduction <add>, %827, %cst_218 [1] : vector<16x32xf32> to vector<16xf32>
    %829 = vector.shape_cast %828 : vector<16xf32> to vector<16x1xf32>
    %cst_219 = arith.constant 3.200000e+01 : f32
    %830 = vector.broadcast %cst_219 : f32 to vector<16x1xf32>
    %831 = arith.divf %829, %830 : vector<16x1xf32>
    %832 = vector.broadcast %824 : vector<16x1xf32> to vector<16x32xf32>
    %833 = arith.subf %818, %832 : vector<16x32xf32>
    %cst_220 = arith.constant 9.99999997E-7 : f32
    %834 = vector.broadcast %cst_220 : f32 to vector<16x1xf32>
    %835 = arith.addf %831, %834 : vector<16x1xf32>
    %836 = math.rsqrt %835 : vector<16x1xf32>
    %837 = vector.broadcast %836 : vector<16x1xf32> to vector<16x32xf32>
    %838 = arith.mulf %833, %837 : vector<16x32xf32>
    %839 = vector.broadcast %819 : vector<1x32xf32> to vector<16x32xf32>
    %840 = arith.mulf %838, %839 : vector<16x32xf32>
    %841 = vector.broadcast %820 : vector<1x32xf32> to vector<16x32xf32>
    %842 = arith.addf %840, %841 : vector<16x32xf32>
    %843 = arith.truncf %842 : vector<16x32xf32> to vector<16x32xbf16>
    %c768 = arith.constant 768 : index
    %c0_221 = arith.constant 0 : index
    %844 = vector.load %arg5[%c768, %c0_221] : memref<864x128xbf16, #tpu.memory_space<vmem>>, vector<32x64xbf16>
    %cst_222 = arith.constant dense<0.000000e+00> : vector<16x64xf32>
    %845 = tpu.matmul %843, %844, %cst_222 {dimension_numbers = #tpu.dot_dimension_numbers<[1], [0], [0], [1], [0, 0, 1, 1], [], []>} : vector<16x32xbf16>, vector<32x64xbf16>, vector<16x64xf32> -> vector<16x64xf32>
    %c368 = arith.constant 368 : index
    %c0_223 = arith.constant 0 : index
    %846 = vector.load %arg6[%c368, %c0_223] : memref<400x128xf32, #tpu.memory_space<vmem>>, vector<1x64xf32>
    %847 = vector.broadcast %846 : vector<1x64xf32> to vector<16x64xf32>
    %848 = arith.addf %845, %847 : vector<16x64xf32>
    %cst_224 = arith.constant 0.000000e+00 : f32
    %849 = vector.broadcast %cst_224 : f32 to vector<16x64xf32>
    %850 = arith.maximumf %848, %849 : vector<16x64xf32>
    %851 = arith.truncf %850 : vector<16x64xf32> to vector<16x64xbf16>
    %c800 = arith.constant 800 : index
    %c0_225 = arith.constant 0 : index
    %852 = vector.load %arg5[%c800, %c0_225] : memref<864x128xbf16, #tpu.memory_space<vmem>>, vector<64x32xbf16>
    %cst_226 = arith.constant dense<0.000000e+00> : vector<16x32xf32>
    %853 = tpu.matmul %851, %852, %cst_226 {dimension_numbers = #tpu.dot_dimension_numbers<[1], [0], [0], [1], [0, 0, 1, 1], [], []>} : vector<16x64xbf16>, vector<64x32xbf16>, vector<16x32xf32> -> vector<16x32xf32>
    %c376 = arith.constant 376 : index
    %c0_227 = arith.constant 0 : index
    %854 = vector.load %arg6[%c376, %c0_227] : memref<400x128xf32, #tpu.memory_space<vmem>>, vector<1x32xf32>
    %855 = vector.broadcast %854 : vector<1x32xf32> to vector<16x32xf32>
    %856 = arith.addf %853, %855 : vector<16x32xf32>
    %857 = arith.addf %818, %856 : vector<16x32xf32>
    %c384_228 = arith.constant 384 : index
    %c0_229 = arith.constant 0 : index
    %858 = vector.load %arg6[%c384_228, %c0_229] : memref<400x128xf32, #tpu.memory_space<vmem>>, vector<1x32xf32>
    %c392 = arith.constant 392 : index
    %c0_230 = arith.constant 0 : index
    %859 = vector.load %arg6[%c392, %c0_230] : memref<400x128xf32, #tpu.memory_space<vmem>>, vector<1x32xf32>
    %cst_231 = arith.constant dense<0.000000e+00> : vector<16xf32>
    %860 = vector.multi_reduction <add>, %857, %cst_231 [1] : vector<16x32xf32> to vector<16xf32>
    %861 = vector.shape_cast %860 : vector<16xf32> to vector<16x1xf32>
    %cst_232 = arith.constant 3.200000e+01 : f32
    %862 = vector.broadcast %cst_232 : f32 to vector<16x1xf32>
    %863 = arith.divf %861, %862 : vector<16x1xf32>
    %864 = vector.broadcast %863 : vector<16x1xf32> to vector<16x32xf32>
    %865 = arith.subf %857, %864 : vector<16x32xf32>
    %866 = arith.mulf %865, %865 : vector<16x32xf32>
    %cst_233 = arith.constant dense<0.000000e+00> : vector<16xf32>
    %867 = vector.multi_reduction <add>, %866, %cst_233 [1] : vector<16x32xf32> to vector<16xf32>
    %868 = vector.shape_cast %867 : vector<16xf32> to vector<16x1xf32>
    %cst_234 = arith.constant 3.200000e+01 : f32
    %869 = vector.broadcast %cst_234 : f32 to vector<16x1xf32>
    %870 = arith.divf %868, %869 : vector<16x1xf32>
    %871 = vector.broadcast %863 : vector<16x1xf32> to vector<16x32xf32>
    %872 = arith.subf %857, %871 : vector<16x32xf32>
    %cst_235 = arith.constant 9.99999997E-7 : f32
    %873 = vector.broadcast %cst_235 : f32 to vector<16x1xf32>
    %874 = arith.addf %870, %873 : vector<16x1xf32>
    %875 = math.rsqrt %874 : vector<16x1xf32>
    %876 = vector.broadcast %875 : vector<16x1xf32> to vector<16x32xf32>
    %877 = arith.mulf %872, %876 : vector<16x32xf32>
    %878 = vector.broadcast %858 : vector<1x32xf32> to vector<16x32xf32>
    %879 = arith.mulf %877, %878 : vector<16x32xf32>
    %880 = vector.broadcast %859 : vector<1x32xf32> to vector<16x32xf32>
    %881 = arith.addf %879, %880 : vector<16x32xf32>
    %c0_236 = arith.constant 0 : index
    %c0_237 = arith.constant 0 : index
    %882 = vector.load %arg7[%c0_236, %c0_237] : memref<16x32xf32, #tpu.memory_space<vmem>>, vector<16x32xf32>
    tpu.vector_store %arg7[%c0_236, %c0_237], %881 {strides = array<i32>} : memref<16x32xf32, #tpu.memory_space<vmem>>, vector<16x32xf32>,
    return
  }
}

</mosaic_0001>

<llo_original>
// kernel: transformer_forward.1
$region0: #{transformer_forward.1}
  #allocation0 [shape = 'u32[]', space=smem, size = 0x4, offset = 0x4, fixed_abs, tag = 'smem constant byte address 0x4 - core index']
  #allocation1 [shape = 'u32[144,128]{1,0:T(1,128)}', space=vmem, size = 0x12000, scoped, tag = 'internal scratch']
  %s0 = inlined_call_operand.vmem [shape: s32[16,1], index: 0, kind: input, shape index: {}]
  %s1 = inlined_call_operand.vmem [shape: s32[16,1], index: 1, kind: input, shape index: {}]
  %s2 = inlined_call_operand.vmem [shape: f32[8,8,8], index: 2, kind: input, shape index: {}, may-alias: {2,4}]
  %s3 = inlined_call_operand.vmem [shape: f32[8,8,8], index: 3, kind: input, shape index: {}]
  %s4 = inlined_call_operand.vmem [shape: f32[8,8,8], index: 4, kind: input, shape index: {}, may-alias: {2,4}]
  %s5 = inlined_call_operand.hbm [shape: bf16[864,128], index: 5, kind: input, shape index: {}]
  %s6 = inlined_call_operand.hbm [shape: f32[400,128], index: 6, kind: input, shape index: {}]
  %s7 = inlined_call_operand.hbm [shape: f32[16,32], index: 7, kind: output, shape index: {}]
  %s8 = sld [smem:[#allocation0]]
  $region46: #{transformer_forward.1} parent=0
    _
  %s10 = ssub.s32 1, %s8
  %s11 = scalar_select 0, %s10, %s8
  $region1: #{transformer_forward.1} parent=0
    #allocation2 [shape = 'u8[221184]{0}', space=vmem, size = 0x36000, scoped, tag = 'input window, operand 5, single buffered']
    #allocation3 [shape = 's32[1]{0}', space=sflag, size = 0x4, scoped, tag = 'scoped memory for transformer_forward.1']
    #allocation4 [shape = 's32[1]{0}', space=sflag, size = 0x4, scoped, tag = 'scoped memory for transformer_forward.1']
    #allocation5 [shape = 'u8[204800]{0}', space=vmem, size = 0x32000, scoped, tag = 'input window, operand 6, single buffered']
    #allocation6 [shape = 's32[1]{0}', space=sflag, size = 0x4, scoped, tag = 'scoped memory for transformer_forward.1']
    #allocation7 [shape = 'u8[8192]{0}', space=vmem, size = 0x2000, scoped, tag = 'output window, operand 0, single buffered']
    %12 = vsyncpa [#allocation3], 0
    %13 = vsyncpa [#allocation6], 0
    %14 = vsyncpa [#allocation4], 0
    // Predicated region
    $region2: #{transformer_forward.1} parent=1 // pred_check
      _
    $region3: #{transformer_forward.1} parent=1 // pred_check_branch
      %16 = sbr.rel (0) target = $region5
    $region4: #{transformer_forward.1} parent=1 // pred_region
      _
    $region5: #{transformer_forward.1} parent=1 // pred_fallthru
      _
    // Predicated region
    $region6: #{transformer_forward.1} parent=1 // pred_check
      _
    $region7: #{transformer_forward.1} parent=1 // pred_check_branch
      %18 = sbr.rel (0) target = $region9
    $region8: #{transformer_forward.1} parent=1 // pred_region
      _
    $region9: #{transformer_forward.1} parent=1 // pred_fallthru
      _
    // Predicated region
    $region10: #{transformer_forward.1} parent=1 // pred_check
      _
    $region11: #{transformer_forward.1} parent=1 // pred_check_branch
      %20 = sbr.rel (0) target = $region13
    $region12: #{transformer_forward.1} parent=1 // pred_region
      _
    $region13: #{transformer_forward.1} parent=1 // pred_fallthru
      _
    // Predicated region
    $region14: #{transformer_forward.1} parent=1 // pred_check
      _
    $region15: #{transformer_forward.1} parent=1 // pred_check_branch
      %22 = sbr.rel (0) target = $region17
    $region16: #{transformer_forward.1} parent=1 // pred_region
      _
    $region17: #{transformer_forward.1} parent=1 // pred_fallthru
      _
    // Predicated region
    $region18: #{transformer_forward.1} parent=1 // pred_check
      _
    $region19: #{transformer_forward.1} parent=1 // pred_check_branch
      %24 = sbr.rel (0) target = $region21
    $region20: #{transformer_forward.1} parent=1 // pred_region
      _
    $region21: #{transformer_forward.1} parent=1 // pred_fallthru
      _
    // Predicated region
    $region22: #{transformer_forward.1} parent=1 // pred_check
      _
    $region23: #{transformer_forward.1} parent=1 // pred_check_branch
      %26 = sbr.rel (0) target = $region25
    $region24: #{transformer_forward.1} parent=1 // pred_region
      %s28 = ssub.s32 6912, 6912
      %29 = vsyncadd [#allocation3], %s28
      %s30 = sshll.u32 [#allocation2], 4
      %s31 = int_to_ptr.vmem [resolvable:$true] %s30
      %36 = dma.hbm_to_vmem [thread:$0]  %s5, 6912, %s31, [#allocation3], 64, 64, 4
    $region25: #{transformer_forward.1} parent=1 // pred_fallthru
      _
    // Predicated region
    $region26: #{transformer_forward.1} parent=1 // pred_check
      _
    $region27: #{transformer_forward.1} parent=1 // pred_check_branch
      %38 = sbr.rel (0) target = $region29
    $region28: #{transformer_forward.1} parent=1 // pred_region
      %s40 = ssub.s32 6400, 6400
      %41 = vsyncadd [#allocation6], %s40
      %s42 = sshll.u32 [#allocation5], 4
      %s43 = int_to_ptr.vmem [resolvable:$true] %s42
      %48 = dma.hbm_to_vmem [thread:$0]  %s6, 6400, %s43, [#allocation6], 128, 128, 8
    $region29: #{transformer_forward.1} parent=1 // pred_fallthru
      _
    // Predicated region
    $region30: #{transformer_forward.1} parent=1 // pred_check
      _
    $region31: #{transformer_forward.1} parent=1 // pred_check_branch
      %50 = sbr.rel (0) target = $region33
    $region32: #{transformer_forward.1} parent=1 // pred_region
      %51 = dma.done [#allocation3], 6912
    $region33: #{transformer_forward.1} parent=1 // pred_fallthru
      _
    // Predicated region
    $region34: #{transformer_forward.1} parent=1 // pred_check
      _
    $region35: #{transformer_forward.1} parent=1 // pred_check_branch
      %53 = sbr.rel (0) target = $region37
    $region36: #{transformer_forward.1} parent=1 // pred_region
      %54 = dma.done [#allocation6], 6400
    $region37: #{transformer_forward.1} parent=1 // pred_fallthru
      _
    %v56 = vld [vmem:[%s0] sm:$0xff]
    %v57 = vld [vmem:[%s0 + $0x8] sm:$0xff]
    %v58 = vld [vmem:[%s1] sm:$0xff]
    %v59 = vld [vmem:[%s1 + $0x8] sm:$0xff]
    %v60 = vld [vmem:[%s2] sm:$0xff]
    %v61 = vld [vmem:[%s2 + $0x8] sm:$0xff]
    %v62 = vld [vmem:[%s2 + $0x10] sm:$0xff]
    %v63 = vld [vmem:[%s2 + $0x18] sm:$0xff]
    %v64 = vld [vmem:[%s2 + $0x20] sm:$0xff]
    %v65 = vld [vmem:[%s2 + $0x28] sm:$0xff]
    %v66 = vld [vmem:[%s2 + $0x30] sm:$0xff]
    %v67 = vld [vmem:[%s2 + $0x38] sm:$0xff]
    %v68 = vld [vmem:[%s3] sm:$0xff]
    %v69 = vld [vmem:[%s3 + $0x8] sm:$0xff]
    %v70 = vld [vmem:[%s3 + $0x10] sm:$0xff]
    %v71 = vld [vmem:[%s3 + $0x18] sm:$0xff]
    %v72 = vld [vmem:[%s3 + $0x20] sm:$0xff]
    %v73 = vld [vmem:[%s3 + $0x28] sm:$0xff]
    %v74 = vld [vmem:[%s3 + $0x30] sm:$0xff]
    %v75 = vld [vmem:[%s3 + $0x38] sm:$0xff]
    %v76 = vld [vmem:[%s4] sm:$0xff]
    %v77 = vld [vmem:[%s4 + $0x8] sm:$0xff]
    %v78 = vld [vmem:[%s4 + $0x10] sm:$0xff]
    %v79 = vld [vmem:[%s4 + $0x18] sm:$0xff]
    %v80 = vld [vmem:[%s4 + $0x20] sm:$0xff]
    %v81 = vld [vmem:[%s4 + $0x28] sm:$0xff]
    %v82 = vld [vmem:[%s4 + $0x30] sm:$0xff]
    %v83 = vld [vmem:[%s4 + $0x38] sm:$0xff]
    %v84 = vlaneseq
    %v85 = vand.u32 %v84, 127
    %86 = vset.pattern.permute.xlu0 0
    %87 = vperm.xlu0 %86, %v56
    %v88 = vpop.permute.xlu0 %87
    %89 = vset.pattern.permute.xlu0 0
    %90 = vperm.xlu0 %89, %v57
    %v91 = vpop.permute.xlu0 %90
    %vm92 = vcmp.eq.s32.totalorder %v88, %v85
    %vm93 = vcmp.eq.s32.totalorder %v91, %v85
    %v94 = vsel %vm92, 1.0, 0.0
    %v95 = vsel %vm93, 1.0, 0.0
    %v96 = vpack.c.bf16 %v95, %v94
    %v97 = vld [vmem:[#allocation2] sm:$0xf]
    %v98 = vld [vmem:[#allocation2 + $0x4] sm:$0xf]
    %v99 = vld [vmem:[#allocation5] sm:$0xff]
    %v100 = vld [vmem:[#allocation5 + $0x8] sm:$0xff]
    %v103 = vunpack.c.l.b16 %v97
    %v104 = vunpack.c.l.b16 %v98
    %v105 = vpack.c.b16 %v104, %v103
    %vm107 = vcmask 130048
    %v109 = vsel %vm107, %v96, 0
    %111 = vmatprep.subr.bf16.mxu0 0
    %112 = vmatpush1.bf16.msra.mxu0 %v105
    %113 = vmatprep.subr.bf16.mxu0 0
    %114 = vmatpush1.bf16.msra.mxu0 0
    %115 = vmatprep.subr.bf16.mxu0 0
    %116 = vmatpush1.bf16.msra.mxu0 0
    %117 = vmatprep.subr.bf16.mxu0 0
    %118 = vmatpush1.bf16.msra.mxu0 0
    %119 = vmatprep.subr.bf16.mxu0 0
    %120 = vmatpush1.bf16.msra.mxu0 0
    %121 = vmatprep.subr.bf16.mxu0 0
    %122 = vmatpush1.bf16.msra.mxu0 0
    %123 = vmatprep.subr.bf16.mxu0 0
    %124 = vmatpush1.bf16.msra.mxu0 0
    %125 = vmatprep.subr.bf16.mxu0 0
    %126 = vmatpush1.bf16.msra.mxu0 0
    %127 = vmatprep.subr.bf16.mxu0 0
    %128 = vmatpush1.bf16.msra.mxu0 0
    %129 = vmatprep.subr.bf16.mxu0 0
    %130 = vmatpush1.bf16.msra.mxu0 0
    %131 = vmatprep.subr.bf16.mxu0 0
    %132 = vmatpush1.bf16.msra.mxu0 0
    %133 = vmatprep.subr.bf16.mxu0 0
    %134 = vmatpush1.bf16.msra.mxu0 0
    %135 = vmatprep.subr.bf16.mxu0 0
    %136 = vmatpush1.bf16.msra.mxu0 0
    %137 = vmatprep.subr.bf16.mxu0 0
    %138 = vmatpush1.bf16.msra.mxu0 0
    %139 = vmatprep.subr.bf16.mxu0 0
    %140 = vmatpush1.bf16.msra.mxu0 0
    %141 = vmatprep.subr.bf16.mxu0 0
    %142 = vmatpush1.bf16.msra.mxu0 0
    %143 = vmatprep.mubr.bf16.mxu0 0
    %144 = vmatmul.mubr.bf16.gmra.mrb[0].mxu0 %v109
    %v145 = vpop.f32.mrb[0].mxu0
    %v146 = vadd.f32 %v99, %v145
    %v147 = vpop.f32.mrb[0].mxu0
    %v148 = vpop.f32.mrb[0].mxu0
    %v149 = vadd.f32 %v100, %v148
    %v150 = vpop.f32.mrb[0].mxu0
    %151 = vdwg.mxu0
    %v152 = vld [vmem:[#allocation5 + $0x30] sm:$0x1]
    %v153 = vld [vmem:[#allocation5 + $0x38] sm:$0x1]
    %vm154 = vcmask 261120
    %v155 = vsel %vm154, %v146, 0.0
    %156 = vadd.xlane.f32.xlu0 %v155
    %v157 = vpop.xlane.xlu0 %156
    %v158 = vsel %vm154, %v149, 0.0
    %159 = vadd.xlane.f32.xlu0 %v158
    %v160 = vpop.xlane.xlu0 %159
    %v161 = vrcp.pop 32.0
    %v162 = vmul.f32 %v157, %v161
    %v163 = vmul.f32 %v160, %v161
    %v164 = vsub.f32 %v146, %v162
    %v165 = vsub.f32 %v149, %v163
    %v166 = vmul.f32 %v164, %v164
    %v167 = vmul.f32 %v165, %v165
    %v168 = vsel %vm154, %v166, 0.0
    %169 = vadd.xlane.f32.xlu0 %v168
    %v170 = vpop.xlane.xlu0 %169
    %v171 = vsel %vm154, %v167, 0.0
    %172 = vadd.xlane.f32.xlu0 %v171
    %v173 = vpop.xlane.xlu0 %172
    %v174 = vmul.f32 %v170, %v161
    %v175 = vmul.f32 %v173, %v161
    %v176 = vadd.f32 %v174, 1e-06
    %v177 = vadd.f32 %v175, 1e-06
    %v178 = vrsqrt.pop %v176
    %v179 = vrsqrt.pop %v177
    %v180 = vmul.f32 %v164, %v178
    %v181 = vmul.f32 %v165, %v179
    %v182 = vlaneseq
    %v183 = vshrl.u32 %v182, 7
    %v184 = vsub.s32 0, %v183
    %v185 = vrot.slane %v152, %v184
    %v186 = vmul.f32 %v180, %v185
    %v187 = vmul.f32 %v181, %v185
    %v188 = vlaneseq
    %v189 = vshrl.u32 %v188, 7
    %v190 = vsub.s32 0, %v189
    %v191 = vrot.slane %v153, %v190
    %v192 = vadd.f32 %v186, %v191
    %v193 = vadd.f32 %v187, %v191
    %v194 = vpack.c.bf16 %v193, %v192
    %v195 = vld [vmem:[#allocation2 + $0x10] sm:$0xf]
    %v196 = vld [vmem:[#allocation2 + $0x14] sm:$0xf]
    %v197 = vld [vmem:[#allocation2 + $0x18] sm:$0xf]
    %v198 = vld [vmem:[#allocation2 + $0x1c] sm:$0xf]
    %v199 = vld [vmem:[#allocation5 + $0x20] sm:$0x1]
    %v200 = vlaneseq
    %v201 = vshrl.u32 %v200, 7
    %v202 = vsub.s32 0, %v201
    %v203 = vrot.slane %v199, %v202
    %v208 = vunpack.c.l.b16 %v195
    %v209 = vunpack.c.l.b16 %v196
    %v210 = vunpack.c.l.b16 %v197
    %v211 = vunpack.c.l.b16 %v198
    %v212 = vpack.c.b16 %v209, %v208
    %v213 = vpack.c.b16 %v211, %v210
    %v217 = vsel %vm154, %v194, 0
    %219 = vmatprep.subr.bf16.mxu0 0
    %220 = vmatpush1.bf16.msra.mxu0 %v212
    %221 = vmatprep.subr.bf16.mxu0 0
    %222 = vmatpush1.bf16.msra.mxu0 %v213
    %223 = vmatprep.subr.bf16.mxu0 0
    %224 = vmatpush1.bf16.msra.mxu0 0
    %225 = vmatprep.subr.bf16.mxu0 0
    %226 = vmatpush1.bf16.msra.mxu0 0
    %227 = vmatprep.subr.bf16.mxu0 0
    %228 = vmatpush1.bf16.msra.mxu0 0
    %229 = vmatprep.subr.bf16.mxu0 0
    %230 = vmatpush1.bf16.msra.mxu0 0
    %231 = vmatprep.subr.bf16.mxu0 0
    %232 = vmatpush1.bf16.msra.mxu0 0
    %233 = vmatprep.subr.bf16.mxu0 0
    %234 = vmatpush1.bf16.msra.mxu0 0
    %235 = vmatprep.subr.bf16.mxu0 0
    %236 = vmatpush1.bf16.msra.mxu0 0
    %237 = vmatprep.subr.bf16.mxu0 0
    %238 = vmatpush1.bf16.msra.mxu0 0
    %239 = vmatprep.subr.bf16.mxu0 0
    %240 = vmatpush1.bf16.msra.mxu0 0
    %241 = vmatprep.subr.bf16.mxu0 0
    %242 = vmatpush1.bf16.msra.mxu0 0
    %243 = vmatprep.subr.bf16.mxu0 0
    %244 = vmatpush1.bf16.msra.mxu0 0
    %245 = vmatprep.subr.bf16.mxu0 0
    %246 = vmatpush1.bf16.msra.mxu0 0
    %247 = vmatprep.subr.bf16.mxu0 0
    %248 = vmatpush1.bf16.msra.mxu0 0
    %249 = vmatprep.subr.bf16.mxu0 0
    %250 = vmatpush1.bf16.msra.mxu0 0
    %251 = vmatprep.mubr.bf16.mxu0 0
    %252 = vmatmul.mubr.bf16.gmra.mrb[0].mxu0 %v217
    %v253 = vpop.f32.mrb[0].mxu0
    %v254 = vadd.f32 %v203, %v253
    %v255 = vpop.f32.mrb[0].mxu0
    %v256 = vpop.f32.mrb[0].mxu0
    %v257 = vadd.f32 %v203, %v256
    %v258 = vpop.f32.mrb[0].mxu0
    %259 = vdwg.mxu0
    %v260 = vld [vmem:[#allocation2 + $0x20] sm:$0xf]
    %v261 = vld [vmem:[#allocation2 + $0x24] sm:$0xf]
    %v262 = vld [vmem:[#allocation2 + $0x28] sm:$0xf]
    %v263 = vld [vmem:[#allocation2 + $0x2c] sm:$0xf]
    %v264 = vld [vmem:[#allocation5 + $0x28] sm:$0x1]
    %267 = vrot.lane.b32.xlu0 %v254, 120
    %v268 = vpop.permute.xlu0 %267
    %269 = vrot.lane.b32.xlu0 %v257, 120
    %v270 = vpop.permute.xlu0 %269
    %273 = vrot.lane.b32.xlu0 %v254, 112
    %v274 = vpop.permute.xlu0 %273
    %275 = vrot.lane.b32.xlu0 %v257, 112
    %v276 = vpop.permute.xlu0 %275
    %279 = vrot.lane.b32.xlu0 %v254, 104
    %v280 = vpop.permute.xlu0 %279
    %281 = vrot.lane.b32.xlu0 %v257, 104
    %v282 = vpop.permute.xlu0 %281
    %v285 = vpack.c.bf16 %v254, %v254
    %v286 = vpack.c.bf16 %v257, %v257
    %v287 = vpack.c.bf16 %v268, %v268
    %v288 = vpack.c.bf16 %v270, %v270
    %v289 = vpack.c.bf16 %v274, %v274
    %v290 = vpack.c.bf16 %v276, %v276
    %v291 = vpack.c.bf16 %v280, %v280
    %v292 = vpack.c.bf16 %v282, %v282
    %294 = vrot.lane.b32.xlu0 %v285, 96
    %v295 = vpop.permute.xlu0 %294
    %vm296 = vcmask 64512
    %v298 = vsel %vm296, %v285, 0
    %v301 = vsel %vm296, %v295, 0
    %303 = vmatprep.subr.bf16.mxu0 0
    %304 = vmatpush1.bf16.xpose.msra.mxu0 %v301
    %305 = vmatprep.subr.bf16.mxu0 0
    %306 = vmatpush1.bf16.xpose.msra.mxu0 0
    %307 = vmatprep.subr.bf16.mxu0 0
    %308 = vmatpush1.bf16.xpose.msra.mxu0 0
    %309 = vmatprep.subr.bf16.mxu0 0
    %310 = vmatpush1.bf16.xpose.msra.mxu0 0
    %311 = vmatprep.subr.bf16.mxu0 0
    %312 = vmatpush1.bf16.xpose.msra.mxu0 0
    %313 = vmatprep.subr.bf16.mxu0 0
    %314 = vmatpush1.bf16.xpose.msra.mxu0 0
    %315 = vmatprep.subr.bf16.mxu0 0
    %316 = vmatpush1.bf16.xpose.msra.mxu0 0
    %317 = vmatprep.subr.bf16.mxu0 0
    %318 = vmatpush1.bf16.xpose.msra.mxu0 0
    %319 = vmatprep.subr.bf16.mxu0 0
    %320 = vmatpush1.bf16.xpose.msra.mxu0 0
    %321 = vmatprep.subr.bf16.mxu0 0
    %322 = vmatpush1.bf16.xpose.msra.mxu0 0
    %323 = vmatprep.subr.bf16.mxu0 0
    %324 = vmatpush1.bf16.xpose.msra.mxu0 0
    %325 = vmatprep.subr.bf16.mxu0 0
    %326 = vmatpush1.bf16.xpose.msra.mxu0 0
    %327 = vmatprep.subr.bf16.mxu0 0
    %328 = vmatpush1.bf16.xpose.msra.mxu0 0
    %329 = vmatprep.subr.bf16.mxu0 0
    %330 = vmatpush1.bf16.xpose.msra.mxu0 0
    %331 = vmatprep.subr.bf16.mxu0 0
    %332 = vmatpush1.bf16.xpose.msra.mxu0 0
    %333 = vmatprep.subr.bf16.mxu0 0
    %334 = vmatpush1.bf16.xpose.msra.mxu0 0
    %335 = vmatprep.mubr.bf16.mxu0 0
    %336 = vmatmul.mubr.bf16.gmra.mrb[0].mxu0 %v298
    %v337 = vpop.f32.mrb[0].mxu0
    %v338 = vadd.f32 0.0, %v337
    %v339 = vpop.f32.mrb[0].mxu0
    %v340 = vpop.f32.mrb[0].mxu0
    %v341 = vpop.f32.mrb[0].mxu0
    %342 = vdwg.mxu0
    %344 = vrot.lane.b32.xlu0 %v286, 96
    %v345 = vpop.permute.xlu0 %344
    %v347 = vsel %vm296, %v286, 0
    %v350 = vsel %vm296, %v345, 0
    %352 = vmatprep.subr.bf16.mxu0 0
    %353 = vmatpush1.bf16.xpose.msra.mxu0 %v350
    %354 = vmatprep.subr.bf16.mxu0 0
    %355 = vmatpush1.bf16.xpose.msra.mxu0 0
    %356 = vmatprep.subr.bf16.mxu0 0
    %357 = vmatpush1.bf16.xpose.msra.mxu0 0
    %358 = vmatprep.subr.bf16.mxu0 0
    %359 = vmatpush1.bf16.xpose.msra.mxu0 0
    %360 = vmatprep.subr.bf16.mxu0 0
    %361 = vmatpush1.bf16.xpose.msra.mxu0 0
    %362 = vmatprep.subr.bf16.mxu0 0
    %363 = vmatpush1.bf16.xpose.msra.mxu0 0
    %364 = vmatprep.subr.bf16.mxu0 0
    %365 = vmatpush1.bf16.xpose.msra.mxu0 0
    %366 = vmatprep.subr.bf16.mxu0 0
    %367 = vmatpush1.bf16.xpose.msra.mxu0 0
    %368 = vmatprep.subr.bf16.mxu0 0
    %369 = vmatpush1.bf16.xpose.msra.mxu0 0
    %370 = vmatprep.subr.bf16.mxu0 0
    %371 = vmatpush1.bf16.xpose.msra.mxu0 0
    %372 = vmatprep.subr.bf16.mxu0 0
    %373 = vmatpush1.bf16.xpose.msra.mxu0 0
    %374 = vmatprep.subr.bf16.mxu0 0
    %375 = vmatpush1.bf16.xpose.msra.mxu0 0
    %376 = vmatprep.subr.bf16.mxu0 0
    %377 = vmatpush1.bf16.xpose.msra.mxu0 0
    %378 = vmatprep.subr.bf16.mxu0 0
    %379 = vmatpush1.bf16.xpose.msra.mxu0 0
    %380 = vmatprep.subr.bf16.mxu0 0
    %381 = vmatpush1.bf16.xpose.msra.mxu0 0
    %382 = vmatprep.subr.bf16.mxu0 0
    %383 = vmatpush1.bf16.xpose.msra.mxu0 0
    %384 = vmatprep.mubr.bf16.mxu0 0
    %385 = vmatmul.mubr.bf16.gmra.mrb[0].mxu0 %v347
    %v386 = vpop.f32.mrb[0].mxu0
    %v387 = vadd.f32 0.0, %v386
    %v388 = vpop.f32.mrb[0].mxu0
    %v389 = vpop.f32.mrb[0].mxu0
    %v390 = vpop.f32.mrb[0].mxu0
    %391 = vdwg.mxu0
    %393 = vrot.lane.b32.xlu0 %v287, 96
    %v394 = vpop.permute.xlu0 %393
    %v396 = vsel %vm296, %v287, 0
    %v399 = vsel %vm296, %v394, 0
    %401 = vmatprep.subr.bf16.mxu0 0
    %402 = vmatpush1.bf16.xpose.msra.mxu0 %v399
    %403 = vmatprep.subr.bf16.mxu0 0
    %404 = vmatpush1.bf16.xpose.msra.mxu0 0
    %405 = vmatprep.subr.bf16.mxu0 0
    %406 = vmatpush1.bf16.xpose.msra.mxu0 0
    %407 = vmatprep.subr.bf16.mxu0 0
    %408 = vmatpush1.bf16.xpose.msra.mxu0 0
    %409 = vmatprep.subr.bf16.mxu0 0
    %410 = vmatpush1.bf16.xpose.msra.mxu0 0
    %411 = vmatprep.subr.bf16.mxu0 0
    %412 = vmatpush1.bf16.xpose.msra.mxu0 0
    %413 = vmatprep.subr.bf16.mxu0 0
    %414 = vmatpush1.bf16.xpose.msra.mxu0 0
    %415 = vmatprep.subr.bf16.mxu0 0
    %416 = vmatpush1.bf16.xpose.msra.mxu0 0
    %417 = vmatprep.subr.bf16.mxu0 0
    %418 = vmatpush1.bf16.xpose.msra.mxu0 0
    %419 = vmatprep.subr.bf16.mxu0 0
    %420 = vmatpush1.bf16.xpose.msra.mxu0 0
    %421 = vmatprep.subr.bf16.mxu0 0
    %422 = vmatpush1.bf16.xpose.msra.mxu0 0
    %423 = vmatprep.subr.bf16.mxu0 0
    %424 = vmatpush1.bf16.xpose.msra.mxu0 0
    %425 = vmatprep.subr.bf16.mxu0 0
    %426 = vmatpush1.bf16.xpose.msra.mxu0 0
    %427 = vmatprep.subr.bf16.mxu0 0
    %428 = vmatpush1.bf16.xpose.msra.mxu0 0
    %429 = vmatprep.subr.bf16.mxu0 0
    %430 = vmatpush1.bf16.xpose.msra.mxu0 0
    %431 = vmatprep.subr.bf16.mxu0 0
    %432 = vmatpush1.bf16.xpose.msra.mxu0 0
    %433 = vmatprep.mubr.bf16.mxu0 0
    %434 = vmatmul.mubr.bf16.gmra.mrb[0].mxu0 %v396
    %v435 = vpop.f32.mrb[0].mxu0
    %v436 = vadd.f32 0.0, %v435
    %v437 = vpop.f32.mrb[0].mxu0
    %v438 = vpop.f32.mrb[0].mxu0
    %v439 = vpop.f32.mrb[0].mxu0
    %440 = vdwg.mxu0
    %442 = vrot.lane.b32.xlu0 %v288, 96
    %v443 = vpop.permute.xlu0 %442
    %v445 = vsel %vm296, %v288, 0
    %v448 = vsel %vm296, %v443, 0
    %450 = vmatprep.subr.bf16.mxu0 0
    %451 = vmatpush1.bf16.xpose.msra.mxu0 %v448
    %452 = vmatprep.subr.bf16.mxu0 0
    %453 = vmatpush1.bf16.xpose.msra.mxu0 0
    %454 = vmatprep.subr.bf16.mxu0 0
    %455 = vmatpush1.bf16.xpose.msra.mxu0 0
    %456 = vmatprep.subr.bf16.mxu0 0
    %457 = vmatpush1.bf16.xpose.msra.mxu0 0
    %458 = vmatprep.subr.bf16.mxu0 0
    %459 = vmatpush1.bf16.xpose.msra.mxu0 0
    %460 = vmatprep.subr.bf16.mxu0 0
    %461 = vmatpush1.bf16.xpose.msra.mxu0 0
    %462 = vmatprep.subr.bf16.mxu0 0
    %463 = vmatpush1.bf16.xpose.msra.mxu0 0
    %464 = vmatprep.subr.bf16.mxu0 0
    %465 = vmatpush1.bf16.xpose.msra.mxu0 0
    %466 = vmatprep.subr.bf16.mxu0 0
    %467 = vmatpush1.bf16.xpose.msra.mxu0 0
    %468 = vmatprep.subr.bf16.mxu0 0
    %469 = vmatpush1.bf16.xpose.msra.mxu0 0
    %470 = vmatprep.subr.bf16.mxu0 0
    %471 = vmatpush1.bf16.xpose.msra.mxu0 0
    %472 = vmatprep.subr.bf16.mxu0 0
    %473 = vmatpush1.bf16.xpose.msra.mxu0 0
    %474 = vmatprep.subr.bf16.mxu0 0
    %475 = vmatpush1.bf16.xpose.msra.mxu0 0
    %476 = vmatprep.subr.bf16.mxu0 0
    %477 = vmatpush1.bf16.xpose.msra.mxu0 0
    %478 = vmatprep.subr.bf16.mxu0 0
    %479 = vmatpush1.bf16.xpose.msra.mxu0 0
    %480 = vmatprep.subr.bf16.mxu0 0
    %481 = vmatpush1.bf16.xpose.msra.mxu0 0
    %482 = vmatprep.mubr.bf16.mxu0 0
    %483 = vmatmul.mubr.bf16.gmra.mrb[0].mxu0 %v445
    %v484 = vpop.f32.mrb[0].mxu0
    %v485 = vadd.f32 0.0, %v484
    %v486 = vpop.f32.mrb[0].mxu0
    %v487 = vpop.f32.mrb[0].mxu0
    %v488 = vpop.f32.mrb[0].mxu0
    %489 = vdwg.mxu0
    %491 = vrot.lane.b32.xlu0 %v289, 96
    %v492 = vpop.permute.xlu0 %491
    %v494 = vsel %vm296, %v289, 0
    %v497 = vsel %vm296, %v492, 0
    %499 = vmatprep.subr.bf16.mxu0 0
    %500 = vmatpush1.bf16.xpose.msra.mxu0 %v497
    %501 = vmatprep.subr.bf16.mxu0 0
    %502 = vmatpush1.bf16.xpose.msra.mxu0 0
    %503 = vmatprep.subr.bf16.mxu0 0
    %504 = vmatpush1.bf16.xpose.msra.mxu0 0
    %505 = vmatprep.subr.bf16.mxu0 0
    %506 = vmatpush1.bf16.xpose.msra.mxu0 0
    %507 = vmatprep.subr.bf16.mxu0 0
    %508 = vmatpush1.bf16.xpose.msra.mxu0 0
    %509 = vmatprep.subr.bf16.mxu0 0
    %510 = vmatpush1.bf16.xpose.msra.mxu0 0
    %511 = vmatprep.subr.bf16.mxu0 0
    %512 = vmatpush1.bf16.xpose.msra.mxu0 0
    %513 = vmatprep.subr.bf16.mxu0 0
    %514 = vmatpush1.bf16.xpose.msra.mxu0 0
    %515 = vmatprep.subr.bf16.mxu0 0
    %516 = vmatpush1.bf16.xpose.msra.mxu0 0
    %517 = vmatprep.subr.bf16.mxu0 0
    %518 = vmatpush1.bf16.xpose.msra.mxu0 0
    %519 = vmatprep.subr.bf16.mxu0 0
    %520 = vmatpush1.bf16.xpose.msra.mxu0 0
    %521 = vmatprep.subr.bf16.mxu0 0
    %522 = vmatpush1.bf16.xpose.msra.mxu0 0
    %523 = vmatprep.subr.bf16.mxu0 0
    %524 = vmatpush1.bf16.xpose.msra.mxu0 0
    %525 = vmatprep.subr.bf16.mxu0 0
    %526 = vmatpush1.bf16.xpose.msra.mxu0 0
    %527 = vmatprep.subr.bf16.mxu0 0
    %528 = vmatpush1.bf16.xpose.msra.mxu0 0
    %529 = vmatprep.subr.bf16.mxu0 0
    %530 = vmatpush1.bf16.xpose.msra.mxu0 0
    %531 = vmatprep.mubr.bf16.mxu0 0
    %532 = vmatmul.mubr.bf16.gmra.mrb[0].mxu0 %v494
    %v533 = vpop.f32.mrb[0].mxu0
    %v534 = vadd.f32 0.0, %v533
    %v535 = vpop.f32.mrb[0].mxu0
    %v536 = vpop.f32.mrb[0].mxu0
    %v537 = vpop.f32.mrb[0].mxu0
    %538 = vdwg.mxu0
    %540 = vrot.lane.b32.xlu0 %v290, 96
    %v541 = vpop.permute.xlu0 %540
    %v543 = vsel %vm296, %v290, 0
    %v546 = vsel %vm296, %v541, 0
    %548 = vmatprep.subr.bf16.mxu0 0
    %549 = vmatpush1.bf16.xpose.msra.mxu0 %v546
    %550 = vmatprep.subr.bf16.mxu0 0
    %551 = vmatpush1.bf16.xpose.msra.mxu0 0
    %552 = vmatprep.subr.bf16.mxu0 0
    %553 = vmatpush1.bf16.xpose.msra.mxu0 0
    %554 = vmatprep.subr.bf16.mxu0 0
    %555 = vmatpush1.bf16.xpose.msra.mxu0 0
    %556 = vmatprep.subr.bf16.mxu0 0
    %557 = vmatpush1.bf16.xpose.msra.mxu0 0
    %558 = vmatprep.subr.bf16.mxu0 0
    %559 = vmatpush1.bf16.xpose.msra.mxu0 0
    %560 = vmatprep.subr.bf16.mxu0 0
    %561 = vmatpush1.bf16.xpose.msra.mxu0 0
    %562 = vmatprep.subr.bf16.mxu0 0
    %563 = vmatpush1.bf16.xpose.msra.mxu0 0
    %564 = vmatprep.subr.bf16.mxu0 0
    %565 = vmatpush1.bf16.xpose.msra.mxu0 0
    %566 = vmatprep.subr.bf16.mxu0 0
    %567 = vmatpush1.bf16.xpose.msra.mxu0 0
    %568 = vmatprep.subr.bf16.mxu0 0
    %569 = vmatpush1.bf16.xpose.msra.mxu0 0
    %570 = vmatprep.subr.bf16.mxu0 0
    %571 = vmatpush1.bf16.xpose.msra.mxu0 0
    %572 = vmatprep.subr.bf16.mxu0 0
    %573 = vmatpush1.bf16.xpose.msra.mxu0 0
    %574 = vmatprep.subr.bf16.mxu0 0
    %575 = vmatpush1.bf16.xpose.msra.mxu0 0
    %576 = vmatprep.subr.bf16.mxu0 0
    %577 = vmatpush1.bf16.xpose.msra.mxu0 0
    %578 = vmatprep.subr.bf16.mxu0 0
    %579 = vmatpush1.bf16.xpose.msra.mxu0 0
    %580 = vmatprep.mubr.bf16.mxu0 0
    %581 = vmatmul.mubr.bf16.gmra.mrb[0].mxu0 %v543
    %v582 = vpop.f32.mrb[0].mxu0
    %v583 = vadd.f32 0.0, %v582
    %v584 = vpop.f32.mrb[0].mxu0
    %v585 = vpop.f32.mrb[0].mxu0
    %v586 = vpop.f32.mrb[0].mxu0
    %587 = vdwg.mxu0
    %589 = vrot.lane.b32.xlu0 %v291, 96
    %v590 = vpop.permute.xlu0 %589
    %v592 = vsel %vm296, %v291, 0
    %v595 = vsel %vm296, %v590, 0
    %597 = vmatprep.subr.bf16.mxu0 0
    %598 = vmatpush1.bf16.xpose.msra.mxu0 %v595
    %599 = vmatprep.subr.bf16.mxu0 0
    %600 = vmatpush1.bf16.xpose.msra.mxu0 0
    %601 = vmatprep.subr.bf16.mxu0 0
    %602 = vmatpush1.bf16.xpose.msra.mxu0 0
    %603 = vmatprep.subr.bf16.mxu0 0
    %604 = vmatpush1.bf16.xpose.msra.mxu0 0
    %605 = vmatprep.subr.bf16.mxu0 0
    %606 = vmatpush1.bf16.xpose.msra.mxu0 0
    %607 = vmatprep.subr.bf16.mxu0 0
    %608 = vmatpush1.bf16.xpose.msra.mxu0 0
    %609 = vmatprep.subr.bf16.mxu0 0
    %610 = vmatpush1.bf16.xpose.msra.mxu0 0
    %611 = vmatprep.subr.bf16.mxu0 0
    %612 = vmatpush1.bf16.xpose.msra.mxu0 0
    %613 = vmatprep.subr.bf16.mxu0 0
    %614 = vmatpush1.bf16.xpose.msra.mxu0 0
    %615 = vmatprep.subr.bf16.mxu0 0
    %616 = vmatpush1.bf16.xpose.msra.mxu0 0
    %617 = vmatprep.subr.bf16.mxu0 0
    %618 = vmatpush1.bf16.xpose.msra.mxu0 0
    %619 = vmatprep.subr.bf16.mxu0 0
    %620 = vmatpush1.bf16.xpose.msra.mxu0 0
    %621 = vmatprep.subr.bf16.mxu0 0
    %622 = vmatpush1.bf16.xpose.msra.mxu0 0
    %623 = vmatprep.subr.bf16.mxu0 0
    %624 = vmatpush1.bf16.xpose.msra.mxu0 0
    %625 = vmatprep.subr.bf16.mxu0 0
    %626 = vmatpush1.bf16.xpose.msra.mxu0 0
    %627 = vmatprep.subr.bf16.mxu0 0
    %628 = vmatpush1.bf16.xpose.msra.mxu0 0
    %629 = vmatprep.mubr.bf16.mxu0 0
    %630 = vmatmul.mubr.bf16.gmra.mrb[0].mxu0 %v592
    %v631 = vpop.f32.mrb[0].mxu0
    %v632 = vadd.f32 0.0, %v631
    %v633 = vpop.f32.mrb[0].mxu0
    %v634 = vpop.f32.mrb[0].mxu0
    %v635 = vpop.f32.mrb[0].mxu0
    %636 = vdwg.mxu0
    %638 = vrot.lane.b32.xlu0 %v292, 96
    %v639 = vpop.permute.xlu0 %638
    %v641 = vsel %vm296, %v292, 0
    %v644 = vsel %vm296, %v639, 0
    %646 = vmatprep.subr.bf16.mxu0 0
    %647 = vmatpush1.bf16.xpose.msra.mxu0 %v644
    %648 = vmatprep.subr.bf16.mxu0 0
    %649 = vmatpush1.bf16.xpose.msra.mxu0 0
    %650 = vmatprep.subr.bf16.mxu0 0
    %651 = vmatpush1.bf16.xpose.msra.mxu0 0
    %652 = vmatprep.subr.bf16.mxu0 0
    %653 = vmatpush1.bf16.xpose.msra.mxu0 0
    %654 = vmatprep.subr.bf16.mxu0 0
    %655 = vmatpush1.bf16.xpose.msra.mxu0 0
    %656 = vmatprep.subr.bf16.mxu0 0
    %657 = vmatpush1.bf16.xpose.msra.mxu0 0
    %658 = vmatprep.subr.bf16.mxu0 0
    %659 = vmatpush1.bf16.xpose.msra.mxu0 0
    %660 = vmatprep.subr.bf16.mxu0 0
    %661 = vmatpush1.bf16.xpose.msra.mxu0 0
    %662 = vmatprep.subr.bf16.mxu0 0
    %663 = vmatpush1.bf16.xpose.msra.mxu0 0
    %664 = vmatprep.subr.bf16.mxu0 0
    %665 = vmatpush1.bf16.xpose.msra.mxu0 0
    %666 = vmatprep.subr.bf16.mxu0 0
    %667 = vmatpush1.bf16.xpose.msra.mxu0 0
    %668 = vmatprep.subr.bf16.mxu0 0
    %669 = vmatpush1.bf16.xpose.msra.mxu0 0
    %670 = vmatprep.subr.bf16.mxu0 0
    %671 = vmatpush1.bf16.xpose.msra.mxu0 0
    %672 = vmatprep.subr.bf16.mxu0 0
    %673 = vmatpush1.bf16.xpose.msra.mxu0 0
    %674 = vmatprep.subr.bf16.mxu0 0
    %675 = vmatpush1.bf16.xpose.msra.mxu0 0
    %676 = vmatprep.subr.bf16.mxu0 0
    %677 = vmatpush1.bf16.xpose.msra.mxu0 0
    %678 = vmatprep.mubr.bf16.mxu0 0
    %679 = vmatmul.mubr.bf16.gmra.mrb[0].mxu0 %v641
    %v680 = vpop.f32.mrb[0].mxu0
    %v681 = vadd.f32 0.0, %v680
    %v682 = vpop.f32.mrb[0].mxu0
    %v683 = vpop.f32.mrb[0].mxu0
    %v684 = vpop.f32.mrb[0].mxu0
    %685 = vdwg.mxu0
    %v686 = vmul.f32 %v338, 0.35355338
    %v687 = vmul.f32 %v387, 0.35355338
    %v688 = vmul.f32 %v436, 0.35355338
    %v689 = vmul.f32 %v485, 0.35355338
    %v690 = vmul.f32 %v534, 0.35355338
    %v691 = vmul.f32 %v583, 0.35355338
    %v692 = vmul.f32 %v632, 0.35355338
    %v693 = vmul.f32 %v681, 0.35355338
    %v694 = vadd.f32 %v686, %v60
    %v695 = vadd.f32 %v687, %v61
    %v696 = vadd.f32 %v688, %v62
    %v697 = vadd.f32 %v689, %v63
    %v698 = vadd.f32 %v690, %v64
    %v699 = vadd.f32 %v691, %v65
    %v700 = vadd.f32 %v692, %v66
    %v701 = vadd.f32 %v693, %v67
    %v702 = vsel %vm296, %v694, -inf
    %703 = vmax.xlane.f32.xlu0 %v702
    %v704 = vpop.xlane.xlu0 %703
    %v705 = vsel %vm296, %v695, -inf
    %706 = vmax.xlane.f32.xlu0 %v705
    %v707 = vpop.xlane.xlu0 %706
    %v708 = vsel %vm296, %v696, -inf
    %709 = vmax.xlane.f32.xlu0 %v708
    %v710 = vpop.xlane.xlu0 %709
    %v711 = vsel %vm296, %v697, -inf
    %712 = vmax.xlane.f32.xlu0 %v711
    %v713 = vpop.xlane.xlu0 %712
    %v714 = vsel %vm296, %v698, -inf
    %715 = vmax.xlane.f32.xlu0 %v714
    %v716 = vpop.xlane.xlu0 %715
    %v717 = vsel %vm296, %v699, -inf
    %718 = vmax.xlane.f32.xlu0 %v717
    %v719 = vpop.xlane.xlu0 %718
    %v720 = vsel %vm296, %v700, -inf
    %721 = vmax.xlane.f32.xlu0 %v720
    %v722 = vpop.xlane.xlu0 %721
    %v723 = vsel %vm296, %v701, -inf
    %724 = vmax.xlane.f32.xlu0 %v723
    %v725 = vpop.xlane.xlu0 %724
    %v726 = vsub.f32 %v694, %v704
    %v727 = vsub.f32 %v695, %v707
    %v728 = vsub.f32 %v696, %v710
    %v729 = vsub.f32 %v697, %v713
    %v730 = vsub.f32 %v698, %v716
    %v731 = vsub.f32 %v699, %v719
    %v732 = vsub.f32 %v700, %v722
    %v733 = vsub.f32 %v701, %v725
    %v734 = vmul.f32 %v726, 1.442695
    %v735 = vpow.pop %v734
    %v736 = vmul.f32 %v727, 1.442695
    %v737 = vpow.pop %v736
    %v738 = vmul.f32 %v728, 1.442695
    %v739 = vpow.pop %v738
    %v740 = vmul.f32 %v729, 1.442695
    %v741 = vpow.pop %v740
    %v742 = vmul.f32 %v730, 1.442695
    %v743 = vpow.pop %v742
    %v744 = vmul.f32 %v731, 1.442695
    %v745 = vpow.pop %v744
    %v746 = vmul.f32 %v732, 1.442695
    %v747 = vpow.pop %v746
    %v748 = vmul.f32 %v733, 1.442695
    %v749 = vpow.pop %v748
    %v750 = vsel %vm296, %v735, 0.0
    %751 = vadd.xlane.f32.xlu0 %v750
    %v752 = vpop.xlane.xlu0 %751
    %v753 = vsel %vm296, %v737, 0.0
    %754 = vadd.xlane.f32.xlu0 %v753
    %v755 = vpop.xlane.xlu0 %754
    %v756 = vsel %vm296, %v739, 0.0
    %757 = vadd.xlane.f32.xlu0 %v756
    %v758 = vpop.xlane.xlu0 %757
    %v759 = vsel %vm296, %v741, 0.0
    %760 = vadd.xlane.f32.xlu0 %v759
    %v761 = vpop.xlane.xlu0 %760
    %v762 = vsel %vm296, %v743, 0.0
    %763 = vadd.xlane.f32.xlu0 %v762
    %v764 = vpop.xlane.xlu0 %763
    %v765 = vsel %vm296, %v745, 0.0
    %766 = vadd.xlane.f32.xlu0 %v765
    %v767 = vpop.xlane.xlu0 %766
    %v768 = vsel %vm296, %v747, 0.0
    %769 = vadd.xlane.f32.xlu0 %v768
    %v770 = vpop.xlane.xlu0 %769
    %v771 = vsel %vm296, %v749, 0.0
    %772 = vadd.xlane.f32.xlu0 %v771
    %v773 = vpop.xlane.xlu0 %772
    %v774 = vrcp.pop %v752
    %v775 = vrcp.pop %v755
    %v776 = vrcp.pop %v758
    %v777 = vrcp.pop %v761
    %v778 = vrcp.pop %v764
    %v779 = vrcp.pop %v767
    %v780 = vrcp.pop %v770
    %v781 = vrcp.pop %v773
    %v782 = vmul.f32 %v735, %v774
    %v783 = vmul.f32 %v737, %v775
    %v784 = vmul.f32 %v739, %v776
    %v785 = vmul.f32 %v741, %v777
    %v786 = vmul.f32 %v743, %v778
    %v787 = vmul.f32 %v745, %v779
    %v788 = vmul.f32 %v747, %v780
    %v789 = vmul.f32 %v749, %v781
    %v790 = vpack.c.bf16 %v782, %v782
    %v791 = vpack.c.bf16 %v783, %v783
    %v792 = vpack.c.bf16 %v784, %v784
    %v793 = vpack.c.bf16 %v785, %v785
    %v794 = vpack.c.bf16 %v786, %v786
    %v795 = vpack.c.bf16 %v787, %v787
    %v796 = vpack.c.bf16 %v788, %v788
    %v797 = vpack.c.bf16 %v789, %v789
    %798 = vrot.lane.b32.xlu0 %v285, 64
    %v799 = vpop.permute.xlu0 %798
    %v801 = vsel %vm296, %v790, 0
    %vm803 = vcmask 1043456
    %v805 = vsel %vm803, %v799, 0
    %807 = vmatprep.subr.bf16.mxu0 0
    %808 = vmatpush1.bf16.msra.mxu0 %v805
    %809 = vmatprep.subr.bf16.mxu0 0
    %810 = vmatpush1.bf16.msra.mxu0 0
    %811 = vmatprep.subr.bf16.mxu0 0
    %812 = vmatpush1.bf16.msra.mxu0 0
    %813 = vmatprep.subr.bf16.mxu0 0
    %814 = vmatpush1.bf16.msra.mxu0 0
    %815 = vmatprep.subr.bf16.mxu0 0
    %816 = vmatpush1.bf16.msra.mxu0 0
    %817 = vmatprep.subr.bf16.mxu0 0
    %818 = vmatpush1.bf16.msra.mxu0 0
    %819 = vmatprep.subr.bf16.mxu0 0
    %820 = vmatpush1.bf16.msra.mxu0 0
    %821 = vmatprep.subr.bf16.mxu0 0
    %822 = vmatpush1.bf16.msra.mxu0 0
    %823 = vmatprep.subr.bf16.mxu0 0
    %824 = vmatpush1.bf16.msra.mxu0 0
    %825 = vmatprep.subr.bf16.mxu0 0
    %826 = vmatpush1.bf16.msra.mxu0 0
    %827 = vmatprep.subr.bf16.mxu0 0
    %828 = vmatpush1.bf16.msra.mxu0 0
    %829 = vmatprep.subr.bf16.mxu0 0
    %830 = vmatpush1.bf16.msra.mxu0 0
    %831 = vmatprep.subr.bf16.mxu0 0
    %832 = vmatpush1.bf16.msra.mxu0 0
    %833 = vmatprep.subr.bf16.mxu0 0
    %834 = vmatpush1.bf16.msra.mxu0 0
    %835 = vmatprep.subr.bf16.mxu0 0
    %836 = vmatpush1.bf16.msra.mxu0 0
    %837 = vmatprep.subr.bf16.mxu0 0
    %838 = vmatpush1.bf16.msra.mxu0 0
    %839 = vmatprep.mubr.bf16.mxu0 0
    %840 = vmatmul.mubr.bf16.gmra.mrb[0].mxu0 %v801
    %v841 = vpop.f32.mrb[0].mxu0
    %v842 = vadd.f32 0.0, %v841
    %v843 = vpop.f32.mrb[0].mxu0
    %v844 = vpop.f32.mrb[0].mxu0
    %v845 = vpop.f32.mrb[0].mxu0
    %846 = vdwg.mxu0
    %847 = vrot.lane.b32.xlu0 %v286, 64
    %v848 = vpop.permute.xlu0 %847
    %v850 = vsel %vm296, %v791, 0
    %v853 = vsel %vm803, %v848, 0
    %855 = vmatprep.subr.bf16.mxu0 0
    %856 = vmatpush1.bf16.msra.mxu0 %v853
    %857 = vmatprep.subr.bf16.mxu0 0
    %858 = vmatpush1.bf16.msra.mxu0 0
    %859 = vmatprep.subr.bf16.mxu0 0
    %860 = vmatpush1.bf16.msra.mxu0 0
    %861 = vmatprep.subr.bf16.mxu0 0
    %862 = vmatpush1.bf16.msra.mxu0 0
    %863 = vmatprep.subr.bf16.mxu0 0
    %864 = vmatpush1.bf16.msra.mxu0 0
    %865 = vmatprep.subr.bf16.mxu0 0
    %866 = vmatpush1.bf16.msra.mxu0 0
    %867 = vmatprep.subr.bf16.mxu0 0
    %868 = vmatpush1.bf16.msra.mxu0 0
    %869 = vmatprep.subr.bf16.mxu0 0
    %870 = vmatpush1.bf16.msra.mxu0 0
    %871 = vmatprep.subr.bf16.mxu0 0
    %872 = vmatpush1.bf16.msra.mxu0 0
    %873 = vmatprep.subr.bf16.mxu0 0
    %874 = vmatpush1.bf16.msra.mxu0 0
    %875 = vmatprep.subr.bf16.mxu0 0
    %876 = vmatpush1.bf16.msra.mxu0 0
    %877 = vmatprep.subr.bf16.mxu0 0
    %878 = vmatpush1.bf16.msra.mxu0 0
    %879 = vmatprep.subr.bf16.mxu0 0
    %880 = vmatpush1.bf16.msra.mxu0 0
    %881 = vmatprep.subr.bf16.mxu0 0
    %882 = vmatpush1.bf16.msra.mxu0 0
    %883 = vmatprep.subr.bf16.mxu0 0
    %884 = vmatpush1.bf16.msra.mxu0 0
    %885 = vmatprep.subr.bf16.mxu0 0
    %886 = vmatpush1.bf16.msra.mxu0 0
    %887 = vmatprep.mubr.bf16.mxu0 0
    %888 = vmatmul.mubr.bf16.gmra.mrb[0].mxu0 %v850
    %v889 = vpop.f32.mrb[0].mxu0
    %v890 = vadd.f32 0.0, %v889
    %v891 = vpop.f32.mrb[0].mxu0
    %v892 = vpop.f32.mrb[0].mxu0
    %v893 = vpop.f32.mrb[0].mxu0
    %894 = vdwg.mxu0
    %895 = vrot.lane.b32.xlu0 %v287, 64
    %v896 = vpop.permute.xlu0 %895
    %v898 = vsel %vm296, %v792, 0
    %v901 = vsel %vm803, %v896, 0
    %903 = vmatprep.subr.bf16.mxu0 0
    %904 = vmatpush1.bf16.msra.mxu0 %v901
    %905 = vmatprep.subr.bf16.mxu0 0
    %906 = vmatpush1.bf16.msra.mxu0 0
    %907 = vmatprep.subr.bf16.mxu0 0
    %908 = vmatpush1.bf16.msra.mxu0 0
    %909 = vmatprep.subr.bf16.mxu0 0
    %910 = vmatpush1.bf16.msra.mxu0 0
    %911 = vmatprep.subr.bf16.mxu0 0
    %912 = vmatpush1.bf16.msra.mxu0 0
    %913 = vmatprep.subr.bf16.mxu0 0
    %914 = vmatpush1.bf16.msra.mxu0 0
    %915 = vmatprep.subr.bf16.mxu0 0
    %916 = vmatpush1.bf16.msra.mxu0 0
    %917 = vmatprep.subr.bf16.mxu0 0
    %918 = vmatpush1.bf16.msra.mxu0 0
    %919 = vmatprep.subr.bf16.mxu0 0
    %920 = vmatpush1.bf16.msra.mxu0 0
    %921 = vmatprep.subr.bf16.mxu0 0
    %922 = vmatpush1.bf16.msra.mxu0 0
    %923 = vmatprep.subr.bf16.mxu0 0
    %924 = vmatpush1.bf16.msra.mxu0 0
    %925 = vmatprep.subr.bf16.mxu0 0
    %926 = vmatpush1.bf16.msra.mxu0 0
    %927 = vmatprep.subr.bf16.mxu0 0
    %928 = vmatpush1.bf16.msra.mxu0 0
    %929 = vmatprep.subr.bf16.mxu0 0
    %930 = vmatpush1.bf16.msra.mxu0 0
    %931 = vmatprep.subr.bf16.mxu0 0
    %932 = vmatpush1.bf16.msra.mxu0 0
    %933 = vmatprep.subr.bf16.mxu0 0
    %934 = vmatpush1.bf16.msra.mxu0 0
    %935 = vmatprep.mubr.bf16.mxu0 0
    %936 = vmatmul.mubr.bf16.gmra.mrb[0].mxu0 %v898
    %v937 = vpop.f32.mrb[0].mxu0
    %v938 = vadd.f32 0.0, %v937
    %v939 = vpop.f32.mrb[0].mxu0
    %v940 = vpop.f32.mrb[0].mxu0
    %v941 = vpop.f32.mrb[0].mxu0
    %942 = vdwg.mxu0
    %943 = vrot.lane.b32.xlu0 %v288, 64
    %v944 = vpop.permute.xlu0 %943
    %v946 = vsel %vm296, %v793, 0
    %v949 = vsel %vm803, %v944, 0
    %951 = vmatprep.subr.bf16.mxu0 0
    %952 = vmatpush1.bf16.msra.mxu0 %v949
    %953 = vmatprep.subr.bf16.mxu0 0
    %954 = vmatpush1.bf16.msra.mxu0 0
    %955 = vmatprep.subr.bf16.mxu0 0
    %956 = vmatpush1.bf16.msra.mxu0 0
    %957 = vmatprep.subr.bf16.mxu0 0
    %958 = vmatpush1.bf16.msra.mxu0 0
    %959 = vmatprep.subr.bf16.mxu0 0
    %960 = vmatpush1.bf16.msra.mxu0 0
    %961 = vmatprep.subr.bf16.mxu0 0
    %962 = vmatpush1.bf16.msra.mxu0 0
    %963 = vmatprep.subr.bf16.mxu0 0
    %964 = vmatpush1.bf16.msra.mxu0 0
    %965 = vmatprep.subr.bf16.mxu0 0
    %966 = vmatpush1.bf16.msra.mxu0 0
    %967 = vmatprep.subr.bf16.mxu0 0
    %968 = vmatpush1.bf16.msra.mxu0 0
    %969 = vmatprep.subr.bf16.mxu0 0
    %970 = vmatpush1.bf16.msra.mxu0 0
    %971 = vmatprep.subr.bf16.mxu0 0
    %972 = vmatpush1.bf16.msra.mxu0 0
    %973 = vmatprep.subr.bf16.mxu0 0
    %974 = vmatpush1.bf16.msra.mxu0 0
    %975 = vmatprep.subr.bf16.mxu0 0
    %976 = vmatpush1.bf16.msra.mxu0 0
    %977 = vmatprep.subr.bf16.mxu0 0
    %978 = vmatpush1.bf16.msra.mxu0 0
    %979 = vmatprep.subr.bf16.mxu0 0
    %980 = vmatpush1.bf16.msra.mxu0 0
    %981 = vmatprep.subr.bf16.mxu0 0
    %982 = vmatpush1.bf16.msra.mxu0 0
    %983 = vmatprep.mubr.bf16.mxu0 0
    %984 = vmatmul.mubr.bf16.gmra.mrb[0].mxu0 %v946
    %v985 = vpop.f32.mrb[0].mxu0
    %v986 = vadd.f32 0.0, %v985
    %v987 = vpop.f32.mrb[0].mxu0
    %v988 = vpop.f32.mrb[0].mxu0
    %v989 = vpop.f32.mrb[0].mxu0
    %990 = vdwg.mxu0
    %991 = vrot.lane.b32.xlu0 %v289, 64
    %v992 = vpop.permute.xlu0 %991
    %v994 = vsel %vm296, %v794, 0
    %v997 = vsel %vm803, %v992, 0
    %999 = vmatprep.subr.bf16.mxu0 0
    %1000 = vmatpush1.bf16.msra.mxu0 %v997
    %1001 = vmatprep.subr.bf16.mxu0 0
    %1002 = vmatpush1.bf16.msra.mxu0 0
    %1003 = vmatprep.subr.bf16.mxu0 0
    %1004 = vmatpush1.bf16.msra.mxu0 0
    %1005 = vmatprep.subr.bf16.mxu0 0
    %1006 = vmatpush1.bf16.msra.mxu0 0
    %1007 = vmatprep.subr.bf16.mxu0 0
    %1008 = vmatpush1.bf16.msra.mxu0 0
    %1009 = vmatprep.subr.bf16.mxu0 0
    %1010 = vmatpush1.bf16.msra.mxu0 0
    %1011 = vmatprep.subr.bf16.mxu0 0
    %1012 = vmatpush1.bf16.msra.mxu0 0
    %1013 = vmatprep.subr.bf16.mxu0 0
    %1014 = vmatpush1.bf16.msra.mxu0 0
    %1015 = vmatprep.subr.bf16.mxu0 0
    %1016 = vmatpush1.bf16.msra.mxu0 0
    %1017 = vmatprep.subr.bf16.mxu0 0
    %1018 = vmatpush1.bf16.msra.mxu0 0
    %1019 = vmatprep.subr.bf16.mxu0 0
    %1020 = vmatpush1.bf16.msra.mxu0 0
    %1021 = vmatprep.subr.bf16.mxu0 0
    %1022 = vmatpush1.bf16.msra.mxu0 0
    %1023 = vmatprep.subr.bf16.mxu0 0
    %1024 = vmatpush1.bf16.msra.mxu0 0
    %1025 = vmatprep.subr.bf16.mxu0 0
    %1026 = vmatpush1.bf16.msra.mxu0 0
    %1027 = vmatprep.subr.bf16.mxu0 0
    %1028 = vmatpush1.bf16.msra.mxu0 0
    %1029 = vmatprep.subr.bf16.mxu0 0
    %1030 = vmatpush1.bf16.msra.mxu0 0
    %1031 = vmatprep.mubr.bf16.mxu0 0
    %1032 = vmatmul.mubr.bf16.gmra.mrb[0].mxu0 %v994
    %v1033 = vpop.f32.mrb[0].mxu0
    %v1034 = vadd.f32 0.0, %v1033
    %v1035 = vpop.f32.mrb[0].mxu0
    %v1036 = vpop.f32.mrb[0].mxu0
    %v1037 = vpop.f32.mrb[0].mxu0
    %1038 = vdwg.mxu0
    %1039 = vrot.lane.b32.xlu0 %v290, 64
    %v1040 = vpop.permute.xlu0 %1039
    %v1042 = vsel %vm296, %v795, 0
    %v1045 = vsel %vm803, %v1040, 0
    %1047 = vmatprep.subr.bf16.mxu0 0
    %1048 = vmatpush1.bf16.msra.mxu0 %v1045
    %1049 = vmatprep.subr.bf16.mxu0 0
    %1050 = vmatpush1.bf16.msra.mxu0 0
    %1051 = vmatprep.subr.bf16.mxu0 0
    %1052 = vmatpush1.bf16.msra.mxu0 0
    %1053 = vmatprep.subr.bf16.mxu0 0
    %1054 = vmatpush1.bf16.msra.mxu0 0
    %1055 = vmatprep.subr.bf16.mxu0 0
    %1056 = vmatpush1.bf16.msra.mxu0 0
    %1057 = vmatprep.subr.bf16.mxu0 0
    %1058 = vmatpush1.bf16.msra.mxu0 0
    %1059 = vmatprep.subr.bf16.mxu0 0
    %1060 = vmatpush1.bf16.msra.mxu0 0
    %1061 = vmatprep.subr.bf16.mxu0 0
    %1062 = vmatpush1.bf16.msra.mxu0 0
    %1063 = vmatprep.subr.bf16.mxu0 0
    %1064 = vmatpush1.bf16.msra.mxu0 0
    %1065 = vmatprep.subr.bf16.mxu0 0
    %1066 = vmatpush1.bf16.msra.mxu0 0
    %1067 = vmatprep.subr.bf16.mxu0 0
    %1068 = vmatpush1.bf16.msra.mxu0 0
    %1069 = vmatprep.subr.bf16.mxu0 0
    %1070 = vmatpush1.bf16.msra.mxu0 0
    %1071 = vmatprep.subr.bf16.mxu0 0
    %1072 = vmatpush1.bf16.msra.mxu0 0
    %1073 = vmatprep.subr.bf16.mxu0 0
    %1074 = vmatpush1.bf16.msra.mxu0 0
    %1075 = vmatprep.subr.bf16.mxu0 0
    %1076 = vmatpush1.bf16.msra.mxu0 0
    %1077 = vmatprep.subr.bf16.mxu0 0
    %1078 = vmatpush1.bf16.msra.mxu0 0
    %1079 = vmatprep.mubr.bf16.mxu0 0
    %1080 = vmatmul.mubr.bf16.gmra.mrb[0].mxu0 %v1042
    %v1081 = vpop.f32.mrb[0].mxu0
    %v1082 = vadd.f32 0.0, %v1081
    %v1083 = vpop.f32.mrb[0].mxu0
    %v1084 = vpop.f32.mrb[0].mxu0
    %v1085 = vpop.f32.mrb[0].mxu0
    %1086 = vdwg.mxu0
    %1087 = vrot.lane.b32.xlu0 %v291, 64
    %v1088 = vpop.permute.xlu0 %1087
    %v1090 = vsel %vm296, %v796, 0
    %v1093 = vsel %vm803, %v1088, 0
    %1095 = vmatprep.subr.bf16.mxu0 0
    %1096 = vmatpush1.bf16.msra.mxu0 %v1093
    %1097 = vmatprep.subr.bf16.mxu0 0
    %1098 = vmatpush1.bf16.msra.mxu0 0
    %1099 = vmatprep.subr.bf16.mxu0 0
    %1100 = vmatpush1.bf16.msra.mxu0 0
    %1101 = vmatprep.subr.bf16.mxu0 0
    %1102 = vmatpush1.bf16.msra.mxu0 0
    %1103 = vmatprep.subr.bf16.mxu0 0
    %1104 = vmatpush1.bf16.msra.mxu0 0
    %1105 = vmatprep.subr.bf16.mxu0 0
    %1106 = vmatpush1.bf16.msra.mxu0 0
    %1107 = vmatprep.subr.bf16.mxu0 0
    %1108 = vmatpush1.bf16.msra.mxu0 0
    %1109 = vmatprep.subr.bf16.mxu0 0
    %1110 = vmatpush1.bf16.msra.mxu0 0
    %1111 = vmatprep.subr.bf16.mxu0 0
    %1112 = vmatpush1.bf16.msra.mxu0 0
    %1113 = vmatprep.subr.bf16.mxu0 0
    %1114 = vmatpush1.bf16.msra.mxu0 0
    %1115 = vmatprep.subr.bf16.mxu0 0
    %1116 = vmatpush1.bf16.msra.mxu0 0
    %1117 = vmatprep.subr.bf16.mxu0 0
    %1118 = vmatpush1.bf16.msra.mxu0 0
    %1119 = vmatprep.subr.bf16.mxu0 0
    %1120 = vmatpush1.bf16.msra.mxu0 0
    %1121 = vmatprep.subr.bf16.mxu0 0
    %1122 = vmatpush1.bf16.msra.mxu0 0
    %1123 = vmatprep.subr.bf16.mxu0 0
    %1124 = vmatpush1.bf16.msra.mxu0 0
    %1125 = vmatprep.subr.bf16.mxu0 0
    %1126 = vmatpush1.bf16.msra.mxu0 0
    %1127 = vmatprep.mubr.bf16.mxu0 0
    %1128 = vmatmul.mubr.bf16.gmra.mrb[0].mxu0 %v1090
    %v1129 = vpop.f32.mrb[0].mxu0
    %v1130 = vadd.f32 0.0, %v1129
    %v1131 = vpop.f32.mrb[0].mxu0
    %v1132 = vpop.f32.mrb[0].mxu0
    %v1133 = vpop.f32.mrb[0].mxu0
    %1134 = vdwg.mxu0
    %1135 = vrot.lane.b32.xlu0 %v292, 64
    %v1136 = vpop.permute.xlu0 %1135
    %v1138 = vsel %vm296, %v797, 0
    %v1141 = vsel %vm803, %v1136, 0
    %1143 = vmatprep.subr.bf16.mxu0 0
    %1144 = vmatpush1.bf16.msra.mxu0 %v1141
    %1145 = vmatprep.subr.bf16.mxu0 0
    %1146 = vmatpush1.bf16.msra.mxu0 0
    %1147 = vmatprep.subr.bf16.mxu0 0
    %1148 = vmatpush1.bf16.msra.mxu0 0
    %1149 = vmatprep.subr.bf16.mxu0 0
    %1150 = vmatpush1.bf16.msra.mxu0 0
    %1151 = vmatprep.subr.bf16.mxu0 0
    %1152 = vmatpush1.bf16.msra.mxu0 0
    %1153 = vmatprep.subr.bf16.mxu0 0
    %1154 = vmatpush1.bf16.msra.mxu0 0
    %1155 = vmatprep.subr.bf16.mxu0 0
    %1156 = vmatpush1.bf16.msra.mxu0 0
    %1157 = vmatprep.subr.bf16.mxu0 0
    %1158 = vmatpush1.bf16.msra.mxu0 0
    %1159 = vmatprep.subr.bf16.mxu0 0
    %1160 = vmatpush1.bf16.msra.mxu0 0
    %1161 = vmatprep.subr.bf16.mxu0 0
    %1162 = vmatpush1.bf16.msra.mxu0 0
    %1163 = vmatprep.subr.bf16.mxu0 0
    %1164 = vmatpush1.bf16.msra.mxu0 0
    %1165 = vmatprep.subr.bf16.mxu0 0
    %1166 = vmatpush1.bf16.msra.mxu0 0
    %1167 = vmatprep.subr.bf16.mxu0 0
    %1168 = vmatpush1.bf16.msra.mxu0 0
    %1169 = vmatprep.subr.bf16.mxu0 0
    %1170 = vmatpush1.bf16.msra.mxu0 0
    %1171 = vmatprep.subr.bf16.mxu0 0
    %1172 = vmatpush1.bf16.msra.mxu0 0
    %1173 = vmatprep.subr.bf16.mxu0 0
    %1174 = vmatpush1.bf16.msra.mxu0 0
    %1175 = vmatprep.mubr.bf16.mxu0 0
    %1176 = vmatmul.mubr.bf16.gmra.mrb[0].mxu0 %v1138
    %v1177 = vpop.f32.mrb[0].mxu0
    %v1178 = vadd.f32 0.0, %v1177
    %v1179 = vpop.f32.mrb[0].mxu0
    %v1180 = vpop.f32.mrb[0].mxu0
    %v1181 = vpop.f32.mrb[0].mxu0
    %1182 = vdwg.mxu0
    %v1183 = vpack.c.bf16 %v890, %v842
    %v1184 = vpack.c.bf16 %v986, %v938
    %v1186 = vsel %vm296, %v1184, 0
    %v1189 = vsel %vm803, %v261, 0
    %1191 = vmatprep.subr.bf16.mxu0 0
    %1192 = vmatpush1.bf16.msra.mxu0 %v1189
    %1193 = vmatprep.subr.bf16.mxu0 0
    %1194 = vmatpush1.bf16.msra.mxu0 0
    %1195 = vmatprep.subr.bf16.mxu0 0
    %1196 = vmatpush1.bf16.msra.mxu0 0
    %1197 = vmatprep.subr.bf16.mxu0 0
    %1198 = vmatpush1.bf16.msra.mxu0 0
    %1199 = vmatprep.subr.bf16.mxu0 0
    %1200 = vmatpush1.bf16.msra.mxu0 0
    %1201 = vmatprep.subr.bf16.mxu0 0
    %1202 = vmatpush1.bf16.msra.mxu0 0
    %1203 = vmatprep.subr.bf16.mxu0 0
    %1204 = vmatpush1.bf16.msra.mxu0 0
    %1205 = vmatprep.subr.bf16.mxu0 0
    %1206 = vmatpush1.bf16.msra.mxu0 0
    %1207 = vmatprep.subr.bf16.mxu0 0
    %1208 = vmatpush1.bf16.msra.mxu0 0
    %1209 = vmatprep.subr.bf16.mxu0 0
    %1210 = vmatpush1.bf16.msra.mxu0 0
    %1211 = vmatprep.subr.bf16.mxu0 0
    %1212 = vmatpush1.bf16.msra.mxu0 0
    %1213 = vmatprep.subr.bf16.mxu0 0
    %1214 = vmatpush1.bf16.msra.mxu0 0
    %1215 = vmatprep.subr.bf16.mxu0 0
    %1216 = vmatpush1.bf16.msra.mxu0 0
    %1217 = vmatprep.subr.bf16.mxu0 0
    %1218 = vmatpush1.bf16.msra.mxu0 0
    %1219 = vmatprep.subr.bf16.mxu0 0
    %1220 = vmatpush1.bf16.msra.mxu0 0
    %1221 = vmatprep.subr.bf16.mxu0 0
    %1222 = vmatpush1.bf16.msra.mxu0 0
    %1223 = vmatprep.mubr.bf16.mxu0 0
    %1224 = vmatmul.mubr.bf16.gmra.mrb[0].mxu0 %v1186
    %v1225 = vpop.f32.mrb[0].mxu0
    %v1226 = vadd.f32 0.0, %v1225
    %v1227 = vpop.f32.mrb[0].mxu0
    %v1228 = vpop.f32.mrb[0].mxu0
    %v1229 = vadd.f32 0.0, %v1228
    %v1230 = vpop.f32.mrb[0].mxu0
    %1231 = vdwg.mxu0
    %v1233 = vsel %vm296, %v1183, 0
    %v1236 = vsel %vm803, %v260, 0
    %1238 = vmatprep.subr.bf16.mxu0 0
    %1239 = vmatpush1.bf16.msra.mxu0 %v1236
    %1240 = vmatprep.subr.bf16.mxu0 0
    %1241 = vmatpush1.bf16.msra.mxu0 0
    %1242 = vmatprep.subr.bf16.mxu0 0
    %1243 = vmatpush1.bf16.msra.mxu0 0
    %1244 = vmatprep.subr.bf16.mxu0 0
    %1245 = vmatpush1.bf16.msra.mxu0 0
    %1246 = vmatprep.subr.bf16.mxu0 0
    %1247 = vmatpush1.bf16.msra.mxu0 0
    %1248 = vmatprep.subr.bf16.mxu0 0
    %1249 = vmatpush1.bf16.msra.mxu0 0
    %1250 = vmatprep.subr.bf16.mxu0 0
    %1251 = vmatpush1.bf16.msra.mxu0 0
    %1252 = vmatprep.subr.bf16.mxu0 0
    %1253 = vmatpush1.bf16.msra.mxu0 0
    %1254 = vmatprep.subr.bf16.mxu0 0
    %1255 = vmatpush1.bf16.msra.mxu0 0
    %1256 = vmatprep.subr.bf16.mxu0 0
    %1257 = vmatpush1.bf16.msra.mxu0 0
    %1258 = vmatprep.subr.bf16.mxu0 0
    %1259 = vmatpush1.bf16.msra.mxu0 0
    %1260 = vmatprep.subr.bf16.mxu0 0
    %1261 = vmatpush1.bf16.msra.mxu0 0
    %1262 = vmatprep.subr.bf16.mxu0 0
    %1263 = vmatpush1.bf16.msra.mxu0 0
    %1264 = vmatprep.subr.bf16.mxu0 0
    %1265 = vmatpush1.bf16.msra.mxu0 0
    %1266 = vmatprep.subr.bf16.mxu0 0
    %1267 = vmatpush1.bf16.msra.mxu0 0
    %1268 = vmatprep.subr.bf16.mxu0 0
    %1269 = vmatpush1.bf16.msra.mxu0 0
    %1270 = vmatprep.mubr.bf16.mxu0 0
    %1271 = vmatmul.mubr.bf16.gmra.mrb[0].mxu0 %v1233
    %v1272 = vpop.f32.mrb[0].mxu0
    %v1273 = vadd.f32 %v1226, %v1272
    %v1274 = vpop.f32.mrb[0].mxu0
    %v1275 = vpop.f32.mrb[0].mxu0
    %v1276 = vadd.f32 %v1229, %v1275
    %v1277 = vpop.f32.mrb[0].mxu0
    %1278 = vdwg.mxu0
    %v1279 = vpack.c.bf16 %v1082, %v1034
    %v1281 = vsel %vm296, %v1279, 0
    %v1284 = vsel %vm803, %v262, 0
    %1286 = vmatprep.subr.bf16.mxu0 0
    %1287 = vmatpush1.bf16.msra.mxu0 %v1284
    %1288 = vmatprep.subr.bf16.mxu0 0
    %1289 = vmatpush1.bf16.msra.mxu0 0
    %1290 = vmatprep.subr.bf16.mxu0 0
    %1291 = vmatpush1.bf16.msra.mxu0 0
    %1292 = vmatprep.subr.bf16.mxu0 0
    %1293 = vmatpush1.bf16.msra.mxu0 0
    %1294 = vmatprep.subr.bf16.mxu0 0
    %1295 = vmatpush1.bf16.msra.mxu0 0
    %1296 = vmatprep.subr.bf16.mxu0 0
    %1297 = vmatpush1.bf16.msra.mxu0 0
    %1298 = vmatprep.subr.bf16.mxu0 0
    %1299 = vmatpush1.bf16.msra.mxu0 0
    %1300 = vmatprep.subr.bf16.mxu0 0
    %1301 = vmatpush1.bf16.msra.mxu0 0
    %1302 = vmatprep.subr.bf16.mxu0 0
    %1303 = vmatpush1.bf16.msra.mxu0 0
    %1304 = vmatprep.subr.bf16.mxu0 0
    %1305 = vmatpush1.bf16.msra.mxu0 0
    %1306 = vmatprep.subr.bf16.mxu0 0
    %1307 = vmatpush1.bf16.msra.mxu0 0
    %1308 = vmatprep.subr.bf16.mxu0 0
    %1309 = vmatpush1.bf16.msra.mxu0 0
    %1310 = vmatprep.subr.bf16.mxu0 0
    %1311 = vmatpush1.bf16.msra.mxu0 0
    %1312 = vmatprep.subr.bf16.mxu0 0
    %1313 = vmatpush1.bf16.msra.mxu0 0
    %1314 = vmatprep.subr.bf16.mxu0 0
    %1315 = vmatpush1.bf16.msra.mxu0 0
    %1316 = vmatprep.subr.bf16.mxu0 0
    %1317 = vmatpush1.bf16.msra.mxu0 0
    %1318 = vmatprep.mubr.bf16.mxu0 0
    %1319 = vmatmul.mubr.bf16.gmra.mrb[0].mxu0 %v1281
    %v1320 = vpop.f32.mrb[0].mxu0
    %v1321 = vadd.f32 0.0, %v1320
    %v1322 = vpop.f32.mrb[0].mxu0
    %v1323 = vpop.f32.mrb[0].mxu0
    %v1324 = vadd.f32 0.0, %v1323
    %v1325 = vpop.f32.mrb[0].mxu0
    %1326 = vdwg.mxu0
    %v1327 = vadd.f32 %v1273, %v1321
    %v1328 = vadd.f32 %v1276, %v1324
    %v1329 = vpack.c.bf16 %v1178, %v1130
    %v1331 = vsel %vm296, %v1329, 0
    %v1334 = vsel %vm803, %v263, 0
    %1336 = vmatprep.subr.bf16.mxu0 0
    %1337 = vmatpush1.bf16.msra.mxu0 %v1334
    %1338 = vmatprep.subr.bf16.mxu0 0
    %1339 = vmatpush1.bf16.msra.mxu0 0
    %1340 = vmatprep.subr.bf16.mxu0 0
    %1341 = vmatpush1.bf16.msra.mxu0 0
    %1342 = vmatprep.subr.bf16.mxu0 0
    %1343 = vmatpush1.bf16.msra.mxu0 0
    %1344 = vmatprep.subr.bf16.mxu0 0
    %1345 = vmatpush1.bf16.msra.mxu0 0
    %1346 = vmatprep.subr.bf16.mxu0 0
    %1347 = vmatpush1.bf16.msra.mxu0 0
    %1348 = vmatprep.subr.bf16.mxu0 0
    %1349 = vmatpush1.bf16.msra.mxu0 0
    %1350 = vmatprep.subr.bf16.mxu0 0
    %1351 = vmatpush1.bf16.msra.mxu0 0
    %1352 = vmatprep.subr.bf16.mxu0 0
    %1353 = vmatpush1.bf16.msra.mxu0 0
    %1354 = vmatprep.subr.bf16.mxu0 0
    %1355 = vmatpush1.bf16.msra.mxu0 0
    %1356 = vmatprep.subr.bf16.mxu0 0
    %1357 = vmatpush1.bf16.msra.mxu0 0
    %1358 = vmatprep.subr.bf16.mxu0 0
    %1359 = vmatpush1.bf16.msra.mxu0 0
    %1360 = vmatprep.subr.bf16.mxu0 0
    %1361 = vmatpush1.bf16.msra.mxu0 0
    %1362 = vmatprep.subr.bf16.mxu0 0
    %1363 = vmatpush1.bf16.msra.mxu0 0
    %1364 = vmatprep.subr.bf16.mxu0 0
    %1365 = vmatpush1.bf16.msra.mxu0 0
    %1366 = vmatprep.subr.bf16.mxu0 0
    %1367 = vmatpush1.bf16.msra.mxu0 0
    %1368 = vmatprep.mubr.bf16.mxu0 0
    %1369 = vmatmul.mubr.bf16.gmra.mrb[0].mxu0 %v1331
    %v1370 = vpop.f32.mrb[0].mxu0
    %v1371 = vadd.f32 0.0, %v1370
    %v1372 = vpop.f32.mrb[0].mxu0
    %v1373 = vpop.f32.mrb[0].mxu0
    %v1374 = vadd.f32 0.0, %v1373
    %v1375 = vpop.f32.mrb[0].mxu0
    %1376 = vdwg.mxu0
    %v1377 = vadd.f32 %v1327, %v1371
    %v1378 = vadd.f32 %v1328, %v1374
    %v1379 = vlaneseq
    %v1380 = vshrl.u32 %v1379, 7
    %v1381 = vsub.s32 0, %v1380
    %v1382 = vrot.slane %v264, %v1381
    %v1383 = vadd.f32 %v1377, %v1382
    %v1384 = vadd.f32 %v1378, %v1382
    %v1385 = vadd.f32 %v146, %v1383
    %v1386 = vadd.f32 %v149, %v1384
    %v1387 = vld [vmem:[#allocation5 + $0x40] sm:$0x1]
    %v1388 = vld [vmem:[#allocation5 + $0x48] sm:$0x1]
    %v1389 = vsel %vm154, %v1385, 0.0
    %1390 = vadd.xlane.f32.xlu0 %v1389
    %v1391 = vpop.xlane.xlu0 %1390
    %v1392 = vsel %vm154, %v1386, 0.0
    %1393 = vadd.xlane.f32.xlu0 %v1392
    %v1394 = vpop.xlane.xlu0 %1393
    %v1395 = vmul.f32 %v1391, %v161
    %v1396 = vmul.f32 %v1394, %v161
    %v1397 = vsub.f32 %v1385, %v1395
    %v1398 = vsub.f32 %v1386, %v1396
    %v1399 = vmul.f32 %v1397, %v1397
    %v1400 = vmul.f32 %v1398, %v1398
    %v1401 = vsel %vm154, %v1399, 0.0
    %1402 = vadd.xlane.f32.xlu0 %v1401
    %v1403 = vpop.xlane.xlu0 %1402
    %v1404 = vsel %vm154, %v1400, 0.0
    %1405 = vadd.xlane.f32.xlu0 %v1404
    %v1406 = vpop.xlane.xlu0 %1405
    %v1407 = vmul.f32 %v1403, %v161
    %v1408 = vmul.f32 %v1406, %v161
    %v1409 = vadd.f32 %v1407, 1e-06
    %v1410 = vadd.f32 %v1408, 1e-06
    %v1411 = vrsqrt.pop %v1409
    %v1412 = vrsqrt.pop %v1410
    %v1413 = vmul.f32 %v1397, %v1411
    %v1414 = vmul.f32 %v1398, %v1412
    %v1415 = vlaneseq
    %v1416 = vshrl.u32 %v1415, 7
    %v1417 = vsub.s32 0, %v1416
    %v1418 = vrot.slane %v1387, %v1417
    %v1419 = vmul.f32 %v1413, %v1418
    %v1420 = vmul.f32 %v1414, %v1418
    %v1421 = vlaneseq
    %v1422 = vshrl.u32 %v1421, 7
    %v1423 = vsub.s32 0, %v1422
    %v1424 = vrot.slane %v1388, %v1423
    %v1425 = vadd.f32 %v1419, %v1424
    %v1426 = vadd.f32 %v1420, %v1424
    %v1427 = vpack.c.bf16 %v1426, %v1425
    %v1428 = vld [vmem:[#allocation2 + $0x30] sm:$0xf]
    %v1429 = vld [vmem:[#allocation2 + $0x34] sm:$0xf]
    %v1430 = vld [vmem:[#allocation2 + $0x38] sm:$0xf]
    %v1431 = vld [vmem:[#allocation2 + $0x3c] sm:$0xf]
    %v1432 = vld [vmem:[#allocation5 + $0x50] sm:$0x1]
    %v1433 = vlaneseq
    %v1434 = vshrl.u32 %v1433, 7
    %v1435 = vsub.s32 0, %v1434
    %v1436 = vrot.slane %v1432, %v1435
    %v1441 = vunpack.c.l.b16 %v1428
    %v1442 = vunpack.c.l.b16 %v1429
    %v1443 = vunpack.c.l.b16 %v1430
    %v1444 = vunpack.c.l.b16 %v1431
    %v1445 = vpack.c.b16 %v1442, %v1441
    %v1446 = vpack.c.b16 %v1444, %v1443
    %v1450 = vsel %vm154, %v1427, 0
    %1452 = vmatprep.subr.bf16.mxu0 0
    %1453 = vmatpush1.bf16.msra.mxu0 %v1445
    %1454 = vmatprep.subr.bf16.mxu0 0
    %1455 = vmatpush1.bf16.msra.mxu0 %v1446
    %1456 = vmatprep.subr.bf16.mxu0 0
    %1457 = vmatpush1.bf16.msra.mxu0 0
    %1458 = vmatprep.subr.bf16.mxu0 0
    %1459 = vmatpush1.bf16.msra.mxu0 0
    %1460 = vmatprep.subr.bf16.mxu0 0
    %1461 = vmatpush1.bf16.msra.mxu0 0
    %1462 = vmatprep.subr.bf16.mxu0 0
    %1463 = vmatpush1.bf16.msra.mxu0 0
    %1464 = vmatprep.subr.bf16.mxu0 0
    %1465 = vmatpush1.bf16.msra.mxu0 0
    %1466 = vmatprep.subr.bf16.mxu0 0
    %1467 = vmatpush1.bf16.msra.mxu0 0
    %1468 = vmatprep.subr.bf16.mxu0 0
    %1469 = vmatpush1.bf16.msra.mxu0 0
    %1470 = vmatprep.subr.bf16.mxu0 0
    %1471 = vmatpush1.bf16.msra.mxu0 0
    %1472 = vmatprep.subr.bf16.mxu0 0
    %1473 = vmatpush1.bf16.msra.mxu0 0
    %1474 = vmatprep.subr.bf16.mxu0 0
    %1475 = vmatpush1.bf16.msra.mxu0 0
    %1476 = vmatprep.subr.bf16.mxu0 0
    %1477 = vmatpush1.bf16.msra.mxu0 0
    %1478 = vmatprep.subr.bf16.mxu0 0
    %1479 = vmatpush1.bf16.msra.mxu0 0
    %1480 = vmatprep.subr.bf16.mxu0 0
    %1481 = vmatpush1.bf16.msra.mxu0 0
    %1482 = vmatprep.subr.bf16.mxu0 0
    %1483 = vmatpush1.bf16.msra.mxu0 0
    %1484 = vmatprep.mubr.bf16.mxu0 0
    %1485 = vmatmul.mubr.bf16.gmra.mrb[0].mxu0 %v1450
    %v1486 = vpop.f32.mrb[0].mxu0
    %v1487 = vadd.f32 %v1436, %v1486
    %v1488 = vpop.f32.mrb[0].mxu0
    %v1489 = vpop.f32.mrb[0].mxu0
    %v1490 = vadd.f32 %v1436, %v1489
    %v1491 = vpop.f32.mrb[0].mxu0
    %1492 = vdwg.mxu0
    %v1493 = vmax.f32 %v1487, 0.0
    %v1494 = vmax.f32 %v1490, 0.0
    %v1495 = vpack.c.bf16 %v1494, %v1493
    %v1496 = vld [vmem:[#allocation2 + $0x40] sm:$0xf]
    %v1497 = vld [vmem:[#allocation2 + $0x44] sm:$0xf]
    %v1498 = vld [vmem:[#allocation2 + $0x48] sm:$0xf]
    %v1499 = vld [vmem:[#allocation2 + $0x4c] sm:$0xf]
    %v1500 = vld [vmem:[#allocation2 + $0x50] sm:$0xf]
    %v1501 = vld [vmem:[#allocation2 + $0x54] sm:$0xf]
    %v1502 = vld [vmem:[#allocation2 + $0x58] sm:$0xf]
    %v1503 = vld [vmem:[#allocation2 + $0x5c] sm:$0xf]
    %v1504 = vld [vmem:[#allocation5 + $0x58] sm:$0x1]
    %v1505 = vlaneseq
    %v1506 = vshrl.u32 %v1505, 7
    %v1507 = vsub.s32 0, %v1506
    %v1508 = vrot.slane %v1504, %v1507
    %v1517 = vunpack.c.l.b16 %v1496
    %v1518 = vunpack.c.l.b16 %v1497
    %v1519 = vunpack.c.l.b16 %v1498
    %v1520 = vunpack.c.l.b16 %v1499
    %v1521 = vunpack.c.l.b16 %v1500
    %v1522 = vunpack.c.l.b16 %v1501
    %v1523 = vunpack.c.l.b16 %v1502
    %v1524 = vunpack.c.l.b16 %v1503
    %v1525 = vpack.c.b16 %v1518, %v1517
    %v1526 = vpack.c.b16 %v1520, %v1519
    %v1527 = vpack.c.b16 %v1522, %v1521
    %v1528 = vpack.c.b16 %v1524, %v1523
    %vm1533 = vcmask 523264
    %v1535 = vsel %vm1533, %v1495, 0
    %1537 = vmatprep.subr.bf16.mxu0 0
    %1538 = vmatpush1.bf16.msra.mxu0 %v1525
    %1539 = vmatprep.subr.bf16.mxu0 0
    %1540 = vmatpush1.bf16.msra.mxu0 %v1526
    %1541 = vmatprep.subr.bf16.mxu0 0
    %1542 = vmatpush1.bf16.msra.mxu0 %v1527
    %1543 = vmatprep.subr.bf16.mxu0 0
    %1544 = vmatpush1.bf16.msra.mxu0 %v1528
    %1545 = vmatprep.subr.bf16.mxu0 0
    %1546 = vmatpush1.bf16.msra.mxu0 0
    %1547 = vmatprep.subr.bf16.mxu0 0
    %1548 = vmatpush1.bf16.msra.mxu0 0
    %1549 = vmatprep.subr.bf16.mxu0 0
    %1550 = vmatpush1.bf16.msra.mxu0 0
    %1551 = vmatprep.subr.bf16.mxu0 0
    %1552 = vmatpush1.bf16.msra.mxu0 0
    %1553 = vmatprep.subr.bf16.mxu0 0
    %1554 = vmatpush1.bf16.msra.mxu0 0
    %1555 = vmatprep.subr.bf16.mxu0 0
    %1556 = vmatpush1.bf16.msra.mxu0 0
    %1557 = vmatprep.subr.bf16.mxu0 0
    %1558 = vmatpush1.bf16.msra.mxu0 0
    %1559 = vmatprep.subr.bf16.mxu0 0
    %1560 = vmatpush1.bf16.msra.mxu0 0
    %1561 = vmatprep.subr.bf16.mxu0 0
    %1562 = vmatpush1.bf16.msra.mxu0 0
    %1563 = vmatprep.subr.bf16.mxu0 0
    %1564 = vmatpush1.bf16.msra.mxu0 0
    %1565 = vmatprep.subr.bf16.mxu0 0
    %1566 = vmatpush1.bf16.msra.mxu0 0
    %1567 = vmatprep.subr.bf16.mxu0 0
    %1568 = vmatpush1.bf16.msra.mxu0 0
    %1569 = vmatprep.mubr.bf16.mxu0 0
    %1570 = vmatmul.mubr.bf16.gmra.mrb[0].mxu0 %v1535
    %v1571 = vpop.f32.mrb[0].mxu0
    %v1572 = vadd.f32 %v1508, %v1571
    %v1573 = vpop.f32.mrb[0].mxu0
    %v1574 = vpop.f32.mrb[0].mxu0
    %v1575 = vadd.f32 %v1508, %v1574
    %v1576 = vpop.f32.mrb[0].mxu0
    %1577 = vdwg.mxu0
    %v1578 = vadd.f32 %v1385, %v1572
    %v1579 = vadd.f32 %v1386, %v1575
    %v1580 = vld [vmem:[#allocation5 + $0x70] sm:$0x1]
    %v1581 = vld [vmem:[#allocation5 + $0x78] sm:$0x1]
    %v1582 = vsel %vm154, %v1578, 0.0
    %1583 = vadd.xlane.f32.xlu0 %v1582
    %v1584 = vpop.xlane.xlu0 %1583
    %v1585 = vsel %vm154, %v1579, 0.0
    %1586 = vadd.xlane.f32.xlu0 %v1585
    %v1587 = vpop.xlane.xlu0 %1586
    %v1588 = vmul.f32 %v1584, %v161
    %v1589 = vmul.f32 %v1587, %v161
    %v1590 = vsub.f32 %v1578, %v1588
    %v1591 = vsub.f32 %v1579, %v1589
    %v1592 = vmul.f32 %v1590, %v1590
    %v1593 = vmul.f32 %v1591, %v1591
    %v1594 = vsel %vm154, %v1592, 0.0
    %1595 = vadd.xlane.f32.xlu0 %v1594
    %v1596 = vpop.xlane.xlu0 %1595
    %v1597 = vsel %vm154, %v1593, 0.0
    %1598 = vadd.xlane.f32.xlu0 %v1597
    %v1599 = vpop.xlane.xlu0 %1598
    %v1600 = vmul.f32 %v1596, %v161
    %v1601 = vmul.f32 %v1599, %v161
    %v1602 = vadd.f32 %v1600, 1e-06
    %v1603 = vadd.f32 %v1601, 1e-06
    %v1604 = vrsqrt.pop %v1602
    %v1605 = vrsqrt.pop %v1603
    %v1606 = vmul.f32 %v1590, %v1604
    %v1607 = vmul.f32 %v1591, %v1605
    %v1608 = vlaneseq
    %v1609 = vshrl.u32 %v1608, 7
    %v1610 = vsub.s32 0, %v1609
    %v1611 = vrot.slane %v1580, %v1610
    %v1612 = vmul.f32 %v1606, %v1611
    %v1613 = vmul.f32 %v1607, %v1611
    %v1614 = vlaneseq
    %v1615 = vshrl.u32 %v1614, 7
    %v1616 = vsub.s32 0, %v1615
    %v1617 = vrot.slane %v1581, %v1616
    %v1618 = vadd.f32 %v1612, %v1617
    %v1619 = vadd.f32 %v1613, %v1617
    %v1620 = vpack.c.bf16 %v1619, %v1618
    %v1621 = vld [vmem:[#allocation2 + $0x60] sm:$0xf]
    %v1622 = vld [vmem:[#allocation2 + $0x64] sm:$0xf]
    %v1623 = vld [vmem:[#allocation2 + $0x68] sm:$0xf]
    %v1624 = vld [vmem:[#allocation2 + $0x6c] sm:$0xf]
    %v1625 = vld [vmem:[#allocation5 + $0x60] sm:$0x1]
    %v1626 = vlaneseq
    %v1627 = vshrl.u32 %v1626, 7
    %v1628 = vsub.s32 0, %v1627
    %v1629 = vrot.slane %v1625, %v1628
    %v1634 = vunpack.c.l.b16 %v1621
    %v1635 = vunpack.c.l.b16 %v1622
    %v1636 = vunpack.c.l.b16 %v1623
    %v1637 = vunpack.c.l.b16 %v1624
    %v1638 = vpack.c.b16 %v1635, %v1634
    %v1639 = vpack.c.b16 %v1637, %v1636
    %v1643 = vsel %vm154, %v1620, 0
    %1645 = vmatprep.subr.bf16.mxu0 0
    %1646 = vmatpush1.bf16.msra.mxu0 %v1638
    %1647 = vmatprep.subr.bf16.mxu0 0
    %1648 = vmatpush1.bf16.msra.mxu0 %v1639
    %1649 = vmatprep.subr.bf16.mxu0 0
    %1650 = vmatpush1.bf16.msra.mxu0 0
    %1651 = vmatprep.subr.bf16.mxu0 0
    %1652 = vmatpush1.bf16.msra.mxu0 0
    %1653 = vmatprep.subr.bf16.mxu0 0
    %1654 = vmatpush1.bf16.msra.mxu0 0
    %1655 = vmatprep.subr.bf16.mxu0 0
    %1656 = vmatpush1.bf16.msra.mxu0 0
    %1657 = vmatprep.subr.bf16.mxu0 0
    %1658 = vmatpush1.bf16.msra.mxu0 0
    %1659 = vmatprep.subr.bf16.mxu0 0
    %1660 = vmatpush1.bf16.msra.mxu0 0
    %1661 = vmatprep.subr.bf16.mxu0 0
    %1662 = vmatpush1.bf16.msra.mxu0 0
    %1663 = vmatprep.subr.bf16.mxu0 0
    %1664 = vmatpush1.bf16.msra.mxu0 0
    %1665 = vmatprep.subr.bf16.mxu0 0
    %1666 = vmatpush1.bf16.msra.mxu0 0
    %1667 = vmatprep.subr.bf16.mxu0 0
    %1668 = vmatpush1.bf16.msra.mxu0 0
    %1669 = vmatprep.subr.bf16.mxu0 0
    %1670 = vmatpush1.bf16.msra.mxu0 0
    %1671 = vmatprep.subr.bf16.mxu0 0
    %1672 = vmatpush1.bf16.msra.mxu0 0
    %1673 = vmatprep.subr.bf16.mxu0 0
    %1674 = vmatpush1.bf16.msra.mxu0 0
    %1675 = vmatprep.subr.bf16.mxu0 0
    %1676 = vmatpush1.bf16.msra.mxu0 0
    %1677 = vmatprep.mubr.bf16.mxu0 0
    %1678 = vmatmul.mubr.bf16.gmra.mrb[0].mxu0 %v1643
    %v1679 = vpop.f32.mrb[0].mxu0
    %v1680 = vadd.f32 %v1629, %v1679
    %v1681 = vpop.f32.mrb[0].mxu0
    %v1682 = vpop.f32.mrb[0].mxu0
    %v1683 = vadd.f32 %v1629, %v1682
    %v1684 = vpop.f32.mrb[0].mxu0
    %1685 = vdwg.mxu0
    %v1686 = vld [vmem:[#allocation2 + $0x70] sm:$0xf]
    %v1687 = vld [vmem:[#allocation2 + $0x74] sm:$0xf]
    %v1688 = vld [vmem:[#allocation2 + $0x78] sm:$0xf]
    %v1689 = vld [vmem:[#allocation2 + $0x7c] sm:$0xf]
    %v1690 = vld [vmem:[#allocation5 + $0x68] sm:$0x1]
    %1693 = vrot.lane.b32.xlu0 %v1680, 120
    %v1694 = vpop.permute.xlu0 %1693
    %1695 = vrot.lane.b32.xlu0 %v1683, 120
    %v1696 = vpop.permute.xlu0 %1695
    %1699 = vrot.lane.b32.xlu0 %v1680, 112
    %v1700 = vpop.permute.xlu0 %1699
    %1701 = vrot.lane.b32.xlu0 %v1683, 112
    %v1702 = vpop.permute.xlu0 %1701
    %1705 = vrot.lane.b32.xlu0 %v1680, 104
    %v1706 = vpop.permute.xlu0 %1705
    %1707 = vrot.lane.b32.xlu0 %v1683, 104
    %v1708 = vpop.permute.xlu0 %1707
    %v1711 = vpack.c.bf16 %v1680, %v1680
    %v1712 = vpack.c.bf16 %v1683, %v1683
    %v1713 = vpack.c.bf16 %v1694, %v1694
    %v1714 = vpack.c.bf16 %v1696, %v1696
    %v1715 = vpack.c.bf16 %v1700, %v1700
    %v1716 = vpack.c.bf16 %v1702, %v1702
    %v1717 = vpack.c.bf16 %v1706, %v1706
    %v1718 = vpack.c.bf16 %v1708, %v1708
    %1720 = vrot.lane.b32.xlu0 %v1711, 96
    %v1721 = vpop.permute.xlu0 %1720
    %v1723 = vsel %vm296, %v1711, 0
    %v1726 = vsel %vm296, %v1721, 0
    %1728 = vmatprep.subr.bf16.mxu0 0
    %1729 = vmatpush1.bf16.xpose.msra.mxu0 %v1726
    %1730 = vmatprep.subr.bf16.mxu0 0
    %1731 = vmatpush1.bf16.xpose.msra.mxu0 0
    %1732 = vmatprep.subr.bf16.mxu0 0
    %1733 = vmatpush1.bf16.xpose.msra.mxu0 0
    %1734 = vmatprep.subr.bf16.mxu0 0
    %1735 = vmatpush1.bf16.xpose.msra.mxu0 0
    %1736 = vmatprep.subr.bf16.mxu0 0
    %1737 = vmatpush1.bf16.xpose.msra.mxu0 0
    %1738 = vmatprep.subr.bf16.mxu0 0
    %1739 = vmatpush1.bf16.xpose.msra.mxu0 0
    %1740 = vmatprep.subr.bf16.mxu0 0
    %1741 = vmatpush1.bf16.xpose.msra.mxu0 0
    %1742 = vmatprep.subr.bf16.mxu0 0
    %1743 = vmatpush1.bf16.xpose.msra.mxu0 0
    %1744 = vmatprep.subr.bf16.mxu0 0
    %1745 = vmatpush1.bf16.xpose.msra.mxu0 0
    %1746 = vmatprep.subr.bf16.mxu0 0
    %1747 = vmatpush1.bf16.xpose.msra.mxu0 0
    %1748 = vmatprep.subr.bf16.mxu0 0
    %1749 = vmatpush1.bf16.xpose.msra.mxu0 0
    %1750 = vmatprep.subr.bf16.mxu0 0
    %1751 = vmatpush1.bf16.xpose.msra.mxu0 0
    %1752 = vmatprep.subr.bf16.mxu0 0
    %1753 = vmatpush1.bf16.xpose.msra.mxu0 0
    %1754 = vmatprep.subr.bf16.mxu0 0
    %1755 = vmatpush1.bf16.xpose.msra.mxu0 0
    %1756 = vmatprep.subr.bf16.mxu0 0
    %1757 = vmatpush1.bf16.xpose.msra.mxu0 0
    %1758 = vmatprep.subr.bf16.mxu0 0
    %1759 = vmatpush1.bf16.xpose.msra.mxu0 0
    %1760 = vmatprep.mubr.bf16.mxu0 0
    %1761 = vmatmul.mubr.bf16.gmra.mrb[0].mxu0 %v1723
    %v1762 = vpop.f32.mrb[0].mxu0
    %v1763 = vadd.f32 0.0, %v1762
    %v1764 = vpop.f32.mrb[0].mxu0
    %v1765 = vpop.f32.mrb[0].mxu0
    %v1766 = vpop.f32.mrb[0].mxu0
    %1767 = vdwg.mxu0
    %1769 = vrot.lane.b32.xlu0 %v1712, 96
    %v1770 = vpop.permute.xlu0 %1769
    %v1772 = vsel %vm296, %v1712, 0
    %v1775 = vsel %vm296, %v1770, 0
    %1777 = vmatprep.subr.bf16.mxu0 0
    %1778 = vmatpush1.bf16.xpose.msra.mxu0 %v1775
    %1779 = vmatprep.subr.bf16.mxu0 0
    %1780 = vmatpush1.bf16.xpose.msra.mxu0 0
    %1781 = vmatprep.subr.bf16.mxu0 0
    %1782 = vmatpush1.bf16.xpose.msra.mxu0 0
    %1783 = vmatprep.subr.bf16.mxu0 0
    %1784 = vmatpush1.bf16.xpose.msra.mxu0 0
    %1785 = vmatprep.subr.bf16.mxu0 0
    %1786 = vmatpush1.bf16.xpose.msra.mxu0 0
    %1787 = vmatprep.subr.bf16.mxu0 0
    %1788 = vmatpush1.bf16.xpose.msra.mxu0 0
    %1789 = vmatprep.subr.bf16.mxu0 0
    %1790 = vmatpush1.bf16.xpose.msra.mxu0 0
    %1791 = vmatprep.subr.bf16.mxu0 0
    %1792 = vmatpush1.bf16.xpose.msra.mxu0 0
    %1793 = vmatprep.subr.bf16.mxu0 0
    %1794 = vmatpush1.bf16.xpose.msra.mxu0 0
    %1795 = vmatprep.subr.bf16.mxu0 0
    %1796 = vmatpush1.bf16.xpose.msra.mxu0 0
    %1797 = vmatprep.subr.bf16.mxu0 0
    %1798 = vmatpush1.bf16.xpose.msra.mxu0 0
    %1799 = vmatprep.subr.bf16.mxu0 0
    %1800 = vmatpush1.bf16.xpose.msra.mxu0 0
    %1801 = vmatprep.subr.bf16.mxu0 0
    %1802 = vmatpush1.bf16.xpose.msra.mxu0 0
    %1803 = vmatprep.subr.bf16.mxu0 0
    %1804 = vmatpush1.bf16.xpose.msra.mxu0 0
    %1805 = vmatprep.subr.bf16.mxu0 0
    %1806 = vmatpush1.bf16.xpose.msra.mxu0 0
    %1807 = vmatprep.subr.bf16.mxu0 0
    %1808 = vmatpush1.bf16.xpose.msra.mxu0 0
    %1809 = vmatprep.mubr.bf16.mxu0 0
    %1810 = vmatmul.mubr.bf16.gmra.mrb[0].mxu0 %v1772
    %v1811 = vpop.f32.mrb[0].mxu0
    %v1812 = vadd.f32 0.0, %v1811
    %v1813 = vpop.f32.mrb[0].mxu0
    %v1814 = vpop.f32.mrb[0].mxu0
    %v1815 = vpop.f32.mrb[0].mxu0
    %1816 = vdwg.mxu0
    %1818 = vrot.lane.b32.xlu0 %v1713, 96
    %v1819 = vpop.permute.xlu0 %1818
    %v1821 = vsel %vm296, %v1713, 0
    %v1824 = vsel %vm296, %v1819, 0
    %1826 = vmatprep.subr.bf16.mxu0 0
    %1827 = vmatpush1.bf16.xpose.msra.mxu0 %v1824
    %1828 = vmatprep.subr.bf16.mxu0 0
    %1829 = vmatpush1.bf16.xpose.msra.mxu0 0
    %1830 = vmatprep.subr.bf16.mxu0 0
    %1831 = vmatpush1.bf16.xpose.msra.mxu0 0
    %1832 = vmatprep.subr.bf16.mxu0 0
    %1833 = vmatpush1.bf16.xpose.msra.mxu0 0
    %1834 = vmatprep.subr.bf16.mxu0 0
    %1835 = vmatpush1.bf16.xpose.msra.mxu0 0
    %1836 = vmatprep.subr.bf16.mxu0 0
    %1837 = vmatpush1.bf16.xpose.msra.mxu0 0
    %1838 = vmatprep.subr.bf16.mxu0 0
    %1839 = vmatpush1.bf16.xpose.msra.mxu0 0
    %1840 = vmatprep.subr.bf16.mxu0 0
    %1841 = vmatpush1.bf16.xpose.msra.mxu0 0
    %1842 = vmatprep.subr.bf16.mxu0 0
    %1843 = vmatpush1.bf16.xpose.msra.mxu0 0
    %1844 = vmatprep.subr.bf16.mxu0 0
    %1845 = vmatpush1.bf16.xpose.msra.mxu0 0
    %1846 = vmatprep.subr.bf16.mxu0 0
    %1847 = vmatpush1.bf16.xpose.msra.mxu0 0
    %1848 = vmatprep.subr.bf16.mxu0 0
    %1849 = vmatpush1.bf16.xpose.msra.mxu0 0
    %1850 = vmatprep.subr.bf16.mxu0 0
    %1851 = vmatpush1.bf16.xpose.msra.mxu0 0
    %1852 = vmatprep.subr.bf16.mxu0 0
    %1853 = vmatpush1.bf16.xpose.msra.mxu0 0
    %1854 = vmatprep.subr.bf16.mxu0 0
    %1855 = vmatpush1.bf16.xpose.msra.mxu0 0
    %1856 = vmatprep.subr.bf16.mxu0 0
    %1857 = vmatpush1.bf16.xpose.msra.mxu0 0
    %1858 = vmatprep.mubr.bf16.mxu0 0
    %1859 = vmatmul.mubr.bf16.gmra.mrb[0].mxu0 %v1821
    %v1860 = vpop.f32.mrb[0].mxu0
    %v1861 = vadd.f32 0.0, %v1860
    %v1862 = vpop.f32.mrb[0].mxu0
    %v1863 = vpop.f32.mrb[0].mxu0
    %v1864 = vpop.f32.mrb[0].mxu0
    %1865 = vdwg.mxu0
    %1867 = vrot.lane.b32.xlu0 %v1714, 96
    %v1868 = vpop.permute.xlu0 %1867
    %v1870 = vsel %vm296, %v1714, 0
    %v1873 = vsel %vm296, %v1868, 0
    %1875 = vmatprep.subr.bf16.mxu0 0
    %1876 = vmatpush1.bf16.xpose.msra.mxu0 %v1873
    %1877 = vmatprep.subr.bf16.mxu0 0
    %1878 = vmatpush1.bf16.xpose.msra.mxu0 0
    %1879 = vmatprep.subr.bf16.mxu0 0
    %1880 = vmatpush1.bf16.xpose.msra.mxu0 0
    %1881 = vmatprep.subr.bf16.mxu0 0
    %1882 = vmatpush1.bf16.xpose.msra.mxu0 0
    %1883 = vmatprep.subr.bf16.mxu0 0
    %1884 = vmatpush1.bf16.xpose.msra.mxu0 0
    %1885 = vmatprep.subr.bf16.mxu0 0
    %1886 = vmatpush1.bf16.xpose.msra.mxu0 0
    %1887 = vmatprep.subr.bf16.mxu0 0
    %1888 = vmatpush1.bf16.xpose.msra.mxu0 0
    %1889 = vmatprep.subr.bf16.mxu0 0
    %1890 = vmatpush1.bf16.xpose.msra.mxu0 0
    %1891 = vmatprep.subr.bf16.mxu0 0
    %1892 = vmatpush1.bf16.xpose.msra.mxu0 0
    %1893 = vmatprep.subr.bf16.mxu0 0
    %1894 = vmatpush1.bf16.xpose.msra.mxu0 0
    %1895 = vmatprep.subr.bf16.mxu0 0
    %1896 = vmatpush1.bf16.xpose.msra.mxu0 0
    %1897 = vmatprep.subr.bf16.mxu0 0
    %1898 = vmatpush1.bf16.xpose.msra.mxu0 0
    %1899 = vmatprep.subr.bf16.mxu0 0
    %1900 = vmatpush1.bf16.xpose.msra.mxu0 0
    %1901 = vmatprep.subr.bf16.mxu0 0
    %1902 = vmatpush1.bf16.xpose.msra.mxu0 0
    %1903 = vmatprep.subr.bf16.mxu0 0
    %1904 = vmatpush1.bf16.xpose.msra.mxu0 0
    %1905 = vmatprep.subr.bf16.mxu0 0
    %1906 = vmatpush1.bf16.xpose.msra.mxu0 0
    %1907 = vmatprep.mubr.bf16.mxu0 0
    %1908 = vmatmul.mubr.bf16.gmra.mrb[0].mxu0 %v1870
    %v1909 = vpop.f32.mrb[0].mxu0
    %v1910 = vadd.f32 0.0, %v1909
    %v1911 = vpop.f32.mrb[0].mxu0
    %v1912 = vpop.f32.mrb[0].mxu0
    %v1913 = vpop.f32.mrb[0].mxu0
    %1914 = vdwg.mxu0
    %1916 = vrot.lane.b32.xlu0 %v1715, 96
    %v1917 = vpop.permute.xlu0 %1916
    %v1919 = vsel %vm296, %v1715, 0
    %v1922 = vsel %vm296, %v1917, 0
    %1924 = vmatprep.subr.bf16.mxu0 0
    %1925 = vmatpush1.bf16.xpose.msra.mxu0 %v1922
    %1926 = vmatprep.subr.bf16.mxu0 0
    %1927 = vmatpush1.bf16.xpose.msra.mxu0 0
    %1928 = vmatprep.subr.bf16.mxu0 0
    %1929 = vmatpush1.bf16.xpose.msra.mxu0 0
    %1930 = vmatprep.subr.bf16.mxu0 0
    %1931 = vmatpush1.bf16.xpose.msra.mxu0 0
    %1932 = vmatprep.subr.bf16.mxu0 0
    %1933 = vmatpush1.bf16.xpose.msra.mxu0 0
    %1934 = vmatprep.subr.bf16.mxu0 0
    %1935 = vmatpush1.bf16.xpose.msra.mxu0 0
    %1936 = vmatprep.subr.bf16.mxu0 0
    %1937 = vmatpush1.bf16.xpose.msra.mxu0 0
    %1938 = vmatprep.subr.bf16.mxu0 0
    %1939 = vmatpush1.bf16.xpose.msra.mxu0 0
    %1940 = vmatprep.subr.bf16.mxu0 0
    %1941 = vmatpush1.bf16.xpose.msra.mxu0 0
    %1942 = vmatprep.subr.bf16.mxu0 0
    %1943 = vmatpush1.bf16.xpose.msra.mxu0 0
    %1944 = vmatprep.subr.bf16.mxu0 0
    %1945 = vmatpush1.bf16.xpose.msra.mxu0 0
    %1946 = vmatprep.subr.bf16.mxu0 0
    %1947 = vmatpush1.bf16.xpose.msra.mxu0 0
    %1948 = vmatprep.subr.bf16.mxu0 0
    %1949 = vmatpush1.bf16.xpose.msra.mxu0 0
    %1950 = vmatprep.subr.bf16.mxu0 0
    %1951 = vmatpush1.bf16.xpose.msra.mxu0 0
    %1952 = vmatprep.subr.bf16.mxu0 0
    %1953 = vmatpush1.bf16.xpose.msra.mxu0 0
    %1954 = vmatprep.subr.bf16.mxu0 0
    %1955 = vmatpush1.bf16.xpose.msra.mxu0 0
    %1956 = vmatprep.mubr.bf16.mxu0 0
    %1957 = vmatmul.mubr.bf16.gmra.mrb[0].mxu0 %v1919
    %v1958 = vpop.f32.mrb[0].mxu0
    %v1959 = vadd.f32 0.0, %v1958
    %v1960 = vpop.f32.mrb[0].mxu0
    %v1961 = vpop.f32.mrb[0].mxu0
    %v1962 = vpop.f32.mrb[0].mxu0
    %1963 = vdwg.mxu0
    %1965 = vrot.lane.b32.xlu0 %v1716, 96
    %v1966 = vpop.permute.xlu0 %1965
    %v1968 = vsel %vm296, %v1716, 0
    %v1971 = vsel %vm296, %v1966, 0
    %1973 = vmatprep.subr.bf16.mxu0 0
    %1974 = vmatpush1.bf16.xpose.msra.mxu0 %v1971
    %1975 = vmatprep.subr.bf16.mxu0 0
    %1976 = vmatpush1.bf16.xpose.msra.mxu0 0
    %1977 = vmatprep.subr.bf16.mxu0 0
    %1978 = vmatpush1.bf16.xpose.msra.mxu0 0
    %1979 = vmatprep.subr.bf16.mxu0 0
    %1980 = vmatpush1.bf16.xpose.msra.mxu0 0
    %1981 = vmatprep.subr.bf16.mxu0 0
    %1982 = vmatpush1.bf16.xpose.msra.mxu0 0
    %1983 = vmatprep.subr.bf16.mxu0 0
    %1984 = vmatpush1.bf16.xpose.msra.mxu0 0
    %1985 = vmatprep.subr.bf16.mxu0 0
    %1986 = vmatpush1.bf16.xpose.msra.mxu0 0
    %1987 = vmatprep.subr.bf16.mxu0 0
    %1988 = vmatpush1.bf16.xpose.msra.mxu0 0
    %1989 = vmatprep.subr.bf16.mxu0 0
    %1990 = vmatpush1.bf16.xpose.msra.mxu0 0
    %1991 = vmatprep.subr.bf16.mxu0 0
    %1992 = vmatpush1.bf16.xpose.msra.mxu0 0
    %1993 = vmatprep.subr.bf16.mxu0 0
    %1994 = vmatpush1.bf16.xpose.msra.mxu0 0
    %1995 = vmatprep.subr.bf16.mxu0 0
    %1996 = vmatpush1.bf16.xpose.msra.mxu0 0
    %1997 = vmatprep.subr.bf16.mxu0 0
    %1998 = vmatpush1.bf16.xpose.msra.mxu0 0
    %1999 = vmatprep.subr.bf16.mxu0 0
    %2000 = vmatpush1.bf16.xpose.msra.mxu0 0
    %2001 = vmatprep.subr.bf16.mxu0 0
    %2002 = vmatpush1.bf16.xpose.msra.mxu0 0
    %2003 = vmatprep.subr.bf16.mxu0 0
    %2004 = vmatpush1.bf16.xpose.msra.mxu0 0
    %2005 = vmatprep.mubr.bf16.mxu0 0
    %2006 = vmatmul.mubr.bf16.gmra.mrb[0].mxu0 %v1968
    %v2007 = vpop.f32.mrb[0].mxu0
    %v2008 = vadd.f32 0.0, %v2007
    %v2009 = vpop.f32.mrb[0].mxu0
    %v2010 = vpop.f32.mrb[0].mxu0
    %v2011 = vpop.f32.mrb[0].mxu0
    %2012 = vdwg.mxu0
    %2014 = vrot.lane.b32.xlu0 %v1717, 96
    %v2015 = vpop.permute.xlu0 %2014
    %v2017 = vsel %vm296, %v1717, 0
    %v2020 = vsel %vm296, %v2015, 0
    %2022 = vmatprep.subr.bf16.mxu0 0
    %2023 = vmatpush1.bf16.xpose.msra.mxu0 %v2020
    %2024 = vmatprep.subr.bf16.mxu0 0
    %2025 = vmatpush1.bf16.xpose.msra.mxu0 0
    %2026 = vmatprep.subr.bf16.mxu0 0
    %2027 = vmatpush1.bf16.xpose.msra.mxu0 0
    %2028 = vmatprep.subr.bf16.mxu0 0
    %2029 = vmatpush1.bf16.xpose.msra.mxu0 0
    %2030 = vmatprep.subr.bf16.mxu0 0
    %2031 = vmatpush1.bf16.xpose.msra.mxu0 0
    %2032 = vmatprep.subr.bf16.mxu0 0
    %2033 = vmatpush1.bf16.xpose.msra.mxu0 0
    %2034 = vmatprep.subr.bf16.mxu0 0
    %2035 = vmatpush1.bf16.xpose.msra.mxu0 0
    %2036 = vmatprep.subr.bf16.mxu0 0
    %2037 = vmatpush1.bf16.xpose.msra.mxu0 0
    %2038 = vmatprep.subr.bf16.mxu0 0
    %2039 = vmatpush1.bf16.xpose.msra.mxu0 0
    %2040 = vmatprep.subr.bf16.mxu0 0
    %2041 = vmatpush1.bf16.xpose.msra.mxu0 0
    %2042 = vmatprep.subr.bf16.mxu0 0
    %2043 = vmatpush1.bf16.xpose.msra.mxu0 0
    %2044 = vmatprep.subr.bf16.mxu0 0
    %2045 = vmatpush1.bf16.xpose.msra.mxu0 0
    %2046 = vmatprep.subr.bf16.mxu0 0
    %2047 = vmatpush1.bf16.xpose.msra.mxu0 0
    %2048 = vmatprep.subr.bf16.mxu0 0
    %2049 = vmatpush1.bf16.xpose.msra.mxu0 0
    %2050 = vmatprep.subr.bf16.mxu0 0
    %2051 = vmatpush1.bf16.xpose.msra.mxu0 0
    %2052 = vmatprep.subr.bf16.mxu0 0
    %2053 = vmatpush1.bf16.xpose.msra.mxu0 0
    %2054 = vmatprep.mubr.bf16.mxu0 0
    %2055 = vmatmul.mubr.bf16.gmra.mrb[0].mxu0 %v2017
    %v2056 = vpop.f32.mrb[0].mxu0
    %v2057 = vadd.f32 0.0, %v2056
    %v2058 = vpop.f32.mrb[0].mxu0
    %v2059 = vpop.f32.mrb[0].mxu0
    %v2060 = vpop.f32.mrb[0].mxu0
    %2061 = vdwg.mxu0
    %2063 = vrot.lane.b32.xlu0 %v1718, 96
    %v2064 = vpop.permute.xlu0 %2063
    %v2066 = vsel %vm296, %v1718, 0
    %v2069 = vsel %vm296, %v2064, 0
    %2071 = vmatprep.subr.bf16.mxu0 0
    %2072 = vmatpush1.bf16.xpose.msra.mxu0 %v2069
    %2073 = vmatprep.subr.bf16.mxu0 0
    %2074 = vmatpush1.bf16.xpose.msra.mxu0 0
    %2075 = vmatprep.subr.bf16.mxu0 0
    %2076 = vmatpush1.bf16.xpose.msra.mxu0 0
    %2077 = vmatprep.subr.bf16.mxu0 0
    %2078 = vmatpush1.bf16.xpose.msra.mxu0 0
    %2079 = vmatprep.subr.bf16.mxu0 0
    %2080 = vmatpush1.bf16.xpose.msra.mxu0 0
    %2081 = vmatprep.subr.bf16.mxu0 0
    %2082 = vmatpush1.bf16.xpose.msra.mxu0 0
    %2083 = vmatprep.subr.bf16.mxu0 0
    %2084 = vmatpush1.bf16.xpose.msra.mxu0 0
    %2085 = vmatprep.subr.bf16.mxu0 0
    %2086 = vmatpush1.bf16.xpose.msra.mxu0 0
    %2087 = vmatprep.subr.bf16.mxu0 0
    %2088 = vmatpush1.bf16.xpose.msra.mxu0 0
    %2089 = vmatprep.subr.bf16.mxu0 0
    %2090 = vmatpush1.bf16.xpose.msra.mxu0 0
    %2091 = vmatprep.subr.bf16.mxu0 0
    %2092 = vmatpush1.bf16.xpose.msra.mxu0 0
    %2093 = vmatprep.subr.bf16.mxu0 0
    %2094 = vmatpush1.bf16.xpose.msra.mxu0 0
    %2095 = vmatprep.subr.bf16.mxu0 0
    %2096 = vmatpush1.bf16.xpose.msra.mxu0 0
    %2097 = vmatprep.subr.bf16.mxu0 0
    %2098 = vmatpush1.bf16.xpose.msra.mxu0 0
    %2099 = vmatprep.subr.bf16.mxu0 0
    %2100 = vmatpush1.bf16.xpose.msra.mxu0 0
    %2101 = vmatprep.subr.bf16.mxu0 0
    %2102 = vmatpush1.bf16.xpose.msra.mxu0 0
    %2103 = vmatprep.mubr.bf16.mxu0 0
    %2104 = vmatmul.mubr.bf16.gmra.mrb[0].mxu0 %v2066
    %v2105 = vpop.f32.mrb[0].mxu0
    %v2106 = vadd.f32 0.0, %v2105
    %v2107 = vpop.f32.mrb[0].mxu0
    %v2108 = vpop.f32.mrb[0].mxu0
    %v2109 = vpop.f32.mrb[0].mxu0
    %2110 = vdwg.mxu0
    %v2111 = vmul.f32 %v1763, 0.35355338
    %v2112 = vmul.f32 %v1812, 0.35355338
    %v2113 = vmul.f32 %v1861, 0.35355338
    %v2114 = vmul.f32 %v1910, 0.35355338
    %v2115 = vmul.f32 %v1959, 0.35355338
    %v2116 = vmul.f32 %v2008, 0.35355338
    %v2117 = vmul.f32 %v2057, 0.35355338
    %v2118 = vmul.f32 %v2106, 0.35355338
    %v2119 = vadd.f32 %v2111, %v60
    %v2120 = vadd.f32 %v2112, %v61
    %v2121 = vadd.f32 %v2113, %v62
    %v2122 = vadd.f32 %v2114, %v63
    %v2123 = vadd.f32 %v2115, %v64
    %v2124 = vadd.f32 %v2116, %v65
    %v2125 = vadd.f32 %v2117, %v66
    %v2126 = vadd.f32 %v2118, %v67
    %v2127 = vsel %vm296, %v2119, -inf
    %2128 = vmax.xlane.f32.xlu0 %v2127
    %v2129 = vpop.xlane.xlu0 %2128
    %v2130 = vsel %vm296, %v2120, -inf
    %2131 = vmax.xlane.f32.xlu0 %v2130
    %v2132 = vpop.xlane.xlu0 %2131
    %v2133 = vsel %vm296, %v2121, -inf
    %2134 = vmax.xlane.f32.xlu0 %v2133
    %v2135 = vpop.xlane.xlu0 %2134
    %v2136 = vsel %vm296, %v2122, -inf
    %2137 = vmax.xlane.f32.xlu0 %v2136
    %v2138 = vpop.xlane.xlu0 %2137
    %v2139 = vsel %vm296, %v2123, -inf
    %2140 = vmax.xlane.f32.xlu0 %v2139
    %v2141 = vpop.xlane.xlu0 %2140
    %v2142 = vsel %vm296, %v2124, -inf
    %2143 = vmax.xlane.f32.xlu0 %v2142
    %v2144 = vpop.xlane.xlu0 %2143
    %v2145 = vsel %vm296, %v2125, -inf
    %2146 = vmax.xlane.f32.xlu0 %v2145
    %v2147 = vpop.xlane.xlu0 %2146
    %v2148 = vsel %vm296, %v2126, -inf
    %2149 = vmax.xlane.f32.xlu0 %v2148
    %v2150 = vpop.xlane.xlu0 %2149
    %v2151 = vsub.f32 %v2119, %v2129
    %v2152 = vsub.f32 %v2120, %v2132
    %v2153 = vsub.f32 %v2121, %v2135
    %v2154 = vsub.f32 %v2122, %v2138
    %v2155 = vsub.f32 %v2123, %v2141
    %v2156 = vsub.f32 %v2124, %v2144
    %v2157 = vsub.f32 %v2125, %v2147
    %v2158 = vsub.f32 %v2126, %v2150
    %v2159 = vmul.f32 %v2151, 1.442695
    %v2160 = vpow.pop %v2159
    %v2161 = vmul.f32 %v2152, 1.442695
    %v2162 = vpow.pop %v2161
    %v2163 = vmul.f32 %v2153, 1.442695
    %v2164 = vpow.pop %v2163
    %v2165 = vmul.f32 %v2154, 1.442695
    %v2166 = vpow.pop %v2165
    %v2167 = vmul.f32 %v2155, 1.442695
    %v2168 = vpow.pop %v2167
    %v2169 = vmul.f32 %v2156, 1.442695
    %v2170 = vpow.pop %v2169
    %v2171 = vmul.f32 %v2157, 1.442695
    %v2172 = vpow.pop %v2171
    %v2173 = vmul.f32 %v2158, 1.442695
    %v2174 = vpow.pop %v2173
    %v2175 = vsel %vm296, %v2160, 0.0
    %2176 = vadd.xlane.f32.xlu0 %v2175
    %v2177 = vpop.xlane.xlu0 %2176
    %v2178 = vsel %vm296, %v2162, 0.0
    %2179 = vadd.xlane.f32.xlu0 %v2178
    %v2180 = vpop.xlane.xlu0 %2179
    %v2181 = vsel %vm296, %v2164, 0.0
    %2182 = vadd.xlane.f32.xlu0 %v2181
    %v2183 = vpop.xlane.xlu0 %2182
    %v2184 = vsel %vm296, %v2166, 0.0
    %2185 = vadd.xlane.f32.xlu0 %v2184
    %v2186 = vpop.xlane.xlu0 %2185
    %v2187 = vsel %vm296, %v2168, 0.0
    %2188 = vadd.xlane.f32.xlu0 %v2187
    %v2189 = vpop.xlane.xlu0 %2188
    %v2190 = vsel %vm296, %v2170, 0.0
    %2191 = vadd.xlane.f32.xlu0 %v2190
    %v2192 = vpop.xlane.xlu0 %2191
    %v2193 = vsel %vm296, %v2172, 0.0
    %2194 = vadd.xlane.f32.xlu0 %v2193
    %v2195 = vpop.xlane.xlu0 %2194
    %v2196 = vsel %vm296, %v2174, 0.0
    %2197 = vadd.xlane.f32.xlu0 %v2196
    %v2198 = vpop.xlane.xlu0 %2197
    %v2199 = vrcp.pop %v2177
    %v2200 = vrcp.pop %v2180
    %v2201 = vrcp.pop %v2183
    %v2202 = vrcp.pop %v2186
    %v2203 = vrcp.pop %v2189
    %v2204 = vrcp.pop %v2192
    %v2205 = vrcp.pop %v2195
    %v2206 = vrcp.pop %v2198
    %v2207 = vmul.f32 %v2160, %v2199
    %v2208 = vmul.f32 %v2162, %v2200
    %v2209 = vmul.f32 %v2164, %v2201
    %v2210 = vmul.f32 %v2166, %v2202
    %v2211 = vmul.f32 %v2168, %v2203
    %v2212 = vmul.f32 %v2170, %v2204
    %v2213 = vmul.f32 %v2172, %v2205
    %v2214 = vmul.f32 %v2174, %v2206
    %v2215 = vpack.c.bf16 %v2207, %v2207
    %v2216 = vpack.c.bf16 %v2208, %v2208
    %v2217 = vpack.c.bf16 %v2209, %v2209
    %v2218 = vpack.c.bf16 %v2210, %v2210
    %v2219 = vpack.c.bf16 %v2211, %v2211
    %v2220 = vpack.c.bf16 %v2212, %v2212
    %v2221 = vpack.c.bf16 %v2213, %v2213
    %v2222 = vpack.c.bf16 %v2214, %v2214
    %2223 = vrot.lane.b32.xlu0 %v1711, 64
    %v2224 = vpop.permute.xlu0 %2223
    %v2226 = vsel %vm296, %v2215, 0
    %v2229 = vsel %vm803, %v2224, 0
    %2231 = vmatprep.subr.bf16.mxu0 0
    %2232 = vmatpush1.bf16.msra.mxu0 %v2229
    %2233 = vmatprep.subr.bf16.mxu0 0
    %2234 = vmatpush1.bf16.msra.mxu0 0
    %2235 = vmatprep.subr.bf16.mxu0 0
    %2236 = vmatpush1.bf16.msra.mxu0 0
    %2237 = vmatprep.subr.bf16.mxu0 0
    %2238 = vmatpush1.bf16.msra.mxu0 0
    %2239 = vmatprep.subr.bf16.mxu0 0
    %2240 = vmatpush1.bf16.msra.mxu0 0
    %2241 = vmatprep.subr.bf16.mxu0 0
    %2242 = vmatpush1.bf16.msra.mxu0 0
    %2243 = vmatprep.subr.bf16.mxu0 0
    %2244 = vmatpush1.bf16.msra.mxu0 0
    %2245 = vmatprep.subr.bf16.mxu0 0
    %2246 = vmatpush1.bf16.msra.mxu0 0
    %2247 = vmatprep.subr.bf16.mxu0 0
    %2248 = vmatpush1.bf16.msra.mxu0 0
    %2249 = vmatprep.subr.bf16.mxu0 0
    %2250 = vmatpush1.bf16.msra.mxu0 0
    %2251 = vmatprep.subr.bf16.mxu0 0
    %2252 = vmatpush1.bf16.msra.mxu0 0
    %2253 = vmatprep.subr.bf16.mxu0 0
    %2254 = vmatpush1.bf16.msra.mxu0 0
    %2255 = vmatprep.subr.bf16.mxu0 0
    %2256 = vmatpush1.bf16.msra.mxu0 0
    %2257 = vmatprep.subr.bf16.mxu0 0
    %2258 = vmatpush1.bf16.msra.mxu0 0
    %2259 = vmatprep.subr.bf16.mxu0 0
    %2260 = vmatpush1.bf16.msra.mxu0 0
    %2261 = vmatprep.subr.bf16.mxu0 0
    %2262 = vmatpush1.bf16.msra.mxu0 0
    %2263 = vmatprep.mubr.bf16.mxu0 0
    %2264 = vmatmul.mubr.bf16.gmra.mrb[0].mxu0 %v2226
    %v2265 = vpop.f32.mrb[0].mxu0
    %v2266 = vadd.f32 0.0, %v2265
    %v2267 = vpop.f32.mrb[0].mxu0
    %v2268 = vpop.f32.mrb[0].mxu0
    %v2269 = vpop.f32.mrb[0].mxu0
    %2270 = vdwg.mxu0
    %2271 = vrot.lane.b32.xlu0 %v1712, 64
    %v2272 = vpop.permute.xlu0 %2271
    %v2274 = vsel %vm296, %v2216, 0
    %v2277 = vsel %vm803, %v2272, 0
    %2279 = vmatprep.subr.bf16.mxu0 0
    %2280 = vmatpush1.bf16.msra.mxu0 %v2277
    %2281 = vmatprep.subr.bf16.mxu0 0
    %2282 = vmatpush1.bf16.msra.mxu0 0
    %2283 = vmatprep.subr.bf16.mxu0 0
    %2284 = vmatpush1.bf16.msra.mxu0 0
    %2285 = vmatprep.subr.bf16.mxu0 0
    %2286 = vmatpush1.bf16.msra.mxu0 0
    %2287 = vmatprep.subr.bf16.mxu0 0
    %2288 = vmatpush1.bf16.msra.mxu0 0
    %2289 = vmatprep.subr.bf16.mxu0 0
    %2290 = vmatpush1.bf16.msra.mxu0 0
    %2291 = vmatprep.subr.bf16.mxu0 0
    %2292 = vmatpush1.bf16.msra.mxu0 0
    %2293 = vmatprep.subr.bf16.mxu0 0
    %2294 = vmatpush1.bf16.msra.mxu0 0
    %2295 = vmatprep.subr.bf16.mxu0 0
    %2296 = vmatpush1.bf16.msra.mxu0 0
    %2297 = vmatprep.subr.bf16.mxu0 0
    %2298 = vmatpush1.bf16.msra.mxu0 0
    %2299 = vmatprep.subr.bf16.mxu0 0
    %2300 = vmatpush1.bf16.msra.mxu0 0
    %2301 = vmatprep.subr.bf16.mxu0 0
    %2302 = vmatpush1.bf16.msra.mxu0 0
    %2303 = vmatprep.subr.bf16.mxu0 0
    %2304 = vmatpush1.bf16.msra.mxu0 0
    %2305 = vmatprep.subr.bf16.mxu0 0
    %2306 = vmatpush1.bf16.msra.mxu0 0
    %2307 = vmatprep.subr.bf16.mxu0 0
    %2308 = vmatpush1.bf16.msra.mxu0 0
    %2309 = vmatprep.subr.bf16.mxu0 0
    %2310 = vmatpush1.bf16.msra.mxu0 0
    %2311 = vmatprep.mubr.bf16.mxu0 0
    %2312 = vmatmul.mubr.bf16.gmra.mrb[0].mxu0 %v2274
    %v2313 = vpop.f32.mrb[0].mxu0
    %v2314 = vadd.f32 0.0, %v2313
    %v2315 = vpop.f32.mrb[0].mxu0
    %v2316 = vpop.f32.mrb[0].mxu0
    %v2317 = vpop.f32.mrb[0].mxu0
    %2318 = vdwg.mxu0
    %2319 = vrot.lane.b32.xlu0 %v1713, 64
    %v2320 = vpop.permute.xlu0 %2319
    %v2322 = vsel %vm296, %v2217, 0
    %v2325 = vsel %vm803, %v2320, 0
    %2327 = vmatprep.subr.bf16.mxu0 0
    %2328 = vmatpush1.bf16.msra.mxu0 %v2325
    %2329 = vmatprep.subr.bf16.mxu0 0
    %2330 = vmatpush1.bf16.msra.mxu0 0
    %2331 = vmatprep.subr.bf16.mxu0 0
    %2332 = vmatpush1.bf16.msra.mxu0 0
    %2333 = vmatprep.subr.bf16.mxu0 0
    %2334 = vmatpush1.bf16.msra.mxu0 0
    %2335 = vmatprep.subr.bf16.mxu0 0
    %2336 = vmatpush1.bf16.msra.mxu0 0
    %2337 = vmatprep.subr.bf16.mxu0 0
    %2338 = vmatpush1.bf16.msra.mxu0 0
    %2339 = vmatprep.subr.bf16.mxu0 0
    %2340 = vmatpush1.bf16.msra.mxu0 0
    %2341 = vmatprep.subr.bf16.mxu0 0
    %2342 = vmatpush1.bf16.msra.mxu0 0
    %2343 = vmatprep.subr.bf16.mxu0 0
    %2344 = vmatpush1.bf16.msra.mxu0 0
    %2345 = vmatprep.subr.bf16.mxu0 0
    %2346 = vmatpush1.bf16.msra.mxu0 0
    %2347 = vmatprep.subr.bf16.mxu0 0
    %2348 = vmatpush1.bf16.msra.mxu0 0
    %2349 = vmatprep.subr.bf16.mxu0 0
    %2350 = vmatpush1.bf16.msra.mxu0 0
    %2351 = vmatprep.subr.bf16.mxu0 0
    %2352 = vmatpush1.bf16.msra.mxu0 0
    %2353 = vmatprep.subr.bf16.mxu0 0
    %2354 = vmatpush1.bf16.msra.mxu0 0
    %2355 = vmatprep.subr.bf16.mxu0 0
    %2356 = vmatpush1.bf16.msra.mxu0 0
    %2357 = vmatprep.subr.bf16.mxu0 0
    %2358 = vmatpush1.bf16.msra.mxu0 0
    %2359 = vmatprep.mubr.bf16.mxu0 0
    %2360 = vmatmul.mubr.bf16.gmra.mrb[0].mxu0 %v2322
    %v2361 = vpop.f32.mrb[0].mxu0
    %v2362 = vadd.f32 0.0, %v2361
    %v2363 = vpop.f32.mrb[0].mxu0
    %v2364 = vpop.f32.mrb[0].mxu0
    %v2365 = vpop.f32.mrb[0].mxu0
    %2366 = vdwg.mxu0
    %2367 = vrot.lane.b32.xlu0 %v1714, 64
    %v2368 = vpop.permute.xlu0 %2367
    %v2370 = vsel %vm296, %v2218, 0
    %v2373 = vsel %vm803, %v2368, 0
    %2375 = vmatprep.subr.bf16.mxu0 0
    %2376 = vmatpush1.bf16.msra.mxu0 %v2373
    %2377 = vmatprep.subr.bf16.mxu0 0
    %2378 = vmatpush1.bf16.msra.mxu0 0
    %2379 = vmatprep.subr.bf16.mxu0 0
    %2380 = vmatpush1.bf16.msra.mxu0 0
    %2381 = vmatprep.subr.bf16.mxu0 0
    %2382 = vmatpush1.bf16.msra.mxu0 0
    %2383 = vmatprep.subr.bf16.mxu0 0
    %2384 = vmatpush1.bf16.msra.mxu0 0
    %2385 = vmatprep.subr.bf16.mxu0 0
    %2386 = vmatpush1.bf16.msra.mxu0 0
    %2387 = vmatprep.subr.bf16.mxu0 0
    %2388 = vmatpush1.bf16.msra.mxu0 0
    %2389 = vmatprep.subr.bf16.mxu0 0
    %2390 = vmatpush1.bf16.msra.mxu0 0
    %2391 = vmatprep.subr.bf16.mxu0 0
    %2392 = vmatpush1.bf16.msra.mxu0 0
    %2393 = vmatprep.subr.bf16.mxu0 0
    %2394 = vmatpush1.bf16.msra.mxu0 0
    %2395 = vmatprep.subr.bf16.mxu0 0
    %2396 = vmatpush1.bf16.msra.mxu0 0
    %2397 = vmatprep.subr.bf16.mxu0 0
    %2398 = vmatpush1.bf16.msra.mxu0 0
    %2399 = vmatprep.subr.bf16.mxu0 0
    %2400 = vmatpush1.bf16.msra.mxu0 0
    %2401 = vmatprep.subr.bf16.mxu0 0
    %2402 = vmatpush1.bf16.msra.mxu0 0
    %2403 = vmatprep.subr.bf16.mxu0 0
    %2404 = vmatpush1.bf16.msra.mxu0 0
    %2405 = vmatprep.subr.bf16.mxu0 0
    %2406 = vmatpush1.bf16.msra.mxu0 0
    %2407 = vmatprep.mubr.bf16.mxu0 0
    %2408 = vmatmul.mubr.bf16.gmra.mrb[0].mxu0 %v2370
    %v2409 = vpop.f32.mrb[0].mxu0
    %v2410 = vadd.f32 0.0, %v2409
    %v2411 = vpop.f32.mrb[0].mxu0
    %v2412 = vpop.f32.mrb[0].mxu0
    %v2413 = vpop.f32.mrb[0].mxu0
    %2414 = vdwg.mxu0
    %2415 = vrot.lane.b32.xlu0 %v1715, 64
    %v2416 = vpop.permute.xlu0 %2415
    %v2418 = vsel %vm296, %v2219, 0
    %v2421 = vsel %vm803, %v2416, 0
    %2423 = vmatprep.subr.bf16.mxu0 0
    %2424 = vmatpush1.bf16.msra.mxu0 %v2421
    %2425 = vmatprep.subr.bf16.mxu0 0
    %2426 = vmatpush1.bf16.msra.mxu0 0
    %2427 = vmatprep.subr.bf16.mxu0 0
    %2428 = vmatpush1.bf16.msra.mxu0 0
    %2429 = vmatprep.subr.bf16.mxu0 0
    %2430 = vmatpush1.bf16.msra.mxu0 0
    %2431 = vmatprep.subr.bf16.mxu0 0
    %2432 = vmatpush1.bf16.msra.mxu0 0
    %2433 = vmatprep.subr.bf16.mxu0 0
    %2434 = vmatpush1.bf16.msra.mxu0 0
    %2435 = vmatprep.subr.bf16.mxu0 0
    %2436 = vmatpush1.bf16.msra.mxu0 0
    %2437 = vmatprep.subr.bf16.mxu0 0
    %2438 = vmatpush1.bf16.msra.mxu0 0
    %2439 = vmatprep.subr.bf16.mxu0 0
    %2440 = vmatpush1.bf16.msra.mxu0 0
    %2441 = vmatprep.subr.bf16.mxu0 0
    %2442 = vmatpush1.bf16.msra.mxu0 0
    %2443 = vmatprep.subr.bf16.mxu0 0
    %2444 = vmatpush1.bf16.msra.mxu0 0
    %2445 = vmatprep.subr.bf16.mxu0 0
    %2446 = vmatpush1.bf16.msra.mxu0 0
    %2447 = vmatprep.subr.bf16.mxu0 0
    %2448 = vmatpush1.bf16.msra.mxu0 0
    %2449 = vmatprep.subr.bf16.mxu0 0
    %2450 = vmatpush1.bf16.msra.mxu0 0
    %2451 = vmatprep.subr.bf16.mxu0 0
    %2452 = vmatpush1.bf16.msra.mxu0 0
    %2453 = vmatprep.subr.bf16.mxu0 0
    %2454 = vmatpush1.bf16.msra.mxu0 0
    %2455 = vmatprep.mubr.bf16.mxu0 0
    %2456 = vmatmul.mubr.bf16.gmra.mrb[0].mxu0 %v2418
    %v2457 = vpop.f32.mrb[0].mxu0
    %v2458 = vadd.f32 0.0, %v2457
    %v2459 = vpop.f32.mrb[0].mxu0
    %v2460 = vpop.f32.mrb[0].mxu0
    %v2461 = vpop.f32.mrb[0].mxu0
    %2462 = vdwg.mxu0
    %2463 = vrot.lane.b32.xlu0 %v1716, 64
    %v2464 = vpop.permute.xlu0 %2463
    %v2466 = vsel %vm296, %v2220, 0
    %v2469 = vsel %vm803, %v2464, 0
    %2471 = vmatprep.subr.bf16.mxu0 0
    %2472 = vmatpush1.bf16.msra.mxu0 %v2469
    %2473 = vmatprep.subr.bf16.mxu0 0
    %2474 = vmatpush1.bf16.msra.mxu0 0
    %2475 = vmatprep.subr.bf16.mxu0 0
    %2476 = vmatpush1.bf16.msra.mxu0 0
    %2477 = vmatprep.subr.bf16.mxu0 0
    %2478 = vmatpush1.bf16.msra.mxu0 0
    %2479 = vmatprep.subr.bf16.mxu0 0
    %2480 = vmatpush1.bf16.msra.mxu0 0
    %2481 = vmatprep.subr.bf16.mxu0 0
    %2482 = vmatpush1.bf16.msra.mxu0 0
    %2483 = vmatprep.subr.bf16.mxu0 0
    %2484 = vmatpush1.bf16.msra.mxu0 0
    %2485 = vmatprep.subr.bf16.mxu0 0
    %2486 = vmatpush1.bf16.msra.mxu0 0
    %2487 = vmatprep.subr.bf16.mxu0 0
    %2488 = vmatpush1.bf16.msra.mxu0 0
    %2489 = vmatprep.subr.bf16.mxu0 0
    %2490 = vmatpush1.bf16.msra.mxu0 0
    %2491 = vmatprep.subr.bf16.mxu0 0
    %2492 = vmatpush1.bf16.msra.mxu0 0
    %2493 = vmatprep.subr.bf16.mxu0 0
    %2494 = vmatpush1.bf16.msra.mxu0 0
    %2495 = vmatprep.subr.bf16.mxu0 0
    %2496 = vmatpush1.bf16.msra.mxu0 0
    %2497 = vmatprep.subr.bf16.mxu0 0
    %2498 = vmatpush1.bf16.msra.mxu0 0
    %2499 = vmatprep.subr.bf16.mxu0 0
    %2500 = vmatpush1.bf16.msra.mxu0 0
    %2501 = vmatprep.subr.bf16.mxu0 0
    %2502 = vmatpush1.bf16.msra.mxu0 0
    %2503 = vmatprep.mubr.bf16.mxu0 0
    %2504 = vmatmul.mubr.bf16.gmra.mrb[0].mxu0 %v2466
    %v2505 = vpop.f32.mrb[0].mxu0
    %v2506 = vadd.f32 0.0, %v2505
    %v2507 = vpop.f32.mrb[0].mxu0
    %v2508 = vpop.f32.mrb[0].mxu0
    %v2509 = vpop.f32.mrb[0].mxu0
    %2510 = vdwg.mxu0
    %2511 = vrot.lane.b32.xlu0 %v1717, 64
    %v2512 = vpop.permute.xlu0 %2511
    %v2514 = vsel %vm296, %v2221, 0
    %v2517 = vsel %vm803, %v2512, 0
    %2519 = vmatprep.subr.bf16.mxu0 0
    %2520 = vmatpush1.bf16.msra.mxu0 %v2517
    %2521 = vmatprep.subr.bf16.mxu0 0
    %2522 = vmatpush1.bf16.msra.mxu0 0
    %2523 = vmatprep.subr.bf16.mxu0 0
    %2524 = vmatpush1.bf16.msra.mxu0 0
    %2525 = vmatprep.subr.bf16.mxu0 0
    %2526 = vmatpush1.bf16.msra.mxu0 0
    %2527 = vmatprep.subr.bf16.mxu0 0
    %2528 = vmatpush1.bf16.msra.mxu0 0
    %2529 = vmatprep.subr.bf16.mxu0 0
    %2530 = vmatpush1.bf16.msra.mxu0 0
    %2531 = vmatprep.subr.bf16.mxu0 0
    %2532 = vmatpush1.bf16.msra.mxu0 0
    %2533 = vmatprep.subr.bf16.mxu0 0
    %2534 = vmatpush1.bf16.msra.mxu0 0
    %2535 = vmatprep.subr.bf16.mxu0 0
    %2536 = vmatpush1.bf16.msra.mxu0 0
    %2537 = vmatprep.subr.bf16.mxu0 0
    %2538 = vmatpush1.bf16.msra.mxu0 0
    %2539 = vmatprep.subr.bf16.mxu0 0
    %2540 = vmatpush1.bf16.msra.mxu0 0
    %2541 = vmatprep.subr.bf16.mxu0 0
    %2542 = vmatpush1.bf16.msra.mxu0 0
    %2543 = vmatprep.subr.bf16.mxu0 0
    %2544 = vmatpush1.bf16.msra.mxu0 0
    %2545 = vmatprep.subr.bf16.mxu0 0
    %2546 = vmatpush1.bf16.msra.mxu0 0
    %2547 = vmatprep.subr.bf16.mxu0 0
    %2548 = vmatpush1.bf16.msra.mxu0 0
    %2549 = vmatprep.subr.bf16.mxu0 0
    %2550 = vmatpush1.bf16.msra.mxu0 0
    %2551 = vmatprep.mubr.bf16.mxu0 0
    %2552 = vmatmul.mubr.bf16.gmra.mrb[0].mxu0 %v2514
    %v2553 = vpop.f32.mrb[0].mxu0
    %v2554 = vadd.f32 0.0, %v2553
    %v2555 = vpop.f32.mrb[0].mxu0
    %v2556 = vpop.f32.mrb[0].mxu0
    %v2557 = vpop.f32.mrb[0].mxu0
    %2558 = vdwg.mxu0
    %2559 = vrot.lane.b32.xlu0 %v1718, 64
    %v2560 = vpop.permute.xlu0 %2559
    %v2562 = vsel %vm296, %v2222, 0
    %v2565 = vsel %vm803, %v2560, 0
    %2567 = vmatprep.subr.bf16.mxu0 0
    %2568 = vmatpush1.bf16.msra.mxu0 %v2565
    %2569 = vmatprep.subr.bf16.mxu0 0
    %2570 = vmatpush1.bf16.msra.mxu0 0
    %2571 = vmatprep.subr.bf16.mxu0 0
    %2572 = vmatpush1.bf16.msra.mxu0 0
    %2573 = vmatprep.subr.bf16.mxu0 0
    %2574 = vmatpush1.bf16.msra.mxu0 0
    %2575 = vmatprep.subr.bf16.mxu0 0
    %2576 = vmatpush1.bf16.msra.mxu0 0
    %2577 = vmatprep.subr.bf16.mxu0 0
    %2578 = vmatpush1.bf16.msra.mxu0 0
    %2579 = vmatprep.subr.bf16.mxu0 0
    %2580 = vmatpush1.bf16.msra.mxu0 0
    %2581 = vmatprep.subr.bf16.mxu0 0
    %2582 = vmatpush1.bf16.msra.mxu0 0
    %2583 = vmatprep.subr.bf16.mxu0 0
    %2584 = vmatpush1.bf16.msra.mxu0 0
    %2585 = vmatprep.subr.bf16.mxu0 0
    %2586 = vmatpush1.bf16.msra.mxu0 0
    %2587 = vmatprep.subr.bf16.mxu0 0
    %2588 = vmatpush1.bf16.msra.mxu0 0
    %2589 = vmatprep.subr.bf16.mxu0 0
    %2590 = vmatpush1.bf16.msra.mxu0 0
    %2591 = vmatprep.subr.bf16.mxu0 0
    %2592 = vmatpush1.bf16.msra.mxu0 0
    %2593 = vmatprep.subr.bf16.mxu0 0
    %2594 = vmatpush1.bf16.msra.mxu0 0
    %2595 = vmatprep.subr.bf16.mxu0 0
    %2596 = vmatpush1.bf16.msra.mxu0 0
    %2597 = vmatprep.subr.bf16.mxu0 0
    %2598 = vmatpush1.bf16.msra.mxu0 0
    %2599 = vmatprep.mubr.bf16.mxu0 0
    %2600 = vmatmul.mubr.bf16.gmra.mrb[0].mxu0 %v2562
    %v2601 = vpop.f32.mrb[0].mxu0
    %v2602 = vadd.f32 0.0, %v2601
    %v2603 = vpop.f32.mrb[0].mxu0
    %v2604 = vpop.f32.mrb[0].mxu0
    %v2605 = vpop.f32.mrb[0].mxu0
    %2606 = vdwg.mxu0
    %v2607 = vpack.c.bf16 %v2314, %v2266
    %v2608 = vpack.c.bf16 %v2410, %v2362
    %v2610 = vsel %vm296, %v2608, 0
    %v2613 = vsel %vm803, %v1687, 0
    %2615 = vmatprep.subr.bf16.mxu0 0
    %2616 = vmatpush1.bf16.msra.mxu0 %v2613
    %2617 = vmatprep.subr.bf16.mxu0 0
    %2618 = vmatpush1.bf16.msra.mxu0 0
    %2619 = vmatprep.subr.bf16.mxu0 0
    %2620 = vmatpush1.bf16.msra.mxu0 0
    %2621 = vmatprep.subr.bf16.mxu0 0
    %2622 = vmatpush1.bf16.msra.mxu0 0
    %2623 = vmatprep.subr.bf16.mxu0 0
    %2624 = vmatpush1.bf16.msra.mxu0 0
    %2625 = vmatprep.subr.bf16.mxu0 0
    %2626 = vmatpush1.bf16.msra.mxu0 0
    %2627 = vmatprep.subr.bf16.mxu0 0
    %2628 = vmatpush1.bf16.msra.mxu0 0
    %2629 = vmatprep.subr.bf16.mxu0 0
    %2630 = vmatpush1.bf16.msra.mxu0 0
    %2631 = vmatprep.subr.bf16.mxu0 0
    %2632 = vmatpush1.bf16.msra.mxu0 0
    %2633 = vmatprep.subr.bf16.mxu0 0
    %2634 = vmatpush1.bf16.msra.mxu0 0
    %2635 = vmatprep.subr.bf16.mxu0 0
    %2636 = vmatpush1.bf16.msra.mxu0 0
    %2637 = vmatprep.subr.bf16.mxu0 0
    %2638 = vmatpush1.bf16.msra.mxu0 0
    %2639 = vmatprep.subr.bf16.mxu0 0
    %2640 = vmatpush1.bf16.msra.mxu0 0
    %2641 = vmatprep.subr.bf16.mxu0 0
    %2642 = vmatpush1.bf16.msra.mxu0 0
    %2643 = vmatprep.subr.bf16.mxu0 0
    %2644 = vmatpush1.bf16.msra.mxu0 0
    %2645 = vmatprep.subr.bf16.mxu0 0
    %2646 = vmatpush1.bf16.msra.mxu0 0
    %2647 = vmatprep.mubr.bf16.mxu0 0
    %2648 = vmatmul.mubr.bf16.gmra.mrb[0].mxu0 %v2610
    %v2649 = vpop.f32.mrb[0].mxu0
    %v2650 = vadd.f32 0.0, %v2649
    %v2651 = vpop.f32.mrb[0].mxu0
    %v2652 = vpop.f32.mrb[0].mxu0
    %v2653 = vadd.f32 0.0, %v2652
    %v2654 = vpop.f32.mrb[0].mxu0
    %2655 = vdwg.mxu0
    %v2657 = vsel %vm296, %v2607, 0
    %v2660 = vsel %vm803, %v1686, 0
    %2662 = vmatprep.subr.bf16.mxu0 0
    %2663 = vmatpush1.bf16.msra.mxu0 %v2660
    %2664 = vmatprep.subr.bf16.mxu0 0
    %2665 = vmatpush1.bf16.msra.mxu0 0
    %2666 = vmatprep.subr.bf16.mxu0 0
    %2667 = vmatpush1.bf16.msra.mxu0 0
    %2668 = vmatprep.subr.bf16.mxu0 0
    %2669 = vmatpush1.bf16.msra.mxu0 0
    %2670 = vmatprep.subr.bf16.mxu0 0
    %2671 = vmatpush1.bf16.msra.mxu0 0
    %2672 = vmatprep.subr.bf16.mxu0 0
    %2673 = vmatpush1.bf16.msra.mxu0 0
    %2674 = vmatprep.subr.bf16.mxu0 0
    %2675 = vmatpush1.bf16.msra.mxu0 0
    %2676 = vmatprep.subr.bf16.mxu0 0
    %2677 = vmatpush1.bf16.msra.mxu0 0
    %2678 = vmatprep.subr.bf16.mxu0 0
    %2679 = vmatpush1.bf16.msra.mxu0 0
    %2680 = vmatprep.subr.bf16.mxu0 0
    %2681 = vmatpush1.bf16.msra.mxu0 0
    %2682 = vmatprep.subr.bf16.mxu0 0
    %2683 = vmatpush1.bf16.msra.mxu0 0
    %2684 = vmatprep.subr.bf16.mxu0 0
    %2685 = vmatpush1.bf16.msra.mxu0 0
    %2686 = vmatprep.subr.bf16.mxu0 0
    %2687 = vmatpush1.bf16.msra.mxu0 0
    %2688 = vmatprep.subr.bf16.mxu0 0
    %2689 = vmatpush1.bf16.msra.mxu0 0
    %2690 = vmatprep.subr.bf16.mxu0 0
    %2691 = vmatpush1.bf16.msra.mxu0 0
    %2692 = vmatprep.subr.bf16.mxu0 0
    %2693 = vmatpush1.bf16.msra.mxu0 0
    %2694 = vmatprep.mubr.bf16.mxu0 0
    %2695 = vmatmul.mubr.bf16.gmra.mrb[0].mxu0 %v2657
    %v2696 = vpop.f32.mrb[0].mxu0
    %v2697 = vadd.f32 %v2650, %v2696
    %v2698 = vpop.f32.mrb[0].mxu0
    %v2699 = vpop.f32.mrb[0].mxu0
    %v2700 = vadd.f32 %v2653, %v2699
    %v2701 = vpop.f32.mrb[0].mxu0
    %2702 = vdwg.mxu0
    %v2703 = vpack.c.bf16 %v2506, %v2458
    %v2705 = vsel %vm296, %v2703, 0
    %v2708 = vsel %vm803, %v1688, 0
    %2710 = vmatprep.subr.bf16.mxu0 0
    %2711 = vmatpush1.bf16.msra.mxu0 %v2708
    %2712 = vmatprep.subr.bf16.mxu0 0
    %2713 = vmatpush1.bf16.msra.mxu0 0
    %2714 = vmatprep.subr.bf16.mxu0 0
    %2715 = vmatpush1.bf16.msra.mxu0 0
    %2716 = vmatprep.subr.bf16.mxu0 0
    %2717 = vmatpush1.bf16.msra.mxu0 0
    %2718 = vmatprep.subr.bf16.mxu0 0
    %2719 = vmatpush1.bf16.msra.mxu0 0
    %2720 = vmatprep.subr.bf16.mxu0 0
    %2721 = vmatpush1.bf16.msra.mxu0 0
    %2722 = vmatprep.subr.bf16.mxu0 0
    %2723 = vmatpush1.bf16.msra.mxu0 0
    %2724 = vmatprep.subr.bf16.mxu0 0
    %2725 = vmatpush1.bf16.msra.mxu0 0
    %2726 = vmatprep.subr.bf16.mxu0 0
    %2727 = vmatpush1.bf16.msra.mxu0 0
    %2728 = vmatprep.subr.bf16.mxu0 0
    %2729 = vmatpush1.bf16.msra.mxu0 0
    %2730 = vmatprep.subr.bf16.mxu0 0
    %2731 = vmatpush1.bf16.msra.mxu0 0
    %2732 = vmatprep.subr.bf16.mxu0 0
    %2733 = vmatpush1.bf16.msra.mxu0 0
    %2734 = vmatprep.subr.bf16.mxu0 0
    %2735 = vmatpush1.bf16.msra.mxu0 0
    %2736 = vmatprep.subr.bf16.mxu0 0
    %2737 = vmatpush1.bf16.msra.mxu0 0
    %2738 = vmatprep.subr.bf16.mxu0 0
    %2739 = vmatpush1.bf16.msra.mxu0 0
    %2740 = vmatprep.subr.bf16.mxu0 0
    %2741 = vmatpush1.bf16.msra.mxu0 0
    %2742 = vmatprep.mubr.bf16.mxu0 0
    %2743 = vmatmul.mubr.bf16.gmra.mrb[0].mxu0 %v2705
    %v2744 = vpop.f32.mrb[0].mxu0
    %v2745 = vadd.f32 0.0, %v2744
    %v2746 = vpop.f32.mrb[0].mxu0
    %v2747 = vpop.f32.mrb[0].mxu0
    %v2748 = vadd.f32 0.0, %v2747
    %v2749 = vpop.f32.mrb[0].mxu0
    %2750 = vdwg.mxu0
    %v2751 = vadd.f32 %v2697, %v2745
    %v2752 = vadd.f32 %v2700, %v2748
    %v2753 = vpack.c.bf16 %v2602, %v2554
    %v2755 = vsel %vm296, %v2753, 0
    %v2758 = vsel %vm803, %v1689, 0
    %2760 = vmatprep.subr.bf16.mxu0 0
    %2761 = vmatpush1.bf16.msra.mxu0 %v2758
    %2762 = vmatprep.subr.bf16.mxu0 0
    %2763 = vmatpush1.bf16.msra.mxu0 0
    %2764 = vmatprep.subr.bf16.mxu0 0
    %2765 = vmatpush1.bf16.msra.mxu0 0
    %2766 = vmatprep.subr.bf16.mxu0 0
    %2767 = vmatpush1.bf16.msra.mxu0 0
    %2768 = vmatprep.subr.bf16.mxu0 0
    %2769 = vmatpush1.bf16.msra.mxu0 0
    %2770 = vmatprep.subr.bf16.mxu0 0
    %2771 = vmatpush1.bf16.msra.mxu0 0
    %2772 = vmatprep.subr.bf16.mxu0 0
    %2773 = vmatpush1.bf16.msra.mxu0 0
    %2774 = vmatprep.subr.bf16.mxu0 0
    %2775 = vmatpush1.bf16.msra.mxu0 0
    %2776 = vmatprep.subr.bf16.mxu0 0
    %2777 = vmatpush1.bf16.msra.mxu0 0
    %2778 = vmatprep.subr.bf16.mxu0 0
    %2779 = vmatpush1.bf16.msra.mxu0 0
    %2780 = vmatprep.subr.bf16.mxu0 0
    %2781 = vmatpush1.bf16.msra.mxu0 0
    %2782 = vmatprep.subr.bf16.mxu0 0
    %2783 = vmatpush1.bf16.msra.mxu0 0
    %2784 = vmatprep.subr.bf16.mxu0 0
    %2785 = vmatpush1.bf16.msra.mxu0 0
    %2786 = vmatprep.subr.bf16.mxu0 0
    %2787 = vmatpush1.bf16.msra.mxu0 0
    %2788 = vmatprep.subr.bf16.mxu0 0
    %2789 = vmatpush1.bf16.msra.mxu0 0
    %2790 = vmatprep.subr.bf16.mxu0 0
    %2791 = vmatpush1.bf16.msra.mxu0 0
    %2792 = vmatprep.mubr.bf16.mxu0 0
    %2793 = vmatmul.mubr.bf16.gmra.mrb[0].mxu0 %v2755
    %v2794 = vpop.f32.mrb[0].mxu0
    %v2795 = vadd.f32 0.0, %v2794
    %v2796 = vpop.f32.mrb[0].mxu0
    %v2797 = vpop.f32.mrb[0].mxu0
    %v2798 = vadd.f32 0.0, %v2797
    %v2799 = vpop.f32.mrb[0].mxu0
    %2800 = vdwg.mxu0
    %v2801 = vadd.f32 %v2751, %v2795
    %v2802 = vadd.f32 %v2752, %v2798
    %v2803 = vlaneseq
    %v2804 = vshrl.u32 %v2803, 7
    %v2805 = vsub.s32 0, %v2804
    %v2806 = vrot.slane %v1690, %v2805
    %v2807 = vadd.f32 %v2801, %v2806
    %v2808 = vadd.f32 %v2802, %v2806
    %v2809 = vadd.f32 %v1578, %v2807
    %v2810 = vadd.f32 %v1579, %v2808
    %v2811 = vld [vmem:[#allocation5 + $0x80] sm:$0x1]
    %v2812 = vld [vmem:[#allocation5 + $0x88] sm:$0x1]
    %v2813 = vsel %vm154, %v2809, 0.0
    %2814 = vadd.xlane.f32.xlu0 %v2813
    %v2815 = vpop.xlane.xlu0 %2814
    %v2816 = vsel %vm154, %v2810, 0.0
    %2817 = vadd.xlane.f32.xlu0 %v2816
    %v2818 = vpop.xlane.xlu0 %2817
    %v2819 = vmul.f32 %v2815, %v161
    %v2820 = vmul.f32 %v2818, %v161
    %v2821 = vsub.f32 %v2809, %v2819
    %v2822 = vsub.f32 %v2810, %v2820
    %v2823 = vmul.f32 %v2821, %v2821
    %v2824 = vmul.f32 %v2822, %v2822
    %v2825 = vsel %vm154, %v2823, 0.0
    %2826 = vadd.xlane.f32.xlu0 %v2825
    %v2827 = vpop.xlane.xlu0 %2826
    %v2828 = vsel %vm154, %v2824, 0.0
    %2829 = vadd.xlane.f32.xlu0 %v2828
    %v2830 = vpop.xlane.xlu0 %2829
    %v2831 = vmul.f32 %v2827, %v161
    %v2832 = vmul.f32 %v2830, %v161
    %v2833 = vadd.f32 %v2831, 1e-06
    %v2834 = vadd.f32 %v2832, 1e-06
    %v2835 = vrsqrt.pop %v2833
    %v2836 = vrsqrt.pop %v2834
    %v2837 = vmul.f32 %v2821, %v2835
    %v2838 = vmul.f32 %v2822, %v2836
    %v2839 = vlaneseq
    %v2840 = vshrl.u32 %v2839, 7
    %v2841 = vsub.s32 0, %v2840
    %v2842 = vrot.slane %v2811, %v2841
    %v2843 = vmul.f32 %v2837, %v2842
    %v2844 = vmul.f32 %v2838, %v2842
    %v2845 = vlaneseq
    %v2846 = vshrl.u32 %v2845, 7
    %v2847 = vsub.s32 0, %v2846
    %v2848 = vrot.slane %v2812, %v2847
    %v2849 = vadd.f32 %v2843, %v2848
    %v2850 = vadd.f32 %v2844, %v2848
    %v2851 = vpack.c.bf16 %v2850, %v2849
    %v2852 = vld [vmem:[#allocation2 + $0x80] sm:$0xf]
    %v2853 = vld [vmem:[#allocation2 + $0x84] sm:$0xf]
    %v2854 = vld [vmem:[#allocation2 + $0x88] sm:$0xf]
    %v2855 = vld [vmem:[#allocation2 + $0x8c] sm:$0xf]
    %v2856 = vld [vmem:[#allocation5 + $0x90] sm:$0x1]
    %v2857 = vlaneseq
    %v2858 = vshrl.u32 %v2857, 7
    %v2859 = vsub.s32 0, %v2858
    %v2860 = vrot.slane %v2856, %v2859
    %v2865 = vunpack.c.l.b16 %v2852
    %v2866 = vunpack.c.l.b16 %v2853
    %v2867 = vunpack.c.l.b16 %v2854
    %v2868 = vunpack.c.l.b16 %v2855
    %v2869 = vpack.c.b16 %v2866, %v2865
    %v2870 = vpack.c.b16 %v2868, %v2867
    %v2874 = vsel %vm154, %v2851, 0
    %2876 = vmatprep.subr.bf16.mxu0 0
    %2877 = vmatpush1.bf16.msra.mxu0 %v2869
    %2878 = vmatprep.subr.bf16.mxu0 0
    %2879 = vmatpush1.bf16.msra.mxu0 %v2870
    %2880 = vmatprep.subr.bf16.mxu0 0
    %2881 = vmatpush1.bf16.msra.mxu0 0
    %2882 = vmatprep.subr.bf16.mxu0 0
    %2883 = vmatpush1.bf16.msra.mxu0 0
    %2884 = vmatprep.subr.bf16.mxu0 0
    %2885 = vmatpush1.bf16.msra.mxu0 0
    %2886 = vmatprep.subr.bf16.mxu0 0
    %2887 = vmatpush1.bf16.msra.mxu0 0
    %2888 = vmatprep.subr.bf16.mxu0 0
    %2889 = vmatpush1.bf16.msra.mxu0 0
    %2890 = vmatprep.subr.bf16.mxu0 0
    %2891 = vmatpush1.bf16.msra.mxu0 0
    %2892 = vmatprep.subr.bf16.mxu0 0
    %2893 = vmatpush1.bf16.msra.mxu0 0
    %2894 = vmatprep.subr.bf16.mxu0 0
    %2895 = vmatpush1.bf16.msra.mxu0 0
    %2896 = vmatprep.subr.bf16.mxu0 0
    %2897 = vmatpush1.bf16.msra.mxu0 0
    %2898 = vmatprep.subr.bf16.mxu0 0
    %2899 = vmatpush1.bf16.msra.mxu0 0
    %2900 = vmatprep.subr.bf16.mxu0 0
    %2901 = vmatpush1.bf16.msra.mxu0 0
    %2902 = vmatprep.subr.bf16.mxu0 0
    %2903 = vmatpush1.bf16.msra.mxu0 0
    %2904 = vmatprep.subr.bf16.mxu0 0
    %2905 = vmatpush1.bf16.msra.mxu0 0
    %2906 = vmatprep.subr.bf16.mxu0 0
    %2907 = vmatpush1.bf16.msra.mxu0 0
    %2908 = vmatprep.mubr.bf16.mxu0 0
    %2909 = vmatmul.mubr.bf16.gmra.mrb[0].mxu0 %v2874
    %v2910 = vpop.f32.mrb[0].mxu0
    %v2911 = vadd.f32 %v2860, %v2910
    %v2912 = vpop.f32.mrb[0].mxu0
    %v2913 = vpop.f32.mrb[0].mxu0
    %v2914 = vadd.f32 %v2860, %v2913
    %v2915 = vpop.f32.mrb[0].mxu0
    %2916 = vdwg.mxu0
    %v2917 = vmax.f32 %v2911, 0.0
    %v2918 = vmax.f32 %v2914, 0.0
    %v2919 = vpack.c.bf16 %v2918, %v2917
    %v2920 = vld [vmem:[#allocation2 + $0x90] sm:$0xf]
    %v2921 = vld [vmem:[#allocation2 + $0x94] sm:$0xf]
    %v2922 = vld [vmem:[#allocation2 + $0x98] sm:$0xf]
    %v2923 = vld [vmem:[#allocation2 + $0x9c] sm:$0xf]
    %v2924 = vld [vmem:[#allocation2 + $0xa0] sm:$0xf]
    %v2925 = vld [vmem:[#allocation2 + $0xa4] sm:$0xf]
    %v2926 = vld [vmem:[#allocation2 + $0xa8] sm:$0xf]
    %v2927 = vld [vmem:[#allocation2 + $0xac] sm:$0xf]
    %v2928 = vld [vmem:[#allocation5 + $0x98] sm:$0x1]
    %v2929 = vlaneseq
    %v2930 = vshrl.u32 %v2929, 7
    %v2931 = vsub.s32 0, %v2930
    %v2932 = vrot.slane %v2928, %v2931
    %v2941 = vunpack.c.l.b16 %v2920
    %v2942 = vunpack.c.l.b16 %v2921
    %v2943 = vunpack.c.l.b16 %v2922
    %v2944 = vunpack.c.l.b16 %v2923
    %v2945 = vunpack.c.l.b16 %v2924
    %v2946 = vunpack.c.l.b16 %v2925
    %v2947 = vunpack.c.l.b16 %v2926
    %v2948 = vunpack.c.l.b16 %v2927
    %v2949 = vpack.c.b16 %v2942, %v2941
    %v2950 = vpack.c.b16 %v2944, %v2943
    %v2951 = vpack.c.b16 %v2946, %v2945
    %v2952 = vpack.c.b16 %v2948, %v2947
    %v2958 = vsel %vm1533, %v2919, 0
    %2960 = vmatprep.subr.bf16.mxu0 0
    %2961 = vmatpush1.bf16.msra.mxu0 %v2949
    %2962 = vmatprep.subr.bf16.mxu0 0
    %2963 = vmatpush1.bf16.msra.mxu0 %v2950
    %2964 = vmatprep.subr.bf16.mxu0 0
    %2965 = vmatpush1.bf16.msra.mxu0 %v2951
    %2966 = vmatprep.subr.bf16.mxu0 0
    %2967 = vmatpush1.bf16.msra.mxu0 %v2952
    %2968 = vmatprep.subr.bf16.mxu0 0
    %2969 = vmatpush1.bf16.msra.mxu0 0
    %2970 = vmatprep.subr.bf16.mxu0 0
    %2971 = vmatpush1.bf16.msra.mxu0 0
    %2972 = vmatprep.subr.bf16.mxu0 0
    %2973 = vmatpush1.bf16.msra.mxu0 0
    %2974 = vmatprep.subr.bf16.mxu0 0
    %2975 = vmatpush1.bf16.msra.mxu0 0
    %2976 = vmatprep.subr.bf16.mxu0 0
    %2977 = vmatpush1.bf16.msra.mxu0 0
    %2978 = vmatprep.subr.bf16.mxu0 0
    %2979 = vmatpush1.bf16.msra.mxu0 0
    %2980 = vmatprep.subr.bf16.mxu0 0
    %2981 = vmatpush1.bf16.msra.mxu0 0
    %2982 = vmatprep.subr.bf16.mxu0 0
    %2983 = vmatpush1.bf16.msra.mxu0 0
    %2984 = vmatprep.subr.bf16.mxu0 0
    %2985 = vmatpush1.bf16.msra.mxu0 0
    %2986 = vmatprep.subr.bf16.mxu0 0
    %2987 = vmatpush1.bf16.msra.mxu0 0
    %2988 = vmatprep.subr.bf16.mxu0 0
    %2989 = vmatpush1.bf16.msra.mxu0 0
    %2990 = vmatprep.subr.bf16.mxu0 0
    %2991 = vmatpush1.bf16.msra.mxu0 0
    %2992 = vmatprep.mubr.bf16.mxu0 0
    %2993 = vmatmul.mubr.bf16.gmra.mrb[0].mxu0 %v2958
    %v2994 = vpop.f32.mrb[0].mxu0
    %v2995 = vadd.f32 %v2932, %v2994
    %v2996 = vpop.f32.mrb[0].mxu0
    %v2997 = vpop.f32.mrb[0].mxu0
    %v2998 = vadd.f32 %v2932, %v2997
    %v2999 = vpop.f32.mrb[0].mxu0
    %3000 = vdwg.mxu0
    %v3001 = vadd.f32 %v2809, %v2995
    %v3002 = vadd.f32 %v2810, %v2998
    %v3003 = vld [vmem:[#allocation5 + $0xa0] sm:$0x1]
    %v3004 = vld [vmem:[#allocation5 + $0xa8] sm:$0x1]
    %v3005 = vsel %vm154, %v3001, 0.0
    %3006 = vadd.xlane.f32.xlu0 %v3005
    %v3007 = vpop.xlane.xlu0 %3006
    %v3008 = vsel %vm154, %v3002, 0.0
    %3009 = vadd.xlane.f32.xlu0 %v3008
    %v3010 = vpop.xlane.xlu0 %3009
    %v3011 = vmul.f32 %v3007, %v161
    %v3012 = vmul.f32 %v3010, %v161
    %v3013 = vsub.f32 %v3001, %v3011
    %v3014 = vsub.f32 %v3002, %v3012
    %v3015 = vmul.f32 %v3013, %v3013
    %v3016 = vmul.f32 %v3014, %v3014
    %v3017 = vsel %vm154, %v3015, 0.0
    %3018 = vadd.xlane.f32.xlu0 %v3017
    %v3019 = vpop.xlane.xlu0 %3018
    %v3020 = vsel %vm154, %v3016, 0.0
    %3021 = vadd.xlane.f32.xlu0 %v3020
    %v3022 = vpop.xlane.xlu0 %3021
    %v3023 = vmul.f32 %v3019, %v161
    %v3024 = vmul.f32 %v3022, %v161
    %v3025 = vadd.f32 %v3023, 1e-06
    %v3026 = vadd.f32 %v3024, 1e-06
    %v3027 = vrsqrt.pop %v3025
    %v3028 = vrsqrt.pop %v3026
    %v3029 = vmul.f32 %v3013, %v3027
    %v3030 = vmul.f32 %v3014, %v3028
    %v3031 = vlaneseq
    %v3032 = vshrl.u32 %v3031, 7
    %v3033 = vsub.s32 0, %v3032
    %v3034 = vrot.slane %v3003, %v3033
    %v3035 = vmul.f32 %v3029, %v3034
    %v3036 = vmul.f32 %v3030, %v3034
    %v3037 = vlaneseq
    %v3038 = vshrl.u32 %v3037, 7
    %v3039 = vsub.s32 0, %v3038
    %v3040 = vrot.slane %v3004, %v3039
    %v3041 = vadd.f32 %v3035, %v3040
    %v3042 = vadd.f32 %v3036, %v3040
    %v3043 = vpack.c.bf16 %v3042, %v3041
    %3044 = vset.pattern.permute.xlu0 0
    %3045 = vperm.xlu0 %3044, %v58
    %v3046 = vpop.permute.xlu0 %3045
    %3047 = vset.pattern.permute.xlu0 0
    %3048 = vperm.xlu0 %3047, %v59
    %v3049 = vpop.permute.xlu0 %3048
    %vm3050 = vcmp.eq.s32.totalorder %v3046, %v85
    %vm3051 = vcmp.eq.s32.totalorder %v3049, %v85
    %v3052 = vsel %vm3050, 1.0, 0.0
    %v3053 = vsel %vm3051, 1.0, 0.0
    %v3054 = vpack.c.bf16 %v3053, %v3052
    %v3055 = vld [vmem:[#allocation2 + $0x8] sm:$0xf]
    %v3056 = vld [vmem:[#allocation2 + $0xc] sm:$0xf]
    %v3057 = vld [vmem:[#allocation5 + $0x10] sm:$0xff]
    %v3058 = vld [vmem:[#allocation5 + $0x18] sm:$0xff]
    %v3061 = vunpack.c.l.b16 %v3055
    %v3062 = vunpack.c.l.b16 %v3056
    %v3063 = vpack.c.b16 %v3062, %v3061
    %v3066 = vsel %vm107, %v3054, 0
    %3068 = vmatprep.subr.bf16.mxu0 0
    %3069 = vmatpush1.bf16.msra.mxu0 %v3063
    %3070 = vmatprep.subr.bf16.mxu0 0
    %3071 = vmatpush1.bf16.msra.mxu0 0
    %3072 = vmatprep.subr.bf16.mxu0 0
    %3073 = vmatpush1.bf16.msra.mxu0 0
    %3074 = vmatprep.subr.bf16.mxu0 0
    %3075 = vmatpush1.bf16.msra.mxu0 0
    %3076 = vmatprep.subr.bf16.mxu0 0
    %3077 = vmatpush1.bf16.msra.mxu0 0
    %3078 = vmatprep.subr.bf16.mxu0 0
    %3079 = vmatpush1.bf16.msra.mxu0 0
    %3080 = vmatprep.subr.bf16.mxu0 0
    %3081 = vmatpush1.bf16.msra.mxu0 0
    %3082 = vmatprep.subr.bf16.mxu0 0
    %3083 = vmatpush1.bf16.msra.mxu0 0
    %3084 = vmatprep.subr.bf16.mxu0 0
    %3085 = vmatpush1.bf16.msra.mxu0 0
    %3086 = vmatprep.subr.bf16.mxu0 0
    %3087 = vmatpush1.bf16.msra.mxu0 0
    %3088 = vmatprep.subr.bf16.mxu0 0
    %3089 = vmatpush1.bf16.msra.mxu0 0
    %3090 = vmatprep.subr.bf16.mxu0 0
    %3091 = vmatpush1.bf16.msra.mxu0 0
    %3092 = vmatprep.subr.bf16.mxu0 0
    %3093 = vmatpush1.bf16.msra.mxu0 0
    %3094 = vmatprep.subr.bf16.mxu0 0
    %3095 = vmatpush1.bf16.msra.mxu0 0
    %3096 = vmatprep.subr.bf16.mxu0 0
    %3097 = vmatpush1.bf16.msra.mxu0 0
    %3098 = vmatprep.subr.bf16.mxu0 0
    %3099 = vmatpush1.bf16.msra.mxu0 0
    %3100 = vmatprep.mubr.bf16.mxu0 0
    %3101 = vmatmul.mubr.bf16.gmra.mrb[0].mxu0 %v3066
    %v3102 = vpop.f32.mrb[0].mxu0
    %v3103 = vadd.f32 %v3057, %v3102
    %v3104 = vpop.f32.mrb[0].mxu0
    %v3105 = vpop.f32.mrb[0].mxu0
    %v3106 = vadd.f32 %v3058, %v3105
    %v3107 = vpop.f32.mrb[0].mxu0
    %3108 = vdwg.mxu0
    %v3109 = vld [vmem:[#allocation5 + $0xd8] sm:$0x1]
    %v3110 = vld [vmem:[#allocation5 + $0xe0] sm:$0x1]
    %v3111 = vsel %vm154, %v3103, 0.0
    %3112 = vadd.xlane.f32.xlu0 %v3111
    %v3113 = vpop.xlane.xlu0 %3112
    %v3114 = vsel %vm154, %v3106, 0.0
    %3115 = vadd.xlane.f32.xlu0 %v3114
    %v3116 = vpop.xlane.xlu0 %3115
    %v3117 = vmul.f32 %v3113, %v161
    %v3118 = vmul.f32 %v3116, %v161
    %v3119 = vsub.f32 %v3103, %v3117
    %v3120 = vsub.f32 %v3106, %v3118
    %v3121 = vmul.f32 %v3119, %v3119
    %v3122 = vmul.f32 %v3120, %v3120
    %v3123 = vsel %vm154, %v3121, 0.0
    %3124 = vadd.xlane.f32.xlu0 %v3123
    %v3125 = vpop.xlane.xlu0 %3124
    %v3126 = vsel %vm154, %v3122, 0.0
    %3127 = vadd.xlane.f32.xlu0 %v3126
    %v3128 = vpop.xlane.xlu0 %3127
    %v3129 = vmul.f32 %v3125, %v161
    %v3130 = vmul.f32 %v3128, %v161
    %v3131 = vadd.f32 %v3129, 1e-06
    %v3132 = vadd.f32 %v3130, 1e-06
    %v3133 = vrsqrt.pop %v3131
    %v3134 = vrsqrt.pop %v3132
    %v3135 = vmul.f32 %v3119, %v3133
    %v3136 = vmul.f32 %v3120, %v3134
    %v3137 = vlaneseq
    %v3138 = vshrl.u32 %v3137, 7
    %v3139 = vsub.s32 0, %v3138
    %v3140 = vrot.slane %v3109, %v3139
    %v3141 = vmul.f32 %v3135, %v3140
    %v3142 = vmul.f32 %v3136, %v3140
    %v3143 = vlaneseq
    %v3144 = vshrl.u32 %v3143, 7
    %v3145 = vsub.s32 0, %v3144
    %v3146 = vrot.slane %v3110, %v3145
    %v3147 = vadd.f32 %v3141, %v3146
    %v3148 = vadd.f32 %v3142, %v3146
    %v3149 = vpack.c.bf16 %v3148, %v3147
    %v3150 = vld [vmem:[#allocation2 + $0xb0] sm:$0xf]
    %v3151 = vld [vmem:[#allocation2 + $0xb4] sm:$0xf]
    %v3152 = vld [vmem:[#allocation2 + $0xb8] sm:$0xf]
    %v3153 = vld [vmem:[#allocation2 + $0xbc] sm:$0xf]
    %v3154 = vld [vmem:[#allocation5 + $0xb0] sm:$0x1]
    %v3155 = vlaneseq
    %v3156 = vshrl.u32 %v3155, 7
    %v3157 = vsub.s32 0, %v3156
    %v3158 = vrot.slane %v3154, %v3157
    %v3163 = vunpack.c.l.b16 %v3150
    %v3164 = vunpack.c.l.b16 %v3151
    %v3165 = vunpack.c.l.b16 %v3152
    %v3166 = vunpack.c.l.b16 %v3153
    %v3167 = vpack.c.b16 %v3164, %v3163
    %v3168 = vpack.c.b16 %v3166, %v3165
    %v3172 = vsel %vm154, %v3149, 0
    %3174 = vmatprep.subr.bf16.mxu0 0
    %3175 = vmatpush1.bf16.msra.mxu0 %v3167
    %3176 = vmatprep.subr.bf16.mxu0 0
    %3177 = vmatpush1.bf16.msra.mxu0 %v3168
    %3178 = vmatprep.subr.bf16.mxu0 0
    %3179 = vmatpush1.bf16.msra.mxu0 0
    %3180 = vmatprep.subr.bf16.mxu0 0
    %3181 = vmatpush1.bf16.msra.mxu0 0
    %3182 = vmatprep.subr.bf16.mxu0 0
    %3183 = vmatpush1.bf16.msra.mxu0 0
    %3184 = vmatprep.subr.bf16.mxu0 0
    %3185 = vmatpush1.bf16.msra.mxu0 0
    %3186 = vmatprep.subr.bf16.mxu0 0
    %3187 = vmatpush1.bf16.msra.mxu0 0
    %3188 = vmatprep.subr.bf16.mxu0 0
    %3189 = vmatpush1.bf16.msra.mxu0 0
    %3190 = vmatprep.subr.bf16.mxu0 0
    %3191 = vmatpush1.bf16.msra.mxu0 0
    %3192 = vmatprep.subr.bf16.mxu0 0
    %3193 = vmatpush1.bf16.msra.mxu0 0
    %3194 = vmatprep.subr.bf16.mxu0 0
    %3195 = vmatpush1.bf16.msra.mxu0 0
    %3196 = vmatprep.subr.bf16.mxu0 0
    %3197 = vmatpush1.bf16.msra.mxu0 0
    %3198 = vmatprep.subr.bf16.mxu0 0
    %3199 = vmatpush1.bf16.msra.mxu0 0
    %3200 = vmatprep.subr.bf16.mxu0 0
    %3201 = vmatpush1.bf16.msra.mxu0 0
    %3202 = vmatprep.subr.bf16.mxu0 0
    %3203 = vmatpush1.bf16.msra.mxu0 0
    %3204 = vmatprep.subr.bf16.mxu0 0
    %3205 = vmatpush1.bf16.msra.mxu0 0
    %3206 = vmatprep.mubr.bf16.mxu0 0
    %3207 = vmatmul.mubr.bf16.gmra.mrb[0].mxu0 %v3172
    %v3208 = vpop.f32.mrb[0].mxu0
    %v3209 = vadd.f32 %v3158, %v3208
    %v3210 = vpop.f32.mrb[0].mxu0
    %v3211 = vpop.f32.mrb[0].mxu0
    %v3212 = vadd.f32 %v3158, %v3211
    %v3213 = vpop.f32.mrb[0].mxu0
    %3214 = vdwg.mxu0
    %v3215 = vld [vmem:[#allocation2 + $0xc0] sm:$0xf]
    %v3216 = vld [vmem:[#allocation2 + $0xc4] sm:$0xf]
    %v3217 = vld [vmem:[#allocation2 + $0xc8] sm:$0xf]
    %v3218 = vld [vmem:[#allocation2 + $0xcc] sm:$0xf]
    %v3219 = vld [vmem:[#allocation5 + $0xb8] sm:$0x1]
    %3222 = vrot.lane.b32.xlu0 %v3209, 120
    %v3223 = vpop.permute.xlu0 %3222
    %3224 = vrot.lane.b32.xlu0 %v3212, 120
    %v3225 = vpop.permute.xlu0 %3224
    %3228 = vrot.lane.b32.xlu0 %v3209, 112
    %v3229 = vpop.permute.xlu0 %3228
    %3230 = vrot.lane.b32.xlu0 %v3212, 112
    %v3231 = vpop.permute.xlu0 %3230
    %3234 = vrot.lane.b32.xlu0 %v3209, 104
    %v3235 = vpop.permute.xlu0 %3234
    %3236 = vrot.lane.b32.xlu0 %v3212, 104
    %v3237 = vpop.permute.xlu0 %3236
    %v3240 = vpack.c.bf16 %v3209, %v3209
    %v3241 = vpack.c.bf16 %v3212, %v3212
    %v3242 = vpack.c.bf16 %v3223, %v3223
    %v3243 = vpack.c.bf16 %v3225, %v3225
    %v3244 = vpack.c.bf16 %v3229, %v3229
    %v3245 = vpack.c.bf16 %v3231, %v3231
    %v3246 = vpack.c.bf16 %v3235, %v3235
    %v3247 = vpack.c.bf16 %v3237, %v3237
    %3249 = vrot.lane.b32.xlu0 %v3240, 96
    %v3250 = vpop.permute.xlu0 %3249
    %v3252 = vsel %vm296, %v3240, 0
    %v3255 = vsel %vm296, %v3250, 0
    %3257 = vmatprep.subr.bf16.mxu0 0
    %3258 = vmatpush1.bf16.xpose.msra.mxu0 %v3255
    %3259 = vmatprep.subr.bf16.mxu0 0
    %3260 = vmatpush1.bf16.xpose.msra.mxu0 0
    %3261 = vmatprep.subr.bf16.mxu0 0
    %3262 = vmatpush1.bf16.xpose.msra.mxu0 0
    %3263 = vmatprep.subr.bf16.mxu0 0
    %3264 = vmatpush1.bf16.xpose.msra.mxu0 0
    %3265 = vmatprep.subr.bf16.mxu0 0
    %3266 = vmatpush1.bf16.xpose.msra.mxu0 0
    %3267 = vmatprep.subr.bf16.mxu0 0
    %3268 = vmatpush1.bf16.xpose.msra.mxu0 0
    %3269 = vmatprep.subr.bf16.mxu0 0
    %3270 = vmatpush1.bf16.xpose.msra.mxu0 0
    %3271 = vmatprep.subr.bf16.mxu0 0
    %3272 = vmatpush1.bf16.xpose.msra.mxu0 0
    %3273 = vmatprep.subr.bf16.mxu0 0
    %3274 = vmatpush1.bf16.xpose.msra.mxu0 0
    %3275 = vmatprep.subr.bf16.mxu0 0
    %3276 = vmatpush1.bf16.xpose.msra.mxu0 0
    %3277 = vmatprep.subr.bf16.mxu0 0
    %3278 = vmatpush1.bf16.xpose.msra.mxu0 0
    %3279 = vmatprep.subr.bf16.mxu0 0
    %3280 = vmatpush1.bf16.xpose.msra.mxu0 0
    %3281 = vmatprep.subr.bf16.mxu0 0
    %3282 = vmatpush1.bf16.xpose.msra.mxu0 0
    %3283 = vmatprep.subr.bf16.mxu0 0
    %3284 = vmatpush1.bf16.xpose.msra.mxu0 0
    %3285 = vmatprep.subr.bf16.mxu0 0
    %3286 = vmatpush1.bf16.xpose.msra.mxu0 0
    %3287 = vmatprep.subr.bf16.mxu0 0
    %3288 = vmatpush1.bf16.xpose.msra.mxu0 0
    %3289 = vmatprep.mubr.bf16.mxu0 0
    %3290 = vmatmul.mubr.bf16.gmra.mrb[0].mxu0 %v3252
    %v3291 = vpop.f32.mrb[0].mxu0
    %v3292 = vadd.f32 0.0, %v3291
    %v3293 = vpop.f32.mrb[0].mxu0
    %v3294 = vpop.f32.mrb[0].mxu0
    %v3295 = vpop.f32.mrb[0].mxu0
    %3296 = vdwg.mxu0
    %3298 = vrot.lane.b32.xlu0 %v3241, 96
    %v3299 = vpop.permute.xlu0 %3298
    %v3301 = vsel %vm296, %v3241, 0
    %v3304 = vsel %vm296, %v3299, 0
    %3306 = vmatprep.subr.bf16.mxu0 0
    %3307 = vmatpush1.bf16.xpose.msra.mxu0 %v3304
    %3308 = vmatprep.subr.bf16.mxu0 0
    %3309 = vmatpush1.bf16.xpose.msra.mxu0 0
    %3310 = vmatprep.subr.bf16.mxu0 0
    %3311 = vmatpush1.bf16.xpose.msra.mxu0 0
    %3312 = vmatprep.subr.bf16.mxu0 0
    %3313 = vmatpush1.bf16.xpose.msra.mxu0 0
    %3314 = vmatprep.subr.bf16.mxu0 0
    %3315 = vmatpush1.bf16.xpose.msra.mxu0 0
    %3316 = vmatprep.subr.bf16.mxu0 0
    %3317 = vmatpush1.bf16.xpose.msra.mxu0 0
    %3318 = vmatprep.subr.bf16.mxu0 0
    %3319 = vmatpush1.bf16.xpose.msra.mxu0 0
    %3320 = vmatprep.subr.bf16.mxu0 0
    %3321 = vmatpush1.bf16.xpose.msra.mxu0 0
    %3322 = vmatprep.subr.bf16.mxu0 0
    %3323 = vmatpush1.bf16.xpose.msra.mxu0 0
    %3324 = vmatprep.subr.bf16.mxu0 0
    %3325 = vmatpush1.bf16.xpose.msra.mxu0 0
    %3326 = vmatprep.subr.bf16.mxu0 0
    %3327 = vmatpush1.bf16.xpose.msra.mxu0 0
    %3328 = vmatprep.subr.bf16.mxu0 0
    %3329 = vmatpush1.bf16.xpose.msra.mxu0 0
    %3330 = vmatprep.subr.bf16.mxu0 0
    %3331 = vmatpush1.bf16.xpose.msra.mxu0 0
    %3332 = vmatprep.subr.bf16.mxu0 0
    %3333 = vmatpush1.bf16.xpose.msra.mxu0 0
    %3334 = vmatprep.subr.bf16.mxu0 0
    %3335 = vmatpush1.bf16.xpose.msra.mxu0 0
    %3336 = vmatprep.subr.bf16.mxu0 0
    %3337 = vmatpush1.bf16.xpose.msra.mxu0 0
    %3338 = vmatprep.mubr.bf16.mxu0 0
    %3339 = vmatmul.mubr.bf16.gmra.mrb[0].mxu0 %v3301
    %v3340 = vpop.f32.mrb[0].mxu0
    %v3341 = vadd.f32 0.0, %v3340
    %v3342 = vpop.f32.mrb[0].mxu0
    %v3343 = vpop.f32.mrb[0].mxu0
    %v3344 = vpop.f32.mrb[0].mxu0
    %3345 = vdwg.mxu0
    %3347 = vrot.lane.b32.xlu0 %v3242, 96
    %v3348 = vpop.permute.xlu0 %3347
    %v3350 = vsel %vm296, %v3242, 0
    %v3353 = vsel %vm296, %v3348, 0
    %3355 = vmatprep.subr.bf16.mxu0 0
    %3356 = vmatpush1.bf16.xpose.msra.mxu0 %v3353
    %3357 = vmatprep.subr.bf16.mxu0 0
    %3358 = vmatpush1.bf16.xpose.msra.mxu0 0
    %3359 = vmatprep.subr.bf16.mxu0 0
    %3360 = vmatpush1.bf16.xpose.msra.mxu0 0
    %3361 = vmatprep.subr.bf16.mxu0 0
    %3362 = vmatpush1.bf16.xpose.msra.mxu0 0
    %3363 = vmatprep.subr.bf16.mxu0 0
    %3364 = vmatpush1.bf16.xpose.msra.mxu0 0
    %3365 = vmatprep.subr.bf16.mxu0 0
    %3366 = vmatpush1.bf16.xpose.msra.mxu0 0
    %3367 = vmatprep.subr.bf16.mxu0 0
    %3368 = vmatpush1.bf16.xpose.msra.mxu0 0
    %3369 = vmatprep.subr.bf16.mxu0 0
    %3370 = vmatpush1.bf16.xpose.msra.mxu0 0
    %3371 = vmatprep.subr.bf16.mxu0 0
    %3372 = vmatpush1.bf16.xpose.msra.mxu0 0
    %3373 = vmatprep.subr.bf16.mxu0 0
    %3374 = vmatpush1.bf16.xpose.msra.mxu0 0
    %3375 = vmatprep.subr.bf16.mxu0 0
    %3376 = vmatpush1.bf16.xpose.msra.mxu0 0
    %3377 = vmatprep.subr.bf16.mxu0 0
    %3378 = vmatpush1.bf16.xpose.msra.mxu0 0
    %3379 = vmatprep.subr.bf16.mxu0 0
    %3380 = vmatpush1.bf16.xpose.msra.mxu0 0
    %3381 = vmatprep.subr.bf16.mxu0 0
    %3382 = vmatpush1.bf16.xpose.msra.mxu0 0
    %3383 = vmatprep.subr.bf16.mxu0 0
    %3384 = vmatpush1.bf16.xpose.msra.mxu0 0
    %3385 = vmatprep.subr.bf16.mxu0 0
    %3386 = vmatpush1.bf16.xpose.msra.mxu0 0
    %3387 = vmatprep.mubr.bf16.mxu0 0
    %3388 = vmatmul.mubr.bf16.gmra.mrb[0].mxu0 %v3350
    %v3389 = vpop.f32.mrb[0].mxu0
    %v3390 = vadd.f32 0.0, %v3389
    %v3391 = vpop.f32.mrb[0].mxu0
    %v3392 = vpop.f32.mrb[0].mxu0
    %v3393 = vpop.f32.mrb[0].mxu0
    %3394 = vdwg.mxu0
    %3396 = vrot.lane.b32.xlu0 %v3243, 96
    %v3397 = vpop.permute.xlu0 %3396
    %v3399 = vsel %vm296, %v3243, 0
    %v3402 = vsel %vm296, %v3397, 0
    %3404 = vmatprep.subr.bf16.mxu0 0
    %3405 = vmatpush1.bf16.xpose.msra.mxu0 %v3402
    %3406 = vmatprep.subr.bf16.mxu0 0
    %3407 = vmatpush1.bf16.xpose.msra.mxu0 0
    %3408 = vmatprep.subr.bf16.mxu0 0
    %3409 = vmatpush1.bf16.xpose.msra.mxu0 0
    %3410 = vmatprep.subr.bf16.mxu0 0
    %3411 = vmatpush1.bf16.xpose.msra.mxu0 0
    %3412 = vmatprep.subr.bf16.mxu0 0
    %3413 = vmatpush1.bf16.xpose.msra.mxu0 0
    %3414 = vmatprep.subr.bf16.mxu0 0
    %3415 = vmatpush1.bf16.xpose.msra.mxu0 0
    %3416 = vmatprep.subr.bf16.mxu0 0
    %3417 = vmatpush1.bf16.xpose.msra.mxu0 0
    %3418 = vmatprep.subr.bf16.mxu0 0
    %3419 = vmatpush1.bf16.xpose.msra.mxu0 0
    %3420 = vmatprep.subr.bf16.mxu0 0
    %3421 = vmatpush1.bf16.xpose.msra.mxu0 0
    %3422 = vmatprep.subr.bf16.mxu0 0
    %3423 = vmatpush1.bf16.xpose.msra.mxu0 0
    %3424 = vmatprep.subr.bf16.mxu0 0
    %3425 = vmatpush1.bf16.xpose.msra.mxu0 0
    %3426 = vmatprep.subr.bf16.mxu0 0
    %3427 = vmatpush1.bf16.xpose.msra.mxu0 0
    %3428 = vmatprep.subr.bf16.mxu0 0
    %3429 = vmatpush1.bf16.xpose.msra.mxu0 0
    %3430 = vmatprep.subr.bf16.mxu0 0
    %3431 = vmatpush1.bf16.xpose.msra.mxu0 0
    %3432 = vmatprep.subr.bf16.mxu0 0
    %3433 = vmatpush1.bf16.xpose.msra.mxu0 0
    %3434 = vmatprep.subr.bf16.mxu0 0
    %3435 = vmatpush1.bf16.xpose.msra.mxu0 0
    %3436 = vmatprep.mubr.bf16.mxu0 0
    %3437 = vmatmul.mubr.bf16.gmra.mrb[0].mxu0 %v3399
    %v3438 = vpop.f32.mrb[0].mxu0
    %v3439 = vadd.f32 0.0, %v3438
    %v3440 = vpop.f32.mrb[0].mxu0
    %v3441 = vpop.f32.mrb[0].mxu0
    %v3442 = vpop.f32.mrb[0].mxu0
    %3443 = vdwg.mxu0
    %3445 = vrot.lane.b32.xlu0 %v3244, 96
    %v3446 = vpop.permute.xlu0 %3445
    %v3448 = vsel %vm296, %v3244, 0
    %v3451 = vsel %vm296, %v3446, 0
    %3453 = vmatprep.subr.bf16.mxu0 0
    %3454 = vmatpush1.bf16.xpose.msra.mxu0 %v3451
    %3455 = vmatprep.subr.bf16.mxu0 0
    %3456 = vmatpush1.bf16.xpose.msra.mxu0 0
    %3457 = vmatprep.subr.bf16.mxu0 0
    %3458 = vmatpush1.bf16.xpose.msra.mxu0 0
    %3459 = vmatprep.subr.bf16.mxu0 0
    %3460 = vmatpush1.bf16.xpose.msra.mxu0 0
    %3461 = vmatprep.subr.bf16.mxu0 0
    %3462 = vmatpush1.bf16.xpose.msra.mxu0 0
    %3463 = vmatprep.subr.bf16.mxu0 0
    %3464 = vmatpush1.bf16.xpose.msra.mxu0 0
    %3465 = vmatprep.subr.bf16.mxu0 0
    %3466 = vmatpush1.bf16.xpose.msra.mxu0 0
    %3467 = vmatprep.subr.bf16.mxu0 0
    %3468 = vmatpush1.bf16.xpose.msra.mxu0 0
    %3469 = vmatprep.subr.bf16.mxu0 0
    %3470 = vmatpush1.bf16.xpose.msra.mxu0 0
    %3471 = vmatprep.subr.bf16.mxu0 0
    %3472 = vmatpush1.bf16.xpose.msra.mxu0 0
    %3473 = vmatprep.subr.bf16.mxu0 0
    %3474 = vmatpush1.bf16.xpose.msra.mxu0 0
    %3475 = vmatprep.subr.bf16.mxu0 0
    %3476 = vmatpush1.bf16.xpose.msra.mxu0 0
    %3477 = vmatprep.subr.bf16.mxu0 0
    %3478 = vmatpush1.bf16.xpose.msra.mxu0 0
    %3479 = vmatprep.subr.bf16.mxu0 0
    %3480 = vmatpush1.bf16.xpose.msra.mxu0 0
    %3481 = vmatprep.subr.bf16.mxu0 0
    %3482 = vmatpush1.bf16.xpose.msra.mxu0 0
    %3483 = vmatprep.subr.bf16.mxu0 0
    %3484 = vmatpush1.bf16.xpose.msra.mxu0 0
    %3485 = vmatprep.mubr.bf16.mxu0 0
    %3486 = vmatmul.mubr.bf16.gmra.mrb[0].mxu0 %v3448
    %v3487 = vpop.f32.mrb[0].mxu0
    %v3488 = vadd.f32 0.0, %v3487
    %v3489 = vpop.f32.mrb[0].mxu0
    %v3490 = vpop.f32.mrb[0].mxu0
    %v3491 = vpop.f32.mrb[0].mxu0
    %3492 = vdwg.mxu0
    %3494 = vrot.lane.b32.xlu0 %v3245, 96
    %v3495 = vpop.permute.xlu0 %3494
    %v3497 = vsel %vm296, %v3245, 0
    %v3500 = vsel %vm296, %v3495, 0
    %3502 = vmatprep.subr.bf16.mxu0 0
    %3503 = vmatpush1.bf16.xpose.msra.mxu0 %v3500
    %3504 = vmatprep.subr.bf16.mxu0 0
    %3505 = vmatpush1.bf16.xpose.msra.mxu0 0
    %3506 = vmatprep.subr.bf16.mxu0 0
    %3507 = vmatpush1.bf16.xpose.msra.mxu0 0
    %3508 = vmatprep.subr.bf16.mxu0 0
    %3509 = vmatpush1.bf16.xpose.msra.mxu0 0
    %3510 = vmatprep.subr.bf16.mxu0 0
    %3511 = vmatpush1.bf16.xpose.msra.mxu0 0
    %3512 = vmatprep.subr.bf16.mxu0 0
    %3513 = vmatpush1.bf16.xpose.msra.mxu0 0
    %3514 = vmatprep.subr.bf16.mxu0 0
    %3515 = vmatpush1.bf16.xpose.msra.mxu0 0
    %3516 = vmatprep.subr.bf16.mxu0 0
    %3517 = vmatpush1.bf16.xpose.msra.mxu0 0
    %3518 = vmatprep.subr.bf16.mxu0 0
    %3519 = vmatpush1.bf16.xpose.msra.mxu0 0
    %3520 = vmatprep.subr.bf16.mxu0 0
    %3521 = vmatpush1.bf16.xpose.msra.mxu0 0
    %3522 = vmatprep.subr.bf16.mxu0 0
    %3523 = vmatpush1.bf16.xpose.msra.mxu0 0
    %3524 = vmatprep.subr.bf16.mxu0 0
    %3525 = vmatpush1.bf16.xpose.msra.mxu0 0
    %3526 = vmatprep.subr.bf16.mxu0 0
    %3527 = vmatpush1.bf16.xpose.msra.mxu0 0
    %3528 = vmatprep.subr.bf16.mxu0 0
    %3529 = vmatpush1.bf16.xpose.msra.mxu0 0
    %3530 = vmatprep.subr.bf16.mxu0 0
    %3531 = vmatpush1.bf16.xpose.msra.mxu0 0
    %3532 = vmatprep.subr.bf16.mxu0 0
    %3533 = vmatpush1.bf16.xpose.msra.mxu0 0
    %3534 = vmatprep.mubr.bf16.mxu0 0
    %3535 = vmatmul.mubr.bf16.gmra.mrb[0].mxu0 %v3497
    %v3536 = vpop.f32.mrb[0].mxu0
    %v3537 = vadd.f32 0.0, %v3536
    %v3538 = vpop.f32.mrb[0].mxu0
    %v3539 = vpop.f32.mrb[0].mxu0
    %v3540 = vpop.f32.mrb[0].mxu0
    %3541 = vdwg.mxu0
    %3543 = vrot.lane.b32.xlu0 %v3246, 96
    %v3544 = vpop.permute.xlu0 %3543
    %v3546 = vsel %vm296, %v3246, 0
    %v3549 = vsel %vm296, %v3544, 0
    %3551 = vmatprep.subr.bf16.mxu0 0
    %3552 = vmatpush1.bf16.xpose.msra.mxu0 %v3549
    %3553 = vmatprep.subr.bf16.mxu0 0
    %3554 = vmatpush1.bf16.xpose.msra.mxu0 0
    %3555 = vmatprep.subr.bf16.mxu0 0
    %3556 = vmatpush1.bf16.xpose.msra.mxu0 0
    %3557 = vmatprep.subr.bf16.mxu0 0
    %3558 = vmatpush1.bf16.xpose.msra.mxu0 0
    %3559 = vmatprep.subr.bf16.mxu0 0
    %3560 = vmatpush1.bf16.xpose.msra.mxu0 0
    %3561 = vmatprep.subr.bf16.mxu0 0
    %3562 = vmatpush1.bf16.xpose.msra.mxu0 0
    %3563 = vmatprep.subr.bf16.mxu0 0
    %3564 = vmatpush1.bf16.xpose.msra.mxu0 0
    %3565 = vmatprep.subr.bf16.mxu0 0
    %3566 = vmatpush1.bf16.xpose.msra.mxu0 0
    %3567 = vmatprep.subr.bf16.mxu0 0
    %3568 = vmatpush1.bf16.xpose.msra.mxu0 0
    %3569 = vmatprep.subr.bf16.mxu0 0
    %3570 = vmatpush1.bf16.xpose.msra.mxu0 0
    %3571 = vmatprep.subr.bf16.mxu0 0
    %3572 = vmatpush1.bf16.xpose.msra.mxu0 0
    %3573 = vmatprep.subr.bf16.mxu0 0
    %3574 = vmatpush1.bf16.xpose.msra.mxu0 0
    %3575 = vmatprep.subr.bf16.mxu0 0
    %3576 = vmatpush1.bf16.xpose.msra.mxu0 0
    %3577 = vmatprep.subr.bf16.mxu0 0
    %3578 = vmatpush1.bf16.xpose.msra.mxu0 0
    %3579 = vmatprep.subr.bf16.mxu0 0
    %3580 = vmatpush1.bf16.xpose.msra.mxu0 0
    %3581 = vmatprep.subr.bf16.mxu0 0
    %3582 = vmatpush1.bf16.xpose.msra.mxu0 0
    %3583 = vmatprep.mubr.bf16.mxu0 0
    %3584 = vmatmul.mubr.bf16.gmra.mrb[0].mxu0 %v3546
    %v3585 = vpop.f32.mrb[0].mxu0
    %v3586 = vadd.f32 0.0, %v3585
    %v3587 = vpop.f32.mrb[0].mxu0
    %v3588 = vpop.f32.mrb[0].mxu0
    %v3589 = vpop.f32.mrb[0].mxu0
    %3590 = vdwg.mxu0
    %3592 = vrot.lane.b32.xlu0 %v3247, 96
    %v3593 = vpop.permute.xlu0 %3592
    %v3595 = vsel %vm296, %v3247, 0
    %v3598 = vsel %vm296, %v3593, 0
    %3600 = vmatprep.subr.bf16.mxu0 0
    %3601 = vmatpush1.bf16.xpose.msra.mxu0 %v3598
    %3602 = vmatprep.subr.bf16.mxu0 0
    %3603 = vmatpush1.bf16.xpose.msra.mxu0 0
    %3604 = vmatprep.subr.bf16.mxu0 0
    %3605 = vmatpush1.bf16.xpose.msra.mxu0 0
    %3606 = vmatprep.subr.bf16.mxu0 0
    %3607 = vmatpush1.bf16.xpose.msra.mxu0 0
    %3608 = vmatprep.subr.bf16.mxu0 0
    %3609 = vmatpush1.bf16.xpose.msra.mxu0 0
    %3610 = vmatprep.subr.bf16.mxu0 0
    %3611 = vmatpush1.bf16.xpose.msra.mxu0 0
    %3612 = vmatprep.subr.bf16.mxu0 0
    %3613 = vmatpush1.bf16.xpose.msra.mxu0 0
    %3614 = vmatprep.subr.bf16.mxu0 0
    %3615 = vmatpush1.bf16.xpose.msra.mxu0 0
    %3616 = vmatprep.subr.bf16.mxu0 0
    %3617 = vmatpush1.bf16.xpose.msra.mxu0 0
    %3618 = vmatprep.subr.bf16.mxu0 0
    %3619 = vmatpush1.bf16.xpose.msra.mxu0 0
    %3620 = vmatprep.subr.bf16.mxu0 0
    %3621 = vmatpush1.bf16.xpose.msra.mxu0 0
    %3622 = vmatprep.subr.bf16.mxu0 0
    %3623 = vmatpush1.bf16.xpose.msra.mxu0 0
    %3624 = vmatprep.subr.bf16.mxu0 0
    %3625 = vmatpush1.bf16.xpose.msra.mxu0 0
    %3626 = vmatprep.subr.bf16.mxu0 0
    %3627 = vmatpush1.bf16.xpose.msra.mxu0 0
    %3628 = vmatprep.subr.bf16.mxu0 0
    %3629 = vmatpush1.bf16.xpose.msra.mxu0 0
    %3630 = vmatprep.subr.bf16.mxu0 0
    %3631 = vmatpush1.bf16.xpose.msra.mxu0 0
    %3632 = vmatprep.mubr.bf16.mxu0 0
    %3633 = vmatmul.mubr.bf16.gmra.mrb[0].mxu0 %v3595
    %v3634 = vpop.f32.mrb[0].mxu0
    %v3635 = vadd.f32 0.0, %v3634
    %v3636 = vpop.f32.mrb[0].mxu0
    %v3637 = vpop.f32.mrb[0].mxu0
    %v3638 = vpop.f32.mrb[0].mxu0
    %3639 = vdwg.mxu0
    %v3640 = vmul.f32 %v3292, 0.35355338
    %v3641 = vmul.f32 %v3341, 0.35355338
    %v3642 = vmul.f32 %v3390, 0.35355338
    %v3643 = vmul.f32 %v3439, 0.35355338
    %v3644 = vmul.f32 %v3488, 0.35355338
    %v3645 = vmul.f32 %v3537, 0.35355338
    %v3646 = vmul.f32 %v3586, 0.35355338
    %v3647 = vmul.f32 %v3635, 0.35355338
    %v3648 = vadd.f32 %v3640, %v68
    %v3649 = vadd.f32 %v3641, %v69
    %v3650 = vadd.f32 %v3642, %v70
    %v3651 = vadd.f32 %v3643, %v71
    %v3652 = vadd.f32 %v3644, %v72
    %v3653 = vadd.f32 %v3645, %v73
    %v3654 = vadd.f32 %v3646, %v74
    %v3655 = vadd.f32 %v3647, %v75
    %v3656 = vsel %vm296, %v3648, -inf
    %3657 = vmax.xlane.f32.xlu0 %v3656
    %v3658 = vpop.xlane.xlu0 %3657
    %v3659 = vsel %vm296, %v3649, -inf
    %3660 = vmax.xlane.f32.xlu0 %v3659
    %v3661 = vpop.xlane.xlu0 %3660
    %v3662 = vsel %vm296, %v3650, -inf
    %3663 = vmax.xlane.f32.xlu0 %v3662
    %v3664 = vpop.xlane.xlu0 %3663
    %v3665 = vsel %vm296, %v3651, -inf
    %3666 = vmax.xlane.f32.xlu0 %v3665
    %v3667 = vpop.xlane.xlu0 %3666
    %v3668 = vsel %vm296, %v3652, -inf
    %3669 = vmax.xlane.f32.xlu0 %v3668
    %v3670 = vpop.xlane.xlu0 %3669
    %v3671 = vsel %vm296, %v3653, -inf
    %3672 = vmax.xlane.f32.xlu0 %v3671
    %v3673 = vpop.xlane.xlu0 %3672
    %v3674 = vsel %vm296, %v3654, -inf
    %3675 = vmax.xlane.f32.xlu0 %v3674
    %v3676 = vpop.xlane.xlu0 %3675
    %v3677 = vsel %vm296, %v3655, -inf
    %3678 = vmax.xlane.f32.xlu0 %v3677
    %v3679 = vpop.xlane.xlu0 %3678
    %v3680 = vsub.f32 %v3648, %v3658
    %v3681 = vsub.f32 %v3649, %v3661
    %v3682 = vsub.f32 %v3650, %v3664
    %v3683 = vsub.f32 %v3651, %v3667
    %v3684 = vsub.f32 %v3652, %v3670
    %v3685 = vsub.f32 %v3653, %v3673
    %v3686 = vsub.f32 %v3654, %v3676
    %v3687 = vsub.f32 %v3655, %v3679
    %v3688 = vmul.f32 %v3680, 1.442695
    %v3689 = vpow.pop %v3688
    %v3690 = vmul.f32 %v3681, 1.442695
    %v3691 = vpow.pop %v3690
    %v3692 = vmul.f32 %v3682, 1.442695
    %v3693 = vpow.pop %v3692
    %v3694 = vmul.f32 %v3683, 1.442695
    %v3695 = vpow.pop %v3694
    %v3696 = vmul.f32 %v3684, 1.442695
    %v3697 = vpow.pop %v3696
    %v3698 = vmul.f32 %v3685, 1.442695
    %v3699 = vpow.pop %v3698
    %v3700 = vmul.f32 %v3686, 1.442695
    %v3701 = vpow.pop %v3700
    %v3702 = vmul.f32 %v3687, 1.442695
    %v3703 = vpow.pop %v3702
    %v3704 = vsel %vm296, %v3689, 0.0
    %3705 = vadd.xlane.f32.xlu0 %v3704
    %v3706 = vpop.xlane.xlu0 %3705
    %v3707 = vsel %vm296, %v3691, 0.0
    %3708 = vadd.xlane.f32.xlu0 %v3707
    %v3709 = vpop.xlane.xlu0 %3708
    %v3710 = vsel %vm296, %v3693, 0.0
    %3711 = vadd.xlane.f32.xlu0 %v3710
    %v3712 = vpop.xlane.xlu0 %3711
    %v3713 = vsel %vm296, %v3695, 0.0
    %3714 = vadd.xlane.f32.xlu0 %v3713
    %v3715 = vpop.xlane.xlu0 %3714
    %v3716 = vsel %vm296, %v3697, 0.0
    %3717 = vadd.xlane.f32.xlu0 %v3716
    %v3718 = vpop.xlane.xlu0 %3717
    %v3719 = vsel %vm296, %v3699, 0.0
    %3720 = vadd.xlane.f32.xlu0 %v3719
    %v3721 = vpop.xlane.xlu0 %3720
    %v3722 = vsel %vm296, %v3701, 0.0
    %3723 = vadd.xlane.f32.xlu0 %v3722
    %v3724 = vpop.xlane.xlu0 %3723
    %v3725 = vsel %vm296, %v3703, 0.0
    %3726 = vadd.xlane.f32.xlu0 %v3725
    %v3727 = vpop.xlane.xlu0 %3726
    %v3728 = vrcp.pop %v3706
    %v3729 = vrcp.pop %v3709
    %v3730 = vrcp.pop %v3712
    %v3731 = vrcp.pop %v3715
    %v3732 = vrcp.pop %v3718
    %v3733 = vrcp.pop %v3721
    %v3734 = vrcp.pop %v3724
    %v3735 = vrcp.pop %v3727
    %v3736 = vmul.f32 %v3689, %v3728
    %v3737 = vmul.f32 %v3691, %v3729
    %v3738 = vmul.f32 %v3693, %v3730
    %v3739 = vmul.f32 %v3695, %v3731
    %v3740 = vmul.f32 %v3697, %v3732
    %v3741 = vmul.f32 %v3699, %v3733
    %v3742 = vmul.f32 %v3701, %v3734
    %v3743 = vmul.f32 %v3703, %v3735
    %v3744 = vpack.c.bf16 %v3736, %v3736
    %v3745 = vpack.c.bf16 %v3737, %v3737
    %v3746 = vpack.c.bf16 %v3738, %v3738
    %v3747 = vpack.c.bf16 %v3739, %v3739
    %v3748 = vpack.c.bf16 %v3740, %v3740
    %v3749 = vpack.c.bf16 %v3741, %v3741
    %v3750 = vpack.c.bf16 %v3742, %v3742
    %v3751 = vpack.c.bf16 %v3743, %v3743
    %3752 = vrot.lane.b32.xlu0 %v3240, 64
    %v3753 = vpop.permute.xlu0 %3752
    %v3755 = vsel %vm296, %v3744, 0
    %v3758 = vsel %vm803, %v3753, 0
    %3760 = vmatprep.subr.bf16.mxu0 0
    %3761 = vmatpush1.bf16.msra.mxu0 %v3758
    %3762 = vmatprep.subr.bf16.mxu0 0
    %3763 = vmatpush1.bf16.msra.mxu0 0
    %3764 = vmatprep.subr.bf16.mxu0 0
    %3765 = vmatpush1.bf16.msra.mxu0 0
    %3766 = vmatprep.subr.bf16.mxu0 0
    %3767 = vmatpush1.bf16.msra.mxu0 0
    %3768 = vmatprep.subr.bf16.mxu0 0
    %3769 = vmatpush1.bf16.msra.mxu0 0
    %3770 = vmatprep.subr.bf16.mxu0 0
    %3771 = vmatpush1.bf16.msra.mxu0 0
    %3772 = vmatprep.subr.bf16.mxu0 0
    %3773 = vmatpush1.bf16.msra.mxu0 0
    %3774 = vmatprep.subr.bf16.mxu0 0
    %3775 = vmatpush1.bf16.msra.mxu0 0
    %3776 = vmatprep.subr.bf16.mxu0 0
    %3777 = vmatpush1.bf16.msra.mxu0 0
    %3778 = vmatprep.subr.bf16.mxu0 0
    %3779 = vmatpush1.bf16.msra.mxu0 0
    %3780 = vmatprep.subr.bf16.mxu0 0
    %3781 = vmatpush1.bf16.msra.mxu0 0
    %3782 = vmatprep.subr.bf16.mxu0 0
    %3783 = vmatpush1.bf16.msra.mxu0 0
    %3784 = vmatprep.subr.bf16.mxu0 0
    %3785 = vmatpush1.bf16.msra.mxu0 0
    %3786 = vmatprep.subr.bf16.mxu0 0
    %3787 = vmatpush1.bf16.msra.mxu0 0
    %3788 = vmatprep.subr.bf16.mxu0 0
    %3789 = vmatpush1.bf16.msra.mxu0 0
    %3790 = vmatprep.subr.bf16.mxu0 0
    %3791 = vmatpush1.bf16.msra.mxu0 0
    %3792 = vmatprep.mubr.bf16.mxu0 0
    %3793 = vmatmul.mubr.bf16.gmra.mrb[0].mxu0 %v3755
    %v3794 = vpop.f32.mrb[0].mxu0
    %v3795 = vadd.f32 0.0, %v3794
    %v3796 = vpop.f32.mrb[0].mxu0
    %v3797 = vpop.f32.mrb[0].mxu0
    %v3798 = vpop.f32.mrb[0].mxu0
    %3799 = vdwg.mxu0
    %3800 = vrot.lane.b32.xlu0 %v3241, 64
    %v3801 = vpop.permute.xlu0 %3800
    %v3803 = vsel %vm296, %v3745, 0
    %v3806 = vsel %vm803, %v3801, 0
    %3808 = vmatprep.subr.bf16.mxu0 0
    %3809 = vmatpush1.bf16.msra.mxu0 %v3806
    %3810 = vmatprep.subr.bf16.mxu0 0
    %3811 = vmatpush1.bf16.msra.mxu0 0
    %3812 = vmatprep.subr.bf16.mxu0 0
    %3813 = vmatpush1.bf16.msra.mxu0 0
    %3814 = vmatprep.subr.bf16.mxu0 0
    %3815 = vmatpush1.bf16.msra.mxu0 0
    %3816 = vmatprep.subr.bf16.mxu0 0
    %3817 = vmatpush1.bf16.msra.mxu0 0
    %3818 = vmatprep.subr.bf16.mxu0 0
    %3819 = vmatpush1.bf16.msra.mxu0 0
    %3820 = vmatprep.subr.bf16.mxu0 0
    %3821 = vmatpush1.bf16.msra.mxu0 0
    %3822 = vmatprep.subr.bf16.mxu0 0
    %3823 = vmatpush1.bf16.msra.mxu0 0
    %3824 = vmatprep.subr.bf16.mxu0 0
    %3825 = vmatpush1.bf16.msra.mxu0 0
    %3826 = vmatprep.subr.bf16.mxu0 0
    %3827 = vmatpush1.bf16.msra.mxu0 0
    %3828 = vmatprep.subr.bf16.mxu0 0
    %3829 = vmatpush1.bf16.msra.mxu0 0
    %3830 = vmatprep.subr.bf16.mxu0 0
    %3831 = vmatpush1.bf16.msra.mxu0 0
    %3832 = vmatprep.subr.bf16.mxu0 0
    %3833 = vmatpush1.bf16.msra.mxu0 0
    %3834 = vmatprep.subr.bf16.mxu0 0
    %3835 = vmatpush1.bf16.msra.mxu0 0
    %3836 = vmatprep.subr.bf16.mxu0 0
    %3837 = vmatpush1.bf16.msra.mxu0 0
    %3838 = vmatprep.subr.bf16.mxu0 0
    %3839 = vmatpush1.bf16.msra.mxu0 0
    %3840 = vmatprep.mubr.bf16.mxu0 0
    %3841 = vmatmul.mubr.bf16.gmra.mrb[0].mxu0 %v3803
    %v3842 = vpop.f32.mrb[0].mxu0
    %v3843 = vadd.f32 0.0, %v3842
    %v3844 = vpop.f32.mrb[0].mxu0
    %v3845 = vpop.f32.mrb[0].mxu0
    %v3846 = vpop.f32.mrb[0].mxu0
    %3847 = vdwg.mxu0
    %3848 = vrot.lane.b32.xlu0 %v3242, 64
    %v3849 = vpop.permute.xlu0 %3848
    %v3851 = vsel %vm296, %v3746, 0
    %v3854 = vsel %vm803, %v3849, 0
    %3856 = vmatprep.subr.bf16.mxu0 0
    %3857 = vmatpush1.bf16.msra.mxu0 %v3854
    %3858 = vmatprep.subr.bf16.mxu0 0
    %3859 = vmatpush1.bf16.msra.mxu0 0
    %3860 = vmatprep.subr.bf16.mxu0 0
    %3861 = vmatpush1.bf16.msra.mxu0 0
    %3862 = vmatprep.subr.bf16.mxu0 0
    %3863 = vmatpush1.bf16.msra.mxu0 0
    %3864 = vmatprep.subr.bf16.mxu0 0
    %3865 = vmatpush1.bf16.msra.mxu0 0
    %3866 = vmatprep.subr.bf16.mxu0 0
    %3867 = vmatpush1.bf16.msra.mxu0 0
    %3868 = vmatprep.subr.bf16.mxu0 0
    %3869 = vmatpush1.bf16.msra.mxu0 0
    %3870 = vmatprep.subr.bf16.mxu0 0
    %3871 = vmatpush1.bf16.msra.mxu0 0
    %3872 = vmatprep.subr.bf16.mxu0 0
    %3873 = vmatpush1.bf16.msra.mxu0 0
    %3874 = vmatprep.subr.bf16.mxu0 0
    %3875 = vmatpush1.bf16.msra.mxu0 0
    %3876 = vmatprep.subr.bf16.mxu0 0
    %3877 = vmatpush1.bf16.msra.mxu0 0
    %3878 = vmatprep.subr.bf16.mxu0 0
    %3879 = vmatpush1.bf16.msra.mxu0 0
    %3880 = vmatprep.subr.bf16.mxu0 0
    %3881 = vmatpush1.bf16.msra.mxu0 0
    %3882 = vmatprep.subr.bf16.mxu0 0
    %3883 = vmatpush1.bf16.msra.mxu0 0
    %3884 = vmatprep.subr.bf16.mxu0 0
    %3885 = vmatpush1.bf16.msra.mxu0 0
    %3886 = vmatprep.subr.bf16.mxu0 0
    %3887 = vmatpush1.bf16.msra.mxu0 0
    %3888 = vmatprep.mubr.bf16.mxu0 0
    %3889 = vmatmul.mubr.bf16.gmra.mrb[0].mxu0 %v3851
    %v3890 = vpop.f32.mrb[0].mxu0
    %v3891 = vadd.f32 0.0, %v3890
    %v3892 = vpop.f32.mrb[0].mxu0
    %v3893 = vpop.f32.mrb[0].mxu0
    %v3894 = vpop.f32.mrb[0].mxu0
    %3895 = vdwg.mxu0
    %3896 = vrot.lane.b32.xlu0 %v3243, 64
    %v3897 = vpop.permute.xlu0 %3896
    %v3899 = vsel %vm296, %v3747, 0
    %v3902 = vsel %vm803, %v3897, 0
    %3904 = vmatprep.subr.bf16.mxu0 0
    %3905 = vmatpush1.bf16.msra.mxu0 %v3902
    %3906 = vmatprep.subr.bf16.mxu0 0
    %3907 = vmatpush1.bf16.msra.mxu0 0
    %3908 = vmatprep.subr.bf16.mxu0 0
    %3909 = vmatpush1.bf16.msra.mxu0 0
    %3910 = vmatprep.subr.bf16.mxu0 0
    %3911 = vmatpush1.bf16.msra.mxu0 0
    %3912 = vmatprep.subr.bf16.mxu0 0
    %3913 = vmatpush1.bf16.msra.mxu0 0
    %3914 = vmatprep.subr.bf16.mxu0 0
    %3915 = vmatpush1.bf16.msra.mxu0 0
    %3916 = vmatprep.subr.bf16.mxu0 0
    %3917 = vmatpush1.bf16.msra.mxu0 0
    %3918 = vmatprep.subr.bf16.mxu0 0
    %3919 = vmatpush1.bf16.msra.mxu0 0
    %3920 = vmatprep.subr.bf16.mxu0 0
    %3921 = vmatpush1.bf16.msra.mxu0 0
    %3922 = vmatprep.subr.bf16.mxu0 0
    %3923 = vmatpush1.bf16.msra.mxu0 0
    %3924 = vmatprep.subr.bf16.mxu0 0
    %3925 = vmatpush1.bf16.msra.mxu0 0
    %3926 = vmatprep.subr.bf16.mxu0 0
    %3927 = vmatpush1.bf16.msra.mxu0 0
    %3928 = vmatprep.subr.bf16.mxu0 0
    %3929 = vmatpush1.bf16.msra.mxu0 0
    %3930 = vmatprep.subr.bf16.mxu0 0
    %3931 = vmatpush1.bf16.msra.mxu0 0
    %3932 = vmatprep.subr.bf16.mxu0 0
    %3933 = vmatpush1.bf16.msra.mxu0 0
    %3934 = vmatprep.subr.bf16.mxu0 0
    %3935 = vmatpush1.bf16.msra.mxu0 0
    %3936 = vmatprep.mubr.bf16.mxu0 0
    %3937 = vmatmul.mubr.bf16.gmra.mrb[0].mxu0 %v3899
    %v3938 = vpop.f32.mrb[0].mxu0
    %v3939 = vadd.f32 0.0, %v3938
    %v3940 = vpop.f32.mrb[0].mxu0
    %v3941 = vpop.f32.mrb[0].mxu0
    %v3942 = vpop.f32.mrb[0].mxu0
    %3943 = vdwg.mxu0
    %3944 = vrot.lane.b32.xlu0 %v3244, 64
    %v3945 = vpop.permute.xlu0 %3944
    %v3947 = vsel %vm296, %v3748, 0
    %v3950 = vsel %vm803, %v3945, 0
    %3952 = vmatprep.subr.bf16.mxu0 0
    %3953 = vmatpush1.bf16.msra.mxu0 %v3950
    %3954 = vmatprep.subr.bf16.mxu0 0
    %3955 = vmatpush1.bf16.msra.mxu0 0
    %3956 = vmatprep.subr.bf16.mxu0 0
    %3957 = vmatpush1.bf16.msra.mxu0 0
    %3958 = vmatprep.subr.bf16.mxu0 0
    %3959 = vmatpush1.bf16.msra.mxu0 0
    %3960 = vmatprep.subr.bf16.mxu0 0
    %3961 = vmatpush1.bf16.msra.mxu0 0
    %3962 = vmatprep.subr.bf16.mxu0 0
    %3963 = vmatpush1.bf16.msra.mxu0 0
    %3964 = vmatprep.subr.bf16.mxu0 0
    %3965 = vmatpush1.bf16.msra.mxu0 0
    %3966 = vmatprep.subr.bf16.mxu0 0
    %3967 = vmatpush1.bf16.msra.mxu0 0
    %3968 = vmatprep.subr.bf16.mxu0 0
    %3969 = vmatpush1.bf16.msra.mxu0 0
    %3970 = vmatprep.subr.bf16.mxu0 0
    %3971 = vmatpush1.bf16.msra.mxu0 0
    %3972 = vmatprep.subr.bf16.mxu0 0
    %3973 = vmatpush1.bf16.msra.mxu0 0
    %3974 = vmatprep.subr.bf16.mxu0 0
    %3975 = vmatpush1.bf16.msra.mxu0 0
    %3976 = vmatprep.subr.bf16.mxu0 0
    %3977 = vmatpush1.bf16.msra.mxu0 0
    %3978 = vmatprep.subr.bf16.mxu0 0
    %3979 = vmatpush1.bf16.msra.mxu0 0
    %3980 = vmatprep.subr.bf16.mxu0 0
    %3981 = vmatpush1.bf16.msra.mxu0 0
    %3982 = vmatprep.subr.bf16.mxu0 0
    %3983 = vmatpush1.bf16.msra.mxu0 0
    %3984 = vmatprep.mubr.bf16.mxu0 0
    %3985 = vmatmul.mubr.bf16.gmra.mrb[0].mxu0 %v3947
    %v3986 = vpop.f32.mrb[0].mxu0
    %v3987 = vadd.f32 0.0, %v3986
    %v3988 = vpop.f32.mrb[0].mxu0
    %v3989 = vpop.f32.mrb[0].mxu0
    %v3990 = vpop.f32.mrb[0].mxu0
    %3991 = vdwg.mxu0
    %3992 = vrot.lane.b32.xlu0 %v3245, 64
    %v3993 = vpop.permute.xlu0 %3992
    %v3995 = vsel %vm296, %v3749, 0
    %v3998 = vsel %vm803, %v3993, 0
    %4000 = vmatprep.subr.bf16.mxu0 0
    %4001 = vmatpush1.bf16.msra.mxu0 %v3998
    %4002 = vmatprep.subr.bf16.mxu0 0
    %4003 = vmatpush1.bf16.msra.mxu0 0
    %4004 = vmatprep.subr.bf16.mxu0 0
    %4005 = vmatpush1.bf16.msra.mxu0 0
    %4006 = vmatprep.subr.bf16.mxu0 0
    %4007 = vmatpush1.bf16.msra.mxu0 0
    %4008 = vmatprep.subr.bf16.mxu0 0
    %4009 = vmatpush1.bf16.msra.mxu0 0
    %4010 = vmatprep.subr.bf16.mxu0 0
    %4011 = vmatpush1.bf16.msra.mxu0 0
    %4012 = vmatprep.subr.bf16.mxu0 0
    %4013 = vmatpush1.bf16.msra.mxu0 0
    %4014 = vmatprep.subr.bf16.mxu0 0
    %4015 = vmatpush1.bf16.msra.mxu0 0
    %4016 = vmatprep.subr.bf16.mxu0 0
    %4017 = vmatpush1.bf16.msra.mxu0 0
    %4018 = vmatprep.subr.bf16.mxu0 0
    %4019 = vmatpush1.bf16.msra.mxu0 0
    %4020 = vmatprep.subr.bf16.mxu0 0
    %4021 = vmatpush1.bf16.msra.mxu0 0
    %4022 = vmatprep.subr.bf16.mxu0 0
    %4023 = vmatpush1.bf16.msra.mxu0 0
    %4024 = vmatprep.subr.bf16.mxu0 0
    %4025 = vmatpush1.bf16.msra.mxu0 0
    %4026 = vmatprep.subr.bf16.mxu0 0
    %4027 = vmatpush1.bf16.msra.mxu0 0
    %4028 = vmatprep.subr.bf16.mxu0 0
    %4029 = vmatpush1.bf16.msra.mxu0 0
    %4030 = vmatprep.subr.bf16.mxu0 0
    %4031 = vmatpush1.bf16.msra.mxu0 0
    %4032 = vmatprep.mubr.bf16.mxu0 0
    %4033 = vmatmul.mubr.bf16.gmra.mrb[0].mxu0 %v3995
    %v4034 = vpop.f32.mrb[0].mxu0
    %v4035 = vadd.f32 0.0, %v4034
    %v4036 = vpop.f32.mrb[0].mxu0
    %v4037 = vpop.f32.mrb[0].mxu0
    %v4038 = vpop.f32.mrb[0].mxu0
    %4039 = vdwg.mxu0
    %4040 = vrot.lane.b32.xlu0 %v3246, 64
    %v4041 = vpop.permute.xlu0 %4040
    %v4043 = vsel %vm296, %v3750, 0
    %v4046 = vsel %vm803, %v4041, 0
    %4048 = vmatprep.subr.bf16.mxu0 0
    %4049 = vmatpush1.bf16.msra.mxu0 %v4046
    %4050 = vmatprep.subr.bf16.mxu0 0
    %4051 = vmatpush1.bf16.msra.mxu0 0
    %4052 = vmatprep.subr.bf16.mxu0 0
    %4053 = vmatpush1.bf16.msra.mxu0 0
    %4054 = vmatprep.subr.bf16.mxu0 0
    %4055 = vmatpush1.bf16.msra.mxu0 0
    %4056 = vmatprep.subr.bf16.mxu0 0
    %4057 = vmatpush1.bf16.msra.mxu0 0
    %4058 = vmatprep.subr.bf16.mxu0 0
    %4059 = vmatpush1.bf16.msra.mxu0 0
    %4060 = vmatprep.subr.bf16.mxu0 0
    %4061 = vmatpush1.bf16.msra.mxu0 0
    %4062 = vmatprep.subr.bf16.mxu0 0
    %4063 = vmatpush1.bf16.msra.mxu0 0
    %4064 = vmatprep.subr.bf16.mxu0 0
    %4065 = vmatpush1.bf16.msra.mxu0 0
    %4066 = vmatprep.subr.bf16.mxu0 0
    %4067 = vmatpush1.bf16.msra.mxu0 0
    %4068 = vmatprep.subr.bf16.mxu0 0
    %4069 = vmatpush1.bf16.msra.mxu0 0
    %4070 = vmatprep.subr.bf16.mxu0 0
    %4071 = vmatpush1.bf16.msra.mxu0 0
    %4072 = vmatprep.subr.bf16.mxu0 0
    %4073 = vmatpush1.bf16.msra.mxu0 0
    %4074 = vmatprep.subr.bf16.mxu0 0
    %4075 = vmatpush1.bf16.msra.mxu0 0
    %4076 = vmatprep.subr.bf16.mxu0 0
    %4077 = vmatpush1.bf16.msra.mxu0 0
    %4078 = vmatprep.subr.bf16.mxu0 0
    %4079 = vmatpush1.bf16.msra.mxu0 0
    %4080 = vmatprep.mubr.bf16.mxu0 0
    %4081 = vmatmul.mubr.bf16.gmra.mrb[0].mxu0 %v4043
    %v4082 = vpop.f32.mrb[0].mxu0
    %v4083 = vadd.f32 0.0, %v4082
    %v4084 = vpop.f32.mrb[0].mxu0
    %v4085 = vpop.f32.mrb[0].mxu0
    %v4086 = vpop.f32.mrb[0].mxu0
    %4087 = vdwg.mxu0
    %4088 = vrot.lane.b32.xlu0 %v3247, 64
    %v4089 = vpop.permute.xlu0 %4088
    %v4091 = vsel %vm296, %v3751, 0
    %v4094 = vsel %vm803, %v4089, 0
    %4096 = vmatprep.subr.bf16.mxu0 0
    %4097 = vmatpush1.bf16.msra.mxu0 %v4094
    %4098 = vmatprep.subr.bf16.mxu0 0
    %4099 = vmatpush1.bf16.msra.mxu0 0
    %4100 = vmatprep.subr.bf16.mxu0 0
    %4101 = vmatpush1.bf16.msra.mxu0 0
    %4102 = vmatprep.subr.bf16.mxu0 0
    %4103 = vmatpush1.bf16.msra.mxu0 0
    %4104 = vmatprep.subr.bf16.mxu0 0
    %4105 = vmatpush1.bf16.msra.mxu0 0
    %4106 = vmatprep.subr.bf16.mxu0 0
    %4107 = vmatpush1.bf16.msra.mxu0 0
    %4108 = vmatprep.subr.bf16.mxu0 0
    %4109 = vmatpush1.bf16.msra.mxu0 0
    %4110 = vmatprep.subr.bf16.mxu0 0
    %4111 = vmatpush1.bf16.msra.mxu0 0
    %4112 = vmatprep.subr.bf16.mxu0 0
    %4113 = vmatpush1.bf16.msra.mxu0 0
    %4114 = vmatprep.subr.bf16.mxu0 0
    %4115 = vmatpush1.bf16.msra.mxu0 0
    %4116 = vmatprep.subr.bf16.mxu0 0
    %4117 = vmatpush1.bf16.msra.mxu0 0
    %4118 = vmatprep.subr.bf16.mxu0 0
    %4119 = vmatpush1.bf16.msra.mxu0 0
    %4120 = vmatprep.subr.bf16.mxu0 0
    %4121 = vmatpush1.bf16.msra.mxu0 0
    %4122 = vmatprep.subr.bf16.mxu0 0
    %4123 = vmatpush1.bf16.msra.mxu0 0
    %4124 = vmatprep.subr.bf16.mxu0 0
    %4125 = vmatpush1.bf16.msra.mxu0 0
    %4126 = vmatprep.subr.bf16.mxu0 0
    %4127 = vmatpush1.bf16.msra.mxu0 0
    %4128 = vmatprep.mubr.bf16.mxu0 0
    %4129 = vmatmul.mubr.bf16.gmra.mrb[0].mxu0 %v4091
    %v4130 = vpop.f32.mrb[0].mxu0
    %v4131 = vadd.f32 0.0, %v4130
    %v4132 = vpop.f32.mrb[0].mxu0
    %v4133 = vpop.f32.mrb[0].mxu0
    %v4134 = vpop.f32.mrb[0].mxu0
    %4135 = vdwg.mxu0
    %v4136 = vpack.c.bf16 %v3843, %v3795
    %v4137 = vpack.c.bf16 %v3939, %v3891
    %v4139 = vsel %vm296, %v4137, 0
    %v4142 = vsel %vm803, %v3216, 0
    %4144 = vmatprep.subr.bf16.mxu0 0
    %4145 = vmatpush1.bf16.msra.mxu0 %v4142
    %4146 = vmatprep.subr.bf16.mxu0 0
    %4147 = vmatpush1.bf16.msra.mxu0 0
    %4148 = vmatprep.subr.bf16.mxu0 0
    %4149 = vmatpush1.bf16.msra.mxu0 0
    %4150 = vmatprep.subr.bf16.mxu0 0
    %4151 = vmatpush1.bf16.msra.mxu0 0
    %4152 = vmatprep.subr.bf16.mxu0 0
    %4153 = vmatpush1.bf16.msra.mxu0 0
    %4154 = vmatprep.subr.bf16.mxu0 0
    %4155 = vmatpush1.bf16.msra.mxu0 0
    %4156 = vmatprep.subr.bf16.mxu0 0
    %4157 = vmatpush1.bf16.msra.mxu0 0
    %4158 = vmatprep.subr.bf16.mxu0 0
    %4159 = vmatpush1.bf16.msra.mxu0 0
    %4160 = vmatprep.subr.bf16.mxu0 0
    %4161 = vmatpush1.bf16.msra.mxu0 0
    %4162 = vmatprep.subr.bf16.mxu0 0
    %4163 = vmatpush1.bf16.msra.mxu0 0
    %4164 = vmatprep.subr.bf16.mxu0 0
    %4165 = vmatpush1.bf16.msra.mxu0 0
    %4166 = vmatprep.subr.bf16.mxu0 0
    %4167 = vmatpush1.bf16.msra.mxu0 0
    %4168 = vmatprep.subr.bf16.mxu0 0
    %4169 = vmatpush1.bf16.msra.mxu0 0
    %4170 = vmatprep.subr.bf16.mxu0 0
    %4171 = vmatpush1.bf16.msra.mxu0 0
    %4172 = vmatprep.subr.bf16.mxu0 0
    %4173 = vmatpush1.bf16.msra.mxu0 0
    %4174 = vmatprep.subr.bf16.mxu0 0
    %4175 = vmatpush1.bf16.msra.mxu0 0
    %4176 = vmatprep.mubr.bf16.mxu0 0
    %4177 = vmatmul.mubr.bf16.gmra.mrb[0].mxu0 %v4139
    %v4178 = vpop.f32.mrb[0].mxu0
    %v4179 = vadd.f32 0.0, %v4178
    %v4180 = vpop.f32.mrb[0].mxu0
    %v4181 = vpop.f32.mrb[0].mxu0
    %v4182 = vadd.f32 0.0, %v4181
    %v4183 = vpop.f32.mrb[0].mxu0
    %4184 = vdwg.mxu0
    %v4186 = vsel %vm296, %v4136, 0
    %v4189 = vsel %vm803, %v3215, 0
    %4191 = vmatprep.subr.bf16.mxu0 0
    %4192 = vmatpush1.bf16.msra.mxu0 %v4189
    %4193 = vmatprep.subr.bf16.mxu0 0
    %4194 = vmatpush1.bf16.msra.mxu0 0
    %4195 = vmatprep.subr.bf16.mxu0 0
    %4196 = vmatpush1.bf16.msra.mxu0 0
    %4197 = vmatprep.subr.bf16.mxu0 0
    %4198 = vmatpush1.bf16.msra.mxu0 0
    %4199 = vmatprep.subr.bf16.mxu0 0
    %4200 = vmatpush1.bf16.msra.mxu0 0
    %4201 = vmatprep.subr.bf16.mxu0 0
    %4202 = vmatpush1.bf16.msra.mxu0 0
    %4203 = vmatprep.subr.bf16.mxu0 0
    %4204 = vmatpush1.bf16.msra.mxu0 0
    %4205 = vmatprep.subr.bf16.mxu0 0
    %4206 = vmatpush1.bf16.msra.mxu0 0
    %4207 = vmatprep.subr.bf16.mxu0 0
    %4208 = vmatpush1.bf16.msra.mxu0 0
    %4209 = vmatprep.subr.bf16.mxu0 0
    %4210 = vmatpush1.bf16.msra.mxu0 0
    %4211 = vmatprep.subr.bf16.mxu0 0
    %4212 = vmatpush1.bf16.msra.mxu0 0
    %4213 = vmatprep.subr.bf16.mxu0 0
    %4214 = vmatpush1.bf16.msra.mxu0 0
    %4215 = vmatprep.subr.bf16.mxu0 0
    %4216 = vmatpush1.bf16.msra.mxu0 0
    %4217 = vmatprep.subr.bf16.mxu0 0
    %4218 = vmatpush1.bf16.msra.mxu0 0
    %4219 = vmatprep.subr.bf16.mxu0 0
    %4220 = vmatpush1.bf16.msra.mxu0 0
    %4221 = vmatprep.subr.bf16.mxu0 0
    %4222 = vmatpush1.bf16.msra.mxu0 0
    %4223 = vmatprep.mubr.bf16.mxu0 0
    %4224 = vmatmul.mubr.bf16.gmra.mrb[0].mxu0 %v4186
    %v4225 = vpop.f32.mrb[0].mxu0
    %v4226 = vadd.f32 %v4179, %v4225
    %v4227 = vpop.f32.mrb[0].mxu0
    %v4228 = vpop.f32.mrb[0].mxu0
    %v4229 = vadd.f32 %v4182, %v4228
    %v4230 = vpop.f32.mrb[0].mxu0
    %4231 = vdwg.mxu0
    %v4232 = vpack.c.bf16 %v4035, %v3987
    %v4234 = vsel %vm296, %v4232, 0
    %v4237 = vsel %vm803, %v3217, 0
    %4239 = vmatprep.subr.bf16.mxu0 0
    %4240 = vmatpush1.bf16.msra.mxu0 %v4237
    %4241 = vmatprep.subr.bf16.mxu0 0
    %4242 = vmatpush1.bf16.msra.mxu0 0
    %4243 = vmatprep.subr.bf16.mxu0 0
    %4244 = vmatpush1.bf16.msra.mxu0 0
    %4245 = vmatprep.subr.bf16.mxu0 0
    %4246 = vmatpush1.bf16.msra.mxu0 0
    %4247 = vmatprep.subr.bf16.mxu0 0
    %4248 = vmatpush1.bf16.msra.mxu0 0
    %4249 = vmatprep.subr.bf16.mxu0 0
    %4250 = vmatpush1.bf16.msra.mxu0 0
    %4251 = vmatprep.subr.bf16.mxu0 0
    %4252 = vmatpush1.bf16.msra.mxu0 0
    %4253 = vmatprep.subr.bf16.mxu0 0
    %4254 = vmatpush1.bf16.msra.mxu0 0
    %4255 = vmatprep.subr.bf16.mxu0 0
    %4256 = vmatpush1.bf16.msra.mxu0 0
    %4257 = vmatprep.subr.bf16.mxu0 0
    %4258 = vmatpush1.bf16.msra.mxu0 0
    %4259 = vmatprep.subr.bf16.mxu0 0
    %4260 = vmatpush1.bf16.msra.mxu0 0
    %4261 = vmatprep.subr.bf16.mxu0 0
    %4262 = vmatpush1.bf16.msra.mxu0 0
    %4263 = vmatprep.subr.bf16.mxu0 0
    %4264 = vmatpush1.bf16.msra.mxu0 0
    %4265 = vmatprep.subr.bf16.mxu0 0
    %4266 = vmatpush1.bf16.msra.mxu0 0
    %4267 = vmatprep.subr.bf16.mxu0 0
    %4268 = vmatpush1.bf16.msra.mxu0 0
    %4269 = vmatprep.subr.bf16.mxu0 0
    %4270 = vmatpush1.bf16.msra.mxu0 0
    %4271 = vmatprep.mubr.bf16.mxu0 0
    %4272 = vmatmul.mubr.bf16.gmra.mrb[0].mxu0 %v4234
    %v4273 = vpop.f32.mrb[0].mxu0
    %v4274 = vadd.f32 0.0, %v4273
    %v4275 = vpop.f32.mrb[0].mxu0
    %v4276 = vpop.f32.mrb[0].mxu0
    %v4277 = vadd.f32 0.0, %v4276
    %v4278 = vpop.f32.mrb[0].mxu0
    %4279 = vdwg.mxu0
    %v4280 = vadd.f32 %v4226, %v4274
    %v4281 = vadd.f32 %v4229, %v4277
    %v4282 = vpack.c.bf16 %v4131, %v4083
    %v4284 = vsel %vm296, %v4282, 0
    %v4287 = vsel %vm803, %v3218, 0
    %4289 = vmatprep.subr.bf16.mxu0 0
    %4290 = vmatpush1.bf16.msra.mxu0 %v4287
    %4291 = vmatprep.subr.bf16.mxu0 0
    %4292 = vmatpush1.bf16.msra.mxu0 0
    %4293 = vmatprep.subr.bf16.mxu0 0
    %4294 = vmatpush1.bf16.msra.mxu0 0
    %4295 = vmatprep.subr.bf16.mxu0 0
    %4296 = vmatpush1.bf16.msra.mxu0 0
    %4297 = vmatprep.subr.bf16.mxu0 0
    %4298 = vmatpush1.bf16.msra.mxu0 0
    %4299 = vmatprep.subr.bf16.mxu0 0
    %4300 = vmatpush1.bf16.msra.mxu0 0
    %4301 = vmatprep.subr.bf16.mxu0 0
    %4302 = vmatpush1.bf16.msra.mxu0 0
    %4303 = vmatprep.subr.bf16.mxu0 0
    %4304 = vmatpush1.bf16.msra.mxu0 0
    %4305 = vmatprep.subr.bf16.mxu0 0
    %4306 = vmatpush1.bf16.msra.mxu0 0
    %4307 = vmatprep.subr.bf16.mxu0 0
    %4308 = vmatpush1.bf16.msra.mxu0 0
    %4309 = vmatprep.subr.bf16.mxu0 0
    %4310 = vmatpush1.bf16.msra.mxu0 0
    %4311 = vmatprep.subr.bf16.mxu0 0
    %4312 = vmatpush1.bf16.msra.mxu0 0
    %4313 = vmatprep.subr.bf16.mxu0 0
    %4314 = vmatpush1.bf16.msra.mxu0 0
    %4315 = vmatprep.subr.bf16.mxu0 0
    %4316 = vmatpush1.bf16.msra.mxu0 0
    %4317 = vmatprep.subr.bf16.mxu0 0
    %4318 = vmatpush1.bf16.msra.mxu0 0
    %4319 = vmatprep.subr.bf16.mxu0 0
    %4320 = vmatpush1.bf16.msra.mxu0 0
    %4321 = vmatprep.mubr.bf16.mxu0 0
    %4322 = vmatmul.mubr.bf16.gmra.mrb[0].mxu0 %v4284
    %v4323 = vpop.f32.mrb[0].mxu0
    %v4324 = vadd.f32 0.0, %v4323
    %v4325 = vpop.f32.mrb[0].mxu0
    %v4326 = vpop.f32.mrb[0].mxu0
    %v4327 = vadd.f32 0.0, %v4326
    %v4328 = vpop.f32.mrb[0].mxu0
    %4329 = vdwg.mxu0
    %v4330 = vadd.f32 %v4280, %v4324
    %v4331 = vadd.f32 %v4281, %v4327
    %v4332 = vlaneseq
    %v4333 = vshrl.u32 %v4332, 7
    %v4334 = vsub.s32 0, %v4333
    %v4335 = vrot.slane %v3219, %v4334
    %v4336 = vadd.f32 %v4330, %v4335
    %v4337 = vadd.f32 %v4331, %v4335
    %v4338 = vadd.f32 %v3103, %v4336
    %v4339 = vadd.f32 %v3106, %v4337
    %v4340 = vld [vmem:[#allocation5 + $0xe8] sm:$0x1]
    %v4341 = vld [vmem:[#allocation5 + $0xf0] sm:$0x1]
    %v4342 = vsel %vm154, %v4338, 0.0
    %4343 = vadd.xlane.f32.xlu0 %v4342
    %v4344 = vpop.xlane.xlu0 %4343
    %v4345 = vsel %vm154, %v4339, 0.0
    %4346 = vadd.xlane.f32.xlu0 %v4345
    %v4347 = vpop.xlane.xlu0 %4346
    %v4348 = vmul.f32 %v4344, %v161
    %v4349 = vmul.f32 %v4347, %v161
    %v4350 = vsub.f32 %v4338, %v4348
    %v4351 = vsub.f32 %v4339, %v4349
    %v4352 = vmul.f32 %v4350, %v4350
    %v4353 = vmul.f32 %v4351, %v4351
    %v4354 = vsel %vm154, %v4352, 0.0
    %4355 = vadd.xlane.f32.xlu0 %v4354
    %v4356 = vpop.xlane.xlu0 %4355
    %v4357 = vsel %vm154, %v4353, 0.0
    %4358 = vadd.xlane.f32.xlu0 %v4357
    %v4359 = vpop.xlane.xlu0 %4358
    %v4360 = vmul.f32 %v4356, %v161
    %v4361 = vmul.f32 %v4359, %v161
    %v4362 = vadd.f32 %v4360, 1e-06
    %v4363 = vadd.f32 %v4361, 1e-06
    %v4364 = vrsqrt.pop %v4362
    %v4365 = vrsqrt.pop %v4363
    %v4366 = vmul.f32 %v4350, %v4364
    %v4367 = vmul.f32 %v4351, %v4365
    %v4368 = vlaneseq
    %v4369 = vshrl.u32 %v4368, 7
    %v4370 = vsub.s32 0, %v4369
    %v4371 = vrot.slane %v4340, %v4370
    %v4372 = vmul.f32 %v4366, %v4371
    %v4373 = vmul.f32 %v4367, %v4371
    %v4374 = vlaneseq
    %v4375 = vshrl.u32 %v4374, 7
    %v4376 = vsub.s32 0, %v4375
    %v4377 = vrot.slane %v4341, %v4376
    %v4378 = vadd.f32 %v4372, %v4377
    %v4379 = vadd.f32 %v4373, %v4377
    %v4380 = vpack.c.bf16 %v4379, %v4378
    %v4381 = vld [vmem:[#allocation2 + $0xd0] sm:$0xf]
    %v4382 = vld [vmem:[#allocation2 + $0xd4] sm:$0xf]
    %v4383 = vld [vmem:[#allocation2 + $0xd8] sm:$0xf]
    %v4384 = vld [vmem:[#allocation2 + $0xdc] sm:$0xf]
    %v4385 = vld [vmem:[#allocation5 + $0xc0] sm:$0x1]
    %v4386 = vlaneseq
    %v4387 = vshrl.u32 %v4386, 7
    %v4388 = vsub.s32 0, %v4387
    %v4389 = vrot.slane %v4385, %v4388
    %v4394 = vunpack.c.l.b16 %v4381
    %v4395 = vunpack.c.l.b16 %v4382
    %v4396 = vunpack.c.l.b16 %v4383
    %v4397 = vunpack.c.l.b16 %v4384
    %v4398 = vpack.c.b16 %v4395, %v4394
    %v4399 = vpack.c.b16 %v4397, %v4396
    %v4403 = vsel %vm154, %v4380, 0
    %4405 = vmatprep.subr.bf16.mxu0 0
    %4406 = vmatpush1.bf16.msra.mxu0 %v4398
    %4407 = vmatprep.subr.bf16.mxu0 0
    %4408 = vmatpush1.bf16.msra.mxu0 %v4399
    %4409 = vmatprep.subr.bf16.mxu0 0
    %4410 = vmatpush1.bf16.msra.mxu0 0
    %4411 = vmatprep.subr.bf16.mxu0 0
    %4412 = vmatpush1.bf16.msra.mxu0 0
    %4413 = vmatprep.subr.bf16.mxu0 0
    %4414 = vmatpush1.bf16.msra.mxu0 0
    %4415 = vmatprep.subr.bf16.mxu0 0
    %4416 = vmatpush1.bf16.msra.mxu0 0
    %4417 = vmatprep.subr.bf16.mxu0 0
    %4418 = vmatpush1.bf16.msra.mxu0 0
    %4419 = vmatprep.subr.bf16.mxu0 0
    %4420 = vmatpush1.bf16.msra.mxu0 0
    %4421 = vmatprep.subr.bf16.mxu0 0
    %4422 = vmatpush1.bf16.msra.mxu0 0
    %4423 = vmatprep.subr.bf16.mxu0 0
    %4424 = vmatpush1.bf16.msra.mxu0 0
    %4425 = vmatprep.subr.bf16.mxu0 0
    %4426 = vmatpush1.bf16.msra.mxu0 0
    %4427 = vmatprep.subr.bf16.mxu0 0
    %4428 = vmatpush1.bf16.msra.mxu0 0
    %4429 = vmatprep.subr.bf16.mxu0 0
    %4430 = vmatpush1.bf16.msra.mxu0 0
    %4431 = vmatprep.subr.bf16.mxu0 0
    %4432 = vmatpush1.bf16.msra.mxu0 0
    %4433 = vmatprep.subr.bf16.mxu0 0
    %4434 = vmatpush1.bf16.msra.mxu0 0
    %4435 = vmatprep.subr.bf16.mxu0 0
    %4436 = vmatpush1.bf16.msra.mxu0 0
    %4437 = vmatprep.mubr.bf16.mxu0 0
    %4438 = vmatmul.mubr.bf16.gmra.mrb[0].mxu0 %v4403
    %v4439 = vpop.f32.mrb[0].mxu0
    %v4440 = vadd.f32 %v4389, %v4439
    %v4441 = vpop.f32.mrb[0].mxu0
    %v4442 = vpop.f32.mrb[0].mxu0
    %v4443 = vadd.f32 %v4389, %v4442
    %v4444 = vpop.f32.mrb[0].mxu0
    %4445 = vdwg.mxu0
    %v4446 = vld [vmem:[#allocation2 + $0xe0] sm:$0xf]
    %v4447 = vld [vmem:[#allocation2 + $0xe4] sm:$0xf]
    %v4448 = vld [vmem:[#allocation2 + $0xe8] sm:$0xf]
    %v4449 = vld [vmem:[#allocation2 + $0xec] sm:$0xf]
    %v4450 = vld [vmem:[#allocation5 + $0xc8] sm:$0x1]
    %v4451 = vlaneseq
    %v4452 = vshrl.u32 %v4451, 7
    %v4453 = vsub.s32 0, %v4452
    %v4454 = vrot.slane %v4450, %v4453
    %v4459 = vunpack.c.l.b16 %v4446
    %v4460 = vunpack.c.l.b16 %v4447
    %v4461 = vunpack.c.l.b16 %v4448
    %v4462 = vunpack.c.l.b16 %v4449
    %v4463 = vpack.c.b16 %v4460, %v4459
    %v4464 = vpack.c.b16 %v4462, %v4461
    %v4468 = vsel %vm154, %v3043, 0
    %4470 = vmatprep.subr.bf16.mxu0 0
    %4471 = vmatpush1.bf16.msra.mxu0 %v4463
    %4472 = vmatprep.subr.bf16.mxu0 0
    %4473 = vmatpush1.bf16.msra.mxu0 %v4464
    %4474 = vmatprep.subr.bf16.mxu0 0
    %4475 = vmatpush1.bf16.msra.mxu0 0
    %4476 = vmatprep.subr.bf16.mxu0 0
    %4477 = vmatpush1.bf16.msra.mxu0 0
    %4478 = vmatprep.subr.bf16.mxu0 0
    %4479 = vmatpush1.bf16.msra.mxu0 0
    %4480 = vmatprep.subr.bf16.mxu0 0
    %4481 = vmatpush1.bf16.msra.mxu0 0
    %4482 = vmatprep.subr.bf16.mxu0 0
    %4483 = vmatpush1.bf16.msra.mxu0 0
    %4484 = vmatprep.subr.bf16.mxu0 0
    %4485 = vmatpush1.bf16.msra.mxu0 0
    %4486 = vmatprep.subr.bf16.mxu0 0
    %4487 = vmatpush1.bf16.msra.mxu0 0
    %4488 = vmatprep.subr.bf16.mxu0 0
    %4489 = vmatpush1.bf16.msra.mxu0 0
    %4490 = vmatprep.subr.bf16.mxu0 0
    %4491 = vmatpush1.bf16.msra.mxu0 0
    %4492 = vmatprep.subr.bf16.mxu0 0
    %4493 = vmatpush1.bf16.msra.mxu0 0
    %4494 = vmatprep.subr.bf16.mxu0 0
    %4495 = vmatpush1.bf16.msra.mxu0 0
    %4496 = vmatprep.subr.bf16.mxu0 0
    %4497 = vmatpush1.bf16.msra.mxu0 0
    %4498 = vmatprep.subr.bf16.mxu0 0
    %4499 = vmatpush1.bf16.msra.mxu0 0
    %4500 = vmatprep.subr.bf16.mxu0 0
    %4501 = vmatpush1.bf16.msra.mxu0 0
    %4502 = vmatprep.mubr.bf16.mxu0 0
    %4503 = vmatmul.mubr.bf16.gmra.mrb[0].mxu0 %v4468
    %v4504 = vpop.f32.mrb[0].mxu0
    %v4505 = vadd.f32 %v4454, %v4504
    %v4506 = vpop.f32.mrb[0].mxu0
    %v4507 = vpop.f32.mrb[0].mxu0
    %v4508 = vadd.f32 %v4454, %v4507
    %v4509 = vpop.f32.mrb[0].mxu0
    %4510 = vdwg.mxu0
    %v4511 = vld [vmem:[#allocation2 + $0xf0] sm:$0xf]
    %v4512 = vld [vmem:[#allocation2 + $0xf4] sm:$0xf]
    %v4513 = vld [vmem:[#allocation2 + $0xf8] sm:$0xf]
    %v4514 = vld [vmem:[#allocation2 + $0xfc] sm:$0xf]
    %v4515 = vld [vmem:[#allocation5 + $0xd0] sm:$0x1]
    %4518 = vrot.lane.b32.xlu0 %v4440, 120
    %v4519 = vpop.permute.xlu0 %4518
    %4520 = vrot.lane.b32.xlu0 %v4443, 120
    %v4521 = vpop.permute.xlu0 %4520
    %4524 = vrot.lane.b32.xlu0 %v4440, 112
    %v4525 = vpop.permute.xlu0 %4524
    %4526 = vrot.lane.b32.xlu0 %v4443, 112
    %v4527 = vpop.permute.xlu0 %4526
    %4530 = vrot.lane.b32.xlu0 %v4440, 104
    %v4531 = vpop.permute.xlu0 %4530
    %4532 = vrot.lane.b32.xlu0 %v4443, 104
    %v4533 = vpop.permute.xlu0 %4532
    %v4536 = vpack.c.bf16 %v4440, %v4440
    %v4537 = vpack.c.bf16 %v4443, %v4443
    %v4538 = vpack.c.bf16 %v4519, %v4519
    %v4539 = vpack.c.bf16 %v4521, %v4521
    %v4540 = vpack.c.bf16 %v4525, %v4525
    %v4541 = vpack.c.bf16 %v4527, %v4527
    %v4542 = vpack.c.bf16 %v4531, %v4531
    %v4543 = vpack.c.bf16 %v4533, %v4533
    %4546 = vrot.lane.b32.xlu0 %v4505, 120
    %v4547 = vpop.permute.xlu0 %4546
    %4548 = vrot.lane.b32.xlu0 %v4508, 120
    %v4549 = vpop.permute.xlu0 %4548
    %4552 = vrot.lane.b32.xlu0 %v4505, 112
    %v4553 = vpop.permute.xlu0 %4552
    %4554 = vrot.lane.b32.xlu0 %v4508, 112
    %v4555 = vpop.permute.xlu0 %4554
    %4558 = vrot.lane.b32.xlu0 %v4505, 104
    %v4559 = vpop.permute.xlu0 %4558
    %4560 = vrot.lane.b32.xlu0 %v4508, 104
    %v4561 = vpop.permute.xlu0 %4560
    %v4564 = vpack.c.bf16 %v4505, %v4505
    %v4565 = vpack.c.bf16 %v4508, %v4508
    %v4566 = vpack.c.bf16 %v4547, %v4547
    %v4567 = vpack.c.bf16 %v4549, %v4549
    %v4568 = vpack.c.bf16 %v4553, %v4553
    %v4569 = vpack.c.bf16 %v4555, %v4555
    %v4570 = vpack.c.bf16 %v4559, %v4559
    %v4571 = vpack.c.bf16 %v4561, %v4561
    %v4573 = vsel %vm296, %v4536, 0
    %v4576 = vsel %vm296, %v4564, 0
    %4578 = vmatprep.subr.bf16.mxu0 0
    %4579 = vmatpush1.bf16.xpose.msra.mxu0 %v4576
    %4580 = vmatprep.subr.bf16.mxu0 0
    %4581 = vmatpush1.bf16.xpose.msra.mxu0 0
    %4582 = vmatprep.subr.bf16.mxu0 0
    %4583 = vmatpush1.bf16.xpose.msra.mxu0 0
    %4584 = vmatprep.subr.bf16.mxu0 0
    %4585 = vmatpush1.bf16.xpose.msra.mxu0 0
    %4586 = vmatprep.subr.bf16.mxu0 0
    %4587 = vmatpush1.bf16.xpose.msra.mxu0 0
    %4588 = vmatprep.subr.bf16.mxu0 0
    %4589 = vmatpush1.bf16.xpose.msra.mxu0 0
    %4590 = vmatprep.subr.bf16.mxu0 0
    %4591 = vmatpush1.bf16.xpose.msra.mxu0 0
    %4592 = vmatprep.subr.bf16.mxu0 0
    %4593 = vmatpush1.bf16.xpose.msra.mxu0 0
    %4594 = vmatprep.subr.bf16.mxu0 0
    %4595 = vmatpush1.bf16.xpose.msra.mxu0 0
    %4596 = vmatprep.subr.bf16.mxu0 0
    %4597 = vmatpush1.bf16.xpose.msra.mxu0 0
    %4598 = vmatprep.subr.bf16.mxu0 0
    %4599 = vmatpush1.bf16.xpose.msra.mxu0 0
    %4600 = vmatprep.subr.bf16.mxu0 0
    %4601 = vmatpush1.bf16.xpose.msra.mxu0 0
    %4602 = vmatprep.subr.bf16.mxu0 0
    %4603 = vmatpush1.bf16.xpose.msra.mxu0 0
    %4604 = vmatprep.subr.bf16.mxu0 0
    %4605 = vmatpush1.bf16.xpose.msra.mxu0 0
    %4606 = vmatprep.subr.bf16.mxu0 0
    %4607 = vmatpush1.bf16.xpose.msra.mxu0 0
    %4608 = vmatprep.subr.bf16.mxu0 0
    %4609 = vmatpush1.bf16.xpose.msra.mxu0 0
    %4610 = vmatprep.mubr.bf16.mxu0 0
    %4611 = vmatmul.mubr.bf16.gmra.mrb[0].mxu0 %v4573
    %v4612 = vpop.f32.mrb[0].mxu0
    %v4613 = vadd.f32 0.0, %v4612
    %v4614 = vpop.f32.mrb[0].mxu0
    %v4615 = vpop.f32.mrb[0].mxu0
    %v4616 = vpop.f32.mrb[0].mxu0
    %4617 = vdwg.mxu0
    %v4619 = vsel %vm296, %v4537, 0
    %v4622 = vsel %vm296, %v4565, 0
    %4624 = vmatprep.subr.bf16.mxu0 0
    %4625 = vmatpush1.bf16.xpose.msra.mxu0 %v4622
    %4626 = vmatprep.subr.bf16.mxu0 0
    %4627 = vmatpush1.bf16.xpose.msra.mxu0 0
    %4628 = vmatprep.subr.bf16.mxu0 0
    %4629 = vmatpush1.bf16.xpose.msra.mxu0 0
    %4630 = vmatprep.subr.bf16.mxu0 0
    %4631 = vmatpush1.bf16.xpose.msra.mxu0 0
    %4632 = vmatprep.subr.bf16.mxu0 0
    %4633 = vmatpush1.bf16.xpose.msra.mxu0 0
    %4634 = vmatprep.subr.bf16.mxu0 0
    %4635 = vmatpush1.bf16.xpose.msra.mxu0 0
    %4636 = vmatprep.subr.bf16.mxu0 0
    %4637 = vmatpush1.bf16.xpose.msra.mxu0 0
    %4638 = vmatprep.subr.bf16.mxu0 0
    %4639 = vmatpush1.bf16.xpose.msra.mxu0 0
    %4640 = vmatprep.subr.bf16.mxu0 0
    %4641 = vmatpush1.bf16.xpose.msra.mxu0 0
    %4642 = vmatprep.subr.bf16.mxu0 0
    %4643 = vmatpush1.bf16.xpose.msra.mxu0 0
    %4644 = vmatprep.subr.bf16.mxu0 0
    %4645 = vmatpush1.bf16.xpose.msra.mxu0 0
    %4646 = vmatprep.subr.bf16.mxu0 0
    %4647 = vmatpush1.bf16.xpose.msra.mxu0 0
    %4648 = vmatprep.subr.bf16.mxu0 0
    %4649 = vmatpush1.bf16.xpose.msra.mxu0 0
    %4650 = vmatprep.subr.bf16.mxu0 0
    %4651 = vmatpush1.bf16.xpose.msra.mxu0 0
    %4652 = vmatprep.subr.bf16.mxu0 0
    %4653 = vmatpush1.bf16.xpose.msra.mxu0 0
    %4654 = vmatprep.subr.bf16.mxu0 0
    %4655 = vmatpush1.bf16.xpose.msra.mxu0 0
    %4656 = vmatprep.mubr.bf16.mxu0 0
    %4657 = vmatmul.mubr.bf16.gmra.mrb[0].mxu0 %v4619
    %v4658 = vpop.f32.mrb[0].mxu0
    %v4659 = vadd.f32 0.0, %v4658
    %v4660 = vpop.f32.mrb[0].mxu0
    %v4661 = vpop.f32.mrb[0].mxu0
    %v4662 = vpop.f32.mrb[0].mxu0
    %4663 = vdwg.mxu0
    %v4665 = vsel %vm296, %v4538, 0
    %v4668 = vsel %vm296, %v4566, 0
    %4670 = vmatprep.subr.bf16.mxu0 0
    %4671 = vmatpush1.bf16.xpose.msra.mxu0 %v4668
    %4672 = vmatprep.subr.bf16.mxu0 0
    %4673 = vmatpush1.bf16.xpose.msra.mxu0 0
    %4674 = vmatprep.subr.bf16.mxu0 0
    %4675 = vmatpush1.bf16.xpose.msra.mxu0 0
    %4676 = vmatprep.subr.bf16.mxu0 0
    %4677 = vmatpush1.bf16.xpose.msra.mxu0 0
    %4678 = vmatprep.subr.bf16.mxu0 0
    %4679 = vmatpush1.bf16.xpose.msra.mxu0 0
    %4680 = vmatprep.subr.bf16.mxu0 0
    %4681 = vmatpush1.bf16.xpose.msra.mxu0 0
    %4682 = vmatprep.subr.bf16.mxu0 0
    %4683 = vmatpush1.bf16.xpose.msra.mxu0 0
    %4684 = vmatprep.subr.bf16.mxu0 0
    %4685 = vmatpush1.bf16.xpose.msra.mxu0 0
    %4686 = vmatprep.subr.bf16.mxu0 0
    %4687 = vmatpush1.bf16.xpose.msra.mxu0 0
    %4688 = vmatprep.subr.bf16.mxu0 0
    %4689 = vmatpush1.bf16.xpose.msra.mxu0 0
    %4690 = vmatprep.subr.bf16.mxu0 0
    %4691 = vmatpush1.bf16.xpose.msra.mxu0 0
    %4692 = vmatprep.subr.bf16.mxu0 0
    %4693 = vmatpush1.bf16.xpose.msra.mxu0 0
    %4694 = vmatprep.subr.bf16.mxu0 0
    %4695 = vmatpush1.bf16.xpose.msra.mxu0 0
    %4696 = vmatprep.subr.bf16.mxu0 0
    %4697 = vmatpush1.bf16.xpose.msra.mxu0 0
    %4698 = vmatprep.subr.bf16.mxu0 0
    %4699 = vmatpush1.bf16.xpose.msra.mxu0 0
    %4700 = vmatprep.subr.bf16.mxu0 0
    %4701 = vmatpush1.bf16.xpose.msra.mxu0 0
    %4702 = vmatprep.mubr.bf16.mxu0 0
    %4703 = vmatmul.mubr.bf16.gmra.mrb[0].mxu0 %v4665
    %v4704 = vpop.f32.mrb[0].mxu0
    %v4705 = vadd.f32 0.0, %v4704
    %v4706 = vpop.f32.mrb[0].mxu0
    %v4707 = vpop.f32.mrb[0].mxu0
    %v4708 = vpop.f32.mrb[0].mxu0
    %4709 = vdwg.mxu0
    %v4711 = vsel %vm296, %v4539, 0
    %v4714 = vsel %vm296, %v4567, 0
    %4716 = vmatprep.subr.bf16.mxu0 0
    %4717 = vmatpush1.bf16.xpose.msra.mxu0 %v4714
    %4718 = vmatprep.subr.bf16.mxu0 0
    %4719 = vmatpush1.bf16.xpose.msra.mxu0 0
    %4720 = vmatprep.subr.bf16.mxu0 0
    %4721 = vmatpush1.bf16.xpose.msra.mxu0 0
    %4722 = vmatprep.subr.bf16.mxu0 0
    %4723 = vmatpush1.bf16.xpose.msra.mxu0 0
    %4724 = vmatprep.subr.bf16.mxu0 0
    %4725 = vmatpush1.bf16.xpose.msra.mxu0 0
    %4726 = vmatprep.subr.bf16.mxu0 0
    %4727 = vmatpush1.bf16.xpose.msra.mxu0 0
    %4728 = vmatprep.subr.bf16.mxu0 0
    %4729 = vmatpush1.bf16.xpose.msra.mxu0 0
    %4730 = vmatprep.subr.bf16.mxu0 0
    %4731 = vmatpush1.bf16.xpose.msra.mxu0 0
    %4732 = vmatprep.subr.bf16.mxu0 0
    %4733 = vmatpush1.bf16.xpose.msra.mxu0 0
    %4734 = vmatprep.subr.bf16.mxu0 0
    %4735 = vmatpush1.bf16.xpose.msra.mxu0 0
    %4736 = vmatprep.subr.bf16.mxu0 0
    %4737 = vmatpush1.bf16.xpose.msra.mxu0 0
    %4738 = vmatprep.subr.bf16.mxu0 0
    %4739 = vmatpush1.bf16.xpose.msra.mxu0 0
    %4740 = vmatprep.subr.bf16.mxu0 0
    %4741 = vmatpush1.bf16.xpose.msra.mxu0 0
    %4742 = vmatprep.subr.bf16.mxu0 0
    %4743 = vmatpush1.bf16.xpose.msra.mxu0 0
    %4744 = vmatprep.subr.bf16.mxu0 0
    %4745 = vmatpush1.bf16.xpose.msra.mxu0 0
    %4746 = vmatprep.subr.bf16.mxu0 0
    %4747 = vmatpush1.bf16.xpose.msra.mxu0 0
    %4748 = vmatprep.mubr.bf16.mxu0 0
    %4749 = vmatmul.mubr.bf16.gmra.mrb[0].mxu0 %v4711
    %v4750 = vpop.f32.mrb[0].mxu0
    %v4751 = vadd.f32 0.0, %v4750
    %v4752 = vpop.f32.mrb[0].mxu0
    %v4753 = vpop.f32.mrb[0].mxu0
    %v4754 = vpop.f32.mrb[0].mxu0
    %4755 = vdwg.mxu0
    %v4757 = vsel %vm296, %v4540, 0
    %v4760 = vsel %vm296, %v4568, 0
    %4762 = vmatprep.subr.bf16.mxu0 0
    %4763 = vmatpush1.bf16.xpose.msra.mxu0 %v4760
    %4764 = vmatprep.subr.bf16.mxu0 0
    %4765 = vmatpush1.bf16.xpose.msra.mxu0 0
    %4766 = vmatprep.subr.bf16.mxu0 0
    %4767 = vmatpush1.bf16.xpose.msra.mxu0 0
    %4768 = vmatprep.subr.bf16.mxu0 0
    %4769 = vmatpush1.bf16.xpose.msra.mxu0 0
    %4770 = vmatprep.subr.bf16.mxu0 0
    %4771 = vmatpush1.bf16.xpose.msra.mxu0 0
    %4772 = vmatprep.subr.bf16.mxu0 0
    %4773 = vmatpush1.bf16.xpose.msra.mxu0 0
    %4774 = vmatprep.subr.bf16.mxu0 0
    %4775 = vmatpush1.bf16.xpose.msra.mxu0 0
    %4776 = vmatprep.subr.bf16.mxu0 0
    %4777 = vmatpush1.bf16.xpose.msra.mxu0 0
    %4778 = vmatprep.subr.bf16.mxu0 0
    %4779 = vmatpush1.bf16.xpose.msra.mxu0 0
    %4780 = vmatprep.subr.bf16.mxu0 0
    %4781 = vmatpush1.bf16.xpose.msra.mxu0 0
    %4782 = vmatprep.subr.bf16.mxu0 0
    %4783 = vmatpush1.bf16.xpose.msra.mxu0 0
    %4784 = vmatprep.subr.bf16.mxu0 0
    %4785 = vmatpush1.bf16.xpose.msra.mxu0 0
    %4786 = vmatprep.subr.bf16.mxu0 0
    %4787 = vmatpush1.bf16.xpose.msra.mxu0 0
    %4788 = vmatprep.subr.bf16.mxu0 0
    %4789 = vmatpush1.bf16.xpose.msra.mxu0 0
    %4790 = vmatprep.subr.bf16.mxu0 0
    %4791 = vmatpush1.bf16.xpose.msra.mxu0 0
    %4792 = vmatprep.subr.bf16.mxu0 0
    %4793 = vmatpush1.bf16.xpose.msra.mxu0 0
    %4794 = vmatprep.mubr.bf16.mxu0 0
    %4795 = vmatmul.mubr.bf16.gmra.mrb[0].mxu0 %v4757
    %v4796 = vpop.f32.mrb[0].mxu0
    %v4797 = vadd.f32 0.0, %v4796
    %v4798 = vpop.f32.mrb[0].mxu0
    %v4799 = vpop.f32.mrb[0].mxu0
    %v4800 = vpop.f32.mrb[0].mxu0
    %4801 = vdwg.mxu0
    %v4803 = vsel %vm296, %v4541, 0
    %v4806 = vsel %vm296, %v4569, 0
    %4808 = vmatprep.subr.bf16.mxu0 0
    %4809 = vmatpush1.bf16.xpose.msra.mxu0 %v4806
    %4810 = vmatprep.subr.bf16.mxu0 0
    %4811 = vmatpush1.bf16.xpose.msra.mxu0 0
    %4812 = vmatprep.subr.bf16.mxu0 0
    %4813 = vmatpush1.bf16.xpose.msra.mxu0 0
    %4814 = vmatprep.subr.bf16.mxu0 0
    %4815 = vmatpush1.bf16.xpose.msra.mxu0 0
    %4816 = vmatprep.subr.bf16.mxu0 0
    %4817 = vmatpush1.bf16.xpose.msra.mxu0 0
    %4818 = vmatprep.subr.bf16.mxu0 0
    %4819 = vmatpush1.bf16.xpose.msra.mxu0 0
    %4820 = vmatprep.subr.bf16.mxu0 0
    %4821 = vmatpush1.bf16.xpose.msra.mxu0 0
    %4822 = vmatprep.subr.bf16.mxu0 0
    %4823 = vmatpush1.bf16.xpose.msra.mxu0 0
    %4824 = vmatprep.subr.bf16.mxu0 0
    %4825 = vmatpush1.bf16.xpose.msra.mxu0 0
    %4826 = vmatprep.subr.bf16.mxu0 0
    %4827 = vmatpush1.bf16.xpose.msra.mxu0 0
    %4828 = vmatprep.subr.bf16.mxu0 0
    %4829 = vmatpush1.bf16.xpose.msra.mxu0 0
    %4830 = vmatprep.subr.bf16.mxu0 0
    %4831 = vmatpush1.bf16.xpose.msra.mxu0 0
    %4832 = vmatprep.subr.bf16.mxu0 0
    %4833 = vmatpush1.bf16.xpose.msra.mxu0 0
    %4834 = vmatprep.subr.bf16.mxu0 0
    %4835 = vmatpush1.bf16.xpose.msra.mxu0 0
    %4836 = vmatprep.subr.bf16.mxu0 0
    %4837 = vmatpush1.bf16.xpose.msra.mxu0 0
    %4838 = vmatprep.subr.bf16.mxu0 0
    %4839 = vmatpush1.bf16.xpose.msra.mxu0 0
    %4840 = vmatprep.mubr.bf16.mxu0 0
    %4841 = vmatmul.mubr.bf16.gmra.mrb[0].mxu0 %v4803
    %v4842 = vpop.f32.mrb[0].mxu0
    %v4843 = vadd.f32 0.0, %v4842
    %v4844 = vpop.f32.mrb[0].mxu0
    %v4845 = vpop.f32.mrb[0].mxu0
    %v4846 = vpop.f32.mrb[0].mxu0
    %4847 = vdwg.mxu0
    %v4849 = vsel %vm296, %v4542, 0
    %v4852 = vsel %vm296, %v4570, 0
    %4854 = vmatprep.subr.bf16.mxu0 0
    %4855 = vmatpush1.bf16.xpose.msra.mxu0 %v4852
    %4856 = vmatprep.subr.bf16.mxu0 0
    %4857 = vmatpush1.bf16.xpose.msra.mxu0 0
    %4858 = vmatprep.subr.bf16.mxu0 0
    %4859 = vmatpush1.bf16.xpose.msra.mxu0 0
    %4860 = vmatprep.subr.bf16.mxu0 0
    %4861 = vmatpush1.bf16.xpose.msra.mxu0 0
    %4862 = vmatprep.subr.bf16.mxu0 0
    %4863 = vmatpush1.bf16.xpose.msra.mxu0 0
    %4864 = vmatprep.subr.bf16.mxu0 0
    %4865 = vmatpush1.bf16.xpose.msra.mxu0 0
    %4866 = vmatprep.subr.bf16.mxu0 0
    %4867 = vmatpush1.bf16.xpose.msra.mxu0 0
    %4868 = vmatprep.subr.bf16.mxu0 0
    %4869 = vmatpush1.bf16.xpose.msra.mxu0 0
    %4870 = vmatprep.subr.bf16.mxu0 0
    %4871 = vmatpush1.bf16.xpose.msra.mxu0 0
    %4872 = vmatprep.subr.bf16.mxu0 0
    %4873 = vmatpush1.bf16.xpose.msra.mxu0 0
    %4874 = vmatprep.subr.bf16.mxu0 0
    %4875 = vmatpush1.bf16.xpose.msra.mxu0 0
    %4876 = vmatprep.subr.bf16.mxu0 0
    %4877 = vmatpush1.bf16.xpose.msra.mxu0 0
    %4878 = vmatprep.subr.bf16.mxu0 0
    %4879 = vmatpush1.bf16.xpose.msra.mxu0 0
    %4880 = vmatprep.subr.bf16.mxu0 0
    %4881 = vmatpush1.bf16.xpose.msra.mxu0 0
    %4882 = vmatprep.subr.bf16.mxu0 0
    %4883 = vmatpush1.bf16.xpose.msra.mxu0 0
    %4884 = vmatprep.subr.bf16.mxu0 0
    %4885 = vmatpush1.bf16.xpose.msra.mxu0 0
    %4886 = vmatprep.mubr.bf16.mxu0 0
    %4887 = vmatmul.mubr.bf16.gmra.mrb[0].mxu0 %v4849
    %v4888 = vpop.f32.mrb[0].mxu0
    %v4889 = vadd.f32 0.0, %v4888
    %v4890 = vpop.f32.mrb[0].mxu0
    %v4891 = vpop.f32.mrb[0].mxu0
    %v4892 = vpop.f32.mrb[0].mxu0
    %4893 = vdwg.mxu0
    %v4895 = vsel %vm296, %v4543, 0
    %v4898 = vsel %vm296, %v4571, 0
    %4900 = vmatprep.subr.bf16.mxu0 0
    %4901 = vmatpush1.bf16.xpose.msra.mxu0 %v4898
    %4902 = vmatprep.subr.bf16.mxu0 0
    %4903 = vmatpush1.bf16.xpose.msra.mxu0 0
    %4904 = vmatprep.subr.bf16.mxu0 0
    %4905 = vmatpush1.bf16.xpose.msra.mxu0 0
    %4906 = vmatprep.subr.bf16.mxu0 0
    %4907 = vmatpush1.bf16.xpose.msra.mxu0 0
    %4908 = vmatprep.subr.bf16.mxu0 0
    %4909 = vmatpush1.bf16.xpose.msra.mxu0 0
    %4910 = vmatprep.subr.bf16.mxu0 0
    %4911 = vmatpush1.bf16.xpose.msra.mxu0 0
    %4912 = vmatprep.subr.bf16.mxu0 0
    %4913 = vmatpush1.bf16.xpose.msra.mxu0 0
    %4914 = vmatprep.subr.bf16.mxu0 0
    %4915 = vmatpush1.bf16.xpose.msra.mxu0 0
    %4916 = vmatprep.subr.bf16.mxu0 0
    %4917 = vmatpush1.bf16.xpose.msra.mxu0 0
    %4918 = vmatprep.subr.bf16.mxu0 0
    %4919 = vmatpush1.bf16.xpose.msra.mxu0 0
    %4920 = vmatprep.subr.bf16.mxu0 0
    %4921 = vmatpush1.bf16.xpose.msra.mxu0 0
    %4922 = vmatprep.subr.bf16.mxu0 0
    %4923 = vmatpush1.bf16.xpose.msra.mxu0 0
    %4924 = vmatprep.subr.bf16.mxu0 0
    %4925 = vmatpush1.bf16.xpose.msra.mxu0 0
    %4926 = vmatprep.subr.bf16.mxu0 0
    %4927 = vmatpush1.bf16.xpose.msra.mxu0 0
    %4928 = vmatprep.subr.bf16.mxu0 0
    %4929 = vmatpush1.bf16.xpose.msra.mxu0 0
    %4930 = vmatprep.subr.bf16.mxu0 0
    %4931 = vmatpush1.bf16.xpose.msra.mxu0 0
    %4932 = vmatprep.mubr.bf16.mxu0 0
    %4933 = vmatmul.mubr.bf16.gmra.mrb[0].mxu0 %v4895
    %v4934 = vpop.f32.mrb[0].mxu0
    %v4935 = vadd.f32 0.0, %v4934
    %v4936 = vpop.f32.mrb[0].mxu0
    %v4937 = vpop.f32.mrb[0].mxu0
    %v4938 = vpop.f32.mrb[0].mxu0
    %4939 = vdwg.mxu0
    %v4940 = vmul.f32 %v4613, 0.35355338
    %v4941 = vmul.f32 %v4659, 0.35355338
    %v4942 = vmul.f32 %v4705, 0.35355338
    %v4943 = vmul.f32 %v4751, 0.35355338
    %v4944 = vmul.f32 %v4797, 0.35355338
    %v4945 = vmul.f32 %v4843, 0.35355338
    %v4946 = vmul.f32 %v4889, 0.35355338
    %v4947 = vmul.f32 %v4935, 0.35355338
    %v4948 = vadd.f32 %v4940, %v76
    %v4949 = vadd.f32 %v4941, %v77
    %v4950 = vadd.f32 %v4942, %v78
    %v4951 = vadd.f32 %v4943, %v79
    %v4952 = vadd.f32 %v4944, %v80
    %v4953 = vadd.f32 %v4945, %v81
    %v4954 = vadd.f32 %v4946, %v82
    %v4955 = vadd.f32 %v4947, %v83
    %v4956 = vsel %vm296, %v4948, -inf
    %4957 = vmax.xlane.f32.xlu0 %v4956
    %v4958 = vpop.xlane.xlu0 %4957
    %v4959 = vsel %vm296, %v4949, -inf
    %4960 = vmax.xlane.f32.xlu0 %v4959
    %v4961 = vpop.xlane.xlu0 %4960
    %v4962 = vsel %vm296, %v4950, -inf
    %4963 = vmax.xlane.f32.xlu0 %v4962
    %v4964 = vpop.xlane.xlu0 %4963
    %v4965 = vsel %vm296, %v4951, -inf
    %4966 = vmax.xlane.f32.xlu0 %v4965
    %v4967 = vpop.xlane.xlu0 %4966
    %v4968 = vsel %vm296, %v4952, -inf
    %4969 = vmax.xlane.f32.xlu0 %v4968
    %v4970 = vpop.xlane.xlu0 %4969
    %v4971 = vsel %vm296, %v4953, -inf
    %4972 = vmax.xlane.f32.xlu0 %v4971
    %v4973 = vpop.xlane.xlu0 %4972
    %v4974 = vsel %vm296, %v4954, -inf
    %4975 = vmax.xlane.f32.xlu0 %v4974
    %v4976 = vpop.xlane.xlu0 %4975
    %v4977 = vsel %vm296, %v4955, -inf
    %4978 = vmax.xlane.f32.xlu0 %v4977
    %v4979 = vpop.xlane.xlu0 %4978
    %v4980 = vsub.f32 %v4948, %v4958
    %v4981 = vsub.f32 %v4949, %v4961
    %v4982 = vsub.f32 %v4950, %v4964
    %v4983 = vsub.f32 %v4951, %v4967
    %v4984 = vsub.f32 %v4952, %v4970
    %v4985 = vsub.f32 %v4953, %v4973
    %v4986 = vsub.f32 %v4954, %v4976
    %v4987 = vsub.f32 %v4955, %v4979
    %v4988 = vmul.f32 %v4980, 1.442695
    %v4989 = vpow.pop %v4988
    %v4990 = vmul.f32 %v4981, 1.442695
    %v4991 = vpow.pop %v4990
    %v4992 = vmul.f32 %v4982, 1.442695
    %v4993 = vpow.pop %v4992
    %v4994 = vmul.f32 %v4983, 1.442695
    %v4995 = vpow.pop %v4994
    %v4996 = vmul.f32 %v4984, 1.442695
    %v4997 = vpow.pop %v4996
    %v4998 = vmul.f32 %v4985, 1.442695
    %v4999 = vpow.pop %v4998
    %v5000 = vmul.f32 %v4986, 1.442695
    %v5001 = vpow.pop %v5000
    %v5002 = vmul.f32 %v4987, 1.442695
    %v5003 = vpow.pop %v5002
    %v5004 = vsel %vm296, %v4989, 0.0
    %5005 = vadd.xlane.f32.xlu0 %v5004
    %v5006 = vpop.xlane.xlu0 %5005
    %v5007 = vsel %vm296, %v4991, 0.0
    %5008 = vadd.xlane.f32.xlu0 %v5007
    %v5009 = vpop.xlane.xlu0 %5008
    %v5010 = vsel %vm296, %v4993, 0.0
    %5011 = vadd.xlane.f32.xlu0 %v5010
    %v5012 = vpop.xlane.xlu0 %5011
    %v5013 = vsel %vm296, %v4995, 0.0
    %5014 = vadd.xlane.f32.xlu0 %v5013
    %v5015 = vpop.xlane.xlu0 %5014
    %v5016 = vsel %vm296, %v4997, 0.0
    %5017 = vadd.xlane.f32.xlu0 %v5016
    %v5018 = vpop.xlane.xlu0 %5017
    %v5019 = vsel %vm296, %v4999, 0.0
    %5020 = vadd.xlane.f32.xlu0 %v5019
    %v5021 = vpop.xlane.xlu0 %5020
    %v5022 = vsel %vm296, %v5001, 0.0
    %5023 = vadd.xlane.f32.xlu0 %v5022
    %v5024 = vpop.xlane.xlu0 %5023
    %v5025 = vsel %vm296, %v5003, 0.0
    %5026 = vadd.xlane.f32.xlu0 %v5025
    %v5027 = vpop.xlane.xlu0 %5026
    %v5028 = vrcp.pop %v5006
    %v5029 = vrcp.pop %v5009
    %v5030 = vrcp.pop %v5012
    %v5031 = vrcp.pop %v5015
    %v5032 = vrcp.pop %v5018
    %v5033 = vrcp.pop %v5021
    %v5034 = vrcp.pop %v5024
    %v5035 = vrcp.pop %v5027
    %v5036 = vmul.f32 %v4989, %v5028
    %v5037 = vmul.f32 %v4991, %v5029
    %v5038 = vmul.f32 %v4993, %v5030
    %v5039 = vmul.f32 %v4995, %v5031
    %v5040 = vmul.f32 %v4997, %v5032
    %v5041 = vmul.f32 %v4999, %v5033
    %v5042 = vmul.f32 %v5001, %v5034
    %v5043 = vmul.f32 %v5003, %v5035
    %v5044 = vpack.c.bf16 %v5036, %v5036
    %v5045 = vpack.c.bf16 %v5037, %v5037
    %v5046 = vpack.c.bf16 %v5038, %v5038
    %v5047 = vpack.c.bf16 %v5039, %v5039
    %v5048 = vpack.c.bf16 %v5040, %v5040
    %v5049 = vpack.c.bf16 %v5041, %v5041
    %v5050 = vpack.c.bf16 %v5042, %v5042
    %v5051 = vpack.c.bf16 %v5043, %v5043
    %5053 = vrot.lane.b32.xlu0 %v4564, 96
    %v5054 = vpop.permute.xlu0 %5053
    %v5056 = vsel %vm296, %v5044, 0
    %v5059 = vsel %vm803, %v5054, 0
    %5061 = vmatprep.subr.bf16.mxu0 0
    %5062 = vmatpush1.bf16.msra.mxu0 %v5059
    %5063 = vmatprep.subr.bf16.mxu0 0
    %5064 = vmatpush1.bf16.msra.mxu0 0
    %5065 = vmatprep.subr.bf16.mxu0 0
    %5066 = vmatpush1.bf16.msra.mxu0 0
    %5067 = vmatprep.subr.bf16.mxu0 0
    %5068 = vmatpush1.bf16.msra.mxu0 0
    %5069 = vmatprep.subr.bf16.mxu0 0
    %5070 = vmatpush1.bf16.msra.mxu0 0
    %5071 = vmatprep.subr.bf16.mxu0 0
    %5072 = vmatpush1.bf16.msra.mxu0 0
    %5073 = vmatprep.subr.bf16.mxu0 0
    %5074 = vmatpush1.bf16.msra.mxu0 0
    %5075 = vmatprep.subr.bf16.mxu0 0
    %5076 = vmatpush1.bf16.msra.mxu0 0
    %5077 = vmatprep.subr.bf16.mxu0 0
    %5078 = vmatpush1.bf16.msra.mxu0 0
    %5079 = vmatprep.subr.bf16.mxu0 0
    %5080 = vmatpush1.bf16.msra.mxu0 0
    %5081 = vmatprep.subr.bf16.mxu0 0
    %5082 = vmatpush1.bf16.msra.mxu0 0
    %5083 = vmatprep.subr.bf16.mxu0 0
    %5084 = vmatpush1.bf16.msra.mxu0 0
    %5085 = vmatprep.subr.bf16.mxu0 0
    %5086 = vmatpush1.bf16.msra.mxu0 0
    %5087 = vmatprep.subr.bf16.mxu0 0
    %5088 = vmatpush1.bf16.msra.mxu0 0
    %5089 = vmatprep.subr.bf16.mxu0 0
    %5090 = vmatpush1.bf16.msra.mxu0 0
    %5091 = vmatprep.subr.bf16.mxu0 0
    %5092 = vmatpush1.bf16.msra.mxu0 0
    %5093 = vmatprep.mubr.bf16.mxu0 0
    %5094 = vmatmul.mubr.bf16.gmra.mrb[0].mxu0 %v5056
    %v5095 = vpop.f32.mrb[0].mxu0
    %v5096 = vadd.f32 0.0, %v5095
    %v5097 = vpop.f32.mrb[0].mxu0
    %v5098 = vpop.f32.mrb[0].mxu0
    %v5099 = vpop.f32.mrb[0].mxu0
    %5100 = vdwg.mxu0
    %5102 = vrot.lane.b32.xlu0 %v4565, 96
    %v5103 = vpop.permute.xlu0 %5102
    %v5105 = vsel %vm296, %v5045, 0
    %v5108 = vsel %vm803, %v5103, 0
    %5110 = vmatprep.subr.bf16.mxu0 0
    %5111 = vmatpush1.bf16.msra.mxu0 %v5108
    %5112 = vmatprep.subr.bf16.mxu0 0
    %5113 = vmatpush1.bf16.msra.mxu0 0
    %5114 = vmatprep.subr.bf16.mxu0 0
    %5115 = vmatpush1.bf16.msra.mxu0 0
    %5116 = vmatprep.subr.bf16.mxu0 0
    %5117 = vmatpush1.bf16.msra.mxu0 0
    %5118 = vmatprep.subr.bf16.mxu0 0
    %5119 = vmatpush1.bf16.msra.mxu0 0
    %5120 = vmatprep.subr.bf16.mxu0 0
    %5121 = vmatpush1.bf16.msra.mxu0 0
    %5122 = vmatprep.subr.bf16.mxu0 0
    %5123 = vmatpush1.bf16.msra.mxu0 0
    %5124 = vmatprep.subr.bf16.mxu0 0
    %5125 = vmatpush1.bf16.msra.mxu0 0
    %5126 = vmatprep.subr.bf16.mxu0 0
    %5127 = vmatpush1.bf16.msra.mxu0 0
    %5128 = vmatprep.subr.bf16.mxu0 0
    %5129 = vmatpush1.bf16.msra.mxu0 0
    %5130 = vmatprep.subr.bf16.mxu0 0
    %5131 = vmatpush1.bf16.msra.mxu0 0
    %5132 = vmatprep.subr.bf16.mxu0 0
    %5133 = vmatpush1.bf16.msra.mxu0 0
    %5134 = vmatprep.subr.bf16.mxu0 0
    %5135 = vmatpush1.bf16.msra.mxu0 0
    %5136 = vmatprep.subr.bf16.mxu0 0
    %5137 = vmatpush1.bf16.msra.mxu0 0
    %5138 = vmatprep.subr.bf16.mxu0 0
    %5139 = vmatpush1.bf16.msra.mxu0 0
    %5140 = vmatprep.subr.bf16.mxu0 0
    %5141 = vmatpush1.bf16.msra.mxu0 0
    %5142 = vmatprep.mubr.bf16.mxu0 0
    %5143 = vmatmul.mubr.bf16.gmra.mrb[0].mxu0 %v5105
    %v5144 = vpop.f32.mrb[0].mxu0
    %v5145 = vadd.f32 0.0, %v5144
    %v5146 = vpop.f32.mrb[0].mxu0
    %v5147 = vpop.f32.mrb[0].mxu0
    %v5148 = vpop.f32.mrb[0].mxu0
    %5149 = vdwg.mxu0
    %5151 = vrot.lane.b32.xlu0 %v4566, 96
    %v5152 = vpop.permute.xlu0 %5151
    %v5154 = vsel %vm296, %v5046, 0
    %v5157 = vsel %vm803, %v5152, 0
    %5159 = vmatprep.subr.bf16.mxu0 0
    %5160 = vmatpush1.bf16.msra.mxu0 %v5157
    %5161 = vmatprep.subr.bf16.mxu0 0
    %5162 = vmatpush1.bf16.msra.mxu0 0
    %5163 = vmatprep.subr.bf16.mxu0 0
    %5164 = vmatpush1.bf16.msra.mxu0 0
    %5165 = vmatprep.subr.bf16.mxu0 0
    %5166 = vmatpush1.bf16.msra.mxu0 0
    %5167 = vmatprep.subr.bf16.mxu0 0
    %5168 = vmatpush1.bf16.msra.mxu0 0
    %5169 = vmatprep.subr.bf16.mxu0 0
    %5170 = vmatpush1.bf16.msra.mxu0 0
    %5171 = vmatprep.subr.bf16.mxu0 0
    %5172 = vmatpush1.bf16.msra.mxu0 0
    %5173 = vmatprep.subr.bf16.mxu0 0
    %5174 = vmatpush1.bf16.msra.mxu0 0
    %5175 = vmatprep.subr.bf16.mxu0 0
    %5176 = vmatpush1.bf16.msra.mxu0 0
    %5177 = vmatprep.subr.bf16.mxu0 0
    %5178 = vmatpush1.bf16.msra.mxu0 0
    %5179 = vmatprep.subr.bf16.mxu0 0
    %5180 = vmatpush1.bf16.msra.mxu0 0
    %5181 = vmatprep.subr.bf16.mxu0 0
    %5182 = vmatpush1.bf16.msra.mxu0 0
    %5183 = vmatprep.subr.bf16.mxu0 0
    %5184 = vmatpush1.bf16.msra.mxu0 0
    %5185 = vmatprep.subr.bf16.mxu0 0
    %5186 = vmatpush1.bf16.msra.mxu0 0
    %5187 = vmatprep.subr.bf16.mxu0 0
    %5188 = vmatpush1.bf16.msra.mxu0 0
    %5189 = vmatprep.subr.bf16.mxu0 0
    %5190 = vmatpush1.bf16.msra.mxu0 0
    %5191 = vmatprep.mubr.bf16.mxu0 0
    %5192 = vmatmul.mubr.bf16.gmra.mrb[0].mxu0 %v5154
    %v5193 = vpop.f32.mrb[0].mxu0
    %v5194 = vadd.f32 0.0, %v5193
    %v5195 = vpop.f32.mrb[0].mxu0
    %v5196 = vpop.f32.mrb[0].mxu0
    %v5197 = vpop.f32.mrb[0].mxu0
    %5198 = vdwg.mxu0
    %5200 = vrot.lane.b32.xlu0 %v4567, 96
    %v5201 = vpop.permute.xlu0 %5200
    %v5203 = vsel %vm296, %v5047, 0
    %v5206 = vsel %vm803, %v5201, 0
    %5208 = vmatprep.subr.bf16.mxu0 0
    %5209 = vmatpush1.bf16.msra.mxu0 %v5206
    %5210 = vmatprep.subr.bf16.mxu0 0
    %5211 = vmatpush1.bf16.msra.mxu0 0
    %5212 = vmatprep.subr.bf16.mxu0 0
    %5213 = vmatpush1.bf16.msra.mxu0 0
    %5214 = vmatprep.subr.bf16.mxu0 0
    %5215 = vmatpush1.bf16.msra.mxu0 0
    %5216 = vmatprep.subr.bf16.mxu0 0
    %5217 = vmatpush1.bf16.msra.mxu0 0
    %5218 = vmatprep.subr.bf16.mxu0 0
    %5219 = vmatpush1.bf16.msra.mxu0 0
    %5220 = vmatprep.subr.bf16.mxu0 0
    %5221 = vmatpush1.bf16.msra.mxu0 0
    %5222 = vmatprep.subr.bf16.mxu0 0
    %5223 = vmatpush1.bf16.msra.mxu0 0
    %5224 = vmatprep.subr.bf16.mxu0 0
    %5225 = vmatpush1.bf16.msra.mxu0 0
    %5226 = vmatprep.subr.bf16.mxu0 0
    %5227 = vmatpush1.bf16.msra.mxu0 0
    %5228 = vmatprep.subr.bf16.mxu0 0
    %5229 = vmatpush1.bf16.msra.mxu0 0
    %5230 = vmatprep.subr.bf16.mxu0 0
    %5231 = vmatpush1.bf16.msra.mxu0 0
    %5232 = vmatprep.subr.bf16.mxu0 0
    %5233 = vmatpush1.bf16.msra.mxu0 0
    %5234 = vmatprep.subr.bf16.mxu0 0
    %5235 = vmatpush1.bf16.msra.mxu0 0
    %5236 = vmatprep.subr.bf16.mxu0 0
    %5237 = vmatpush1.bf16.msra.mxu0 0
    %5238 = vmatprep.subr.bf16.mxu0 0
    %5239 = vmatpush1.bf16.msra.mxu0 0
    %5240 = vmatprep.mubr.bf16.mxu0 0
    %5241 = vmatmul.mubr.bf16.gmra.mrb[0].mxu0 %v5203
    %v5242 = vpop.f32.mrb[0].mxu0
    %v5243 = vadd.f32 0.0, %v5242
    %v5244 = vpop.f32.mrb[0].mxu0
    %v5245 = vpop.f32.mrb[0].mxu0
    %v5246 = vpop.f32.mrb[0].mxu0
    %5247 = vdwg.mxu0
    %5249 = vrot.lane.b32.xlu0 %v4568, 96
    %v5250 = vpop.permute.xlu0 %5249
    %v5252 = vsel %vm296, %v5048, 0
    %v5255 = vsel %vm803, %v5250, 0
    %5257 = vmatprep.subr.bf16.mxu0 0
    %5258 = vmatpush1.bf16.msra.mxu0 %v5255
    %5259 = vmatprep.subr.bf16.mxu0 0
    %5260 = vmatpush1.bf16.msra.mxu0 0
    %5261 = vmatprep.subr.bf16.mxu0 0
    %5262 = vmatpush1.bf16.msra.mxu0 0
    %5263 = vmatprep.subr.bf16.mxu0 0
    %5264 = vmatpush1.bf16.msra.mxu0 0
    %5265 = vmatprep.subr.bf16.mxu0 0
    %5266 = vmatpush1.bf16.msra.mxu0 0
    %5267 = vmatprep.subr.bf16.mxu0 0
    %5268 = vmatpush1.bf16.msra.mxu0 0
    %5269 = vmatprep.subr.bf16.mxu0 0
    %5270 = vmatpush1.bf16.msra.mxu0 0
    %5271 = vmatprep.subr.bf16.mxu0 0
    %5272 = vmatpush1.bf16.msra.mxu0 0
    %5273 = vmatprep.subr.bf16.mxu0 0
    %5274 = vmatpush1.bf16.msra.mxu0 0
    %5275 = vmatprep.subr.bf16.mxu0 0
    %5276 = vmatpush1.bf16.msra.mxu0 0
    %5277 = vmatprep.subr.bf16.mxu0 0
    %5278 = vmatpush1.bf16.msra.mxu0 0
    %5279 = vmatprep.subr.bf16.mxu0 0
    %5280 = vmatpush1.bf16.msra.mxu0 0
    %5281 = vmatprep.subr.bf16.mxu0 0
    %5282 = vmatpush1.bf16.msra.mxu0 0
    %5283 = vmatprep.subr.bf16.mxu0 0
    %5284 = vmatpush1.bf16.msra.mxu0 0
    %5285 = vmatprep.subr.bf16.mxu0 0
    %5286 = vmatpush1.bf16.msra.mxu0 0
    %5287 = vmatprep.subr.bf16.mxu0 0
    %5288 = vmatpush1.bf16.msra.mxu0 0
    %5289 = vmatprep.mubr.bf16.mxu0 0
    %5290 = vmatmul.mubr.bf16.gmra.mrb[0].mxu0 %v5252
    %v5291 = vpop.f32.mrb[0].mxu0
    %v5292 = vadd.f32 0.0, %v5291
    %v5293 = vpop.f32.mrb[0].mxu0
    %v5294 = vpop.f32.mrb[0].mxu0
    %v5295 = vpop.f32.mrb[0].mxu0
    %5296 = vdwg.mxu0
    %5298 = vrot.lane.b32.xlu0 %v4569, 96
    %v5299 = vpop.permute.xlu0 %5298
    %v5301 = vsel %vm296, %v5049, 0
    %v5304 = vsel %vm803, %v5299, 0
    %5306 = vmatprep.subr.bf16.mxu0 0
    %5307 = vmatpush1.bf16.msra.mxu0 %v5304
    %5308 = vmatprep.subr.bf16.mxu0 0
    %5309 = vmatpush1.bf16.msra.mxu0 0
    %5310 = vmatprep.subr.bf16.mxu0 0
    %5311 = vmatpush1.bf16.msra.mxu0 0
    %5312 = vmatprep.subr.bf16.mxu0 0
    %5313 = vmatpush1.bf16.msra.mxu0 0
    %5314 = vmatprep.subr.bf16.mxu0 0
    %5315 = vmatpush1.bf16.msra.mxu0 0
    %5316 = vmatprep.subr.bf16.mxu0 0
    %5317 = vmatpush1.bf16.msra.mxu0 0
    %5318 = vmatprep.subr.bf16.mxu0 0
    %5319 = vmatpush1.bf16.msra.mxu0 0
    %5320 = vmatprep.subr.bf16.mxu0 0
    %5321 = vmatpush1.bf16.msra.mxu0 0
    %5322 = vmatprep.subr.bf16.mxu0 0
    %5323 = vmatpush1.bf16.msra.mxu0 0
    %5324 = vmatprep.subr.bf16.mxu0 0
    %5325 = vmatpush1.bf16.msra.mxu0 0
    %5326 = vmatprep.subr.bf16.mxu0 0
    %5327 = vmatpush1.bf16.msra.mxu0 0
    %5328 = vmatprep.subr.bf16.mxu0 0
    %5329 = vmatpush1.bf16.msra.mxu0 0
    %5330 = vmatprep.subr.bf16.mxu0 0
    %5331 = vmatpush1.bf16.msra.mxu0 0
    %5332 = vmatprep.subr.bf16.mxu0 0
    %5333 = vmatpush1.bf16.msra.mxu0 0
    %5334 = vmatprep.subr.bf16.mxu0 0
    %5335 = vmatpush1.bf16.msra.mxu0 0
    %5336 = vmatprep.subr.bf16.mxu0 0
    %5337 = vmatpush1.bf16.msra.mxu0 0
    %5338 = vmatprep.mubr.bf16.mxu0 0
    %5339 = vmatmul.mubr.bf16.gmra.mrb[0].mxu0 %v5301
    %v5340 = vpop.f32.mrb[0].mxu0
    %v5341 = vadd.f32 0.0, %v5340
    %v5342 = vpop.f32.mrb[0].mxu0
    %v5343 = vpop.f32.mrb[0].mxu0
    %v5344 = vpop.f32.mrb[0].mxu0
    %5345 = vdwg.mxu0
    %5347 = vrot.lane.b32.xlu0 %v4570, 96
    %v5348 = vpop.permute.xlu0 %5347
    %v5350 = vsel %vm296, %v5050, 0
    %v5353 = vsel %vm803, %v5348, 0
    %5355 = vmatprep.subr.bf16.mxu0 0
    %5356 = vmatpush1.bf16.msra.mxu0 %v5353
    %5357 = vmatprep.subr.bf16.mxu0 0
    %5358 = vmatpush1.bf16.msra.mxu0 0
    %5359 = vmatprep.subr.bf16.mxu0 0
    %5360 = vmatpush1.bf16.msra.mxu0 0
    %5361 = vmatprep.subr.bf16.mxu0 0
    %5362 = vmatpush1.bf16.msra.mxu0 0
    %5363 = vmatprep.subr.bf16.mxu0 0
    %5364 = vmatpush1.bf16.msra.mxu0 0
    %5365 = vmatprep.subr.bf16.mxu0 0
    %5366 = vmatpush1.bf16.msra.mxu0 0
    %5367 = vmatprep.subr.bf16.mxu0 0
    %5368 = vmatpush1.bf16.msra.mxu0 0
    %5369 = vmatprep.subr.bf16.mxu0 0
    %5370 = vmatpush1.bf16.msra.mxu0 0
    %5371 = vmatprep.subr.bf16.mxu0 0
    %5372 = vmatpush1.bf16.msra.mxu0 0
    %5373 = vmatprep.subr.bf16.mxu0 0
    %5374 = vmatpush1.bf16.msra.mxu0 0
    %5375 = vmatprep.subr.bf16.mxu0 0
    %5376 = vmatpush1.bf16.msra.mxu0 0
    %5377 = vmatprep.subr.bf16.mxu0 0
    %5378 = vmatpush1.bf16.msra.mxu0 0
    %5379 = vmatprep.subr.bf16.mxu0 0
    %5380 = vmatpush1.bf16.msra.mxu0 0
    %5381 = vmatprep.subr.bf16.mxu0 0
    %5382 = vmatpush1.bf16.msra.mxu0 0
    %5383 = vmatprep.subr.bf16.mxu0 0
    %5384 = vmatpush1.bf16.msra.mxu0 0
    %5385 = vmatprep.subr.bf16.mxu0 0
    %5386 = vmatpush1.bf16.msra.mxu0 0
    %5387 = vmatprep.mubr.bf16.mxu0 0
    %5388 = vmatmul.mubr.bf16.gmra.mrb[0].mxu0 %v5350
    %v5389 = vpop.f32.mrb[0].mxu0
    %v5390 = vadd.f32 0.0, %v5389
    %v5391 = vpop.f32.mrb[0].mxu0
    %v5392 = vpop.f32.mrb[0].mxu0
    %v5393 = vpop.f32.mrb[0].mxu0
    %5394 = vdwg.mxu0
    %5396 = vrot.lane.b32.xlu0 %v4571, 96
    %v5397 = vpop.permute.xlu0 %5396
    %v5399 = vsel %vm296, %v5051, 0
    %v5402 = vsel %vm803, %v5397, 0
    %5404 = vmatprep.subr.bf16.mxu0 0
    %5405 = vmatpush1.bf16.msra.mxu0 %v5402
    %5406 = vmatprep.subr.bf16.mxu0 0
    %5407 = vmatpush1.bf16.msra.mxu0 0
    %5408 = vmatprep.subr.bf16.mxu0 0
    %5409 = vmatpush1.bf16.msra.mxu0 0
    %5410 = vmatprep.subr.bf16.mxu0 0
    %5411 = vmatpush1.bf16.msra.mxu0 0
    %5412 = vmatprep.subr.bf16.mxu0 0
    %5413 = vmatpush1.bf16.msra.mxu0 0
    %5414 = vmatprep.subr.bf16.mxu0 0
    %5415 = vmatpush1.bf16.msra.mxu0 0
    %5416 = vmatprep.subr.bf16.mxu0 0
    %5417 = vmatpush1.bf16.msra.mxu0 0
    %5418 = vmatprep.subr.bf16.mxu0 0
    %5419 = vmatpush1.bf16.msra.mxu0 0
    %5420 = vmatprep.subr.bf16.mxu0 0
    %5421 = vmatpush1.bf16.msra.mxu0 0
    %5422 = vmatprep.subr.bf16.mxu0 0
    %5423 = vmatpush1.bf16.msra.mxu0 0
    %5424 = vmatprep.subr.bf16.mxu0 0
    %5425 = vmatpush1.bf16.msra.mxu0 0
    %5426 = vmatprep.subr.bf16.mxu0 0
    %5427 = vmatpush1.bf16.msra.mxu0 0
    %5428 = vmatprep.subr.bf16.mxu0 0
    %5429 = vmatpush1.bf16.msra.mxu0 0
    %5430 = vmatprep.subr.bf16.mxu0 0
    %5431 = vmatpush1.bf16.msra.mxu0 0
    %5432 = vmatprep.subr.bf16.mxu0 0
    %5433 = vmatpush1.bf16.msra.mxu0 0
    %5434 = vmatprep.subr.bf16.mxu0 0
    %5435 = vmatpush1.bf16.msra.mxu0 0
    %5436 = vmatprep.mubr.bf16.mxu0 0
    %5437 = vmatmul.mubr.bf16.gmra.mrb[0].mxu0 %v5399
    %v5438 = vpop.f32.mrb[0].mxu0
    %v5439 = vadd.f32 0.0, %v5438
    %v5440 = vpop.f32.mrb[0].mxu0
    %v5441 = vpop.f32.mrb[0].mxu0
    %v5442 = vpop.f32.mrb[0].mxu0
    %5443 = vdwg.mxu0
    %v5444 = vpack.c.bf16 %v5145, %v5096
    %v5445 = vpack.c.bf16 %v5243, %v5194
    %v5447 = vsel %vm296, %v5445, 0
    %v5450 = vsel %vm803, %v4512, 0
    %5452 = vmatprep.subr.bf16.mxu0 0
    %5453 = vmatpush1.bf16.msra.mxu0 %v5450
    %5454 = vmatprep.subr.bf16.mxu0 0
    %5455 = vmatpush1.bf16.msra.mxu0 0
    %5456 = vmatprep.subr.bf16.mxu0 0
    %5457 = vmatpush1.bf16.msra.mxu0 0
    %5458 = vmatprep.subr.bf16.mxu0 0
    %5459 = vmatpush1.bf16.msra.mxu0 0
    %5460 = vmatprep.subr.bf16.mxu0 0
    %5461 = vmatpush1.bf16.msra.mxu0 0
    %5462 = vmatprep.subr.bf16.mxu0 0
    %5463 = vmatpush1.bf16.msra.mxu0 0
    %5464 = vmatprep.subr.bf16.mxu0 0
    %5465 = vmatpush1.bf16.msra.mxu0 0
    %5466 = vmatprep.subr.bf16.mxu0 0
    %5467 = vmatpush1.bf16.msra.mxu0 0
    %5468 = vmatprep.subr.bf16.mxu0 0
    %5469 = vmatpush1.bf16.msra.mxu0 0
    %5470 = vmatprep.subr.bf16.mxu0 0
    %5471 = vmatpush1.bf16.msra.mxu0 0
    %5472 = vmatprep.subr.bf16.mxu0 0
    %5473 = vmatpush1.bf16.msra.mxu0 0
    %5474 = vmatprep.subr.bf16.mxu0 0
    %5475 = vmatpush1.bf16.msra.mxu0 0
    %5476 = vmatprep.subr.bf16.mxu0 0
    %5477 = vmatpush1.bf16.msra.mxu0 0
    %5478 = vmatprep.subr.bf16.mxu0 0
    %5479 = vmatpush1.bf16.msra.mxu0 0
    %5480 = vmatprep.subr.bf16.mxu0 0
    %5481 = vmatpush1.bf16.msra.mxu0 0
    %5482 = vmatprep.subr.bf16.mxu0 0
    %5483 = vmatpush1.bf16.msra.mxu0 0
    %5484 = vmatprep.mubr.bf16.mxu0 0
    %5485 = vmatmul.mubr.bf16.gmra.mrb[0].mxu0 %v5447
    %v5486 = vpop.f32.mrb[0].mxu0
    %v5487 = vadd.f32 0.0, %v5486
    %v5488 = vpop.f32.mrb[0].mxu0
    %v5489 = vpop.f32.mrb[0].mxu0
    %v5490 = vadd.f32 0.0, %v5489
    %v5491 = vpop.f32.mrb[0].mxu0
    %5492 = vdwg.mxu0
    %v5494 = vsel %vm296, %v5444, 0
    %v5497 = vsel %vm803, %v4511, 0
    %5499 = vmatprep.subr.bf16.mxu0 0
    %5500 = vmatpush1.bf16.msra.mxu0 %v5497
    %5501 = vmatprep.subr.bf16.mxu0 0
    %5502 = vmatpush1.bf16.msra.mxu0 0
    %5503 = vmatprep.subr.bf16.mxu0 0
    %5504 = vmatpush1.bf16.msra.mxu0 0
    %5505 = vmatprep.subr.bf16.mxu0 0
    %5506 = vmatpush1.bf16.msra.mxu0 0
    %5507 = vmatprep.subr.bf16.mxu0 0
    %5508 = vmatpush1.bf16.msra.mxu0 0
    %5509 = vmatprep.subr.bf16.mxu0 0
    %5510 = vmatpush1.bf16.msra.mxu0 0
    %5511 = vmatprep.subr.bf16.mxu0 0
    %5512 = vmatpush1.bf16.msra.mxu0 0
    %5513 = vmatprep.subr.bf16.mxu0 0
    %5514 = vmatpush1.bf16.msra.mxu0 0
    %5515 = vmatprep.subr.bf16.mxu0 0
    %5516 = vmatpush1.bf16.msra.mxu0 0
    %5517 = vmatprep.subr.bf16.mxu0 0
    %5518 = vmatpush1.bf16.msra.mxu0 0
    %5519 = vmatprep.subr.bf16.mxu0 0
    %5520 = vmatpush1.bf16.msra.mxu0 0
    %5521 = vmatprep.subr.bf16.mxu0 0
    %5522 = vmatpush1.bf16.msra.mxu0 0
    %5523 = vmatprep.subr.bf16.mxu0 0
    %5524 = vmatpush1.bf16.msra.mxu0 0
    %5525 = vmatprep.subr.bf16.mxu0 0
    %5526 = vmatpush1.bf16.msra.mxu0 0
    %5527 = vmatprep.subr.bf16.mxu0 0
    %5528 = vmatpush1.bf16.msra.mxu0 0
    %5529 = vmatprep.subr.bf16.mxu0 0
    %5530 = vmatpush1.bf16.msra.mxu0 0
    %5531 = vmatprep.mubr.bf16.mxu0 0
    %5532 = vmatmul.mubr.bf16.gmra.mrb[0].mxu0 %v5494
    %v5533 = vpop.f32.mrb[0].mxu0
    %v5534 = vadd.f32 %v5487, %v5533
    %v5535 = vpop.f32.mrb[0].mxu0
    %v5536 = vpop.f32.mrb[0].mxu0
    %v5537 = vadd.f32 %v5490, %v5536
    %v5538 = vpop.f32.mrb[0].mxu0
    %5539 = vdwg.mxu0
    %v5540 = vpack.c.bf16 %v5341, %v5292
    %v5542 = vsel %vm296, %v5540, 0
    %v5545 = vsel %vm803, %v4513, 0
    %5547 = vmatprep.subr.bf16.mxu0 0
    %5548 = vmatpush1.bf16.msra.mxu0 %v5545
    %5549 = vmatprep.subr.bf16.mxu0 0
    %5550 = vmatpush1.bf16.msra.mxu0 0
    %5551 = vmatprep.subr.bf16.mxu0 0
    %5552 = vmatpush1.bf16.msra.mxu0 0
    %5553 = vmatprep.subr.bf16.mxu0 0
    %5554 = vmatpush1.bf16.msra.mxu0 0
    %5555 = vmatprep.subr.bf16.mxu0 0
    %5556 = vmatpush1.bf16.msra.mxu0 0
    %5557 = vmatprep.subr.bf16.mxu0 0
    %5558 = vmatpush1.bf16.msra.mxu0 0
    %5559 = vmatprep.subr.bf16.mxu0 0
    %5560 = vmatpush1.bf16.msra.mxu0 0
    %5561 = vmatprep.subr.bf16.mxu0 0
    %5562 = vmatpush1.bf16.msra.mxu0 0
    %5563 = vmatprep.subr.bf16.mxu0 0
    %5564 = vmatpush1.bf16.msra.mxu0 0
    %5565 = vmatprep.subr.bf16.mxu0 0
    %5566 = vmatpush1.bf16.msra.mxu0 0
    %5567 = vmatprep.subr.bf16.mxu0 0
    %5568 = vmatpush1.bf16.msra.mxu0 0
    %5569 = vmatprep.subr.bf16.mxu0 0
    %5570 = vmatpush1.bf16.msra.mxu0 0
    %5571 = vmatprep.subr.bf16.mxu0 0
    %5572 = vmatpush1.bf16.msra.mxu0 0
    %5573 = vmatprep.subr.bf16.mxu0 0
    %5574 = vmatpush1.bf16.msra.mxu0 0
    %5575 = vmatprep.subr.bf16.mxu0 0
    %5576 = vmatpush1.bf16.msra.mxu0 0
    %5577 = vmatprep.subr.bf16.mxu0 0
    %5578 = vmatpush1.bf16.msra.mxu0 0
    %5579 = vmatprep.mubr.bf16.mxu0 0
    %5580 = vmatmul.mubr.bf16.gmra.mrb[0].mxu0 %v5542
    %v5581 = vpop.f32.mrb[0].mxu0
    %v5582 = vadd.f32 0.0, %v5581
    %v5583 = vpop.f32.mrb[0].mxu0
    %v5584 = vpop.f32.mrb[0].mxu0
    %v5585 = vadd.f32 0.0, %v5584
    %v5586 = vpop.f32.mrb[0].mxu0
    %5587 = vdwg.mxu0
    %v5588 = vadd.f32 %v5534, %v5582
    %v5589 = vadd.f32 %v5537, %v5585
    %v5590 = vpack.c.bf16 %v5439, %v5390
    %v5592 = vsel %vm296, %v5590, 0
    %v5595 = vsel %vm803, %v4514, 0
    %5597 = vmatprep.subr.bf16.mxu0 0
    %5598 = vmatpush1.bf16.msra.mxu0 %v5595
    %5599 = vmatprep.subr.bf16.mxu0 0
    %5600 = vmatpush1.bf16.msra.mxu0 0
    %5601 = vmatprep.subr.bf16.mxu0 0
    %5602 = vmatpush1.bf16.msra.mxu0 0
    %5603 = vmatprep.subr.bf16.mxu0 0
    %5604 = vmatpush1.bf16.msra.mxu0 0
    %5605 = vmatprep.subr.bf16.mxu0 0
    %5606 = vmatpush1.bf16.msra.mxu0 0
    %5607 = vmatprep.subr.bf16.mxu0 0
    %5608 = vmatpush1.bf16.msra.mxu0 0
    %5609 = vmatprep.subr.bf16.mxu0 0
    %5610 = vmatpush1.bf16.msra.mxu0 0
    %5611 = vmatprep.subr.bf16.mxu0 0
    %5612 = vmatpush1.bf16.msra.mxu0 0
    %5613 = vmatprep.subr.bf16.mxu0 0
    %5614 = vmatpush1.bf16.msra.mxu0 0
    %5615 = vmatprep.subr.bf16.mxu0 0
    %5616 = vmatpush1.bf16.msra.mxu0 0
    %5617 = vmatprep.subr.bf16.mxu0 0
    %5618 = vmatpush1.bf16.msra.mxu0 0
    %5619 = vmatprep.subr.bf16.mxu0 0
    %5620 = vmatpush1.bf16.msra.mxu0 0
    %5621 = vmatprep.subr.bf16.mxu0 0
    %5622 = vmatpush1.bf16.msra.mxu0 0
    %5623 = vmatprep.subr.bf16.mxu0 0
    %5624 = vmatpush1.bf16.msra.mxu0 0
    %5625 = vmatprep.subr.bf16.mxu0 0
    %5626 = vmatpush1.bf16.msra.mxu0 0
    %5627 = vmatprep.subr.bf16.mxu0 0
    %5628 = vmatpush1.bf16.msra.mxu0 0
    %5629 = vmatprep.mubr.bf16.mxu0 0
    %5630 = vmatmul.mubr.bf16.gmra.mrb[0].mxu0 %v5592
    %v5631 = vpop.f32.mrb[0].mxu0
    %v5632 = vadd.f32 0.0, %v5631
    %v5633 = vpop.f32.mrb[0].mxu0
    %v5634 = vpop.f32.mrb[0].mxu0
    %v5635 = vadd.f32 0.0, %v5634
    %v5636 = vpop.f32.mrb[0].mxu0
    %5637 = vdwg.mxu0
    %v5638 = vadd.f32 %v5588, %v5632
    %v5639 = vadd.f32 %v5589, %v5635
    %v5640 = vlaneseq
    %v5641 = vshrl.u32 %v5640, 7
    %v5642 = vsub.s32 0, %v5641
    %v5643 = vrot.slane %v4515, %v5642
    %v5644 = vadd.f32 %v5638, %v5643
    %v5645 = vadd.f32 %v5639, %v5643
    %v5646 = vadd.f32 %v4338, %v5644
    %v5647 = vadd.f32 %v4339, %v5645
    %v5648 = vld [vmem:[#allocation5 + $0xf8] sm:$0x1]
    %v5649 = vld [vmem:[#allocation5 + $0x100] sm:$0x1]
    %v5650 = vsel %vm154, %v5646, 0.0
    %5651 = vadd.xlane.f32.xlu0 %v5650
    %v5652 = vpop.xlane.xlu0 %5651
    %v5653 = vsel %vm154, %v5647, 0.0
    %5654 = vadd.xlane.f32.xlu0 %v5653
    %v5655 = vpop.xlane.xlu0 %5654
    %v5656 = vmul.f32 %v5652, %v161
    %v5657 = vmul.f32 %v5655, %v161
    %v5658 = vsub.f32 %v5646, %v5656
    %v5659 = vsub.f32 %v5647, %v5657
    %v5660 = vmul.f32 %v5658, %v5658
    %v5661 = vmul.f32 %v5659, %v5659
    %v5662 = vsel %vm154, %v5660, 0.0
    %5663 = vadd.xlane.f32.xlu0 %v5662
    %v5664 = vpop.xlane.xlu0 %5663
    %v5665 = vsel %vm154, %v5661, 0.0
    %5666 = vadd.xlane.f32.xlu0 %v5665
    %v5667 = vpop.xlane.xlu0 %5666
    %v5668 = vmul.f32 %v5664, %v161
    %v5669 = vmul.f32 %v5667, %v161
    %v5670 = vadd.f32 %v5668, 1e-06
    %v5671 = vadd.f32 %v5669, 1e-06
    %v5672 = vrsqrt.pop %v5670
    %v5673 = vrsqrt.pop %v5671
    %v5674 = vmul.f32 %v5658, %v5672
    %v5675 = vmul.f32 %v5659, %v5673
    %v5676 = vlaneseq
    %v5677 = vshrl.u32 %v5676, 7
    %v5678 = vsub.s32 0, %v5677
    %v5679 = vrot.slane %v5648, %v5678
    %v5680 = vmul.f32 %v5674, %v5679
    %v5681 = vmul.f32 %v5675, %v5679
    %v5682 = vlaneseq
    %v5683 = vshrl.u32 %v5682, 7
    %v5684 = vsub.s32 0, %v5683
    %v5685 = vrot.slane %v5649, %v5684
    %v5686 = vadd.f32 %v5680, %v5685
    %v5687 = vadd.f32 %v5681, %v5685
    %v5688 = vpack.c.bf16 %v5687, %v5686
    %v5689 = vld [vmem:[#allocation2 + $0x100] sm:$0xf]
    %v5690 = vld [vmem:[#allocation2 + $0x104] sm:$0xf]
    %v5691 = vld [vmem:[#allocation2 + $0x108] sm:$0xf]
    %v5692 = vld [vmem:[#allocation2 + $0x10c] sm:$0xf]
    %v5693 = vld [vmem:[#allocation5 + $0x108] sm:$0x1]
    %v5694 = vlaneseq
    %v5695 = vshrl.u32 %v5694, 7
    %v5696 = vsub.s32 0, %v5695
    %v5697 = vrot.slane %v5693, %v5696
    %v5702 = vunpack.c.l.b16 %v5689
    %v5703 = vunpack.c.l.b16 %v5690
    %v5704 = vunpack.c.l.b16 %v5691
    %v5705 = vunpack.c.l.b16 %v5692
    %v5706 = vpack.c.b16 %v5703, %v5702
    %v5707 = vpack.c.b16 %v5705, %v5704
    %v5711 = vsel %vm154, %v5688, 0
    %5713 = vmatprep.subr.bf16.mxu0 0
    %5714 = vmatpush1.bf16.msra.mxu0 %v5706
    %5715 = vmatprep.subr.bf16.mxu0 0
    %5716 = vmatpush1.bf16.msra.mxu0 %v5707
    %5717 = vmatprep.subr.bf16.mxu0 0
    %5718 = vmatpush1.bf16.msra.mxu0 0
    %5719 = vmatprep.subr.bf16.mxu0 0
    %5720 = vmatpush1.bf16.msra.mxu0 0
    %5721 = vmatprep.subr.bf16.mxu0 0
    %5722 = vmatpush1.bf16.msra.mxu0 0
    %5723 = vmatprep.subr.bf16.mxu0 0
    %5724 = vmatpush1.bf16.msra.mxu0 0
    %5725 = vmatprep.subr.bf16.mxu0 0
    %5726 = vmatpush1.bf16.msra.mxu0 0
    %5727 = vmatprep.subr.bf16.mxu0 0
    %5728 = vmatpush1.bf16.msra.mxu0 0
    %5729 = vmatprep.subr.bf16.mxu0 0
    %5730 = vmatpush1.bf16.msra.mxu0 0
    %5731 = vmatprep.subr.bf16.mxu0 0
    %5732 = vmatpush1.bf16.msra.mxu0 0
    %5733 = vmatprep.subr.bf16.mxu0 0
    %5734 = vmatpush1.bf16.msra.mxu0 0
    %5735 = vmatprep.subr.bf16.mxu0 0
    %5736 = vmatpush1.bf16.msra.mxu0 0
    %5737 = vmatprep.subr.bf16.mxu0 0
    %5738 = vmatpush1.bf16.msra.mxu0 0
    %5739 = vmatprep.subr.bf16.mxu0 0
    %5740 = vmatpush1.bf16.msra.mxu0 0
    %5741 = vmatprep.subr.bf16.mxu0 0
    %5742 = vmatpush1.bf16.msra.mxu0 0
    %5743 = vmatprep.subr.bf16.mxu0 0
    %5744 = vmatpush1.bf16.msra.mxu0 0
    %5745 = vmatprep.mubr.bf16.mxu0 0
    %5746 = vmatmul.mubr.bf16.gmra.mrb[0].mxu0 %v5711
    %v5747 = vpop.f32.mrb[0].mxu0
    %v5748 = vadd.f32 %v5697, %v5747
    %v5749 = vpop.f32.mrb[0].mxu0
    %v5750 = vpop.f32.mrb[0].mxu0
    %v5751 = vadd.f32 %v5697, %v5750
    %v5752 = vpop.f32.mrb[0].mxu0
    %5753 = vdwg.mxu0
    %v5754 = vmax.f32 %v5748, 0.0
    %v5755 = vmax.f32 %v5751, 0.0
    %v5756 = vpack.c.bf16 %v5755, %v5754
    %v5757 = vld [vmem:[#allocation2 + $0x110] sm:$0xf]
    %v5758 = vld [vmem:[#allocation2 + $0x114] sm:$0xf]
    %v5759 = vld [vmem:[#allocation2 + $0x118] sm:$0xf]
    %v5760 = vld [vmem:[#allocation2 + $0x11c] sm:$0xf]
    %v5761 = vld [vmem:[#allocation2 + $0x120] sm:$0xf]
    %v5762 = vld [vmem:[#allocation2 + $0x124] sm:$0xf]
    %v5763 = vld [vmem:[#allocation2 + $0x128] sm:$0xf]
    %v5764 = vld [vmem:[#allocation2 + $0x12c] sm:$0xf]
    %v5765 = vld [vmem:[#allocation5 + $0x110] sm:$0x1]
    %v5766 = vlaneseq
    %v5767 = vshrl.u32 %v5766, 7
    %v5768 = vsub.s32 0, %v5767
    %v5769 = vrot.slane %v5765, %v5768
    %v5778 = vunpack.c.l.b16 %v5757
    %v5779 = vunpack.c.l.b16 %v5758
    %v5780 = vunpack.c.l.b16 %v5759
    %v5781 = vunpack.c.l.b16 %v5760
    %v5782 = vunpack.c.l.b16 %v5761
    %v5783 = vunpack.c.l.b16 %v5762
    %v5784 = vunpack.c.l.b16 %v5763
    %v5785 = vunpack.c.l.b16 %v5764
    %v5786 = vpack.c.b16 %v5779, %v5778
    %v5787 = vpack.c.b16 %v5781, %v5780
    %v5788 = vpack.c.b16 %v5783, %v5782
    %v5789 = vpack.c.b16 %v5785, %v5784
    %v5795 = vsel %vm1533, %v5756, 0
    %5797 = vmatprep.subr.bf16.mxu0 0
    %5798 = vmatpush1.bf16.msra.mxu0 %v5786
    %5799 = vmatprep.subr.bf16.mxu0 0
    %5800 = vmatpush1.bf16.msra.mxu0 %v5787
    %5801 = vmatprep.subr.bf16.mxu0 0
    %5802 = vmatpush1.bf16.msra.mxu0 %v5788
    %5803 = vmatprep.subr.bf16.mxu0 0
    %5804 = vmatpush1.bf16.msra.mxu0 %v5789
    %5805 = vmatprep.subr.bf16.mxu0 0
    %5806 = vmatpush1.bf16.msra.mxu0 0
    %5807 = vmatprep.subr.bf16.mxu0 0
    %5808 = vmatpush1.bf16.msra.mxu0 0
    %5809 = vmatprep.subr.bf16.mxu0 0
    %5810 = vmatpush1.bf16.msra.mxu0 0
    %5811 = vmatprep.subr.bf16.mxu0 0
    %5812 = vmatpush1.bf16.msra.mxu0 0
    %5813 = vmatprep.subr.bf16.mxu0 0
    %5814 = vmatpush1.bf16.msra.mxu0 0
    %5815 = vmatprep.subr.bf16.mxu0 0
    %5816 = vmatpush1.bf16.msra.mxu0 0
    %5817 = vmatprep.subr.bf16.mxu0 0
    %5818 = vmatpush1.bf16.msra.mxu0 0
    %5819 = vmatprep.subr.bf16.mxu0 0
    %5820 = vmatpush1.bf16.msra.mxu0 0
    %5821 = vmatprep.subr.bf16.mxu0 0
    %5822 = vmatpush1.bf16.msra.mxu0 0
    %5823 = vmatprep.subr.bf16.mxu0 0
    %5824 = vmatpush1.bf16.msra.mxu0 0
    %5825 = vmatprep.subr.bf16.mxu0 0
    %5826 = vmatpush1.bf16.msra.mxu0 0
    %5827 = vmatprep.subr.bf16.mxu0 0
    %5828 = vmatpush1.bf16.msra.mxu0 0
    %5829 = vmatprep.mubr.bf16.mxu0 0
    %5830 = vmatmul.mubr.bf16.gmra.mrb[0].mxu0 %v5795
    %v5831 = vpop.f32.mrb[0].mxu0
    %v5832 = vadd.f32 %v5769, %v5831
    %v5833 = vpop.f32.mrb[0].mxu0
    %v5834 = vpop.f32.mrb[0].mxu0
    %v5835 = vadd.f32 %v5769, %v5834
    %v5836 = vpop.f32.mrb[0].mxu0
    %5837 = vdwg.mxu0
    %v5838 = vadd.f32 %v5646, %v5832
    %v5839 = vadd.f32 %v5647, %v5835
    %v5840 = vld [vmem:[#allocation5 + $0x140] sm:$0x1]
    %v5841 = vld [vmem:[#allocation5 + $0x148] sm:$0x1]
    %v5842 = vsel %vm154, %v5838, 0.0
    %5843 = vadd.xlane.f32.xlu0 %v5842
    %v5844 = vpop.xlane.xlu0 %5843
    %v5845 = vsel %vm154, %v5839, 0.0
    %5846 = vadd.xlane.f32.xlu0 %v5845
    %v5847 = vpop.xlane.xlu0 %5846
    %v5848 = vmul.f32 %v5844, %v161
    %v5849 = vmul.f32 %v5847, %v161
    %v5850 = vsub.f32 %v5838, %v5848
    %v5851 = vsub.f32 %v5839, %v5849
    %v5852 = vmul.f32 %v5850, %v5850
    %v5853 = vmul.f32 %v5851, %v5851
    %v5854 = vsel %vm154, %v5852, 0.0
    %5855 = vadd.xlane.f32.xlu0 %v5854
    %v5856 = vpop.xlane.xlu0 %5855
    %v5857 = vsel %vm154, %v5853, 0.0
    %5858 = vadd.xlane.f32.xlu0 %v5857
    %v5859 = vpop.xlane.xlu0 %5858
    %v5860 = vmul.f32 %v5856, %v161
    %v5861 = vmul.f32 %v5859, %v161
    %v5862 = vadd.f32 %v5860, 1e-06
    %v5863 = vadd.f32 %v5861, 1e-06
    %v5864 = vrsqrt.pop %v5862
    %v5865 = vrsqrt.pop %v5863
    %v5866 = vmul.f32 %v5850, %v5864
    %v5867 = vmul.f32 %v5851, %v5865
    %v5868 = vlaneseq
    %v5869 = vshrl.u32 %v5868, 7
    %v5870 = vsub.s32 0, %v5869
    %v5871 = vrot.slane %v5840, %v5870
    %v5872 = vmul.f32 %v5866, %v5871
    %v5873 = vmul.f32 %v5867, %v5871
    %v5874 = vlaneseq
    %v5875 = vshrl.u32 %v5874, 7
    %v5876 = vsub.s32 0, %v5875
    %v5877 = vrot.slane %v5841, %v5876
    %v5878 = vadd.f32 %v5872, %v5877
    %v5879 = vadd.f32 %v5873, %v5877
    %v5880 = vpack.c.bf16 %v5879, %v5878
    %v5881 = vld [vmem:[#allocation2 + $0x130] sm:$0xf]
    %v5882 = vld [vmem:[#allocation2 + $0x134] sm:$0xf]
    %v5883 = vld [vmem:[#allocation2 + $0x138] sm:$0xf]
    %v5884 = vld [vmem:[#allocation2 + $0x13c] sm:$0xf]
    %v5885 = vld [vmem:[#allocation5 + $0x118] sm:$0x1]
    %v5886 = vlaneseq
    %v5887 = vshrl.u32 %v5886, 7
    %v5888 = vsub.s32 0, %v5887
    %v5889 = vrot.slane %v5885, %v5888
    %v5894 = vunpack.c.l.b16 %v5881
    %v5895 = vunpack.c.l.b16 %v5882
    %v5896 = vunpack.c.l.b16 %v5883
    %v5897 = vunpack.c.l.b16 %v5884
    %v5898 = vpack.c.b16 %v5895, %v5894
    %v5899 = vpack.c.b16 %v5897, %v5896
    %v5903 = vsel %vm154, %v5880, 0
    %5905 = vmatprep.subr.bf16.mxu0 0
    %5906 = vmatpush1.bf16.msra.mxu0 %v5898
    %5907 = vmatprep.subr.bf16.mxu0 0
    %5908 = vmatpush1.bf16.msra.mxu0 %v5899
    %5909 = vmatprep.subr.bf16.mxu0 0
    %5910 = vmatpush1.bf16.msra.mxu0 0
    %5911 = vmatprep.subr.bf16.mxu0 0
    %5912 = vmatpush1.bf16.msra.mxu0 0
    %5913 = vmatprep.subr.bf16.mxu0 0
    %5914 = vmatpush1.bf16.msra.mxu0 0
    %5915 = vmatprep.subr.bf16.mxu0 0
    %5916 = vmatpush1.bf16.msra.mxu0 0
    %5917 = vmatprep.subr.bf16.mxu0 0
    %5918 = vmatpush1.bf16.msra.mxu0 0
    %5919 = vmatprep.subr.bf16.mxu0 0
    %5920 = vmatpush1.bf16.msra.mxu0 0
    %5921 = vmatprep.subr.bf16.mxu0 0
    %5922 = vmatpush1.bf16.msra.mxu0 0
    %5923 = vmatprep.subr.bf16.mxu0 0
    %5924 = vmatpush1.bf16.msra.mxu0 0
    %5925 = vmatprep.subr.bf16.mxu0 0
    %5926 = vmatpush1.bf16.msra.mxu0 0
    %5927 = vmatprep.subr.bf16.mxu0 0
    %5928 = vmatpush1.bf16.msra.mxu0 0
    %5929 = vmatprep.subr.bf16.mxu0 0
    %5930 = vmatpush1.bf16.msra.mxu0 0
    %5931 = vmatprep.subr.bf16.mxu0 0
    %5932 = vmatpush1.bf16.msra.mxu0 0
    %5933 = vmatprep.subr.bf16.mxu0 0
    %5934 = vmatpush1.bf16.msra.mxu0 0
    %5935 = vmatprep.subr.bf16.mxu0 0
    %5936 = vmatpush1.bf16.msra.mxu0 0
    %5937 = vmatprep.mubr.bf16.mxu0 0
    %5938 = vmatmul.mubr.bf16.gmra.mrb[0].mxu0 %v5903
    %v5939 = vpop.f32.mrb[0].mxu0
    %v5940 = vadd.f32 %v5889, %v5939
    %v5941 = vpop.f32.mrb[0].mxu0
    %v5942 = vpop.f32.mrb[0].mxu0
    %v5943 = vadd.f32 %v5889, %v5942
    %v5944 = vpop.f32.mrb[0].mxu0
    %5945 = vdwg.mxu0
    %v5946 = vld [vmem:[#allocation2 + $0x140] sm:$0xf]
    %v5947 = vld [vmem:[#allocation2 + $0x144] sm:$0xf]
    %v5948 = vld [vmem:[#allocation2 + $0x148] sm:$0xf]
    %v5949 = vld [vmem:[#allocation2 + $0x14c] sm:$0xf]
    %v5950 = vld [vmem:[#allocation5 + $0x120] sm:$0x1]
    %5953 = vrot.lane.b32.xlu0 %v5940, 120
    %v5954 = vpop.permute.xlu0 %5953
    %5955 = vrot.lane.b32.xlu0 %v5943, 120
    %v5956 = vpop.permute.xlu0 %5955
    %5959 = vrot.lane.b32.xlu0 %v5940, 112
    %v5960 = vpop.permute.xlu0 %5959
    %5961 = vrot.lane.b32.xlu0 %v5943, 112
    %v5962 = vpop.permute.xlu0 %5961
    %5965 = vrot.lane.b32.xlu0 %v5940, 104
    %v5966 = vpop.permute.xlu0 %5965
    %5967 = vrot.lane.b32.xlu0 %v5943, 104
    %v5968 = vpop.permute.xlu0 %5967
    %v5971 = vpack.c.bf16 %v5940, %v5940
    %v5972 = vpack.c.bf16 %v5943, %v5943
    %v5973 = vpack.c.bf16 %v5954, %v5954
    %v5974 = vpack.c.bf16 %v5956, %v5956
    %v5975 = vpack.c.bf16 %v5960, %v5960
    %v5976 = vpack.c.bf16 %v5962, %v5962
    %v5977 = vpack.c.bf16 %v5966, %v5966
    %v5978 = vpack.c.bf16 %v5968, %v5968
    %5980 = vrot.lane.b32.xlu0 %v5971, 96
    %v5981 = vpop.permute.xlu0 %5980
    %v5983 = vsel %vm296, %v5971, 0
    %v5986 = vsel %vm296, %v5981, 0
    %5988 = vmatprep.subr.bf16.mxu0 0
    %5989 = vmatpush1.bf16.xpose.msra.mxu0 %v5986
    %5990 = vmatprep.subr.bf16.mxu0 0
    %5991 = vmatpush1.bf16.xpose.msra.mxu0 0
    %5992 = vmatprep.subr.bf16.mxu0 0
    %5993 = vmatpush1.bf16.xpose.msra.mxu0 0
    %5994 = vmatprep.subr.bf16.mxu0 0
    %5995 = vmatpush1.bf16.xpose.msra.mxu0 0
    %5996 = vmatprep.subr.bf16.mxu0 0
    %5997 = vmatpush1.bf16.xpose.msra.mxu0 0
    %5998 = vmatprep.subr.bf16.mxu0 0
    %5999 = vmatpush1.bf16.xpose.msra.mxu0 0
    %6000 = vmatprep.subr.bf16.mxu0 0
    %6001 = vmatpush1.bf16.xpose.msra.mxu0 0
    %6002 = vmatprep.subr.bf16.mxu0 0
    %6003 = vmatpush1.bf16.xpose.msra.mxu0 0
    %6004 = vmatprep.subr.bf16.mxu0 0
    %6005 = vmatpush1.bf16.xpose.msra.mxu0 0
    %6006 = vmatprep.subr.bf16.mxu0 0
    %6007 = vmatpush1.bf16.xpose.msra.mxu0 0
    %6008 = vmatprep.subr.bf16.mxu0 0
    %6009 = vmatpush1.bf16.xpose.msra.mxu0 0
    %6010 = vmatprep.subr.bf16.mxu0 0
    %6011 = vmatpush1.bf16.xpose.msra.mxu0 0
    %6012 = vmatprep.subr.bf16.mxu0 0
    %6013 = vmatpush1.bf16.xpose.msra.mxu0 0
    %6014 = vmatprep.subr.bf16.mxu0 0
    %6015 = vmatpush1.bf16.xpose.msra.mxu0 0
    %6016 = vmatprep.subr.bf16.mxu0 0
    %6017 = vmatpush1.bf16.xpose.msra.mxu0 0
    %6018 = vmatprep.subr.bf16.mxu0 0
    %6019 = vmatpush1.bf16.xpose.msra.mxu0 0
    %6020 = vmatprep.mubr.bf16.mxu0 0
    %6021 = vmatmul.mubr.bf16.gmra.mrb[0].mxu0 %v5983
    %v6022 = vpop.f32.mrb[0].mxu0
    %v6023 = vadd.f32 0.0, %v6022
    %v6024 = vpop.f32.mrb[0].mxu0
    %v6025 = vpop.f32.mrb[0].mxu0
    %v6026 = vpop.f32.mrb[0].mxu0
    %6027 = vdwg.mxu0
    %6029 = vrot.lane.b32.xlu0 %v5972, 96
    %v6030 = vpop.permute.xlu0 %6029
    %v6032 = vsel %vm296, %v5972, 0
    %v6035 = vsel %vm296, %v6030, 0
    %6037 = vmatprep.subr.bf16.mxu0 0
    %6038 = vmatpush1.bf16.xpose.msra.mxu0 %v6035
    %6039 = vmatprep.subr.bf16.mxu0 0
    %6040 = vmatpush1.bf16.xpose.msra.mxu0 0
    %6041 = vmatprep.subr.bf16.mxu0 0
    %6042 = vmatpush1.bf16.xpose.msra.mxu0 0
    %6043 = vmatprep.subr.bf16.mxu0 0
    %6044 = vmatpush1.bf16.xpose.msra.mxu0 0
    %6045 = vmatprep.subr.bf16.mxu0 0
    %6046 = vmatpush1.bf16.xpose.msra.mxu0 0
    %6047 = vmatprep.subr.bf16.mxu0 0
    %6048 = vmatpush1.bf16.xpose.msra.mxu0 0
    %6049 = vmatprep.subr.bf16.mxu0 0
    %6050 = vmatpush1.bf16.xpose.msra.mxu0 0
    %6051 = vmatprep.subr.bf16.mxu0 0
    %6052 = vmatpush1.bf16.xpose.msra.mxu0 0
    %6053 = vmatprep.subr.bf16.mxu0 0
    %6054 = vmatpush1.bf16.xpose.msra.mxu0 0
    %6055 = vmatprep.subr.bf16.mxu0 0
    %6056 = vmatpush1.bf16.xpose.msra.mxu0 0
    %6057 = vmatprep.subr.bf16.mxu0 0
    %6058 = vmatpush1.bf16.xpose.msra.mxu0 0
    %6059 = vmatprep.subr.bf16.mxu0 0
    %6060 = vmatpush1.bf16.xpose.msra.mxu0 0
    %6061 = vmatprep.subr.bf16.mxu0 0
    %6062 = vmatpush1.bf16.xpose.msra.mxu0 0
    %6063 = vmatprep.subr.bf16.mxu0 0
    %6064 = vmatpush1.bf16.xpose.msra.mxu0 0
    %6065 = vmatprep.subr.bf16.mxu0 0
    %6066 = vmatpush1.bf16.xpose.msra.mxu0 0
    %6067 = vmatprep.subr.bf16.mxu0 0
    %6068 = vmatpush1.bf16.xpose.msra.mxu0 0
    %6069 = vmatprep.mubr.bf16.mxu0 0
    %6070 = vmatmul.mubr.bf16.gmra.mrb[0].mxu0 %v6032
    %v6071 = vpop.f32.mrb[0].mxu0
    %v6072 = vadd.f32 0.0, %v6071
    %v6073 = vpop.f32.mrb[0].mxu0
    %v6074 = vpop.f32.mrb[0].mxu0
    %v6075 = vpop.f32.mrb[0].mxu0
    %6076 = vdwg.mxu0
    %6078 = vrot.lane.b32.xlu0 %v5973, 96
    %v6079 = vpop.permute.xlu0 %6078
    %v6081 = vsel %vm296, %v5973, 0
    %v6084 = vsel %vm296, %v6079, 0
    %6086 = vmatprep.subr.bf16.mxu0 0
    %6087 = vmatpush1.bf16.xpose.msra.mxu0 %v6084
    %6088 = vmatprep.subr.bf16.mxu0 0
    %6089 = vmatpush1.bf16.xpose.msra.mxu0 0
    %6090 = vmatprep.subr.bf16.mxu0 0
    %6091 = vmatpush1.bf16.xpose.msra.mxu0 0
    %6092 = vmatprep.subr.bf16.mxu0 0
    %6093 = vmatpush1.bf16.xpose.msra.mxu0 0
    %6094 = vmatprep.subr.bf16.mxu0 0
    %6095 = vmatpush1.bf16.xpose.msra.mxu0 0
    %6096 = vmatprep.subr.bf16.mxu0 0
    %6097 = vmatpush1.bf16.xpose.msra.mxu0 0
    %6098 = vmatprep.subr.bf16.mxu0 0
    %6099 = vmatpush1.bf16.xpose.msra.mxu0 0
    %6100 = vmatprep.subr.bf16.mxu0 0
    %6101 = vmatpush1.bf16.xpose.msra.mxu0 0
    %6102 = vmatprep.subr.bf16.mxu0 0
    %6103 = vmatpush1.bf16.xpose.msra.mxu0 0
    %6104 = vmatprep.subr.bf16.mxu0 0
    %6105 = vmatpush1.bf16.xpose.msra.mxu0 0
    %6106 = vmatprep.subr.bf16.mxu0 0
    %6107 = vmatpush1.bf16.xpose.msra.mxu0 0
    %6108 = vmatprep.subr.bf16.mxu0 0
    %6109 = vmatpush1.bf16.xpose.msra.mxu0 0
    %6110 = vmatprep.subr.bf16.mxu0 0
    %6111 = vmatpush1.bf16.xpose.msra.mxu0 0
    %6112 = vmatprep.subr.bf16.mxu0 0
    %6113 = vmatpush1.bf16.xpose.msra.mxu0 0
    %6114 = vmatprep.subr.bf16.mxu0 0
    %6115 = vmatpush1.bf16.xpose.msra.mxu0 0
    %6116 = vmatprep.subr.bf16.mxu0 0
    %6117 = vmatpush1.bf16.xpose.msra.mxu0 0
    %6118 = vmatprep.mubr.bf16.mxu0 0
    %6119 = vmatmul.mubr.bf16.gmra.mrb[0].mxu0 %v6081
    %v6120 = vpop.f32.mrb[0].mxu0
    %v6121 = vadd.f32 0.0, %v6120
    %v6122 = vpop.f32.mrb[0].mxu0
    %v6123 = vpop.f32.mrb[0].mxu0
    %v6124 = vpop.f32.mrb[0].mxu0
    %6125 = vdwg.mxu0
    %6127 = vrot.lane.b32.xlu0 %v5974, 96
    %v6128 = vpop.permute.xlu0 %6127
    %v6130 = vsel %vm296, %v5974, 0
    %v6133 = vsel %vm296, %v6128, 0
    %6135 = vmatprep.subr.bf16.mxu0 0
    %6136 = vmatpush1.bf16.xpose.msra.mxu0 %v6133
    %6137 = vmatprep.subr.bf16.mxu0 0
    %6138 = vmatpush1.bf16.xpose.msra.mxu0 0
    %6139 = vmatprep.subr.bf16.mxu0 0
    %6140 = vmatpush1.bf16.xpose.msra.mxu0 0
    %6141 = vmatprep.subr.bf16.mxu0 0
    %6142 = vmatpush1.bf16.xpose.msra.mxu0 0
    %6143 = vmatprep.subr.bf16.mxu0 0
    %6144 = vmatpush1.bf16.xpose.msra.mxu0 0
    %6145 = vmatprep.subr.bf16.mxu0 0
    %6146 = vmatpush1.bf16.xpose.msra.mxu0 0
    %6147 = vmatprep.subr.bf16.mxu0 0
    %6148 = vmatpush1.bf16.xpose.msra.mxu0 0
    %6149 = vmatprep.subr.bf16.mxu0 0
    %6150 = vmatpush1.bf16.xpose.msra.mxu0 0
    %6151 = vmatprep.subr.bf16.mxu0 0
    %6152 = vmatpush1.bf16.xpose.msra.mxu0 0
    %6153 = vmatprep.subr.bf16.mxu0 0
    %6154 = vmatpush1.bf16.xpose.msra.mxu0 0
    %6155 = vmatprep.subr.bf16.mxu0 0
    %6156 = vmatpush1.bf16.xpose.msra.mxu0 0
    %6157 = vmatprep.subr.bf16.mxu0 0
    %6158 = vmatpush1.bf16.xpose.msra.mxu0 0
    %6159 = vmatprep.subr.bf16.mxu0 0
    %6160 = vmatpush1.bf16.xpose.msra.mxu0 0
    %6161 = vmatprep.subr.bf16.mxu0 0
    %6162 = vmatpush1.bf16.xpose.msra.mxu0 0
    %6163 = vmatprep.subr.bf16.mxu0 0
    %6164 = vmatpush1.bf16.xpose.msra.mxu0 0
    %6165 = vmatprep.subr.bf16.mxu0 0
    %6166 = vmatpush1.bf16.xpose.msra.mxu0 0
    %6167 = vmatprep.mubr.bf16.mxu0 0
    %6168 = vmatmul.mubr.bf16.gmra.mrb[0].mxu0 %v6130
    %v6169 = vpop.f32.mrb[0].mxu0
    %v6170 = vadd.f32 0.0, %v6169
    %v6171 = vpop.f32.mrb[0].mxu0
    %v6172 = vpop.f32.mrb[0].mxu0
    %v6173 = vpop.f32.mrb[0].mxu0
    %6174 = vdwg.mxu0
    %6176 = vrot.lane.b32.xlu0 %v5975, 96
    %v6177 = vpop.permute.xlu0 %6176
    %v6179 = vsel %vm296, %v5975, 0
    %v6182 = vsel %vm296, %v6177, 0
    %6184 = vmatprep.subr.bf16.mxu0 0
    %6185 = vmatpush1.bf16.xpose.msra.mxu0 %v6182
    %6186 = vmatprep.subr.bf16.mxu0 0
    %6187 = vmatpush1.bf16.xpose.msra.mxu0 0
    %6188 = vmatprep.subr.bf16.mxu0 0
    %6189 = vmatpush1.bf16.xpose.msra.mxu0 0
    %6190 = vmatprep.subr.bf16.mxu0 0
    %6191 = vmatpush1.bf16.xpose.msra.mxu0 0
    %6192 = vmatprep.subr.bf16.mxu0 0
    %6193 = vmatpush1.bf16.xpose.msra.mxu0 0
    %6194 = vmatprep.subr.bf16.mxu0 0
    %6195 = vmatpush1.bf16.xpose.msra.mxu0 0
    %6196 = vmatprep.subr.bf16.mxu0 0
    %6197 = vmatpush1.bf16.xpose.msra.mxu0 0
    %6198 = vmatprep.subr.bf16.mxu0 0
    %6199 = vmatpush1.bf16.xpose.msra.mxu0 0
    %6200 = vmatprep.subr.bf16.mxu0 0
    %6201 = vmatpush1.bf16.xpose.msra.mxu0 0
    %6202 = vmatprep.subr.bf16.mxu0 0
    %6203 = vmatpush1.bf16.xpose.msra.mxu0 0
    %6204 = vmatprep.subr.bf16.mxu0 0
    %6205 = vmatpush1.bf16.xpose.msra.mxu0 0
    %6206 = vmatprep.subr.bf16.mxu0 0
    %6207 = vmatpush1.bf16.xpose.msra.mxu0 0
    %6208 = vmatprep.subr.bf16.mxu0 0
    %6209 = vmatpush1.bf16.xpose.msra.mxu0 0
    %6210 = vmatprep.subr.bf16.mxu0 0
    %6211 = vmatpush1.bf16.xpose.msra.mxu0 0
    %6212 = vmatprep.subr.bf16.mxu0 0
    %6213 = vmatpush1.bf16.xpose.msra.mxu0 0
    %6214 = vmatprep.subr.bf16.mxu0 0
    %6215 = vmatpush1.bf16.xpose.msra.mxu0 0
    %6216 = vmatprep.mubr.bf16.mxu0 0
    %6217 = vmatmul.mubr.bf16.gmra.mrb[0].mxu0 %v6179
    %v6218 = vpop.f32.mrb[0].mxu0
    %v6219 = vadd.f32 0.0, %v6218
    %v6220 = vpop.f32.mrb[0].mxu0
    %v6221 = vpop.f32.mrb[0].mxu0
    %v6222 = vpop.f32.mrb[0].mxu0
    %6223 = vdwg.mxu0
    %6225 = vrot.lane.b32.xlu0 %v5976, 96
    %v6226 = vpop.permute.xlu0 %6225
    %v6228 = vsel %vm296, %v5976, 0
    %v6231 = vsel %vm296, %v6226, 0
    %6233 = vmatprep.subr.bf16.mxu0 0
    %6234 = vmatpush1.bf16.xpose.msra.mxu0 %v6231
    %6235 = vmatprep.subr.bf16.mxu0 0
    %6236 = vmatpush1.bf16.xpose.msra.mxu0 0
    %6237 = vmatprep.subr.bf16.mxu0 0
    %6238 = vmatpush1.bf16.xpose.msra.mxu0 0
    %6239 = vmatprep.subr.bf16.mxu0 0
    %6240 = vmatpush1.bf16.xpose.msra.mxu0 0
    %6241 = vmatprep.subr.bf16.mxu0 0
    %6242 = vmatpush1.bf16.xpose.msra.mxu0 0
    %6243 = vmatprep.subr.bf16.mxu0 0
    %6244 = vmatpush1.bf16.xpose.msra.mxu0 0
    %6245 = vmatprep.subr.bf16.mxu0 0
    %6246 = vmatpush1.bf16.xpose.msra.mxu0 0
    %6247 = vmatprep.subr.bf16.mxu0 0
    %6248 = vmatpush1.bf16.xpose.msra.mxu0 0
    %6249 = vmatprep.subr.bf16.mxu0 0
    %6250 = vmatpush1.bf16.xpose.msra.mxu0 0
    %6251 = vmatprep.subr.bf16.mxu0 0
    %6252 = vmatpush1.bf16.xpose.msra.mxu0 0
    %6253 = vmatprep.subr.bf16.mxu0 0
    %6254 = vmatpush1.bf16.xpose.msra.mxu0 0
    %6255 = vmatprep.subr.bf16.mxu0 0
    %6256 = vmatpush1.bf16.xpose.msra.mxu0 0
    %6257 = vmatprep.subr.bf16.mxu0 0
    %6258 = vmatpush1.bf16.xpose.msra.mxu0 0
    %6259 = vmatprep.subr.bf16.mxu0 0
    %6260 = vmatpush1.bf16.xpose.msra.mxu0 0
    %6261 = vmatprep.subr.bf16.mxu0 0
    %6262 = vmatpush1.bf16.xpose.msra.mxu0 0
    %6263 = vmatprep.subr.bf16.mxu0 0
    %6264 = vmatpush1.bf16.xpose.msra.mxu0 0
    %6265 = vmatprep.mubr.bf16.mxu0 0
    %6266 = vmatmul.mubr.bf16.gmra.mrb[0].mxu0 %v6228
    %v6267 = vpop.f32.mrb[0].mxu0
    %v6268 = vadd.f32 0.0, %v6267
    %v6269 = vpop.f32.mrb[0].mxu0
    %v6270 = vpop.f32.mrb[0].mxu0
    %v6271 = vpop.f32.mrb[0].mxu0
    %6272 = vdwg.mxu0
    %6274 = vrot.lane.b32.xlu0 %v5977, 96
    %v6275 = vpop.permute.xlu0 %6274
    %v6277 = vsel %vm296, %v5977, 0
    %v6280 = vsel %vm296, %v6275, 0
    %6282 = vmatprep.subr.bf16.mxu0 0
    %6283 = vmatpush1.bf16.xpose.msra.mxu0 %v6280
    %6284 = vmatprep.subr.bf16.mxu0 0
    %6285 = vmatpush1.bf16.xpose.msra.mxu0 0
    %6286 = vmatprep.subr.bf16.mxu0 0
    %6287 = vmatpush1.bf16.xpose.msra.mxu0 0
    %6288 = vmatprep.subr.bf16.mxu0 0
    %6289 = vmatpush1.bf16.xpose.msra.mxu0 0
    %6290 = vmatprep.subr.bf16.mxu0 0
    %6291 = vmatpush1.bf16.xpose.msra.mxu0 0
    %6292 = vmatprep.subr.bf16.mxu0 0
    %6293 = vmatpush1.bf16.xpose.msra.mxu0 0
    %6294 = vmatprep.subr.bf16.mxu0 0
    %6295 = vmatpush1.bf16.xpose.msra.mxu0 0
    %6296 = vmatprep.subr.bf16.mxu0 0
    %6297 = vmatpush1.bf16.xpose.msra.mxu0 0
    %6298 = vmatprep.subr.bf16.mxu0 0
    %6299 = vmatpush1.bf16.xpose.msra.mxu0 0
    %6300 = vmatprep.subr.bf16.mxu0 0
    %6301 = vmatpush1.bf16.xpose.msra.mxu0 0
    %6302 = vmatprep.subr.bf16.mxu0 0
    %6303 = vmatpush1.bf16.xpose.msra.mxu0 0
    %6304 = vmatprep.subr.bf16.mxu0 0
    %6305 = vmatpush1.bf16.xpose.msra.mxu0 0
    %6306 = vmatprep.subr.bf16.mxu0 0
    %6307 = vmatpush1.bf16.xpose.msra.mxu0 0
    %6308 = vmatprep.subr.bf16.mxu0 0
    %6309 = vmatpush1.bf16.xpose.msra.mxu0 0
    %6310 = vmatprep.subr.bf16.mxu0 0
    %6311 = vmatpush1.bf16.xpose.msra.mxu0 0
    %6312 = vmatprep.subr.bf16.mxu0 0
    %6313 = vmatpush1.bf16.xpose.msra.mxu0 0
    %6314 = vmatprep.mubr.bf16.mxu0 0
    %6315 = vmatmul.mubr.bf16.gmra.mrb[0].mxu0 %v6277
    %v6316 = vpop.f32.mrb[0].mxu0
    %v6317 = vadd.f32 0.0, %v6316
    %v6318 = vpop.f32.mrb[0].mxu0
    %v6319 = vpop.f32.mrb[0].mxu0
    %v6320 = vpop.f32.mrb[0].mxu0
    %6321 = vdwg.mxu0
    %6323 = vrot.lane.b32.xlu0 %v5978, 96
    %v6324 = vpop.permute.xlu0 %6323
    %v6326 = vsel %vm296, %v5978, 0
    %v6329 = vsel %vm296, %v6324, 0
    %6331 = vmatprep.subr.bf16.mxu0 0
    %6332 = vmatpush1.bf16.xpose.msra.mxu0 %v6329
    %6333 = vmatprep.subr.bf16.mxu0 0
    %6334 = vmatpush1.bf16.xpose.msra.mxu0 0
    %6335 = vmatprep.subr.bf16.mxu0 0
    %6336 = vmatpush1.bf16.xpose.msra.mxu0 0
    %6337 = vmatprep.subr.bf16.mxu0 0
    %6338 = vmatpush1.bf16.xpose.msra.mxu0 0
    %6339 = vmatprep.subr.bf16.mxu0 0
    %6340 = vmatpush1.bf16.xpose.msra.mxu0 0
    %6341 = vmatprep.subr.bf16.mxu0 0
    %6342 = vmatpush1.bf16.xpose.msra.mxu0 0
    %6343 = vmatprep.subr.bf16.mxu0 0
    %6344 = vmatpush1.bf16.xpose.msra.mxu0 0
    %6345 = vmatprep.subr.bf16.mxu0 0
    %6346 = vmatpush1.bf16.xpose.msra.mxu0 0
    %6347 = vmatprep.subr.bf16.mxu0 0
    %6348 = vmatpush1.bf16.xpose.msra.mxu0 0
    %6349 = vmatprep.subr.bf16.mxu0 0
    %6350 = vmatpush1.bf16.xpose.msra.mxu0 0
    %6351 = vmatprep.subr.bf16.mxu0 0
    %6352 = vmatpush1.bf16.xpose.msra.mxu0 0
    %6353 = vmatprep.subr.bf16.mxu0 0
    %6354 = vmatpush1.bf16.xpose.msra.mxu0 0
    %6355 = vmatprep.subr.bf16.mxu0 0
    %6356 = vmatpush1.bf16.xpose.msra.mxu0 0
    %6357 = vmatprep.subr.bf16.mxu0 0
    %6358 = vmatpush1.bf16.xpose.msra.mxu0 0
    %6359 = vmatprep.subr.bf16.mxu0 0
    %6360 = vmatpush1.bf16.xpose.msra.mxu0 0
    %6361 = vmatprep.subr.bf16.mxu0 0
    %6362 = vmatpush1.bf16.xpose.msra.mxu0 0
    %6363 = vmatprep.mubr.bf16.mxu0 0
    %6364 = vmatmul.mubr.bf16.gmra.mrb[0].mxu0 %v6326
    %v6365 = vpop.f32.mrb[0].mxu0
    %v6366 = vadd.f32 0.0, %v6365
    %v6367 = vpop.f32.mrb[0].mxu0
    %v6368 = vpop.f32.mrb[0].mxu0
    %v6369 = vpop.f32.mrb[0].mxu0
    %6370 = vdwg.mxu0
    %v6371 = vmul.f32 %v6023, 0.35355338
    %v6372 = vmul.f32 %v6072, 0.35355338
    %v6373 = vmul.f32 %v6121, 0.35355338
    %v6374 = vmul.f32 %v6170, 0.35355338
    %v6375 = vmul.f32 %v6219, 0.35355338
    %v6376 = vmul.f32 %v6268, 0.35355338
    %v6377 = vmul.f32 %v6317, 0.35355338
    %v6378 = vmul.f32 %v6366, 0.35355338
    %v6379 = vadd.f32 %v6371, %v68
    %v6380 = vadd.f32 %v6372, %v69
    %v6381 = vadd.f32 %v6373, %v70
    %v6382 = vadd.f32 %v6374, %v71
    %v6383 = vadd.f32 %v6375, %v72
    %v6384 = vadd.f32 %v6376, %v73
    %v6385 = vadd.f32 %v6377, %v74
    %v6386 = vadd.f32 %v6378, %v75
    %v6387 = vsel %vm296, %v6379, -inf
    %6388 = vmax.xlane.f32.xlu0 %v6387
    %v6389 = vpop.xlane.xlu0 %6388
    %v6390 = vsel %vm296, %v6380, -inf
    %6391 = vmax.xlane.f32.xlu0 %v6390
    %v6392 = vpop.xlane.xlu0 %6391
    %v6393 = vsel %vm296, %v6381, -inf
    %6394 = vmax.xlane.f32.xlu0 %v6393
    %v6395 = vpop.xlane.xlu0 %6394
    %v6396 = vsel %vm296, %v6382, -inf
    %6397 = vmax.xlane.f32.xlu0 %v6396
    %v6398 = vpop.xlane.xlu0 %6397
    %v6399 = vsel %vm296, %v6383, -inf
    %6400 = vmax.xlane.f32.xlu0 %v6399
    %v6401 = vpop.xlane.xlu0 %6400
    %v6402 = vsel %vm296, %v6384, -inf
    %6403 = vmax.xlane.f32.xlu0 %v6402
    %v6404 = vpop.xlane.xlu0 %6403
    %v6405 = vsel %vm296, %v6385, -inf
    %6406 = vmax.xlane.f32.xlu0 %v6405
    %v6407 = vpop.xlane.xlu0 %6406
    %v6408 = vsel %vm296, %v6386, -inf
    %6409 = vmax.xlane.f32.xlu0 %v6408
    %v6410 = vpop.xlane.xlu0 %6409
    %v6411 = vsub.f32 %v6379, %v6389
    %v6412 = vsub.f32 %v6380, %v6392
    %v6413 = vsub.f32 %v6381, %v6395
    %v6414 = vsub.f32 %v6382, %v6398
    %v6415 = vsub.f32 %v6383, %v6401
    %v6416 = vsub.f32 %v6384, %v6404
    %v6417 = vsub.f32 %v6385, %v6407
    %v6418 = vsub.f32 %v6386, %v6410
    %v6419 = vmul.f32 %v6411, 1.442695
    %v6420 = vpow.pop %v6419
    %v6421 = vmul.f32 %v6412, 1.442695
    %v6422 = vpow.pop %v6421
    %v6423 = vmul.f32 %v6413, 1.442695
    %v6424 = vpow.pop %v6423
    %v6425 = vmul.f32 %v6414, 1.442695
    %v6426 = vpow.pop %v6425
    %v6427 = vmul.f32 %v6415, 1.442695
    %v6428 = vpow.pop %v6427
    %v6429 = vmul.f32 %v6416, 1.442695
    %v6430 = vpow.pop %v6429
    %v6431 = vmul.f32 %v6417, 1.442695
    %v6432 = vpow.pop %v6431
    %v6433 = vmul.f32 %v6418, 1.442695
    %v6434 = vpow.pop %v6433
    %v6435 = vsel %vm296, %v6420, 0.0
    %6436 = vadd.xlane.f32.xlu0 %v6435
    %v6437 = vpop.xlane.xlu0 %6436
    %v6438 = vsel %vm296, %v6422, 0.0
    %6439 = vadd.xlane.f32.xlu0 %v6438
    %v6440 = vpop.xlane.xlu0 %6439
    %v6441 = vsel %vm296, %v6424, 0.0
    %6442 = vadd.xlane.f32.xlu0 %v6441
    %v6443 = vpop.xlane.xlu0 %6442
    %v6444 = vsel %vm296, %v6426, 0.0
    %6445 = vadd.xlane.f32.xlu0 %v6444
    %v6446 = vpop.xlane.xlu0 %6445
    %v6447 = vsel %vm296, %v6428, 0.0
    %6448 = vadd.xlane.f32.xlu0 %v6447
    %v6449 = vpop.xlane.xlu0 %6448
    %v6450 = vsel %vm296, %v6430, 0.0
    %6451 = vadd.xlane.f32.xlu0 %v6450
    %v6452 = vpop.xlane.xlu0 %6451
    %v6453 = vsel %vm296, %v6432, 0.0
    %6454 = vadd.xlane.f32.xlu0 %v6453
    %v6455 = vpop.xlane.xlu0 %6454
    %v6456 = vsel %vm296, %v6434, 0.0
    %6457 = vadd.xlane.f32.xlu0 %v6456
    %v6458 = vpop.xlane.xlu0 %6457
    %v6459 = vrcp.pop %v6437
    %v6460 = vrcp.pop %v6440
    %v6461 = vrcp.pop %v6443
    %v6462 = vrcp.pop %v6446
    %v6463 = vrcp.pop %v6449
    %v6464 = vrcp.pop %v6452
    %v6465 = vrcp.pop %v6455
    %v6466 = vrcp.pop %v6458
    %v6467 = vmul.f32 %v6420, %v6459
    %v6468 = vmul.f32 %v6422, %v6460
    %v6469 = vmul.f32 %v6424, %v6461
    %v6470 = vmul.f32 %v6426, %v6462
    %v6471 = vmul.f32 %v6428, %v6463
    %v6472 = vmul.f32 %v6430, %v6464
    %v6473 = vmul.f32 %v6432, %v6465
    %v6474 = vmul.f32 %v6434, %v6466
    %v6475 = vpack.c.bf16 %v6467, %v6467
    %v6476 = vpack.c.bf16 %v6468, %v6468
    %v6477 = vpack.c.bf16 %v6469, %v6469
    %v6478 = vpack.c.bf16 %v6470, %v6470
    %v6479 = vpack.c.bf16 %v6471, %v6471
    %v6480 = vpack.c.bf16 %v6472, %v6472
    %v6481 = vpack.c.bf16 %v6473, %v6473
    %v6482 = vpack.c.bf16 %v6474, %v6474
    %6483 = vrot.lane.b32.xlu0 %v5971, 64
    %v6484 = vpop.permute.xlu0 %6483
    %v6486 = vsel %vm296, %v6475, 0
    %v6489 = vsel %vm803, %v6484, 0
    %6491 = vmatprep.subr.bf16.mxu0 0
    %6492 = vmatpush1.bf16.msra.mxu0 %v6489
    %6493 = vmatprep.subr.bf16.mxu0 0
    %6494 = vmatpush1.bf16.msra.mxu0 0
    %6495 = vmatprep.subr.bf16.mxu0 0
    %6496 = vmatpush1.bf16.msra.mxu0 0
    %6497 = vmatprep.subr.bf16.mxu0 0
    %6498 = vmatpush1.bf16.msra.mxu0 0
    %6499 = vmatprep.subr.bf16.mxu0 0
    %6500 = vmatpush1.bf16.msra.mxu0 0
    %6501 = vmatprep.subr.bf16.mxu0 0
    %6502 = vmatpush1.bf16.msra.mxu0 0
    %6503 = vmatprep.subr.bf16.mxu0 0
    %6504 = vmatpush1.bf16.msra.mxu0 0
    %6505 = vmatprep.subr.bf16.mxu0 0
    %6506 = vmatpush1.bf16.msra.mxu0 0
    %6507 = vmatprep.subr.bf16.mxu0 0
    %6508 = vmatpush1.bf16.msra.mxu0 0
    %6509 = vmatprep.subr.bf16.mxu0 0
    %6510 = vmatpush1.bf16.msra.mxu0 0
    %6511 = vmatprep.subr.bf16.mxu0 0
    %6512 = vmatpush1.bf16.msra.mxu0 0
    %6513 = vmatprep.subr.bf16.mxu0 0
    %6514 = vmatpush1.bf16.msra.mxu0 0
    %6515 = vmatprep.subr.bf16.mxu0 0
    %6516 = vmatpush1.bf16.msra.mxu0 0
    %6517 = vmatprep.subr.bf16.mxu0 0
    %6518 = vmatpush1.bf16.msra.mxu0 0
    %6519 = vmatprep.subr.bf16.mxu0 0
    %6520 = vmatpush1.bf16.msra.mxu0 0
    %6521 = vmatprep.subr.bf16.mxu0 0
    %6522 = vmatpush1.bf16.msra.mxu0 0
    %6523 = vmatprep.mubr.bf16.mxu0 0
    %6524 = vmatmul.mubr.bf16.gmra.mrb[0].mxu0 %v6486
    %v6525 = vpop.f32.mrb[0].mxu0
    %v6526 = vadd.f32 0.0, %v6525
    %v6527 = vpop.f32.mrb[0].mxu0
    %v6528 = vpop.f32.mrb[0].mxu0
    %v6529 = vpop.f32.mrb[0].mxu0
    %6530 = vdwg.mxu0
    %6531 = vrot.lane.b32.xlu0 %v5972, 64
    %v6532 = vpop.permute.xlu0 %6531
    %v6534 = vsel %vm296, %v6476, 0
    %v6537 = vsel %vm803, %v6532, 0
    %6539 = vmatprep.subr.bf16.mxu0 0
    %6540 = vmatpush1.bf16.msra.mxu0 %v6537
    %6541 = vmatprep.subr.bf16.mxu0 0
    %6542 = vmatpush1.bf16.msra.mxu0 0
    %6543 = vmatprep.subr.bf16.mxu0 0
    %6544 = vmatpush1.bf16.msra.mxu0 0
    %6545 = vmatprep.subr.bf16.mxu0 0
    %6546 = vmatpush1.bf16.msra.mxu0 0
    %6547 = vmatprep.subr.bf16.mxu0 0
    %6548 = vmatpush1.bf16.msra.mxu0 0
    %6549 = vmatprep.subr.bf16.mxu0 0
    %6550 = vmatpush1.bf16.msra.mxu0 0
    %6551 = vmatprep.subr.bf16.mxu0 0
    %6552 = vmatpush1.bf16.msra.mxu0 0
    %6553 = vmatprep.subr.bf16.mxu0 0
    %6554 = vmatpush1.bf16.msra.mxu0 0
    %6555 = vmatprep.subr.bf16.mxu0 0
    %6556 = vmatpush1.bf16.msra.mxu0 0
    %6557 = vmatprep.subr.bf16.mxu0 0
    %6558 = vmatpush1.bf16.msra.mxu0 0
    %6559 = vmatprep.subr.bf16.mxu0 0
    %6560 = vmatpush1.bf16.msra.mxu0 0
    %6561 = vmatprep.subr.bf16.mxu0 0
    %6562 = vmatpush1.bf16.msra.mxu0 0
    %6563 = vmatprep.subr.bf16.mxu0 0
    %6564 = vmatpush1.bf16.msra.mxu0 0
    %6565 = vmatprep.subr.bf16.mxu0 0
    %6566 = vmatpush1.bf16.msra.mxu0 0
    %6567 = vmatprep.subr.bf16.mxu0 0
    %6568 = vmatpush1.bf16.msra.mxu0 0
    %6569 = vmatprep.subr.bf16.mxu0 0
    %6570 = vmatpush1.bf16.msra.mxu0 0
    %6571 = vmatprep.mubr.bf16.mxu0 0
    %6572 = vmatmul.mubr.bf16.gmra.mrb[0].mxu0 %v6534
    %v6573 = vpop.f32.mrb[0].mxu0
    %v6574 = vadd.f32 0.0, %v6573
    %v6575 = vpop.f32.mrb[0].mxu0
    %v6576 = vpop.f32.mrb[0].mxu0
    %v6577 = vpop.f32.mrb[0].mxu0
    %6578 = vdwg.mxu0
    %6579 = vrot.lane.b32.xlu0 %v5973, 64
    %v6580 = vpop.permute.xlu0 %6579
    %v6582 = vsel %vm296, %v6477, 0
    %v6585 = vsel %vm803, %v6580, 0
    %6587 = vmatprep.subr.bf16.mxu0 0
    %6588 = vmatpush1.bf16.msra.mxu0 %v6585
    %6589 = vmatprep.subr.bf16.mxu0 0
    %6590 = vmatpush1.bf16.msra.mxu0 0
    %6591 = vmatprep.subr.bf16.mxu0 0
    %6592 = vmatpush1.bf16.msra.mxu0 0
    %6593 = vmatprep.subr.bf16.mxu0 0
    %6594 = vmatpush1.bf16.msra.mxu0 0
    %6595 = vmatprep.subr.bf16.mxu0 0
    %6596 = vmatpush1.bf16.msra.mxu0 0
    %6597 = vmatprep.subr.bf16.mxu0 0
    %6598 = vmatpush1.bf16.msra.mxu0 0
    %6599 = vmatprep.subr.bf16.mxu0 0
    %6600 = vmatpush1.bf16.msra.mxu0 0
    %6601 = vmatprep.subr.bf16.mxu0 0
    %6602 = vmatpush1.bf16.msra.mxu0 0
    %6603 = vmatprep.subr.bf16.mxu0 0
    %6604 = vmatpush1.bf16.msra.mxu0 0
    %6605 = vmatprep.subr.bf16.mxu0 0
    %6606 = vmatpush1.bf16.msra.mxu0 0
    %6607 = vmatprep.subr.bf16.mxu0 0
    %6608 = vmatpush1.bf16.msra.mxu0 0
    %6609 = vmatprep.subr.bf16.mxu0 0
    %6610 = vmatpush1.bf16.msra.mxu0 0
    %6611 = vmatprep.subr.bf16.mxu0 0
    %6612 = vmatpush1.bf16.msra.mxu0 0
    %6613 = vmatprep.subr.bf16.mxu0 0
    %6614 = vmatpush1.bf16.msra.mxu0 0
    %6615 = vmatprep.subr.bf16.mxu0 0
    %6616 = vmatpush1.bf16.msra.mxu0 0
    %6617 = vmatprep.subr.bf16.mxu0 0
    %6618 = vmatpush1.bf16.msra.mxu0 0
    %6619 = vmatprep.mubr.bf16.mxu0 0
    %6620 = vmatmul.mubr.bf16.gmra.mrb[0].mxu0 %v6582
    %v6621 = vpop.f32.mrb[0].mxu0
    %v6622 = vadd.f32 0.0, %v6621
    %v6623 = vpop.f32.mrb[0].mxu0
    %v6624 = vpop.f32.mrb[0].mxu0
    %v6625 = vpop.f32.mrb[0].mxu0
    %6626 = vdwg.mxu0
    %6627 = vrot.lane.b32.xlu0 %v5974, 64
    %v6628 = vpop.permute.xlu0 %6627
    %v6630 = vsel %vm296, %v6478, 0
    %v6633 = vsel %vm803, %v6628, 0
    %6635 = vmatprep.subr.bf16.mxu0 0
    %6636 = vmatpush1.bf16.msra.mxu0 %v6633
    %6637 = vmatprep.subr.bf16.mxu0 0
    %6638 = vmatpush1.bf16.msra.mxu0 0
    %6639 = vmatprep.subr.bf16.mxu0 0
    %6640 = vmatpush1.bf16.msra.mxu0 0
    %6641 = vmatprep.subr.bf16.mxu0 0
    %6642 = vmatpush1.bf16.msra.mxu0 0
    %6643 = vmatprep.subr.bf16.mxu0 0
    %6644 = vmatpush1.bf16.msra.mxu0 0
    %6645 = vmatprep.subr.bf16.mxu0 0
    %6646 = vmatpush1.bf16.msra.mxu0 0
    %6647 = vmatprep.subr.bf16.mxu0 0
    %6648 = vmatpush1.bf16.msra.mxu0 0
    %6649 = vmatprep.subr.bf16.mxu0 0
    %6650 = vmatpush1.bf16.msra.mxu0 0
    %6651 = vmatprep.subr.bf16.mxu0 0
    %6652 = vmatpush1.bf16.msra.mxu0 0
    %6653 = vmatprep.subr.bf16.mxu0 0
    %6654 = vmatpush1.bf16.msra.mxu0 0
    %6655 = vmatprep.subr.bf16.mxu0 0
    %6656 = vmatpush1.bf16.msra.mxu0 0
    %6657 = vmatprep.subr.bf16.mxu0 0
    %6658 = vmatpush1.bf16.msra.mxu0 0
    %6659 = vmatprep.subr.bf16.mxu0 0
    %6660 = vmatpush1.bf16.msra.mxu0 0
    %6661 = vmatprep.subr.bf16.mxu0 0
    %6662 = vmatpush1.bf16.msra.mxu0 0
    %6663 = vmatprep.subr.bf16.mxu0 0
    %6664 = vmatpush1.bf16.msra.mxu0 0
    %6665 = vmatprep.subr.bf16.mxu0 0
    %6666 = vmatpush1.bf16.msra.mxu0 0
    %6667 = vmatprep.mubr.bf16.mxu0 0
    %6668 = vmatmul.mubr.bf16.gmra.mrb[0].mxu0 %v6630
    %v6669 = vpop.f32.mrb[0].mxu0
    %v6670 = vadd.f32 0.0, %v6669
    %v6671 = vpop.f32.mrb[0].mxu0
    %v6672 = vpop.f32.mrb[0].mxu0
    %v6673 = vpop.f32.mrb[0].mxu0
    %6674 = vdwg.mxu0
    %6675 = vrot.lane.b32.xlu0 %v5975, 64
    %v6676 = vpop.permute.xlu0 %6675
    %v6678 = vsel %vm296, %v6479, 0
    %v6681 = vsel %vm803, %v6676, 0
    %6683 = vmatprep.subr.bf16.mxu0 0
    %6684 = vmatpush1.bf16.msra.mxu0 %v6681
    %6685 = vmatprep.subr.bf16.mxu0 0
    %6686 = vmatpush1.bf16.msra.mxu0 0
    %6687 = vmatprep.subr.bf16.mxu0 0
    %6688 = vmatpush1.bf16.msra.mxu0 0
    %6689 = vmatprep.subr.bf16.mxu0 0
    %6690 = vmatpush1.bf16.msra.mxu0 0
    %6691 = vmatprep.subr.bf16.mxu0 0
    %6692 = vmatpush1.bf16.msra.mxu0 0
    %6693 = vmatprep.subr.bf16.mxu0 0
    %6694 = vmatpush1.bf16.msra.mxu0 0
    %6695 = vmatprep.subr.bf16.mxu0 0
    %6696 = vmatpush1.bf16.msra.mxu0 0
    %6697 = vmatprep.subr.bf16.mxu0 0
    %6698 = vmatpush1.bf16.msra.mxu0 0
    %6699 = vmatprep.subr.bf16.mxu0 0
    %6700 = vmatpush1.bf16.msra.mxu0 0
    %6701 = vmatprep.subr.bf16.mxu0 0
    %6702 = vmatpush1.bf16.msra.mxu0 0
    %6703 = vmatprep.subr.bf16.mxu0 0
    %6704 = vmatpush1.bf16.msra.mxu0 0
    %6705 = vmatprep.subr.bf16.mxu0 0
    %6706 = vmatpush1.bf16.msra.mxu0 0
    %6707 = vmatprep.subr.bf16.mxu0 0
    %6708 = vmatpush1.bf16.msra.mxu0 0
    %6709 = vmatprep.subr.bf16.mxu0 0
    %6710 = vmatpush1.bf16.msra.mxu0 0
    %6711 = vmatprep.subr.bf16.mxu0 0
    %6712 = vmatpush1.bf16.msra.mxu0 0
    %6713 = vmatprep.subr.bf16.mxu0 0
    %6714 = vmatpush1.bf16.msra.mxu0 0
    %6715 = vmatprep.mubr.bf16.mxu0 0
    %6716 = vmatmul.mubr.bf16.gmra.mrb[0].mxu0 %v6678
    %v6717 = vpop.f32.mrb[0].mxu0
    %v6718 = vadd.f32 0.0, %v6717
    %v6719 = vpop.f32.mrb[0].mxu0
    %v6720 = vpop.f32.mrb[0].mxu0
    %v6721 = vpop.f32.mrb[0].mxu0
    %6722 = vdwg.mxu0
    %6723 = vrot.lane.b32.xlu0 %v5976, 64
    %v6724 = vpop.permute.xlu0 %6723
    %v6726 = vsel %vm296, %v6480, 0
    %v6729 = vsel %vm803, %v6724, 0
    %6731 = vmatprep.subr.bf16.mxu0 0
    %6732 = vmatpush1.bf16.msra.mxu0 %v6729
    %6733 = vmatprep.subr.bf16.mxu0 0
    %6734 = vmatpush1.bf16.msra.mxu0 0
    %6735 = vmatprep.subr.bf16.mxu0 0
    %6736 = vmatpush1.bf16.msra.mxu0 0
    %6737 = vmatprep.subr.bf16.mxu0 0
    %6738 = vmatpush1.bf16.msra.mxu0 0
    %6739 = vmatprep.subr.bf16.mxu0 0
    %6740 = vmatpush1.bf16.msra.mxu0 0
    %6741 = vmatprep.subr.bf16.mxu0 0
    %6742 = vmatpush1.bf16.msra.mxu0 0
    %6743 = vmatprep.subr.bf16.mxu0 0
    %6744 = vmatpush1.bf16.msra.mxu0 0
    %6745 = vmatprep.subr.bf16.mxu0 0
    %6746 = vmatpush1.bf16.msra.mxu0 0
    %6747 = vmatprep.subr.bf16.mxu0 0
    %6748 = vmatpush1.bf16.msra.mxu0 0
    %6749 = vmatprep.subr.bf16.mxu0 0
    %6750 = vmatpush1.bf16.msra.mxu0 0
    %6751 = vmatprep.subr.bf16.mxu0 0
    %6752 = vmatpush1.bf16.msra.mxu0 0
    %6753 = vmatprep.subr.bf16.mxu0 0
    %6754 = vmatpush1.bf16.msra.mxu0 0
    %6755 = vmatprep.subr.bf16.mxu0 0
    %6756 = vmatpush1.bf16.msra.mxu0 0
    %6757 = vmatprep.subr.bf16.mxu0 0
    %6758 = vmatpush1.bf16.msra.mxu0 0
    %6759 = vmatprep.subr.bf16.mxu0 0
    %6760 = vmatpush1.bf16.msra.mxu0 0
    %6761 = vmatprep.subr.bf16.mxu0 0
    %6762 = vmatpush1.bf16.msra.mxu0 0
    %6763 = vmatprep.mubr.bf16.mxu0 0
    %6764 = vmatmul.mubr.bf16.gmra.mrb[0].mxu0 %v6726
    %v6765 = vpop.f32.mrb[0].mxu0
    %v6766 = vadd.f32 0.0, %v6765
    %v6767 = vpop.f32.mrb[0].mxu0
    %v6768 = vpop.f32.mrb[0].mxu0
    %v6769 = vpop.f32.mrb[0].mxu0
    %6770 = vdwg.mxu0
    %6771 = vrot.lane.b32.xlu0 %v5977, 64
    %v6772 = vpop.permute.xlu0 %6771
    %v6774 = vsel %vm296, %v6481, 0
    %v6777 = vsel %vm803, %v6772, 0
    %6779 = vmatprep.subr.bf16.mxu0 0
    %6780 = vmatpush1.bf16.msra.mxu0 %v6777
    %6781 = vmatprep.subr.bf16.mxu0 0
    %6782 = vmatpush1.bf16.msra.mxu0 0
    %6783 = vmatprep.subr.bf16.mxu0 0
    %6784 = vmatpush1.bf16.msra.mxu0 0
    %6785 = vmatprep.subr.bf16.mxu0 0
    %6786 = vmatpush1.bf16.msra.mxu0 0
    %6787 = vmatprep.subr.bf16.mxu0 0
    %6788 = vmatpush1.bf16.msra.mxu0 0
    %6789 = vmatprep.subr.bf16.mxu0 0
    %6790 = vmatpush1.bf16.msra.mxu0 0
    %6791 = vmatprep.subr.bf16.mxu0 0
    %6792 = vmatpush1.bf16.msra.mxu0 0
    %6793 = vmatprep.subr.bf16.mxu0 0
    %6794 = vmatpush1.bf16.msra.mxu0 0
    %6795 = vmatprep.subr.bf16.mxu0 0
    %6796 = vmatpush1.bf16.msra.mxu0 0
    %6797 = vmatprep.subr.bf16.mxu0 0
    %6798 = vmatpush1.bf16.msra.mxu0 0
    %6799 = vmatprep.subr.bf16.mxu0 0
    %6800 = vmatpush1.bf16.msra.mxu0 0
    %6801 = vmatprep.subr.bf16.mxu0 0
    %6802 = vmatpush1.bf16.msra.mxu0 0
    %6803 = vmatprep.subr.bf16.mxu0 0
    %6804 = vmatpush1.bf16.msra.mxu0 0
    %6805 = vmatprep.subr.bf16.mxu0 0
    %6806 = vmatpush1.bf16.msra.mxu0 0
    %6807 = vmatprep.subr.bf16.mxu0 0
    %6808 = vmatpush1.bf16.msra.mxu0 0
    %6809 = vmatprep.subr.bf16.mxu0 0
    %6810 = vmatpush1.bf16.msra.mxu0 0
    %6811 = vmatprep.mubr.bf16.mxu0 0
    %6812 = vmatmul.mubr.bf16.gmra.mrb[0].mxu0 %v6774
    %v6813 = vpop.f32.mrb[0].mxu0
    %v6814 = vadd.f32 0.0, %v6813
    %v6815 = vpop.f32.mrb[0].mxu0
    %v6816 = vpop.f32.mrb[0].mxu0
    %v6817 = vpop.f32.mrb[0].mxu0
    %6818 = vdwg.mxu0
    %6819 = vrot.lane.b32.xlu0 %v5978, 64
    %v6820 = vpop.permute.xlu0 %6819
    %v6822 = vsel %vm296, %v6482, 0
    %v6825 = vsel %vm803, %v6820, 0
    %6827 = vmatprep.subr.bf16.mxu0 0
    %6828 = vmatpush1.bf16.msra.mxu0 %v6825
    %6829 = vmatprep.subr.bf16.mxu0 0
    %6830 = vmatpush1.bf16.msra.mxu0 0
    %6831 = vmatprep.subr.bf16.mxu0 0
    %6832 = vmatpush1.bf16.msra.mxu0 0
    %6833 = vmatprep.subr.bf16.mxu0 0
    %6834 = vmatpush1.bf16.msra.mxu0 0
    %6835 = vmatprep.subr.bf16.mxu0 0
    %6836 = vmatpush1.bf16.msra.mxu0 0
    %6837 = vmatprep.subr.bf16.mxu0 0
    %6838 = vmatpush1.bf16.msra.mxu0 0
    %6839 = vmatprep.subr.bf16.mxu0 0
    %6840 = vmatpush1.bf16.msra.mxu0 0
    %6841 = vmatprep.subr.bf16.mxu0 0
    %6842 = vmatpush1.bf16.msra.mxu0 0
    %6843 = vmatprep.subr.bf16.mxu0 0
    %6844 = vmatpush1.bf16.msra.mxu0 0
    %6845 = vmatprep.subr.bf16.mxu0 0
    %6846 = vmatpush1.bf16.msra.mxu0 0
    %6847 = vmatprep.subr.bf16.mxu0 0
    %6848 = vmatpush1.bf16.msra.mxu0 0
    %6849 = vmatprep.subr.bf16.mxu0 0
    %6850 = vmatpush1.bf16.msra.mxu0 0
    %6851 = vmatprep.subr.bf16.mxu0 0
    %6852 = vmatpush1.bf16.msra.mxu0 0
    %6853 = vmatprep.subr.bf16.mxu0 0
    %6854 = vmatpush1.bf16.msra.mxu0 0
    %6855 = vmatprep.subr.bf16.mxu0 0
    %6856 = vmatpush1.bf16.msra.mxu0 0
    %6857 = vmatprep.subr.bf16.mxu0 0
    %6858 = vmatpush1.bf16.msra.mxu0 0
    %6859 = vmatprep.mubr.bf16.mxu0 0
    %6860 = vmatmul.mubr.bf16.gmra.mrb[0].mxu0 %v6822
    %v6861 = vpop.f32.mrb[0].mxu0
    %v6862 = vadd.f32 0.0, %v6861
    %v6863 = vpop.f32.mrb[0].mxu0
    %v6864 = vpop.f32.mrb[0].mxu0
    %v6865 = vpop.f32.mrb[0].mxu0
    %6866 = vdwg.mxu0
    %v6867 = vpack.c.bf16 %v6574, %v6526
    %v6868 = vpack.c.bf16 %v6670, %v6622
    %v6870 = vsel %vm296, %v6868, 0
    %v6873 = vsel %vm803, %v5947, 0
    %6875 = vmatprep.subr.bf16.mxu0 0
    %6876 = vmatpush1.bf16.msra.mxu0 %v6873
    %6877 = vmatprep.subr.bf16.mxu0 0
    %6878 = vmatpush1.bf16.msra.mxu0 0
    %6879 = vmatprep.subr.bf16.mxu0 0
    %6880 = vmatpush1.bf16.msra.mxu0 0
    %6881 = vmatprep.subr.bf16.mxu0 0
    %6882 = vmatpush1.bf16.msra.mxu0 0
    %6883 = vmatprep.subr.bf16.mxu0 0
    %6884 = vmatpush1.bf16.msra.mxu0 0
    %6885 = vmatprep.subr.bf16.mxu0 0
    %6886 = vmatpush1.bf16.msra.mxu0 0
    %6887 = vmatprep.subr.bf16.mxu0 0
    %6888 = vmatpush1.bf16.msra.mxu0 0
    %6889 = vmatprep.subr.bf16.mxu0 0
    %6890 = vmatpush1.bf16.msra.mxu0 0
    %6891 = vmatprep.subr.bf16.mxu0 0
    %6892 = vmatpush1.bf16.msra.mxu0 0
    %6893 = vmatprep.subr.bf16.mxu0 0
    %6894 = vmatpush1.bf16.msra.mxu0 0
    %6895 = vmatprep.subr.bf16.mxu0 0
    %6896 = vmatpush1.bf16.msra.mxu0 0
    %6897 = vmatprep.subr.bf16.mxu0 0
    %6898 = vmatpush1.bf16.msra.mxu0 0
    %6899 = vmatprep.subr.bf16.mxu0 0
    %6900 = vmatpush1.bf16.msra.mxu0 0
    %6901 = vmatprep.subr.bf16.mxu0 0
    %6902 = vmatpush1.bf16.msra.mxu0 0
    %6903 = vmatprep.subr.bf16.mxu0 0
    %6904 = vmatpush1.bf16.msra.mxu0 0
    %6905 = vmatprep.subr.bf16.mxu0 0
    %6906 = vmatpush1.bf16.msra.mxu0 0
    %6907 = vmatprep.mubr.bf16.mxu0 0
    %6908 = vmatmul.mubr.bf16.gmra.mrb[0].mxu0 %v6870
    %v6909 = vpop.f32.mrb[0].mxu0
    %v6910 = vadd.f32 0.0, %v6909
    %v6911 = vpop.f32.mrb[0].mxu0
    %v6912 = vpop.f32.mrb[0].mxu0
    %v6913 = vadd.f32 0.0, %v6912
    %v6914 = vpop.f32.mrb[0].mxu0
    %6915 = vdwg.mxu0
    %v6917 = vsel %vm296, %v6867, 0
    %v6920 = vsel %vm803, %v5946, 0
    %6922 = vmatprep.subr.bf16.mxu0 0
    %6923 = vmatpush1.bf16.msra.mxu0 %v6920
    %6924 = vmatprep.subr.bf16.mxu0 0
    %6925 = vmatpush1.bf16.msra.mxu0 0
    %6926 = vmatprep.subr.bf16.mxu0 0
    %6927 = vmatpush1.bf16.msra.mxu0 0
    %6928 = vmatprep.subr.bf16.mxu0 0
    %6929 = vmatpush1.bf16.msra.mxu0 0
    %6930 = vmatprep.subr.bf16.mxu0 0
    %6931 = vmatpush1.bf16.msra.mxu0 0
    %6932 = vmatprep.subr.bf16.mxu0 0
    %6933 = vmatpush1.bf16.msra.mxu0 0
    %6934 = vmatprep.subr.bf16.mxu0 0
    %6935 = vmatpush1.bf16.msra.mxu0 0
    %6936 = vmatprep.subr.bf16.mxu0 0
    %6937 = vmatpush1.bf16.msra.mxu0 0
    %6938 = vmatprep.subr.bf16.mxu0 0
    %6939 = vmatpush1.bf16.msra.mxu0 0
    %6940 = vmatprep.subr.bf16.mxu0 0
    %6941 = vmatpush1.bf16.msra.mxu0 0
    %6942 = vmatprep.subr.bf16.mxu0 0
    %6943 = vmatpush1.bf16.msra.mxu0 0
    %6944 = vmatprep.subr.bf16.mxu0 0
    %6945 = vmatpush1.bf16.msra.mxu0 0
    %6946 = vmatprep.subr.bf16.mxu0 0
    %6947 = vmatpush1.bf16.msra.mxu0 0
    %6948 = vmatprep.subr.bf16.mxu0 0
    %6949 = vmatpush1.bf16.msra.mxu0 0
    %6950 = vmatprep.subr.bf16.mxu0 0
    %6951 = vmatpush1.bf16.msra.mxu0 0
    %6952 = vmatprep.subr.bf16.mxu0 0
    %6953 = vmatpush1.bf16.msra.mxu0 0
    %6954 = vmatprep.mubr.bf16.mxu0 0
    %6955 = vmatmul.mubr.bf16.gmra.mrb[0].mxu0 %v6917
    %v6956 = vpop.f32.mrb[0].mxu0
    %v6957 = vadd.f32 %v6910, %v6956
    %v6958 = vpop.f32.mrb[0].mxu0
    %v6959 = vpop.f32.mrb[0].mxu0
    %v6960 = vadd.f32 %v6913, %v6959
    %v6961 = vpop.f32.mrb[0].mxu0
    %6962 = vdwg.mxu0
    %v6963 = vpack.c.bf16 %v6766, %v6718
    %v6965 = vsel %vm296, %v6963, 0
    %v6968 = vsel %vm803, %v5948, 0
    %6970 = vmatprep.subr.bf16.mxu0 0
    %6971 = vmatpush1.bf16.msra.mxu0 %v6968
    %6972 = vmatprep.subr.bf16.mxu0 0
    %6973 = vmatpush1.bf16.msra.mxu0 0
    %6974 = vmatprep.subr.bf16.mxu0 0
    %6975 = vmatpush1.bf16.msra.mxu0 0
    %6976 = vmatprep.subr.bf16.mxu0 0
    %6977 = vmatpush1.bf16.msra.mxu0 0
    %6978 = vmatprep.subr.bf16.mxu0 0
    %6979 = vmatpush1.bf16.msra.mxu0 0
    %6980 = vmatprep.subr.bf16.mxu0 0
    %6981 = vmatpush1.bf16.msra.mxu0 0
    %6982 = vmatprep.subr.bf16.mxu0 0
    %6983 = vmatpush1.bf16.msra.mxu0 0
    %6984 = vmatprep.subr.bf16.mxu0 0
    %6985 = vmatpush1.bf16.msra.mxu0 0
    %6986 = vmatprep.subr.bf16.mxu0 0
    %6987 = vmatpush1.bf16.msra.mxu0 0
    %6988 = vmatprep.subr.bf16.mxu0 0
    %6989 = vmatpush1.bf16.msra.mxu0 0
    %6990 = vmatprep.subr.bf16.mxu0 0
    %6991 = vmatpush1.bf16.msra.mxu0 0
    %6992 = vmatprep.subr.bf16.mxu0 0
    %6993 = vmatpush1.bf16.msra.mxu0 0
    %6994 = vmatprep.subr.bf16.mxu0 0
    %6995 = vmatpush1.bf16.msra.mxu0 0
    %6996 = vmatprep.subr.bf16.mxu0 0
    %6997 = vmatpush1.bf16.msra.mxu0 0
    %6998 = vmatprep.subr.bf16.mxu0 0
    %6999 = vmatpush1.bf16.msra.mxu0 0
    %7000 = vmatprep.subr.bf16.mxu0 0
    %7001 = vmatpush1.bf16.msra.mxu0 0
    %7002 = vmatprep.mubr.bf16.mxu0 0
    %7003 = vmatmul.mubr.bf16.gmra.mrb[0].mxu0 %v6965
    %v7004 = vpop.f32.mrb[0].mxu0
    %v7005 = vadd.f32 0.0, %v7004
    %v7006 = vpop.f32.mrb[0].mxu0
    %v7007 = vpop.f32.mrb[0].mxu0
    %v7008 = vadd.f32 0.0, %v7007
    %v7009 = vpop.f32.mrb[0].mxu0
    %7010 = vdwg.mxu0
    %v7011 = vadd.f32 %v6957, %v7005
    %v7012 = vadd.f32 %v6960, %v7008
    %v7013 = vpack.c.bf16 %v6862, %v6814
    %v7015 = vsel %vm296, %v7013, 0
    %v7018 = vsel %vm803, %v5949, 0
    %7020 = vmatprep.subr.bf16.mxu0 0
    %7021 = vmatpush1.bf16.msra.mxu0 %v7018
    %7022 = vmatprep.subr.bf16.mxu0 0
    %7023 = vmatpush1.bf16.msra.mxu0 0
    %7024 = vmatprep.subr.bf16.mxu0 0
    %7025 = vmatpush1.bf16.msra.mxu0 0
    %7026 = vmatprep.subr.bf16.mxu0 0
    %7027 = vmatpush1.bf16.msra.mxu0 0
    %7028 = vmatprep.subr.bf16.mxu0 0
    %7029 = vmatpush1.bf16.msra.mxu0 0
    %7030 = vmatprep.subr.bf16.mxu0 0
    %7031 = vmatpush1.bf16.msra.mxu0 0
    %7032 = vmatprep.subr.bf16.mxu0 0
    %7033 = vmatpush1.bf16.msra.mxu0 0
    %7034 = vmatprep.subr.bf16.mxu0 0
    %7035 = vmatpush1.bf16.msra.mxu0 0
    %7036 = vmatprep.subr.bf16.mxu0 0
    %7037 = vmatpush1.bf16.msra.mxu0 0
    %7038 = vmatprep.subr.bf16.mxu0 0
    %7039 = vmatpush1.bf16.msra.mxu0 0
    %7040 = vmatprep.subr.bf16.mxu0 0
    %7041 = vmatpush1.bf16.msra.mxu0 0
    %7042 = vmatprep.subr.bf16.mxu0 0
    %7043 = vmatpush1.bf16.msra.mxu0 0
    %7044 = vmatprep.subr.bf16.mxu0 0
    %7045 = vmatpush1.bf16.msra.mxu0 0
    %7046 = vmatprep.subr.bf16.mxu0 0
    %7047 = vmatpush1.bf16.msra.mxu0 0
    %7048 = vmatprep.subr.bf16.mxu0 0
    %7049 = vmatpush1.bf16.msra.mxu0 0
    %7050 = vmatprep.subr.bf16.mxu0 0
    %7051 = vmatpush1.bf16.msra.mxu0 0
    %7052 = vmatprep.mubr.bf16.mxu0 0
    %7053 = vmatmul.mubr.bf16.gmra.mrb[0].mxu0 %v7015
    %v7054 = vpop.f32.mrb[0].mxu0
    %v7055 = vadd.f32 0.0, %v7054
    %v7056 = vpop.f32.mrb[0].mxu0
    %v7057 = vpop.f32.mrb[0].mxu0
    %v7058 = vadd.f32 0.0, %v7057
    %v7059 = vpop.f32.mrb[0].mxu0
    %7060 = vdwg.mxu0
    %v7061 = vadd.f32 %v7011, %v7055
    %v7062 = vadd.f32 %v7012, %v7058
    %v7063 = vlaneseq
    %v7064 = vshrl.u32 %v7063, 7
    %v7065 = vsub.s32 0, %v7064
    %v7066 = vrot.slane %v5950, %v7065
    %v7067 = vadd.f32 %v7061, %v7066
    %v7068 = vadd.f32 %v7062, %v7066
    %v7069 = vadd.f32 %v5838, %v7067
    %v7070 = vadd.f32 %v5839, %v7068
    %v7071 = vld [vmem:[#allocation5 + $0x150] sm:$0x1]
    %v7072 = vld [vmem:[#allocation5 + $0x158] sm:$0x1]
    %v7073 = vsel %vm154, %v7069, 0.0
    %7074 = vadd.xlane.f32.xlu0 %v7073
    %v7075 = vpop.xlane.xlu0 %7074
    %v7076 = vsel %vm154, %v7070, 0.0
    %7077 = vadd.xlane.f32.xlu0 %v7076
    %v7078 = vpop.xlane.xlu0 %7077
    %v7079 = vmul.f32 %v7075, %v161
    %v7080 = vmul.f32 %v7078, %v161
    %v7081 = vsub.f32 %v7069, %v7079
    %v7082 = vsub.f32 %v7070, %v7080
    %v7083 = vmul.f32 %v7081, %v7081
    %v7084 = vmul.f32 %v7082, %v7082
    %v7085 = vsel %vm154, %v7083, 0.0
    %7086 = vadd.xlane.f32.xlu0 %v7085
    %v7087 = vpop.xlane.xlu0 %7086
    %v7088 = vsel %vm154, %v7084, 0.0
    %7089 = vadd.xlane.f32.xlu0 %v7088
    %v7090 = vpop.xlane.xlu0 %7089
    %v7091 = vmul.f32 %v7087, %v161
    %v7092 = vmul.f32 %v7090, %v161
    %v7093 = vadd.f32 %v7091, 1e-06
    %v7094 = vadd.f32 %v7092, 1e-06
    %v7095 = vrsqrt.pop %v7093
    %v7096 = vrsqrt.pop %v7094
    %v7097 = vmul.f32 %v7081, %v7095
    %v7098 = vmul.f32 %v7082, %v7096
    %v7099 = vlaneseq
    %v7100 = vshrl.u32 %v7099, 7
    %v7101 = vsub.s32 0, %v7100
    %v7102 = vrot.slane %v7071, %v7101
    %v7103 = vmul.f32 %v7097, %v7102
    %v7104 = vmul.f32 %v7098, %v7102
    %v7105 = vlaneseq
    %v7106 = vshrl.u32 %v7105, 7
    %v7107 = vsub.s32 0, %v7106
    %v7108 = vrot.slane %v7072, %v7107
    %v7109 = vadd.f32 %v7103, %v7108
    %v7110 = vadd.f32 %v7104, %v7108
    %v7111 = vpack.c.bf16 %v7110, %v7109
    %v7112 = vld [vmem:[#allocation2 + $0x150] sm:$0xf]
    %v7113 = vld [vmem:[#allocation2 + $0x154] sm:$0xf]
    %v7114 = vld [vmem:[#allocation2 + $0x158] sm:$0xf]
    %v7115 = vld [vmem:[#allocation2 + $0x15c] sm:$0xf]
    %v7116 = vld [vmem:[#allocation5 + $0x128] sm:$0x1]
    %v7117 = vlaneseq
    %v7118 = vshrl.u32 %v7117, 7
    %v7119 = vsub.s32 0, %v7118
    %v7120 = vrot.slane %v7116, %v7119
    %v7125 = vunpack.c.l.b16 %v7112
    %v7126 = vunpack.c.l.b16 %v7113
    %v7127 = vunpack.c.l.b16 %v7114
    %v7128 = vunpack.c.l.b16 %v7115
    %v7129 = vpack.c.b16 %v7126, %v7125
    %v7130 = vpack.c.b16 %v7128, %v7127
    %v7134 = vsel %vm154, %v7111, 0
    %7136 = vmatprep.subr.bf16.mxu0 0
    %7137 = vmatpush1.bf16.msra.mxu0 %v7129
    %7138 = vmatprep.subr.bf16.mxu0 0
    %7139 = vmatpush1.bf16.msra.mxu0 %v7130
    %7140 = vmatprep.subr.bf16.mxu0 0
    %7141 = vmatpush1.bf16.msra.mxu0 0
    %7142 = vmatprep.subr.bf16.mxu0 0
    %7143 = vmatpush1.bf16.msra.mxu0 0
    %7144 = vmatprep.subr.bf16.mxu0 0
    %7145 = vmatpush1.bf16.msra.mxu0 0
    %7146 = vmatprep.subr.bf16.mxu0 0
    %7147 = vmatpush1.bf16.msra.mxu0 0
    %7148 = vmatprep.subr.bf16.mxu0 0
    %7149 = vmatpush1.bf16.msra.mxu0 0
    %7150 = vmatprep.subr.bf16.mxu0 0
    %7151 = vmatpush1.bf16.msra.mxu0 0
    %7152 = vmatprep.subr.bf16.mxu0 0
    %7153 = vmatpush1.bf16.msra.mxu0 0
    %7154 = vmatprep.subr.bf16.mxu0 0
    %7155 = vmatpush1.bf16.msra.mxu0 0
    %7156 = vmatprep.subr.bf16.mxu0 0
    %7157 = vmatpush1.bf16.msra.mxu0 0
    %7158 = vmatprep.subr.bf16.mxu0 0
    %7159 = vmatpush1.bf16.msra.mxu0 0
    %7160 = vmatprep.subr.bf16.mxu0 0
    %7161 = vmatpush1.bf16.msra.mxu0 0
    %7162 = vmatprep.subr.bf16.mxu0 0
    %7163 = vmatpush1.bf16.msra.mxu0 0
    %7164 = vmatprep.subr.bf16.mxu0 0
    %7165 = vmatpush1.bf16.msra.mxu0 0
    %7166 = vmatprep.subr.bf16.mxu0 0
    %7167 = vmatpush1.bf16.msra.mxu0 0
    %7168 = vmatprep.mubr.bf16.mxu0 0
    %7169 = vmatmul.mubr.bf16.gmra.mrb[0].mxu0 %v7134
    %v7170 = vpop.f32.mrb[0].mxu0
    %v7171 = vadd.f32 %v7120, %v7170
    %v7172 = vpop.f32.mrb[0].mxu0
    %v7173 = vpop.f32.mrb[0].mxu0
    %v7174 = vadd.f32 %v7120, %v7173
    %v7175 = vpop.f32.mrb[0].mxu0
    %7176 = vdwg.mxu0
    %v7177 = vld [vmem:[#allocation2 + $0x160] sm:$0xf]
    %v7178 = vld [vmem:[#allocation2 + $0x164] sm:$0xf]
    %v7179 = vld [vmem:[#allocation2 + $0x168] sm:$0xf]
    %v7180 = vld [vmem:[#allocation2 + $0x16c] sm:$0xf]
    %v7181 = vld [vmem:[#allocation5 + $0x130] sm:$0x1]
    %v7182 = vlaneseq
    %v7183 = vshrl.u32 %v7182, 7
    %v7184 = vsub.s32 0, %v7183
    %v7185 = vrot.slane %v7181, %v7184
    %v7190 = vunpack.c.l.b16 %v7177
    %v7191 = vunpack.c.l.b16 %v7178
    %v7192 = vunpack.c.l.b16 %v7179
    %v7193 = vunpack.c.l.b16 %v7180
    %v7194 = vpack.c.b16 %v7191, %v7190
    %v7195 = vpack.c.b16 %v7193, %v7192
    %7198 = vmatprep.subr.bf16.mxu0 0
    %7199 = vmatpush1.bf16.msra.mxu0 %v7194
    %7200 = vmatprep.subr.bf16.mxu0 0
    %7201 = vmatpush1.bf16.msra.mxu0 %v7195
    %7202 = vmatprep.subr.bf16.mxu0 0
    %7203 = vmatpush1.bf16.msra.mxu0 0
    %7204 = vmatprep.subr.bf16.mxu0 0
    %7205 = vmatpush1.bf16.msra.mxu0 0
    %7206 = vmatprep.subr.bf16.mxu0 0
    %7207 = vmatpush1.bf16.msra.mxu0 0
    %7208 = vmatprep.subr.bf16.mxu0 0
    %7209 = vmatpush1.bf16.msra.mxu0 0
    %7210 = vmatprep.subr.bf16.mxu0 0
    %7211 = vmatpush1.bf16.msra.mxu0 0
    %7212 = vmatprep.subr.bf16.mxu0 0
    %7213 = vmatpush1.bf16.msra.mxu0 0
    %7214 = vmatprep.subr.bf16.mxu0 0
    %7215 = vmatpush1.bf16.msra.mxu0 0
    %7216 = vmatprep.subr.bf16.mxu0 0
    %7217 = vmatpush1.bf16.msra.mxu0 0
    %7218 = vmatprep.subr.bf16.mxu0 0
    %7219 = vmatpush1.bf16.msra.mxu0 0
    %7220 = vmatprep.subr.bf16.mxu0 0
    %7221 = vmatpush1.bf16.msra.mxu0 0
    %7222 = vmatprep.subr.bf16.mxu0 0
    %7223 = vmatpush1.bf16.msra.mxu0 0
    %7224 = vmatprep.subr.bf16.mxu0 0
    %7225 = vmatpush1.bf16.msra.mxu0 0
    %7226 = vmatprep.subr.bf16.mxu0 0
    %7227 = vmatpush1.bf16.msra.mxu0 0
    %7228 = vmatprep.subr.bf16.mxu0 0
    %7229 = vmatpush1.bf16.msra.mxu0 0
    %7230 = vmatprep.mubr.bf16.mxu0 0
    %7231 = vmatmul.mubr.bf16.gmra.mrb[0].mxu0 %v4468
    %v7232 = vpop.f32.mrb[0].mxu0
    %v7233 = vadd.f32 %v7185, %v7232
    %v7234 = vpop.f32.mrb[0].mxu0
    %v7235 = vpop.f32.mrb[0].mxu0
    %v7236 = vadd.f32 %v7185, %v7235
    %v7237 = vpop.f32.mrb[0].mxu0
    %7238 = vdwg.mxu0
    %v7239 = vld [vmem:[#allocation2 + $0x170] sm:$0xf]
    %v7240 = vld [vmem:[#allocation2 + $0x174] sm:$0xf]
    %v7241 = vld [vmem:[#allocation2 + $0x178] sm:$0xf]
    %v7242 = vld [vmem:[#allocation2 + $0x17c] sm:$0xf]
    %v7243 = vld [vmem:[#allocation5 + $0x138] sm:$0x1]
    %7246 = vrot.lane.b32.xlu0 %v7171, 120
    %v7247 = vpop.permute.xlu0 %7246
    %7248 = vrot.lane.b32.xlu0 %v7174, 120
    %v7249 = vpop.permute.xlu0 %7248
    %7252 = vrot.lane.b32.xlu0 %v7171, 112
    %v7253 = vpop.permute.xlu0 %7252
    %7254 = vrot.lane.b32.xlu0 %v7174, 112
    %v7255 = vpop.permute.xlu0 %7254
    %7258 = vrot.lane.b32.xlu0 %v7171, 104
    %v7259 = vpop.permute.xlu0 %7258
    %7260 = vrot.lane.b32.xlu0 %v7174, 104
    %v7261 = vpop.permute.xlu0 %7260
    %v7264 = vpack.c.bf16 %v7171, %v7171
    %v7265 = vpack.c.bf16 %v7174, %v7174
    %v7266 = vpack.c.bf16 %v7247, %v7247
    %v7267 = vpack.c.bf16 %v7249, %v7249
    %v7268 = vpack.c.bf16 %v7253, %v7253
    %v7269 = vpack.c.bf16 %v7255, %v7255
    %v7270 = vpack.c.bf16 %v7259, %v7259
    %v7271 = vpack.c.bf16 %v7261, %v7261
    %7274 = vrot.lane.b32.xlu0 %v7233, 120
    %v7275 = vpop.permute.xlu0 %7274
    %7276 = vrot.lane.b32.xlu0 %v7236, 120
    %v7277 = vpop.permute.xlu0 %7276
    %7280 = vrot.lane.b32.xlu0 %v7233, 112
    %v7281 = vpop.permute.xlu0 %7280
    %7282 = vrot.lane.b32.xlu0 %v7236, 112
    %v7283 = vpop.permute.xlu0 %7282
    %7286 = vrot.lane.b32.xlu0 %v7233, 104
    %v7287 = vpop.permute.xlu0 %7286
    %7288 = vrot.lane.b32.xlu0 %v7236, 104
    %v7289 = vpop.permute.xlu0 %7288
    %v7292 = vpack.c.bf16 %v7233, %v7233
    %v7293 = vpack.c.bf16 %v7236, %v7236
    %v7294 = vpack.c.bf16 %v7275, %v7275
    %v7295 = vpack.c.bf16 %v7277, %v7277
    %v7296 = vpack.c.bf16 %v7281, %v7281
    %v7297 = vpack.c.bf16 %v7283, %v7283
    %v7298 = vpack.c.bf16 %v7287, %v7287
    %v7299 = vpack.c.bf16 %v7289, %v7289
    %v7301 = vsel %vm296, %v7264, 0
    %v7304 = vsel %vm296, %v7292, 0
    %7306 = vmatprep.subr.bf16.mxu0 0
    %7307 = vmatpush1.bf16.xpose.msra.mxu0 %v7304
    %7308 = vmatprep.subr.bf16.mxu0 0
    %7309 = vmatpush1.bf16.xpose.msra.mxu0 0
    %7310 = vmatprep.subr.bf16.mxu0 0
    %7311 = vmatpush1.bf16.xpose.msra.mxu0 0
    %7312 = vmatprep.subr.bf16.mxu0 0
    %7313 = vmatpush1.bf16.xpose.msra.mxu0 0
    %7314 = vmatprep.subr.bf16.mxu0 0
    %7315 = vmatpush1.bf16.xpose.msra.mxu0 0
    %7316 = vmatprep.subr.bf16.mxu0 0
    %7317 = vmatpush1.bf16.xpose.msra.mxu0 0
    %7318 = vmatprep.subr.bf16.mxu0 0
    %7319 = vmatpush1.bf16.xpose.msra.mxu0 0
    %7320 = vmatprep.subr.bf16.mxu0 0
    %7321 = vmatpush1.bf16.xpose.msra.mxu0 0
    %7322 = vmatprep.subr.bf16.mxu0 0
    %7323 = vmatpush1.bf16.xpose.msra.mxu0 0
    %7324 = vmatprep.subr.bf16.mxu0 0
    %7325 = vmatpush1.bf16.xpose.msra.mxu0 0
    %7326 = vmatprep.subr.bf16.mxu0 0
    %7327 = vmatpush1.bf16.xpose.msra.mxu0 0
    %7328 = vmatprep.subr.bf16.mxu0 0
    %7329 = vmatpush1.bf16.xpose.msra.mxu0 0
    %7330 = vmatprep.subr.bf16.mxu0 0
    %7331 = vmatpush1.bf16.xpose.msra.mxu0 0
    %7332 = vmatprep.subr.bf16.mxu0 0
    %7333 = vmatpush1.bf16.xpose.msra.mxu0 0
    %7334 = vmatprep.subr.bf16.mxu0 0
    %7335 = vmatpush1.bf16.xpose.msra.mxu0 0
    %7336 = vmatprep.subr.bf16.mxu0 0
    %7337 = vmatpush1.bf16.xpose.msra.mxu0 0
    %7338 = vmatprep.mubr.bf16.mxu0 0
    %7339 = vmatmul.mubr.bf16.gmra.mrb[0].mxu0 %v7301
    %v7340 = vpop.f32.mrb[0].mxu0
    %v7341 = vadd.f32 0.0, %v7340
    %v7342 = vpop.f32.mrb[0].mxu0
    %v7343 = vpop.f32.mrb[0].mxu0
    %v7344 = vpop.f32.mrb[0].mxu0
    %7345 = vdwg.mxu0
    %v7347 = vsel %vm296, %v7265, 0
    %v7350 = vsel %vm296, %v7293, 0
    %7352 = vmatprep.subr.bf16.mxu0 0
    %7353 = vmatpush1.bf16.xpose.msra.mxu0 %v7350
    %7354 = vmatprep.subr.bf16.mxu0 0
    %7355 = vmatpush1.bf16.xpose.msra.mxu0 0
    %7356 = vmatprep.subr.bf16.mxu0 0
    %7357 = vmatpush1.bf16.xpose.msra.mxu0 0
    %7358 = vmatprep.subr.bf16.mxu0 0
    %7359 = vmatpush1.bf16.xpose.msra.mxu0 0
    %7360 = vmatprep.subr.bf16.mxu0 0
    %7361 = vmatpush1.bf16.xpose.msra.mxu0 0
    %7362 = vmatprep.subr.bf16.mxu0 0
    %7363 = vmatpush1.bf16.xpose.msra.mxu0 0
    %7364 = vmatprep.subr.bf16.mxu0 0
    %7365 = vmatpush1.bf16.xpose.msra.mxu0 0
    %7366 = vmatprep.subr.bf16.mxu0 0
    %7367 = vmatpush1.bf16.xpose.msra.mxu0 0
    %7368 = vmatprep.subr.bf16.mxu0 0
    %7369 = vmatpush1.bf16.xpose.msra.mxu0 0
    %7370 = vmatprep.subr.bf16.mxu0 0
    %7371 = vmatpush1.bf16.xpose.msra.mxu0 0
    %7372 = vmatprep.subr.bf16.mxu0 0
    %7373 = vmatpush1.bf16.xpose.msra.mxu0 0
    %7374 = vmatprep.subr.bf16.mxu0 0
    %7375 = vmatpush1.bf16.xpose.msra.mxu0 0
    %7376 = vmatprep.subr.bf16.mxu0 0
    %7377 = vmatpush1.bf16.xpose.msra.mxu0 0
    %7378 = vmatprep.subr.bf16.mxu0 0
    %7379 = vmatpush1.bf16.xpose.msra.mxu0 0
    %7380 = vmatprep.subr.bf16.mxu0 0
    %7381 = vmatpush1.bf16.xpose.msra.mxu0 0
    %7382 = vmatprep.subr.bf16.mxu0 0
    %7383 = vmatpush1.bf16.xpose.msra.mxu0 0
    %7384 = vmatprep.mubr.bf16.mxu0 0
    %7385 = vmatmul.mubr.bf16.gmra.mrb[0].mxu0 %v7347
    %v7386 = vpop.f32.mrb[0].mxu0
    %v7387 = vadd.f32 0.0, %v7386
    %v7388 = vpop.f32.mrb[0].mxu0
    %v7389 = vpop.f32.mrb[0].mxu0
    %v7390 = vpop.f32.mrb[0].mxu0
    %7391 = vdwg.mxu0
    %v7393 = vsel %vm296, %v7266, 0
    %v7396 = vsel %vm296, %v7294, 0
    %7398 = vmatprep.subr.bf16.mxu0 0
    %7399 = vmatpush1.bf16.xpose.msra.mxu0 %v7396
    %7400 = vmatprep.subr.bf16.mxu0 0
    %7401 = vmatpush1.bf16.xpose.msra.mxu0 0
    %7402 = vmatprep.subr.bf16.mxu0 0
    %7403 = vmatpush1.bf16.xpose.msra.mxu0 0
    %7404 = vmatprep.subr.bf16.mxu0 0
    %7405 = vmatpush1.bf16.xpose.msra.mxu0 0
    %7406 = vmatprep.subr.bf16.mxu0 0
    %7407 = vmatpush1.bf16.xpose.msra.mxu0 0
    %7408 = vmatprep.subr.bf16.mxu0 0
    %7409 = vmatpush1.bf16.xpose.msra.mxu0 0
    %7410 = vmatprep.subr.bf16.mxu0 0
    %7411 = vmatpush1.bf16.xpose.msra.mxu0 0
    %7412 = vmatprep.subr.bf16.mxu0 0
    %7413 = vmatpush1.bf16.xpose.msra.mxu0 0
    %7414 = vmatprep.subr.bf16.mxu0 0
    %7415 = vmatpush1.bf16.xpose.msra.mxu0 0
    %7416 = vmatprep.subr.bf16.mxu0 0
    %7417 = vmatpush1.bf16.xpose.msra.mxu0 0
    %7418 = vmatprep.subr.bf16.mxu0 0
    %7419 = vmatpush1.bf16.xpose.msra.mxu0 0
    %7420 = vmatprep.subr.bf16.mxu0 0
    %7421 = vmatpush1.bf16.xpose.msra.mxu0 0
    %7422 = vmatprep.subr.bf16.mxu0 0
    %7423 = vmatpush1.bf16.xpose.msra.mxu0 0
    %7424 = vmatprep.subr.bf16.mxu0 0
    %7425 = vmatpush1.bf16.xpose.msra.mxu0 0
    %7426 = vmatprep.subr.bf16.mxu0 0
    %7427 = vmatpush1.bf16.xpose.msra.mxu0 0
    %7428 = vmatprep.subr.bf16.mxu0 0
    %7429 = vmatpush1.bf16.xpose.msra.mxu0 0
    %7430 = vmatprep.mubr.bf16.mxu0 0
    %7431 = vmatmul.mubr.bf16.gmra.mrb[0].mxu0 %v7393
    %v7432 = vpop.f32.mrb[0].mxu0
    %v7433 = vadd.f32 0.0, %v7432
    %v7434 = vpop.f32.mrb[0].mxu0
    %v7435 = vpop.f32.mrb[0].mxu0
    %v7436 = vpop.f32.mrb[0].mxu0
    %7437 = vdwg.mxu0
    %v7439 = vsel %vm296, %v7267, 0
    %v7442 = vsel %vm296, %v7295, 0
    %7444 = vmatprep.subr.bf16.mxu0 0
    %7445 = vmatpush1.bf16.xpose.msra.mxu0 %v7442
    %7446 = vmatprep.subr.bf16.mxu0 0
    %7447 = vmatpush1.bf16.xpose.msra.mxu0 0
    %7448 = vmatprep.subr.bf16.mxu0 0
    %7449 = vmatpush1.bf16.xpose.msra.mxu0 0
    %7450 = vmatprep.subr.bf16.mxu0 0
    %7451 = vmatpush1.bf16.xpose.msra.mxu0 0
    %7452 = vmatprep.subr.bf16.mxu0 0
    %7453 = vmatpush1.bf16.xpose.msra.mxu0 0
    %7454 = vmatprep.subr.bf16.mxu0 0
    %7455 = vmatpush1.bf16.xpose.msra.mxu0 0
    %7456 = vmatprep.subr.bf16.mxu0 0
    %7457 = vmatpush1.bf16.xpose.msra.mxu0 0
    %7458 = vmatprep.subr.bf16.mxu0 0
    %7459 = vmatpush1.bf16.xpose.msra.mxu0 0
    %7460 = vmatprep.subr.bf16.mxu0 0
    %7461 = vmatpush1.bf16.xpose.msra.mxu0 0
    %7462 = vmatprep.subr.bf16.mxu0 0
    %7463 = vmatpush1.bf16.xpose.msra.mxu0 0
    %7464 = vmatprep.subr.bf16.mxu0 0
    %7465 = vmatpush1.bf16.xpose.msra.mxu0 0
    %7466 = vmatprep.subr.bf16.mxu0 0
    %7467 = vmatpush1.bf16.xpose.msra.mxu0 0
    %7468 = vmatprep.subr.bf16.mxu0 0
    %7469 = vmatpush1.bf16.xpose.msra.mxu0 0
    %7470 = vmatprep.subr.bf16.mxu0 0
    %7471 = vmatpush1.bf16.xpose.msra.mxu0 0
    %7472 = vmatprep.subr.bf16.mxu0 0
    %7473 = vmatpush1.bf16.xpose.msra.mxu0 0
    %7474 = vmatprep.subr.bf16.mxu0 0
    %7475 = vmatpush1.bf16.xpose.msra.mxu0 0
    %7476 = vmatprep.mubr.bf16.mxu0 0
    %7477 = vmatmul.mubr.bf16.gmra.mrb[0].mxu0 %v7439
    %v7478 = vpop.f32.mrb[0].mxu0
    %v7479 = vadd.f32 0.0, %v7478
    %v7480 = vpop.f32.mrb[0].mxu0
    %v7481 = vpop.f32.mrb[0].mxu0
    %v7482 = vpop.f32.mrb[0].mxu0
    %7483 = vdwg.mxu0
    %v7485 = vsel %vm296, %v7268, 0
    %v7488 = vsel %vm296, %v7296, 0
    %7490 = vmatprep.subr.bf16.mxu0 0
    %7491 = vmatpush1.bf16.xpose.msra.mxu0 %v7488
    %7492 = vmatprep.subr.bf16.mxu0 0
    %7493 = vmatpush1.bf16.xpose.msra.mxu0 0
    %7494 = vmatprep.subr.bf16.mxu0 0
    %7495 = vmatpush1.bf16.xpose.msra.mxu0 0
    %7496 = vmatprep.subr.bf16.mxu0 0
    %7497 = vmatpush1.bf16.xpose.msra.mxu0 0
    %7498 = vmatprep.subr.bf16.mxu0 0
    %7499 = vmatpush1.bf16.xpose.msra.mxu0 0
    %7500 = vmatprep.subr.bf16.mxu0 0
    %7501 = vmatpush1.bf16.xpose.msra.mxu0 0
    %7502 = vmatprep.subr.bf16.mxu0 0
    %7503 = vmatpush1.bf16.xpose.msra.mxu0 0
    %7504 = vmatprep.subr.bf16.mxu0 0
    %7505 = vmatpush1.bf16.xpose.msra.mxu0 0
    %7506 = vmatprep.subr.bf16.mxu0 0
    %7507 = vmatpush1.bf16.xpose.msra.mxu0 0
    %7508 = vmatprep.subr.bf16.mxu0 0
    %7509 = vmatpush1.bf16.xpose.msra.mxu0 0
    %7510 = vmatprep.subr.bf16.mxu0 0
    %7511 = vmatpush1.bf16.xpose.msra.mxu0 0
    %7512 = vmatprep.subr.bf16.mxu0 0
    %7513 = vmatpush1.bf16.xpose.msra.mxu0 0
    %7514 = vmatprep.subr.bf16.mxu0 0
    %7515 = vmatpush1.bf16.xpose.msra.mxu0 0
    %7516 = vmatprep.subr.bf16.mxu0 0
    %7517 = vmatpush1.bf16.xpose.msra.mxu0 0
    %7518 = vmatprep.subr.bf16.mxu0 0
    %7519 = vmatpush1.bf16.xpose.msra.mxu0 0
    %7520 = vmatprep.subr.bf16.mxu0 0
    %7521 = vmatpush1.bf16.xpose.msra.mxu0 0
    %7522 = vmatprep.mubr.bf16.mxu0 0
    %7523 = vmatmul.mubr.bf16.gmra.mrb[0].mxu0 %v7485
    %v7524 = vpop.f32.mrb[0].mxu0
    %v7525 = vadd.f32 0.0, %v7524
    %v7526 = vpop.f32.mrb[0].mxu0
    %v7527 = vpop.f32.mrb[0].mxu0
    %v7528 = vpop.f32.mrb[0].mxu0
    %7529 = vdwg.mxu0
    %v7531 = vsel %vm296, %v7269, 0
    %v7534 = vsel %vm296, %v7297, 0
    %7536 = vmatprep.subr.bf16.mxu0 0
    %7537 = vmatpush1.bf16.xpose.msra.mxu0 %v7534
    %7538 = vmatprep.subr.bf16.mxu0 0
    %7539 = vmatpush1.bf16.xpose.msra.mxu0 0
    %7540 = vmatprep.subr.bf16.mxu0 0
    %7541 = vmatpush1.bf16.xpose.msra.mxu0 0
    %7542 = vmatprep.subr.bf16.mxu0 0
    %7543 = vmatpush1.bf16.xpose.msra.mxu0 0
    %7544 = vmatprep.subr.bf16.mxu0 0
    %7545 = vmatpush1.bf16.xpose.msra.mxu0 0
    %7546 = vmatprep.subr.bf16.mxu0 0
    %7547 = vmatpush1.bf16.xpose.msra.mxu0 0
    %7548 = vmatprep.subr.bf16.mxu0 0
    %7549 = vmatpush1.bf16.xpose.msra.mxu0 0
    %7550 = vmatprep.subr.bf16.mxu0 0
    %7551 = vmatpush1.bf16.xpose.msra.mxu0 0
    %7552 = vmatprep.subr.bf16.mxu0 0
    %7553 = vmatpush1.bf16.xpose.msra.mxu0 0
    %7554 = vmatprep.subr.bf16.mxu0 0
    %7555 = vmatpush1.bf16.xpose.msra.mxu0 0
    %7556 = vmatprep.subr.bf16.mxu0 0
    %7557 = vmatpush1.bf16.xpose.msra.mxu0 0
    %7558 = vmatprep.subr.bf16.mxu0 0
    %7559 = vmatpush1.bf16.xpose.msra.mxu0 0
    %7560 = vmatprep.subr.bf16.mxu0 0
    %7561 = vmatpush1.bf16.xpose.msra.mxu0 0
    %7562 = vmatprep.subr.bf16.mxu0 0
    %7563 = vmatpush1.bf16.xpose.msra.mxu0 0
    %7564 = vmatprep.subr.bf16.mxu0 0
    %7565 = vmatpush1.bf16.xpose.msra.mxu0 0
    %7566 = vmatprep.subr.bf16.mxu0 0
    %7567 = vmatpush1.bf16.xpose.msra.mxu0 0
    %7568 = vmatprep.mubr.bf16.mxu0 0
    %7569 = vmatmul.mubr.bf16.gmra.mrb[0].mxu0 %v7531
    %v7570 = vpop.f32.mrb[0].mxu0
    %v7571 = vadd.f32 0.0, %v7570
    %v7572 = vpop.f32.mrb[0].mxu0
    %v7573 = vpop.f32.mrb[0].mxu0
    %v7574 = vpop.f32.mrb[0].mxu0
    %7575 = vdwg.mxu0
    %v7577 = vsel %vm296, %v7270, 0
    %v7580 = vsel %vm296, %v7298, 0
    %7582 = vmatprep.subr.bf16.mxu0 0
    %7583 = vmatpush1.bf16.xpose.msra.mxu0 %v7580
    %7584 = vmatprep.subr.bf16.mxu0 0
    %7585 = vmatpush1.bf16.xpose.msra.mxu0 0
    %7586 = vmatprep.subr.bf16.mxu0 0
    %7587 = vmatpush1.bf16.xpose.msra.mxu0 0
    %7588 = vmatprep.subr.bf16.mxu0 0
    %7589 = vmatpush1.bf16.xpose.msra.mxu0 0
    %7590 = vmatprep.subr.bf16.mxu0 0
    %7591 = vmatpush1.bf16.xpose.msra.mxu0 0
    %7592 = vmatprep.subr.bf16.mxu0 0
    %7593 = vmatpush1.bf16.xpose.msra.mxu0 0
    %7594 = vmatprep.subr.bf16.mxu0 0
    %7595 = vmatpush1.bf16.xpose.msra.mxu0 0
    %7596 = vmatprep.subr.bf16.mxu0 0
    %7597 = vmatpush1.bf16.xpose.msra.mxu0 0
    %7598 = vmatprep.subr.bf16.mxu0 0
    %7599 = vmatpush1.bf16.xpose.msra.mxu0 0
    %7600 = vmatprep.subr.bf16.mxu0 0
    %7601 = vmatpush1.bf16.xpose.msra.mxu0 0
    %7602 = vmatprep.subr.bf16.mxu0 0
    %7603 = vmatpush1.bf16.xpose.msra.mxu0 0
    %7604 = vmatprep.subr.bf16.mxu0 0
    %7605 = vmatpush1.bf16.xpose.msra.mxu0 0
    %7606 = vmatprep.subr.bf16.mxu0 0
    %7607 = vmatpush1.bf16.xpose.msra.mxu0 0
    %7608 = vmatprep.subr.bf16.mxu0 0
    %7609 = vmatpush1.bf16.xpose.msra.mxu0 0
    %7610 = vmatprep.subr.bf16.mxu0 0
    %7611 = vmatpush1.bf16.xpose.msra.mxu0 0
    %7612 = vmatprep.subr.bf16.mxu0 0
    %7613 = vmatpush1.bf16.xpose.msra.mxu0 0
    %7614 = vmatprep.mubr.bf16.mxu0 0
    %7615 = vmatmul.mubr.bf16.gmra.mrb[0].mxu0 %v7577
    %v7616 = vpop.f32.mrb[0].mxu0
    %v7617 = vadd.f32 0.0, %v7616
    %v7618 = vpop.f32.mrb[0].mxu0
    %v7619 = vpop.f32.mrb[0].mxu0
    %v7620 = vpop.f32.mrb[0].mxu0
    %7621 = vdwg.mxu0
    %v7623 = vsel %vm296, %v7271, 0
    %v7626 = vsel %vm296, %v7299, 0
    %7628 = vmatprep.subr.bf16.mxu0 0
    %7629 = vmatpush1.bf16.xpose.msra.mxu0 %v7626
    %7630 = vmatprep.subr.bf16.mxu0 0
    %7631 = vmatpush1.bf16.xpose.msra.mxu0 0
    %7632 = vmatprep.subr.bf16.mxu0 0
    %7633 = vmatpush1.bf16.xpose.msra.mxu0 0
    %7634 = vmatprep.subr.bf16.mxu0 0
    %7635 = vmatpush1.bf16.xpose.msra.mxu0 0
    %7636 = vmatprep.subr.bf16.mxu0 0
    %7637 = vmatpush1.bf16.xpose.msra.mxu0 0
    %7638 = vmatprep.subr.bf16.mxu0 0
    %7639 = vmatpush1.bf16.xpose.msra.mxu0 0
    %7640 = vmatprep.subr.bf16.mxu0 0
    %7641 = vmatpush1.bf16.xpose.msra.mxu0 0
    %7642 = vmatprep.subr.bf16.mxu0 0
    %7643 = vmatpush1.bf16.xpose.msra.mxu0 0
    %7644 = vmatprep.subr.bf16.mxu0 0
    %7645 = vmatpush1.bf16.xpose.msra.mxu0 0
    %7646 = vmatprep.subr.bf16.mxu0 0
    %7647 = vmatpush1.bf16.xpose.msra.mxu0 0
    %7648 = vmatprep.subr.bf16.mxu0 0
    %7649 = vmatpush1.bf16.xpose.msra.mxu0 0
    %7650 = vmatprep.subr.bf16.mxu0 0
    %7651 = vmatpush1.bf16.xpose.msra.mxu0 0
    %7652 = vmatprep.subr.bf16.mxu0 0
    %7653 = vmatpush1.bf16.xpose.msra.mxu0 0
    %7654 = vmatprep.subr.bf16.mxu0 0
    %7655 = vmatpush1.bf16.xpose.msra.mxu0 0
    %7656 = vmatprep.subr.bf16.mxu0 0
    %7657 = vmatpush1.bf16.xpose.msra.mxu0 0
    %7658 = vmatprep.subr.bf16.mxu0 0
    %7659 = vmatpush1.bf16.xpose.msra.mxu0 0
    %7660 = vmatprep.mubr.bf16.mxu0 0
    %7661 = vmatmul.mubr.bf16.gmra.mrb[0].mxu0 %v7623
    %v7662 = vpop.f32.mrb[0].mxu0
    %v7663 = vadd.f32 0.0, %v7662
    %v7664 = vpop.f32.mrb[0].mxu0
    %v7665 = vpop.f32.mrb[0].mxu0
    %v7666 = vpop.f32.mrb[0].mxu0
    %7667 = vdwg.mxu0
    %v7668 = vmul.f32 %v7341, 0.35355338
    %v7669 = vmul.f32 %v7387, 0.35355338
    %v7670 = vmul.f32 %v7433, 0.35355338
    %v7671 = vmul.f32 %v7479, 0.35355338
    %v7672 = vmul.f32 %v7525, 0.35355338
    %v7673 = vmul.f32 %v7571, 0.35355338
    %v7674 = vmul.f32 %v7617, 0.35355338
    %v7675 = vmul.f32 %v7663, 0.35355338
    %v7676 = vadd.f32 %v7668, %v76
    %v7677 = vadd.f32 %v7669, %v77
    %v7678 = vadd.f32 %v7670, %v78
    %v7679 = vadd.f32 %v7671, %v79
    %v7680 = vadd.f32 %v7672, %v80
    %v7681 = vadd.f32 %v7673, %v81
    %v7682 = vadd.f32 %v7674, %v82
    %v7683 = vadd.f32 %v7675, %v83
    %v7684 = vsel %vm296, %v7676, -inf
    %7685 = vmax.xlane.f32.xlu0 %v7684
    %v7686 = vpop.xlane.xlu0 %7685
    %v7687 = vsel %vm296, %v7677, -inf
    %7688 = vmax.xlane.f32.xlu0 %v7687
    %v7689 = vpop.xlane.xlu0 %7688
    %v7690 = vsel %vm296, %v7678, -inf
    %7691 = vmax.xlane.f32.xlu0 %v7690
    %v7692 = vpop.xlane.xlu0 %7691
    %v7693 = vsel %vm296, %v7679, -inf
    %7694 = vmax.xlane.f32.xlu0 %v7693
    %v7695 = vpop.xlane.xlu0 %7694
    %v7696 = vsel %vm296, %v7680, -inf
    %7697 = vmax.xlane.f32.xlu0 %v7696
    %v7698 = vpop.xlane.xlu0 %7697
    %v7699 = vsel %vm296, %v7681, -inf
    %7700 = vmax.xlane.f32.xlu0 %v7699
    %v7701 = vpop.xlane.xlu0 %7700
    %v7702 = vsel %vm296, %v7682, -inf
    %7703 = vmax.xlane.f32.xlu0 %v7702
    %v7704 = vpop.xlane.xlu0 %7703
    %v7705 = vsel %vm296, %v7683, -inf
    %7706 = vmax.xlane.f32.xlu0 %v7705
    %v7707 = vpop.xlane.xlu0 %7706
    %v7708 = vsub.f32 %v7676, %v7686
    %v7709 = vsub.f32 %v7677, %v7689
    %v7710 = vsub.f32 %v7678, %v7692
    %v7711 = vsub.f32 %v7679, %v7695
    %v7712 = vsub.f32 %v7680, %v7698
    %v7713 = vsub.f32 %v7681, %v7701
    %v7714 = vsub.f32 %v7682, %v7704
    %v7715 = vsub.f32 %v7683, %v7707
    %v7716 = vmul.f32 %v7708, 1.442695
    %v7717 = vpow.pop %v7716
    %v7718 = vmul.f32 %v7709, 1.442695
    %v7719 = vpow.pop %v7718
    %v7720 = vmul.f32 %v7710, 1.442695
    %v7721 = vpow.pop %v7720
    %v7722 = vmul.f32 %v7711, 1.442695
    %v7723 = vpow.pop %v7722
    %v7724 = vmul.f32 %v7712, 1.442695
    %v7725 = vpow.pop %v7724
    %v7726 = vmul.f32 %v7713, 1.442695
    %v7727 = vpow.pop %v7726
    %v7728 = vmul.f32 %v7714, 1.442695
    %v7729 = vpow.pop %v7728
    %v7730 = vmul.f32 %v7715, 1.442695
    %v7731 = vpow.pop %v7730
    %v7732 = vsel %vm296, %v7717, 0.0
    %7733 = vadd.xlane.f32.xlu0 %v7732
    %v7734 = vpop.xlane.xlu0 %7733
    %v7735 = vsel %vm296, %v7719, 0.0
    %7736 = vadd.xlane.f32.xlu0 %v7735
    %v7737 = vpop.xlane.xlu0 %7736
    %v7738 = vsel %vm296, %v7721, 0.0
    %7739 = vadd.xlane.f32.xlu0 %v7738
    %v7740 = vpop.xlane.xlu0 %7739
    %v7741 = vsel %vm296, %v7723, 0.0
    %7742 = vadd.xlane.f32.xlu0 %v7741
    %v7743 = vpop.xlane.xlu0 %7742
    %v7744 = vsel %vm296, %v7725, 0.0
    %7745 = vadd.xlane.f32.xlu0 %v7744
    %v7746 = vpop.xlane.xlu0 %7745
    %v7747 = vsel %vm296, %v7727, 0.0
    %7748 = vadd.xlane.f32.xlu0 %v7747
    %v7749 = vpop.xlane.xlu0 %7748
    %v7750 = vsel %vm296, %v7729, 0.0
    %7751 = vadd.xlane.f32.xlu0 %v7750
    %v7752 = vpop.xlane.xlu0 %7751
    %v7753 = vsel %vm296, %v7731, 0.0
    %7754 = vadd.xlane.f32.xlu0 %v7753
    %v7755 = vpop.xlane.xlu0 %7754
    %v7756 = vrcp.pop %v7734
    %v7757 = vrcp.pop %v7737
    %v7758 = vrcp.pop %v7740
    %v7759 = vrcp.pop %v7743
    %v7760 = vrcp.pop %v7746
    %v7761 = vrcp.pop %v7749
    %v7762 = vrcp.pop %v7752
    %v7763 = vrcp.pop %v7755
    %v7764 = vmul.f32 %v7717, %v7756
    %v7765 = vmul.f32 %v7719, %v7757
    %v7766 = vmul.f32 %v7721, %v7758
    %v7767 = vmul.f32 %v7723, %v7759
    %v7768 = vmul.f32 %v7725, %v7760
    %v7769 = vmul.f32 %v7727, %v7761
    %v7770 = vmul.f32 %v7729, %v7762
    %v7771 = vmul.f32 %v7731, %v7763
    %v7772 = vpack.c.bf16 %v7764, %v7764
    %v7773 = vpack.c.bf16 %v7765, %v7765
    %v7774 = vpack.c.bf16 %v7766, %v7766
    %v7775 = vpack.c.bf16 %v7767, %v7767
    %v7776 = vpack.c.bf16 %v7768, %v7768
    %v7777 = vpack.c.bf16 %v7769, %v7769
    %v7778 = vpack.c.bf16 %v7770, %v7770
    %v7779 = vpack.c.bf16 %v7771, %v7771
    %7781 = vrot.lane.b32.xlu0 %v7292, 96
    %v7782 = vpop.permute.xlu0 %7781
    %v7784 = vsel %vm296, %v7772, 0
    %v7787 = vsel %vm803, %v7782, 0
    %7789 = vmatprep.subr.bf16.mxu0 0
    %7790 = vmatpush1.bf16.msra.mxu0 %v7787
    %7791 = vmatprep.subr.bf16.mxu0 0
    %7792 = vmatpush1.bf16.msra.mxu0 0
    %7793 = vmatprep.subr.bf16.mxu0 0
    %7794 = vmatpush1.bf16.msra.mxu0 0
    %7795 = vmatprep.subr.bf16.mxu0 0
    %7796 = vmatpush1.bf16.msra.mxu0 0
    %7797 = vmatprep.subr.bf16.mxu0 0
    %7798 = vmatpush1.bf16.msra.mxu0 0
    %7799 = vmatprep.subr.bf16.mxu0 0
    %7800 = vmatpush1.bf16.msra.mxu0 0
    %7801 = vmatprep.subr.bf16.mxu0 0
    %7802 = vmatpush1.bf16.msra.mxu0 0
    %7803 = vmatprep.subr.bf16.mxu0 0
    %7804 = vmatpush1.bf16.msra.mxu0 0
    %7805 = vmatprep.subr.bf16.mxu0 0
    %7806 = vmatpush1.bf16.msra.mxu0 0
    %7807 = vmatprep.subr.bf16.mxu0 0
    %7808 = vmatpush1.bf16.msra.mxu0 0
    %7809 = vmatprep.subr.bf16.mxu0 0
    %7810 = vmatpush1.bf16.msra.mxu0 0
    %7811 = vmatprep.subr.bf16.mxu0 0
    %7812 = vmatpush1.bf16.msra.mxu0 0
    %7813 = vmatprep.subr.bf16.mxu0 0
    %7814 = vmatpush1.bf16.msra.mxu0 0
    %7815 = vmatprep.subr.bf16.mxu0 0
    %7816 = vmatpush1.bf16.msra.mxu0 0
    %7817 = vmatprep.subr.bf16.mxu0 0
    %7818 = vmatpush1.bf16.msra.mxu0 0
    %7819 = vmatprep.subr.bf16.mxu0 0
    %7820 = vmatpush1.bf16.msra.mxu0 0
    %7821 = vmatprep.mubr.bf16.mxu0 0
    %7822 = vmatmul.mubr.bf16.gmra.mrb[0].mxu0 %v7784
    %v7823 = vpop.f32.mrb[0].mxu0
    %v7824 = vadd.f32 0.0, %v7823
    %v7825 = vpop.f32.mrb[0].mxu0
    %v7826 = vpop.f32.mrb[0].mxu0
    %v7827 = vpop.f32.mrb[0].mxu0
    %7828 = vdwg.mxu0
    %7830 = vrot.lane.b32.xlu0 %v7293, 96
    %v7831 = vpop.permute.xlu0 %7830
    %v7833 = vsel %vm296, %v7773, 0
    %v7836 = vsel %vm803, %v7831, 0
    %7838 = vmatprep.subr.bf16.mxu0 0
    %7839 = vmatpush1.bf16.msra.mxu0 %v7836
    %7840 = vmatprep.subr.bf16.mxu0 0
    %7841 = vmatpush1.bf16.msra.mxu0 0
    %7842 = vmatprep.subr.bf16.mxu0 0
    %7843 = vmatpush1.bf16.msra.mxu0 0
    %7844 = vmatprep.subr.bf16.mxu0 0
    %7845 = vmatpush1.bf16.msra.mxu0 0
    %7846 = vmatprep.subr.bf16.mxu0 0
    %7847 = vmatpush1.bf16.msra.mxu0 0
    %7848 = vmatprep.subr.bf16.mxu0 0
    %7849 = vmatpush1.bf16.msra.mxu0 0
    %7850 = vmatprep.subr.bf16.mxu0 0
    %7851 = vmatpush1.bf16.msra.mxu0 0
    %7852 = vmatprep.subr.bf16.mxu0 0
    %7853 = vmatpush1.bf16.msra.mxu0 0
    %7854 = vmatprep.subr.bf16.mxu0 0
    %7855 = vmatpush1.bf16.msra.mxu0 0
    %7856 = vmatprep.subr.bf16.mxu0 0
    %7857 = vmatpush1.bf16.msra.mxu0 0
    %7858 = vmatprep.subr.bf16.mxu0 0
    %7859 = vmatpush1.bf16.msra.mxu0 0
    %7860 = vmatprep.subr.bf16.mxu0 0
    %7861 = vmatpush1.bf16.msra.mxu0 0
    %7862 = vmatprep.subr.bf16.mxu0 0
    %7863 = vmatpush1.bf16.msra.mxu0 0
    %7864 = vmatprep.subr.bf16.mxu0 0
    %7865 = vmatpush1.bf16.msra.mxu0 0
    %7866 = vmatprep.subr.bf16.mxu0 0
    %7867 = vmatpush1.bf16.msra.mxu0 0
    %7868 = vmatprep.subr.bf16.mxu0 0
    %7869 = vmatpush1.bf16.msra.mxu0 0
    %7870 = vmatprep.mubr.bf16.mxu0 0
    %7871 = vmatmul.mubr.bf16.gmra.mrb[0].mxu0 %v7833
    %v7872 = vpop.f32.mrb[0].mxu0
    %v7873 = vadd.f32 0.0, %v7872
    %v7874 = vpop.f32.mrb[0].mxu0
    %v7875 = vpop.f32.mrb[0].mxu0
    %v7876 = vpop.f32.mrb[0].mxu0
    %7877 = vdwg.mxu0
    %7879 = vrot.lane.b32.xlu0 %v7294, 96
    %v7880 = vpop.permute.xlu0 %7879
    %v7882 = vsel %vm296, %v7774, 0
    %v7885 = vsel %vm803, %v7880, 0
    %7887 = vmatprep.subr.bf16.mxu0 0
    %7888 = vmatpush1.bf16.msra.mxu0 %v7885
    %7889 = vmatprep.subr.bf16.mxu0 0
    %7890 = vmatpush1.bf16.msra.mxu0 0
    %7891 = vmatprep.subr.bf16.mxu0 0
    %7892 = vmatpush1.bf16.msra.mxu0 0
    %7893 = vmatprep.subr.bf16.mxu0 0
    %7894 = vmatpush1.bf16.msra.mxu0 0
    %7895 = vmatprep.subr.bf16.mxu0 0
    %7896 = vmatpush1.bf16.msra.mxu0 0
    %7897 = vmatprep.subr.bf16.mxu0 0
    %7898 = vmatpush1.bf16.msra.mxu0 0
    %7899 = vmatprep.subr.bf16.mxu0 0
    %7900 = vmatpush1.bf16.msra.mxu0 0
    %7901 = vmatprep.subr.bf16.mxu0 0
    %7902 = vmatpush1.bf16.msra.mxu0 0
    %7903 = vmatprep.subr.bf16.mxu0 0
    %7904 = vmatpush1.bf16.msra.mxu0 0
    %7905 = vmatprep.subr.bf16.mxu0 0
    %7906 = vmatpush1.bf16.msra.mxu0 0
    %7907 = vmatprep.subr.bf16.mxu0 0
    %7908 = vmatpush1.bf16.msra.mxu0 0
    %7909 = vmatprep.subr.bf16.mxu0 0
    %7910 = vmatpush1.bf16.msra.mxu0 0
    %7911 = vmatprep.subr.bf16.mxu0 0
    %7912 = vmatpush1.bf16.msra.mxu0 0
    %7913 = vmatprep.subr.bf16.mxu0 0
    %7914 = vmatpush1.bf16.msra.mxu0 0
    %7915 = vmatprep.subr.bf16.mxu0 0
    %7916 = vmatpush1.bf16.msra.mxu0 0
    %7917 = vmatprep.subr.bf16.mxu0 0
    %7918 = vmatpush1.bf16.msra.mxu0 0
    %7919 = vmatprep.mubr.bf16.mxu0 0
    %7920 = vmatmul.mubr.bf16.gmra.mrb[0].mxu0 %v7882
    %v7921 = vpop.f32.mrb[0].mxu0
    %v7922 = vadd.f32 0.0, %v7921
    %v7923 = vpop.f32.mrb[0].mxu0
    %v7924 = vpop.f32.mrb[0].mxu0
    %v7925 = vpop.f32.mrb[0].mxu0
    %7926 = vdwg.mxu0
    %7928 = vrot.lane.b32.xlu0 %v7295, 96
    %v7929 = vpop.permute.xlu0 %7928
    %v7931 = vsel %vm296, %v7775, 0
    %v7934 = vsel %vm803, %v7929, 0
    %7936 = vmatprep.subr.bf16.mxu0 0
    %7937 = vmatpush1.bf16.msra.mxu0 %v7934
    %7938 = vmatprep.subr.bf16.mxu0 0
    %7939 = vmatpush1.bf16.msra.mxu0 0
    %7940 = vmatprep.subr.bf16.mxu0 0
    %7941 = vmatpush1.bf16.msra.mxu0 0
    %7942 = vmatprep.subr.bf16.mxu0 0
    %7943 = vmatpush1.bf16.msra.mxu0 0
    %7944 = vmatprep.subr.bf16.mxu0 0
    %7945 = vmatpush1.bf16.msra.mxu0 0
    %7946 = vmatprep.subr.bf16.mxu0 0
    %7947 = vmatpush1.bf16.msra.mxu0 0
    %7948 = vmatprep.subr.bf16.mxu0 0
    %7949 = vmatpush1.bf16.msra.mxu0 0
    %7950 = vmatprep.subr.bf16.mxu0 0
    %7951 = vmatpush1.bf16.msra.mxu0 0
    %7952 = vmatprep.subr.bf16.mxu0 0
    %7953 = vmatpush1.bf16.msra.mxu0 0
    %7954 = vmatprep.subr.bf16.mxu0 0
    %7955 = vmatpush1.bf16.msra.mxu0 0
    %7956 = vmatprep.subr.bf16.mxu0 0
    %7957 = vmatpush1.bf16.msra.mxu0 0
    %7958 = vmatprep.subr.bf16.mxu0 0
    %7959 = vmatpush1.bf16.msra.mxu0 0
    %7960 = vmatprep.subr.bf16.mxu0 0
    %7961 = vmatpush1.bf16.msra.mxu0 0
    %7962 = vmatprep.subr.bf16.mxu0 0
    %7963 = vmatpush1.bf16.msra.mxu0 0
    %7964 = vmatprep.subr.bf16.mxu0 0
    %7965 = vmatpush1.bf16.msra.mxu0 0
    %7966 = vmatprep.subr.bf16.mxu0 0
    %7967 = vmatpush1.bf16.msra.mxu0 0
    %7968 = vmatprep.mubr.bf16.mxu0 0
    %7969 = vmatmul.mubr.bf16.gmra.mrb[0].mxu0 %v7931
    %v7970 = vpop.f32.mrb[0].mxu0
    %v7971 = vadd.f32 0.0, %v7970
    %v7972 = vpop.f32.mrb[0].mxu0
    %v7973 = vpop.f32.mrb[0].mxu0
    %v7974 = vpop.f32.mrb[0].mxu0
    %7975 = vdwg.mxu0
    %7977 = vrot.lane.b32.xlu0 %v7296, 96
    %v7978 = vpop.permute.xlu0 %7977
    %v7980 = vsel %vm296, %v7776, 0
    %v7983 = vsel %vm803, %v7978, 0
    %7985 = vmatprep.subr.bf16.mxu0 0
    %7986 = vmatpush1.bf16.msra.mxu0 %v7983
    %7987 = vmatprep.subr.bf16.mxu0 0
    %7988 = vmatpush1.bf16.msra.mxu0 0
    %7989 = vmatprep.subr.bf16.mxu0 0
    %7990 = vmatpush1.bf16.msra.mxu0 0
    %7991 = vmatprep.subr.bf16.mxu0 0
    %7992 = vmatpush1.bf16.msra.mxu0 0
    %7993 = vmatprep.subr.bf16.mxu0 0
    %7994 = vmatpush1.bf16.msra.mxu0 0
    %7995 = vmatprep.subr.bf16.mxu0 0
    %7996 = vmatpush1.bf16.msra.mxu0 0
    %7997 = vmatprep.subr.bf16.mxu0 0
    %7998 = vmatpush1.bf16.msra.mxu0 0
    %7999 = vmatprep.subr.bf16.mxu0 0
    %8000 = vmatpush1.bf16.msra.mxu0 0
    %8001 = vmatprep.subr.bf16.mxu0 0
    %8002 = vmatpush1.bf16.msra.mxu0 0
    %8003 = vmatprep.subr.bf16.mxu0 0
    %8004 = vmatpush1.bf16.msra.mxu0 0
    %8005 = vmatprep.subr.bf16.mxu0 0
    %8006 = vmatpush1.bf16.msra.mxu0 0
    %8007 = vmatprep.subr.bf16.mxu0 0
    %8008 = vmatpush1.bf16.msra.mxu0 0
    %8009 = vmatprep.subr.bf16.mxu0 0
    %8010 = vmatpush1.bf16.msra.mxu0 0
    %8011 = vmatprep.subr.bf16.mxu0 0
    %8012 = vmatpush1.bf16.msra.mxu0 0
    %8013 = vmatprep.subr.bf16.mxu0 0
    %8014 = vmatpush1.bf16.msra.mxu0 0
    %8015 = vmatprep.subr.bf16.mxu0 0
    %8016 = vmatpush1.bf16.msra.mxu0 0
    %8017 = vmatprep.mubr.bf16.mxu0 0
    %8018 = vmatmul.mubr.bf16.gmra.mrb[0].mxu0 %v7980
    %v8019 = vpop.f32.mrb[0].mxu0
    %v8020 = vadd.f32 0.0, %v8019
    %v8021 = vpop.f32.mrb[0].mxu0
    %v8022 = vpop.f32.mrb[0].mxu0
    %v8023 = vpop.f32.mrb[0].mxu0
    %8024 = vdwg.mxu0
    %8026 = vrot.lane.b32.xlu0 %v7297, 96
    %v8027 = vpop.permute.xlu0 %8026
    %v8029 = vsel %vm296, %v7777, 0
    %v8032 = vsel %vm803, %v8027, 0
    %8034 = vmatprep.subr.bf16.mxu0 0
    %8035 = vmatpush1.bf16.msra.mxu0 %v8032
    %8036 = vmatprep.subr.bf16.mxu0 0
    %8037 = vmatpush1.bf16.msra.mxu0 0
    %8038 = vmatprep.subr.bf16.mxu0 0
    %8039 = vmatpush1.bf16.msra.mxu0 0
    %8040 = vmatprep.subr.bf16.mxu0 0
    %8041 = vmatpush1.bf16.msra.mxu0 0
    %8042 = vmatprep.subr.bf16.mxu0 0
    %8043 = vmatpush1.bf16.msra.mxu0 0
    %8044 = vmatprep.subr.bf16.mxu0 0
    %8045 = vmatpush1.bf16.msra.mxu0 0
    %8046 = vmatprep.subr.bf16.mxu0 0
    %8047 = vmatpush1.bf16.msra.mxu0 0
    %8048 = vmatprep.subr.bf16.mxu0 0
    %8049 = vmatpush1.bf16.msra.mxu0 0
    %8050 = vmatprep.subr.bf16.mxu0 0
    %8051 = vmatpush1.bf16.msra.mxu0 0
    %8052 = vmatprep.subr.bf16.mxu0 0
    %8053 = vmatpush1.bf16.msra.mxu0 0
    %8054 = vmatprep.subr.bf16.mxu0 0
    %8055 = vmatpush1.bf16.msra.mxu0 0
    %8056 = vmatprep.subr.bf16.mxu0 0
    %8057 = vmatpush1.bf16.msra.mxu0 0
    %8058 = vmatprep.subr.bf16.mxu0 0
    %8059 = vmatpush1.bf16.msra.mxu0 0
    %8060 = vmatprep.subr.bf16.mxu0 0
    %8061 = vmatpush1.bf16.msra.mxu0 0
    %8062 = vmatprep.subr.bf16.mxu0 0
    %8063 = vmatpush1.bf16.msra.mxu0 0
    %8064 = vmatprep.subr.bf16.mxu0 0
    %8065 = vmatpush1.bf16.msra.mxu0 0
    %8066 = vmatprep.mubr.bf16.mxu0 0
    %8067 = vmatmul.mubr.bf16.gmra.mrb[0].mxu0 %v8029
    %v8068 = vpop.f32.mrb[0].mxu0
    %v8069 = vadd.f32 0.0, %v8068
    %v8070 = vpop.f32.mrb[0].mxu0
    %v8071 = vpop.f32.mrb[0].mxu0
    %v8072 = vpop.f32.mrb[0].mxu0
    %8073 = vdwg.mxu0
    %8075 = vrot.lane.b32.xlu0 %v7298, 96
    %v8076 = vpop.permute.xlu0 %8075
    %v8078 = vsel %vm296, %v7778, 0
    %v8081 = vsel %vm803, %v8076, 0
    %8083 = vmatprep.subr.bf16.mxu0 0
    %8084 = vmatpush1.bf16.msra.mxu0 %v8081
    %8085 = vmatprep.subr.bf16.mxu0 0
    %8086 = vmatpush1.bf16.msra.mxu0 0
    %8087 = vmatprep.subr.bf16.mxu0 0
    %8088 = vmatpush1.bf16.msra.mxu0 0
    %8089 = vmatprep.subr.bf16.mxu0 0
    %8090 = vmatpush1.bf16.msra.mxu0 0
    %8091 = vmatprep.subr.bf16.mxu0 0
    %8092 = vmatpush1.bf16.msra.mxu0 0
    %8093 = vmatprep.subr.bf16.mxu0 0
    %8094 = vmatpush1.bf16.msra.mxu0 0
    %8095 = vmatprep.subr.bf16.mxu0 0
    %8096 = vmatpush1.bf16.msra.mxu0 0
    %8097 = vmatprep.subr.bf16.mxu0 0
    %8098 = vmatpush1.bf16.msra.mxu0 0
    %8099 = vmatprep.subr.bf16.mxu0 0
    %8100 = vmatpush1.bf16.msra.mxu0 0
    %8101 = vmatprep.subr.bf16.mxu0 0
    %8102 = vmatpush1.bf16.msra.mxu0 0
    %8103 = vmatprep.subr.bf16.mxu0 0
    %8104 = vmatpush1.bf16.msra.mxu0 0
    %8105 = vmatprep.subr.bf16.mxu0 0
    %8106 = vmatpush1.bf16.msra.mxu0 0
    %8107 = vmatprep.subr.bf16.mxu0 0
    %8108 = vmatpush1.bf16.msra.mxu0 0
    %8109 = vmatprep.subr.bf16.mxu0 0
    %8110 = vmatpush1.bf16.msra.mxu0 0
    %8111 = vmatprep.subr.bf16.mxu0 0
    %8112 = vmatpush1.bf16.msra.mxu0 0
    %8113 = vmatprep.subr.bf16.mxu0 0
    %8114 = vmatpush1.bf16.msra.mxu0 0
    %8115 = vmatprep.mubr.bf16.mxu0 0
    %8116 = vmatmul.mubr.bf16.gmra.mrb[0].mxu0 %v8078
    %v8117 = vpop.f32.mrb[0].mxu0
    %v8118 = vadd.f32 0.0, %v8117
    %v8119 = vpop.f32.mrb[0].mxu0
    %v8120 = vpop.f32.mrb[0].mxu0
    %v8121 = vpop.f32.mrb[0].mxu0
    %8122 = vdwg.mxu0
    %8124 = vrot.lane.b32.xlu0 %v7299, 96
    %v8125 = vpop.permute.xlu0 %8124
    %v8127 = vsel %vm296, %v7779, 0
    %v8130 = vsel %vm803, %v8125, 0
    %8132 = vmatprep.subr.bf16.mxu0 0
    %8133 = vmatpush1.bf16.msra.mxu0 %v8130
    %8134 = vmatprep.subr.bf16.mxu0 0
    %8135 = vmatpush1.bf16.msra.mxu0 0
    %8136 = vmatprep.subr.bf16.mxu0 0
    %8137 = vmatpush1.bf16.msra.mxu0 0
    %8138 = vmatprep.subr.bf16.mxu0 0
    %8139 = vmatpush1.bf16.msra.mxu0 0
    %8140 = vmatprep.subr.bf16.mxu0 0
    %8141 = vmatpush1.bf16.msra.mxu0 0
    %8142 = vmatprep.subr.bf16.mxu0 0
    %8143 = vmatpush1.bf16.msra.mxu0 0
    %8144 = vmatprep.subr.bf16.mxu0 0
    %8145 = vmatpush1.bf16.msra.mxu0 0
    %8146 = vmatprep.subr.bf16.mxu0 0
    %8147 = vmatpush1.bf16.msra.mxu0 0
    %8148 = vmatprep.subr.bf16.mxu0 0
    %8149 = vmatpush1.bf16.msra.mxu0 0
    %8150 = vmatprep.subr.bf16.mxu0 0
    %8151 = vmatpush1.bf16.msra.mxu0 0
    %8152 = vmatprep.subr.bf16.mxu0 0
    %8153 = vmatpush1.bf16.msra.mxu0 0
    %8154 = vmatprep.subr.bf16.mxu0 0
    %8155 = vmatpush1.bf16.msra.mxu0 0
    %8156 = vmatprep.subr.bf16.mxu0 0
    %8157 = vmatpush1.bf16.msra.mxu0 0
    %8158 = vmatprep.subr.bf16.mxu0 0
    %8159 = vmatpush1.bf16.msra.mxu0 0
    %8160 = vmatprep.subr.bf16.mxu0 0
    %8161 = vmatpush1.bf16.msra.mxu0 0
    %8162 = vmatprep.subr.bf16.mxu0 0
    %8163 = vmatpush1.bf16.msra.mxu0 0
    %8164 = vmatprep.mubr.bf16.mxu0 0
    %8165 = vmatmul.mubr.bf16.gmra.mrb[0].mxu0 %v8127
    %v8166 = vpop.f32.mrb[0].mxu0
    %v8167 = vadd.f32 0.0, %v8166
    %v8168 = vpop.f32.mrb[0].mxu0
    %v8169 = vpop.f32.mrb[0].mxu0
    %v8170 = vpop.f32.mrb[0].mxu0
    %8171 = vdwg.mxu0
    %v8172 = vpack.c.bf16 %v7873, %v7824
    %v8173 = vpack.c.bf16 %v7971, %v7922
    %v8175 = vsel %vm296, %v8173, 0
    %v8178 = vsel %vm803, %v7240, 0
    %8180 = vmatprep.subr.bf16.mxu0 0
    %8181 = vmatpush1.bf16.msra.mxu0 %v8178
    %8182 = vmatprep.subr.bf16.mxu0 0
    %8183 = vmatpush1.bf16.msra.mxu0 0
    %8184 = vmatprep.subr.bf16.mxu0 0
    %8185 = vmatpush1.bf16.msra.mxu0 0
    %8186 = vmatprep.subr.bf16.mxu0 0
    %8187 = vmatpush1.bf16.msra.mxu0 0
    %8188 = vmatprep.subr.bf16.mxu0 0
    %8189 = vmatpush1.bf16.msra.mxu0 0
    %8190 = vmatprep.subr.bf16.mxu0 0
    %8191 = vmatpush1.bf16.msra.mxu0 0
    %8192 = vmatprep.subr.bf16.mxu0 0
    %8193 = vmatpush1.bf16.msra.mxu0 0
    %8194 = vmatprep.subr.bf16.mxu0 0
    %8195 = vmatpush1.bf16.msra.mxu0 0
    %8196 = vmatprep.subr.bf16.mxu0 0
    %8197 = vmatpush1.bf16.msra.mxu0 0
    %8198 = vmatprep.subr.bf16.mxu0 0
    %8199 = vmatpush1.bf16.msra.mxu0 0
    %8200 = vmatprep.subr.bf16.mxu0 0
    %8201 = vmatpush1.bf16.msra.mxu0 0
    %8202 = vmatprep.subr.bf16.mxu0 0
    %8203 = vmatpush1.bf16.msra.mxu0 0
    %8204 = vmatprep.subr.bf16.mxu0 0
    %8205 = vmatpush1.bf16.msra.mxu0 0
    %8206 = vmatprep.subr.bf16.mxu0 0
    %8207 = vmatpush1.bf16.msra.mxu0 0
    %8208 = vmatprep.subr.bf16.mxu0 0
    %8209 = vmatpush1.bf16.msra.mxu0 0
    %8210 = vmatprep.subr.bf16.mxu0 0
    %8211 = vmatpush1.bf16.msra.mxu0 0
    %8212 = vmatprep.mubr.bf16.mxu0 0
    %8213 = vmatmul.mubr.bf16.gmra.mrb[0].mxu0 %v8175
    %v8214 = vpop.f32.mrb[0].mxu0
    %v8215 = vadd.f32 0.0, %v8214
    %v8216 = vpop.f32.mrb[0].mxu0
    %v8217 = vpop.f32.mrb[0].mxu0
    %v8218 = vadd.f32 0.0, %v8217
    %v8219 = vpop.f32.mrb[0].mxu0
    %8220 = vdwg.mxu0
    %v8222 = vsel %vm296, %v8172, 0
    %v8225 = vsel %vm803, %v7239, 0
    %8227 = vmatprep.subr.bf16.mxu0 0
    %8228 = vmatpush1.bf16.msra.mxu0 %v8225
    %8229 = vmatprep.subr.bf16.mxu0 0
    %8230 = vmatpush1.bf16.msra.mxu0 0
    %8231 = vmatprep.subr.bf16.mxu0 0
    %8232 = vmatpush1.bf16.msra.mxu0 0
    %8233 = vmatprep.subr.bf16.mxu0 0
    %8234 = vmatpush1.bf16.msra.mxu0 0
    %8235 = vmatprep.subr.bf16.mxu0 0
    %8236 = vmatpush1.bf16.msra.mxu0 0
    %8237 = vmatprep.subr.bf16.mxu0 0
    %8238 = vmatpush1.bf16.msra.mxu0 0
    %8239 = vmatprep.subr.bf16.mxu0 0
    %8240 = vmatpush1.bf16.msra.mxu0 0
    %8241 = vmatprep.subr.bf16.mxu0 0
    %8242 = vmatpush1.bf16.msra.mxu0 0
    %8243 = vmatprep.subr.bf16.mxu0 0
    %8244 = vmatpush1.bf16.msra.mxu0 0
    %8245 = vmatprep.subr.bf16.mxu0 0
    %8246 = vmatpush1.bf16.msra.mxu0 0
    %8247 = vmatprep.subr.bf16.mxu0 0
    %8248 = vmatpush1.bf16.msra.mxu0 0
    %8249 = vmatprep.subr.bf16.mxu0 0
    %8250 = vmatpush1.bf16.msra.mxu0 0
    %8251 = vmatprep.subr.bf16.mxu0 0
    %8252 = vmatpush1.bf16.msra.mxu0 0
    %8253 = vmatprep.subr.bf16.mxu0 0
    %8254 = vmatpush1.bf16.msra.mxu0 0
    %8255 = vmatprep.subr.bf16.mxu0 0
    %8256 = vmatpush1.bf16.msra.mxu0 0
    %8257 = vmatprep.subr.bf16.mxu0 0
    %8258 = vmatpush1.bf16.msra.mxu0 0
    %8259 = vmatprep.mubr.bf16.mxu0 0
    %8260 = vmatmul.mubr.bf16.gmra.mrb[0].mxu0 %v8222
    %v8261 = vpop.f32.mrb[0].mxu0
    %v8262 = vadd.f32 %v8215, %v8261
    %v8263 = vpop.f32.mrb[0].mxu0
    %v8264 = vpop.f32.mrb[0].mxu0
    %v8265 = vadd.f32 %v8218, %v8264
    %v8266 = vpop.f32.mrb[0].mxu0
    %8267 = vdwg.mxu0
    %v8268 = vpack.c.bf16 %v8069, %v8020
    %v8270 = vsel %vm296, %v8268, 0
    %v8273 = vsel %vm803, %v7241, 0
    %8275 = vmatprep.subr.bf16.mxu0 0
    %8276 = vmatpush1.bf16.msra.mxu0 %v8273
    %8277 = vmatprep.subr.bf16.mxu0 0
    %8278 = vmatpush1.bf16.msra.mxu0 0
    %8279 = vmatprep.subr.bf16.mxu0 0
    %8280 = vmatpush1.bf16.msra.mxu0 0
    %8281 = vmatprep.subr.bf16.mxu0 0
    %8282 = vmatpush1.bf16.msra.mxu0 0
    %8283 = vmatprep.subr.bf16.mxu0 0
    %8284 = vmatpush1.bf16.msra.mxu0 0
    %8285 = vmatprep.subr.bf16.mxu0 0
    %8286 = vmatpush1.bf16.msra.mxu0 0
    %8287 = vmatprep.subr.bf16.mxu0 0
    %8288 = vmatpush1.bf16.msra.mxu0 0
    %8289 = vmatprep.subr.bf16.mxu0 0
    %8290 = vmatpush1.bf16.msra.mxu0 0
    %8291 = vmatprep.subr.bf16.mxu0 0
    %8292 = vmatpush1.bf16.msra.mxu0 0
    %8293 = vmatprep.subr.bf16.mxu0 0
    %8294 = vmatpush1.bf16.msra.mxu0 0
    %8295 = vmatprep.subr.bf16.mxu0 0
    %8296 = vmatpush1.bf16.msra.mxu0 0
    %8297 = vmatprep.subr.bf16.mxu0 0
    %8298 = vmatpush1.bf16.msra.mxu0 0
    %8299 = vmatprep.subr.bf16.mxu0 0
    %8300 = vmatpush1.bf16.msra.mxu0 0
    %8301 = vmatprep.subr.bf16.mxu0 0
    %8302 = vmatpush1.bf16.msra.mxu0 0
    %8303 = vmatprep.subr.bf16.mxu0 0
    %8304 = vmatpush1.bf16.msra.mxu0 0
    %8305 = vmatprep.subr.bf16.mxu0 0
    %8306 = vmatpush1.bf16.msra.mxu0 0
    %8307 = vmatprep.mubr.bf16.mxu0 0
    %8308 = vmatmul.mubr.bf16.gmra.mrb[0].mxu0 %v8270
    %v8309 = vpop.f32.mrb[0].mxu0
    %v8310 = vadd.f32 0.0, %v8309
    %v8311 = vpop.f32.mrb[0].mxu0
    %v8312 = vpop.f32.mrb[0].mxu0
    %v8313 = vadd.f32 0.0, %v8312
    %v8314 = vpop.f32.mrb[0].mxu0
    %8315 = vdwg.mxu0
    %v8316 = vadd.f32 %v8262, %v8310
    %v8317 = vadd.f32 %v8265, %v8313
    %v8318 = vpack.c.bf16 %v8167, %v8118
    %v8320 = vsel %vm296, %v8318, 0
    %v8323 = vsel %vm803, %v7242, 0
    %8325 = vmatprep.subr.bf16.mxu0 0
    %8326 = vmatpush1.bf16.msra.mxu0 %v8323
    %8327 = vmatprep.subr.bf16.mxu0 0
    %8328 = vmatpush1.bf16.msra.mxu0 0
    %8329 = vmatprep.subr.bf16.mxu0 0
    %8330 = vmatpush1.bf16.msra.mxu0 0
    %8331 = vmatprep.subr.bf16.mxu0 0
    %8332 = vmatpush1.bf16.msra.mxu0 0
    %8333 = vmatprep.subr.bf16.mxu0 0
    %8334 = vmatpush1.bf16.msra.mxu0 0
    %8335 = vmatprep.subr.bf16.mxu0 0
    %8336 = vmatpush1.bf16.msra.mxu0 0
    %8337 = vmatprep.subr.bf16.mxu0 0
    %8338 = vmatpush1.bf16.msra.mxu0 0
    %8339 = vmatprep.subr.bf16.mxu0 0
    %8340 = vmatpush1.bf16.msra.mxu0 0
    %8341 = vmatprep.subr.bf16.mxu0 0
    %8342 = vmatpush1.bf16.msra.mxu0 0
    %8343 = vmatprep.subr.bf16.mxu0 0
    %8344 = vmatpush1.bf16.msra.mxu0 0
    %8345 = vmatprep.subr.bf16.mxu0 0
    %8346 = vmatpush1.bf16.msra.mxu0 0
    %8347 = vmatprep.subr.bf16.mxu0 0
    %8348 = vmatpush1.bf16.msra.mxu0 0
    %8349 = vmatprep.subr.bf16.mxu0 0
    %8350 = vmatpush1.bf16.msra.mxu0 0
    %8351 = vmatprep.subr.bf16.mxu0 0
    %8352 = vmatpush1.bf16.msra.mxu0 0
    %8353 = vmatprep.subr.bf16.mxu0 0
    %8354 = vmatpush1.bf16.msra.mxu0 0
    %8355 = vmatprep.subr.bf16.mxu0 0
    %8356 = vmatpush1.bf16.msra.mxu0 0
    %8357 = vmatprep.mubr.bf16.mxu0 0
    %8358 = vmatmul.mubr.bf16.gmra.mrb[0].mxu0 %v8320
    %v8359 = vpop.f32.mrb[0].mxu0
    %v8360 = vadd.f32 0.0, %v8359
    %v8361 = vpop.f32.mrb[0].mxu0
    %v8362 = vpop.f32.mrb[0].mxu0
    %v8363 = vadd.f32 0.0, %v8362
    %v8364 = vpop.f32.mrb[0].mxu0
    %8365 = vdwg.mxu0
    %v8366 = vadd.f32 %v8316, %v8360
    %v8367 = vadd.f32 %v8317, %v8363
    %v8368 = vlaneseq
    %v8369 = vshrl.u32 %v8368, 7
    %v8370 = vsub.s32 0, %v8369
    %v8371 = vrot.slane %v7243, %v8370
    %v8372 = vadd.f32 %v8366, %v8371
    %v8373 = vadd.f32 %v8367, %v8371
    %v8374 = vadd.f32 %v7069, %v8372
    %v8375 = vadd.f32 %v7070, %v8373
    %v8376 = vld [vmem:[#allocation5 + $0x160] sm:$0x1]
    %v8377 = vld [vmem:[#allocation5 + $0x168] sm:$0x1]
    %v8378 = vsel %vm154, %v8374, 0.0
    %8379 = vadd.xlane.f32.xlu0 %v8378
    %v8380 = vpop.xlane.xlu0 %8379
    %v8381 = vsel %vm154, %v8375, 0.0
    %8382 = vadd.xlane.f32.xlu0 %v8381
    %v8383 = vpop.xlane.xlu0 %8382
    %v8384 = vmul.f32 %v8380, %v161
    %v8385 = vmul.f32 %v8383, %v161
    %v8386 = vsub.f32 %v8374, %v8384
    %v8387 = vsub.f32 %v8375, %v8385
    %v8388 = vmul.f32 %v8386, %v8386
    %v8389 = vmul.f32 %v8387, %v8387
    %v8390 = vsel %vm154, %v8388, 0.0
    %8391 = vadd.xlane.f32.xlu0 %v8390
    %v8392 = vpop.xlane.xlu0 %8391
    %v8393 = vsel %vm154, %v8389, 0.0
    %8394 = vadd.xlane.f32.xlu0 %v8393
    %v8395 = vpop.xlane.xlu0 %8394
    %v8396 = vmul.f32 %v8392, %v161
    %v8397 = vmul.f32 %v8395, %v161
    %v8398 = vadd.f32 %v8396, 1e-06
    %v8399 = vadd.f32 %v8397, 1e-06
    %v8400 = vrsqrt.pop %v8398
    %v8401 = vrsqrt.pop %v8399
    %v8402 = vmul.f32 %v8386, %v8400
    %v8403 = vmul.f32 %v8387, %v8401
    %v8404 = vlaneseq
    %v8405 = vshrl.u32 %v8404, 7
    %v8406 = vsub.s32 0, %v8405
    %v8407 = vrot.slane %v8376, %v8406
    %v8408 = vmul.f32 %v8402, %v8407
    %v8409 = vmul.f32 %v8403, %v8407
    %v8410 = vlaneseq
    %v8411 = vshrl.u32 %v8410, 7
    %v8412 = vsub.s32 0, %v8411
    %v8413 = vrot.slane %v8377, %v8412
    %v8414 = vadd.f32 %v8408, %v8413
    %v8415 = vadd.f32 %v8409, %v8413
    %v8416 = vpack.c.bf16 %v8415, %v8414
    %v8417 = vld [vmem:[#allocation2 + $0x180] sm:$0xf]
    %v8418 = vld [vmem:[#allocation2 + $0x184] sm:$0xf]
    %v8419 = vld [vmem:[#allocation2 + $0x188] sm:$0xf]
    %v8420 = vld [vmem:[#allocation2 + $0x18c] sm:$0xf]
    %v8421 = vld [vmem:[#allocation5 + $0x170] sm:$0x1]
    %v8422 = vlaneseq
    %v8423 = vshrl.u32 %v8422, 7
    %v8424 = vsub.s32 0, %v8423
    %v8425 = vrot.slane %v8421, %v8424
    %v8430 = vunpack.c.l.b16 %v8417
    %v8431 = vunpack.c.l.b16 %v8418
    %v8432 = vunpack.c.l.b16 %v8419
    %v8433 = vunpack.c.l.b16 %v8420
    %v8434 = vpack.c.b16 %v8431, %v8430
    %v8435 = vpack.c.b16 %v8433, %v8432
    %v8439 = vsel %vm154, %v8416, 0
    %8441 = vmatprep.subr.bf16.mxu0 0
    %8442 = vmatpush1.bf16.msra.mxu0 %v8434
    %8443 = vmatprep.subr.bf16.mxu0 0
    %8444 = vmatpush1.bf16.msra.mxu0 %v8435
    %8445 = vmatprep.subr.bf16.mxu0 0
    %8446 = vmatpush1.bf16.msra.mxu0 0
    %8447 = vmatprep.subr.bf16.mxu0 0
    %8448 = vmatpush1.bf16.msra.mxu0 0
    %8449 = vmatprep.subr.bf16.mxu0 0
    %8450 = vmatpush1.bf16.msra.mxu0 0
    %8451 = vmatprep.subr.bf16.mxu0 0
    %8452 = vmatpush1.bf16.msra.mxu0 0
    %8453 = vmatprep.subr.bf16.mxu0 0
    %8454 = vmatpush1.bf16.msra.mxu0 0
    %8455 = vmatprep.subr.bf16.mxu0 0
    %8456 = vmatpush1.bf16.msra.mxu0 0
    %8457 = vmatprep.subr.bf16.mxu0 0
    %8458 = vmatpush1.bf16.msra.mxu0 0
    %8459 = vmatprep.subr.bf16.mxu0 0
    %8460 = vmatpush1.bf16.msra.mxu0 0
    %8461 = vmatprep.subr.bf16.mxu0 0
    %8462 = vmatpush1.bf16.msra.mxu0 0
    %8463 = vmatprep.subr.bf16.mxu0 0
    %8464 = vmatpush1.bf16.msra.mxu0 0
    %8465 = vmatprep.subr.bf16.mxu0 0
    %8466 = vmatpush1.bf16.msra.mxu0 0
    %8467 = vmatprep.subr.bf16.mxu0 0
    %8468 = vmatpush1.bf16.msra.mxu0 0
    %8469 = vmatprep.subr.bf16.mxu0 0
    %8470 = vmatpush1.bf16.msra.mxu0 0
    %8471 = vmatprep.subr.bf16.mxu0 0
    %8472 = vmatpush1.bf16.msra.mxu0 0
    %8473 = vmatprep.mubr.bf16.mxu0 0
    %8474 = vmatmul.mubr.bf16.gmra.mrb[0].mxu0 %v8439
    %v8475 = vpop.f32.mrb[0].mxu0
    %v8476 = vadd.f32 %v8425, %v8475
    %v8477 = vpop.f32.mrb[0].mxu0
    %v8478 = vpop.f32.mrb[0].mxu0
    %v8479 = vadd.f32 %v8425, %v8478
    %v8480 = vpop.f32.mrb[0].mxu0
    %8481 = vdwg.mxu0
    %v8482 = vmax.f32 %v8476, 0.0
    %v8483 = vmax.f32 %v8479, 0.0
    %v8484 = vpack.c.bf16 %v8483, %v8482
    %v8485 = vld [vmem:[#allocation2 + $0x190] sm:$0xf]
    %v8486 = vld [vmem:[#allocation2 + $0x194] sm:$0xf]
    %v8487 = vld [vmem:[#allocation2 + $0x198] sm:$0xf]
    %v8488 = vld [vmem:[#allocation2 + $0x19c] sm:$0xf]
    %v8489 = vld [vmem:[#allocation2 + $0x1a0] sm:$0xf]
    %v8490 = vld [vmem:[#allocation2 + $0x1a4] sm:$0xf]
    %v8491 = vld [vmem:[#allocation2 + $0x1a8] sm:$0xf]
    %v8492 = vld [vmem:[#allocation2 + $0x1ac] sm:$0xf]
    %v8493 = vld [vmem:[#allocation5 + $0x178] sm:$0x1]
    %v8494 = vlaneseq
    %v8495 = vshrl.u32 %v8494, 7
    %v8496 = vsub.s32 0, %v8495
    %v8497 = vrot.slane %v8493, %v8496
    %v8506 = vunpack.c.l.b16 %v8485
    %v8507 = vunpack.c.l.b16 %v8486
    %v8508 = vunpack.c.l.b16 %v8487
    %v8509 = vunpack.c.l.b16 %v8488
    %v8510 = vunpack.c.l.b16 %v8489
    %v8511 = vunpack.c.l.b16 %v8490
    %v8512 = vunpack.c.l.b16 %v8491
    %v8513 = vunpack.c.l.b16 %v8492
    %v8514 = vpack.c.b16 %v8507, %v8506
    %v8515 = vpack.c.b16 %v8509, %v8508
    %v8516 = vpack.c.b16 %v8511, %v8510
    %v8517 = vpack.c.b16 %v8513, %v8512
    %v8523 = vsel %vm1533, %v8484, 0
    %8525 = vmatprep.subr.bf16.mxu0 0
    %8526 = vmatpush1.bf16.msra.mxu0 %v8514
    %8527 = vmatprep.subr.bf16.mxu0 0
    %8528 = vmatpush1.bf16.msra.mxu0 %v8515
    %8529 = vmatprep.subr.bf16.mxu0 0
    %8530 = vmatpush1.bf16.msra.mxu0 %v8516
    %8531 = vmatprep.subr.bf16.mxu0 0
    %8532 = vmatpush1.bf16.msra.mxu0 %v8517
    %8533 = vmatprep.subr.bf16.mxu0 0
    %8534 = vmatpush1.bf16.msra.mxu0 0
    %8535 = vmatprep.subr.bf16.mxu0 0
    %8536 = vmatpush1.bf16.msra.mxu0 0
    %8537 = vmatprep.subr.bf16.mxu0 0
    %8538 = vmatpush1.bf16.msra.mxu0 0
    %8539 = vmatprep.subr.bf16.mxu0 0
    %8540 = vmatpush1.bf16.msra.mxu0 0
    %8541 = vmatprep.subr.bf16.mxu0 0
    %8542 = vmatpush1.bf16.msra.mxu0 0
    %8543 = vmatprep.subr.bf16.mxu0 0
    %8544 = vmatpush1.bf16.msra.mxu0 0
    %8545 = vmatprep.subr.bf16.mxu0 0
    %8546 = vmatpush1.bf16.msra.mxu0 0
    %8547 = vmatprep.subr.bf16.mxu0 0
    %8548 = vmatpush1.bf16.msra.mxu0 0
    %8549 = vmatprep.subr.bf16.mxu0 0
    %8550 = vmatpush1.bf16.msra.mxu0 0
    %8551 = vmatprep.subr.bf16.mxu0 0
    %8552 = vmatpush1.bf16.msra.mxu0 0
    %8553 = vmatprep.subr.bf16.mxu0 0
    %8554 = vmatpush1.bf16.msra.mxu0 0
    %8555 = vmatprep.subr.bf16.mxu0 0
    %8556 = vmatpush1.bf16.msra.mxu0 0
    %8557 = vmatprep.mubr.bf16.mxu0 0
    %8558 = vmatmul.mubr.bf16.gmra.mrb[0].mxu0 %v8523
    %v8559 = vpop.f32.mrb[0].mxu0
    %v8560 = vadd.f32 %v8497, %v8559
    %v8561 = vpop.f32.mrb[0].mxu0
    %v8562 = vpop.f32.mrb[0].mxu0
    %v8563 = vadd.f32 %v8497, %v8562
    %v8564 = vpop.f32.mrb[0].mxu0
    %8565 = vdwg.mxu0
    %v8566 = vadd.f32 %v8374, %v8560
    %v8567 = vadd.f32 %v8375, %v8563
    %v8568 = vld [vmem:[#allocation5 + $0x180] sm:$0x1]
    %v8569 = vld [vmem:[#allocation5 + $0x188] sm:$0x1]
    %v8570 = vsel %vm154, %v8566, 0.0
    %8571 = vadd.xlane.f32.xlu0 %v8570
    %v8572 = vpop.xlane.xlu0 %8571
    %v8573 = vsel %vm154, %v8567, 0.0
    %8574 = vadd.xlane.f32.xlu0 %v8573
    %v8575 = vpop.xlane.xlu0 %8574
    %v8576 = vmul.f32 %v8572, %v161
    %v8577 = vmul.f32 %v8575, %v161
    %v8578 = vsub.f32 %v8566, %v8576
    %v8579 = vsub.f32 %v8567, %v8577
    %v8580 = vmul.f32 %v8578, %v8578
    %v8581 = vmul.f32 %v8579, %v8579
    %v8582 = vsel %vm154, %v8580, 0.0
    %8583 = vadd.xlane.f32.xlu0 %v8582
    %v8584 = vpop.xlane.xlu0 %8583
    %v8585 = vsel %vm154, %v8581, 0.0
    %8586 = vadd.xlane.f32.xlu0 %v8585
    %v8587 = vpop.xlane.xlu0 %8586
    %v8588 = vmul.f32 %v8584, %v161
    %v8589 = vmul.f32 %v8587, %v161
    %v8590 = vadd.f32 %v8588, 1e-06
    %v8591 = vadd.f32 %v8589, 1e-06
    %v8592 = vrsqrt.pop %v8590
    %v8593 = vrsqrt.pop %v8591
    %v8594 = vmul.f32 %v8578, %v8592
    %v8595 = vmul.f32 %v8579, %v8593
    %v8596 = vlaneseq
    %v8597 = vshrl.u32 %v8596, 7
    %v8598 = vsub.s32 0, %v8597
    %v8599 = vrot.slane %v8568, %v8598
    %v8600 = vmul.f32 %v8594, %v8599
    %v8601 = vmul.f32 %v8595, %v8599
    %v8602 = vlaneseq
    %v8603 = vshrl.u32 %v8602, 7
    %v8604 = vsub.s32 0, %v8603
    %v8605 = vrot.slane %v8569, %v8604
    %v8606 = vadd.f32 %v8600, %v8605
    %v8607 = vadd.f32 %v8601, %v8605
    %8608 = vst.msk [vmem:[#allocation7] sm:$0xff] %vm154, %v8606
    %8609 = vst.msk [vmem:[#allocation7 + $0x8] sm:$0xff] %vm154, %v8607
    // Predicated region
    $region38: #{transformer_forward.1} parent=1 // pred_check
      _
    $region39: #{transformer_forward.1} parent=1 // pred_check_branch
      %8611 = sbr.rel (0) target = $region41
    $region40: #{transformer_forward.1} parent=1 // pred_region
      %s8613 = ssub.s32 256, 256
      %8614 = vsyncadd [#allocation4], %s8613
      %s8615 = sshll.u32 [#allocation7], 4
      %s8616 = int_to_ptr.vmem [resolvable:$true] %s8615
      %8621 = dma.vmem_to_hbm [thread:$0]  %s8616, 256, %s7, [#allocation4], 128, 128, 8
    $region41: #{transformer_forward.1} parent=1 // pred_fallthru
      _
    // Predicated region
    $region42: #{transformer_forward.1} parent=1 // pred_check
      _
    $region43: #{transformer_forward.1} parent=1 // pred_check_branch
      %8623 = sbr.rel (0) target = $region45
    $region44: #{transformer_forward.1} parent=1 // pred_region
      %8624 = dma.done [#allocation4], 256
    $region45: #{transformer_forward.1} parent=1 // pred_fallthru
      _
    %8625 = vsyncpa [#allocation3], 1
    %8626 = vsyncpa [#allocation6], 1
    %8627 = vsyncpa [#allocation4], 1

</llo_original>
